<compile_context>
chip_gen: v6e
topology: v6e:2x2x1
jax: 0.10.0
libtpu: 0.0.40
codegen_flags: <defaults>
</compile_context>

<pallas_src>
import functools
import math

import numpy as np

import jax
import jax.numpy as jnp
from jax.experimental import pallas as pl
from jax.experimental.pallas import tpu as pltpu


# ----------------------------------------------------------------------------
# Deterministic stand-ins for network.yaml
# ----------------------------------------------------------------------------
NIN, NHID, NOUT = 32, 16, 8        # layer[0..2]['dim']
N_BATCH = 2
T_STEPS = 64                       # tSample / Ts
TS = 1.0                           # simulation['Ts']
THETA = 10.0                       # neuron['theta']
TAU_SR = 10.0                      # neuron['tauSr']
TAU_REF = 1.0                      # neuron['tauRef']
SCALE_REF = 2.0                    # neuron['scaleRef']

LANES = 128                        # padded lane width (full vreg lane occupancy)


def _alpha_kernel(tau, mult, ts, t_sample, eps):
    """SLAYER spikeLayer._calculateAlphaKernel."""
    vals = []
    t = 0.0
    while t < t_sample:
        v = mult * t / tau * math.exp(1.0 - t / tau)
        if abs(v) < eps and t > tau:
            break
        vals.append(v)
        t += ts
    return np.asarray(vals, dtype=np.float32)


def make_srm_matrix(t_steps, ts, tau_sr):
    """Toeplitz M with M[t_out, t_in] = Ts * srm[t_out - t_in]; psp = M @ spikes."""
    srm = _alpha_kernel(tau_sr, 1.0, ts, t_steps * ts, eps=0.01)
    m = np.zeros((t_steps, t_steps), dtype=np.float32)
    for d in range(min(len(srm), t_steps)):
        idx = np.arange(t_steps - d)
        m[idx + d, idx] = ts * srm[d]
    return jnp.asarray(m)


def make_ref_column(t_steps, ts, tau_ref, theta, scale_ref):
    """Refractory kernel taps (finite support), padded up to a multiple of 8 rows.
    ref[0] == 0, which the rolling-accumulator scan relies on."""
    ref = _alpha_kernel(tau_ref, -scale_ref * theta, ts, t_steps * ts, eps=0.0001)
    k = min(len(ref), t_steps)
    r_len = max(8, -(-k // 8) * 8)
    buf = np.zeros((r_len, 1), dtype=np.float32)
    buf[:k, 0] = ref[:k]
    return jnp.asarray(buf)


def build_block_weights(w1, w2, n_batch, lanes):
    """Block-diagonal (batch folded on the lane axis) dense weights, zero-padded
    to `lanes` output columns so every scan op / store in the kernel is
    lane-dense.  Built once, outside the jitted per-call path (weights are
    static across calls)."""
    w1 = np.asarray(w1, np.float32)
    w2 = np.asarray(w2, np.float32)
    w1b = np.kron(np.eye(n_batch, dtype=np.float32), w1.T)   # (N*NIN,  N*NHID)
    w2b = np.kron(np.eye(n_batch, dtype=np.float32), w2.T)   # (N*NHID, N*NOUT)
    assert w1b.shape[1] <= lanes and w2b.shape[1] <= lanes
    w1p = np.zeros((w1b.shape[0], lanes), np.float32)
    w1p[:, :w1b.shape[1]] = w1b
    # Layer-2 input is the lane-padded layer-1 spike slab -> pad rows too
    # (the padded lanes never spike, and their weight rows are zero anyway).
    w2p = np.zeros((lanes, lanes), np.float32)
    w2p[:w2b.shape[0], :w2b.shape[1]] = w2b
    return jnp.asarray(w1p), jnp.asarray(w2p)


# ----------------------------------------------------------------------------
# Fused Pallas kernel: both SLAYER layers (psp -> dense -> spike) x 2
# ----------------------------------------------------------------------------
def _snn_fused_kernel(x_ref, srm_ref, w1_ref, w2_ref, ref_ref, out_ref,
                      u_scr, s_scr, *, theta, inv_ts):
    # x_ref   : (T, N*NIN)        input spike slab (time-major, batch on lanes)
    # srm_ref : (T, T)            Toeplitz SRM filter matrix
    # w1_ref  : (N*NIN, LANES)    block-diag dense weights, layer 1 (lane-padded)
    # w2_ref  : (LANES, LANES)    block-diag dense weights, layer 2 (lane-padded)
    # ref_ref : (R, 1)            refractory kernel taps (ref[0] == 0)
    # out_ref : (T, LANES)        output spike slab (lane-padded)
    # u_scr   : (T, LANES) VMEM   membrane-potential staging slab
    # s_scr   : (T, LANES) VMEM   layer-1 spike slab (never leaves VMEM)
    srm = srm_ref[...]
    t_steps = srm.shape[0]
    lanes = out_ref.shape[1]
    rker = ref_ref[...]                                    # (R, 1)
    ref_len = rker.shape[0]

    # Hoisted loop constants (JAX does not CSE broadcast_in_dim).
    rker_b = jnp.broadcast_to(rker, (ref_len, lanes))      # (R, LANES)
    zero_row = jnp.zeros((1, lanes), jnp.float32)

    def spike_scan(u, dst_ref):
        # SLAYER getSpikes with a rolling refractory accumulator:
        #   m_t     = u[t] + acc[0]
        #   fired_t = m_t >= theta           -> emit spike row fired_t / Ts
        #   acc    += fired_t * ref          (ref[0] == 0 -> current step unaffected)
        #   acc     = shift-down(acc)        (acc[i] <- acc[i+1], tail row <- 0)
        # Only ~2 vregs of state are carried through the serial chain; u is
        # never rewritten and no post-loop threshold pass is needed.
        u_scr[...] = u                                     # lane-dense slab store
        acc = jnp.zeros((ref_len, lanes), jnp.float32)
        for t in range(t_steps):                           # fully unrolled, static idx
            u_row = u_scr[pl.ds(t, 1), :]                  # (1, LANES) row load (vld)
            m = u_row + acc[0:1, :]
            fired = (m >= theta).astype(jnp.float32)       # (1, LANES)
            dst_ref[pl.ds(t, 1), :] = fired * inv_ts       # emit spike row
            acc = acc + fired * rker_b                     # only `fired` is broadcast
            # shift-down one sublane (== pltpu.roll(-1) + zeroed tail row)
            acc = jnp.concatenate(
                [jax.lax.slice(acc, (1, 0), (ref_len, lanes)), zero_row], axis=0)

    # Layer 1: psp -> dense -> spike, with dense applied first (associativity).
    z1 = jnp.dot(x_ref[...], w1_ref[...], preferred_element_type=jnp.float32)
    u1 = jnp.dot(srm, z1, preferred_element_type=jnp.float32)
    spike_scan(u1, s_scr)

    # Layer 2: reads the layer-1 spike slab straight from VMEM scratch.
    z2 = jnp.dot(s_scr[...], w2_ref[...], preferred_element_type=jnp.float32)
    u2 = jnp.dot(srm, z2, preferred_element_type=jnp.float32)
    spike_scan(u2, out_ref)


def snn_forward_fused(x_slab, srm_mat, w1p, w2p, ref_col):
    t_steps = x_slab.shape[0]
    lanes = w2p.shape[1]
    kernel = functools.partial(_snn_fused_kernel,
                               theta=float(THETA), inv_ts=float(1.0 / TS))
    vmem = pl.BlockSpec(memory_space=pltpu.MemorySpace.VMEM)
    # Working set ~250 KB: gridless single invocation, everything resident in
    # VMEM on any TPU generation (v5e/v6e 128 MiB, v7x 64 MiB).
    # TODO(synk): on v7x (2 TensorCores) a grid=(N_BATCH,) batch shard with
    # dimension_semantics=("parallel",) would use the second core; kept
    # gridless because the same grid is a pure-overhead serial loop on v5e/v6e.
    return pl.pallas_call(
        kernel,
        out_shape=jax.ShapeDtypeStruct((t_steps, lanes), jnp.float32),
        in_specs=[vmem, vmem, vmem, vmem, vmem],
        out_specs=vmem,
        scratch_shapes=[pltpu.VMEM((t_steps, lanes), jnp.float32),   # u_scr
                        pltpu.VMEM((t_steps, lanes), jnp.float32)],  # s_scr
    )(x_slab, srm_mat, w1p, w2p, ref_col)


# ----------------------------------------------------------------------------
# Full network forward: spike(fc2(psp(spike(fc1(psp(x))))))
# ----------------------------------------------------------------------------
@jax.jit
def network_forward(spike_input, w1p, w2p, srm_mat, ref_col):
    # spike_input: (N, NIN, T)  (SLAYER NCHWT with H=W=1 squeezed)
    n, cin, t = spike_input.shape
    # Layout plumbing only (tiny tensors): time-major slab, batch folded on lanes.
    x_slab = jnp.transpose(spike_input, (2, 0, 1)).reshape(t, n * cin)
    out_slab = snn_forward_fused(x_slab, srm_mat, w1p, w2p, ref_col)
    out = out_slab[:, :n * NOUT].reshape(t, n, NOUT)
    return jnp.transpose(out, (1, 2, 0))                  # (N, NOUT, T)


# ----------------------------------------------------------------------------
# float64 numpy reference of the SLAYER forward (psp -> dense -> spike) x 2
# ----------------------------------------------------------------------------
def reference_forward(spike_input, w1, w2, srm_mat, ref_col, theta, ts):
    x = np.asarray(spike_input, np.float64)                # (N, C, T)
    m = np.asarray(srm_mat, np.float64)                    # (T, T)
    r = np.asarray(ref_col, np.float64)[:, 0]              # (R,)

    def layer(s, w):
        psp = np.einsum('tu,ncu->nct', m, s)
        u = np.einsum('oc,nct->not', np.asarray(w, np.float64), psp)
        out = np.zeros_like(u)
        t_total = u.shape[-1]
        for t in range(t_total):
            fired = (u[:, :, t] >= theta).astype(np.float64)
            out[:, :, t] = fired / ts
            win = min(len(r), t_total - t)
            u[:, :, t:t + win] += fired[:, :, None] * r[:win]
        return out

    return layer(layer(x, w1), w2)


if __name__ == "__main__":
    key = jax.random.PRNGKey(0)
    k_in, k_w1, k_w2 = jax.random.split(key, 3)

    # Binary input spike train, SLAYER NCHWT with H=W=1 squeezed -> (N, NIN, T).
    spike_input = (jax.random.uniform(k_in, (N_BATCH, NIN, T_STEPS)) < 0.3
                   ).astype(jnp.float32)

    # Dense layer weights (== Conv3d(Nin, Nout, 1) weights squeezed, bias=False).
    w1 = 0.5 * jax.random.normal(k_w1, (NHID, NIN), dtype=jnp.float32)
    w2 = 0.5 * jax.random.normal(k_w2, (NOUT, NHID), dtype=jnp.float32)

    srm_mat = make_srm_matrix(T_STEPS, TS, TAU_SR)
    ref_col = make_ref_column(T_STEPS, TS, TAU_REF, THETA, SCALE_REF)
    # Block-diagonal + lane-padded weights: built once, outside the jitted path.
    w1p, w2p = build_block_weights(w1, w2, N_BATCH, LANES)

    out = network_forward(spike_input, w1p, w2p, srm_mat, ref_col)
    out = jax.block_until_ready(out)

    assert out.shape == (N_BATCH, NOUT, T_STEPS), out.shape
    assert bool(jnp.all(jnp.isfinite(out)))
    # SLAYER spikes take values in {0, 1/Ts}.
    assert bool(jnp.all((out == 0.0) | (out == 1.0 / TS)))

    # Gross-correctness check against the float64 reference.  f32/MXU rounding
    # (and the matmul reassociation) can in principle flip spikes sitting
    # exactly at theta, so tolerate a tiny mismatch fraction; any structural
    # bug (e.g. wrong refractory shift) mismatches far more than this.
    ref = reference_forward(np.asarray(spike_input), np.asarray(w1),
                            np.asarray(w2), srm_mat, ref_col, THETA, TS)
    mismatch = float(np.mean(np.asarray(out) != ref))
    assert mismatch < 0.10, f"spike mismatch fraction {mismatch}"

    print("KERNEL_OK")
</pallas_src>

<mosaic_0001>
module attributes {stable_mosaic.version = 11 : i64} {
  func.func @_snn_fused_kernel(%arg0: memref<64x64xf32, #tpu.memory_space<vmem>>, %arg1: memref<64x64xf32, #tpu.memory_space<vmem>>, %arg2: memref<64x128xf32, #tpu.memory_space<vmem>>, %arg3: memref<128x128xf32, #tpu.memory_space<vmem>>, %arg4: memref<16x1xf32, #tpu.memory_space<vmem>>, %arg5: memref<64x128xf32, #tpu.memory_space<vmem>>, %arg6: memref<64x128xf32, #tpu.memory_space<vmem>>, %arg7: memref<64x128xf32, #tpu.memory_space<vmem>>) attributes {dimension_semantics = [], scalar_prefetch = 0 : i64, scratch_operands = 2 : i64, tpu.core_type = #tpu.core_type<tc>} {
    %c0 = arith.constant 0 : index
    %c0_0 = arith.constant 0 : index
    %0 = vector.load %arg1[%c0, %c0_0] : memref<64x64xf32, #tpu.memory_space<vmem>>, vector<64x64xf32>
    %c0_1 = arith.constant 0 : index
    %c0_2 = arith.constant 0 : index
    %1 = vector.load %arg4[%c0_1, %c0_2] : memref<16x1xf32, #tpu.memory_space<vmem>>, vector<16x1xf32>
    %2 = vector.shape_cast %1 : vector<16x1xf32> to vector<16x1xf32>
    %3 = vector.broadcast %2 : vector<16x1xf32> to vector<16x128xf32>
    %cst = arith.constant 0.000000e+00 : f32
    %4 = vector.broadcast %cst : f32 to vector<1x128xf32>
    %c0_3 = arith.constant 0 : index
    %c0_4 = arith.constant 0 : index
    %5 = vector.load %arg0[%c0_3, %c0_4] : memref<64x64xf32, #tpu.memory_space<vmem>>, vector<64x64xf32>
    %c0_5 = arith.constant 0 : index
    %c0_6 = arith.constant 0 : index
    %6 = vector.load %arg2[%c0_5, %c0_6] : memref<64x128xf32, #tpu.memory_space<vmem>>, vector<64x128xf32>
    %cst_7 = arith.constant dense<0.000000e+00> : vector<64x128xf32>
    %7 = tpu.matmul %5, %6, %cst_7 {dimension_numbers = #tpu.dot_dimension_numbers<[1], [0], [0], [1], [0, 0, 1, 1], [], []>} : vector<64x64xf32>, vector<64x128xf32>, vector<64x128xf32> -> vector<64x128xf32>
    %cst_8 = arith.constant dense<0.000000e+00> : vector<64x128xf32>
    %8 = tpu.matmul %0, %7, %cst_8 {dimension_numbers = #tpu.dot_dimension_numbers<[1], [0], [0], [1], [0, 0, 1, 1], [], []>} : vector<64x64xf32>, vector<64x128xf32>, vector<64x128xf32> -> vector<64x128xf32>
    %c0_9 = arith.constant 0 : index
    %c0_10 = arith.constant 0 : index
    %9 = vector.load %arg6[%c0_9, %c0_10] : memref<64x128xf32, #tpu.memory_space<vmem>>, vector<64x128xf32>
    tpu.vector_store %arg6[%c0_9, %c0_10], %8 {strides = array<i32>} : memref<64x128xf32, #tpu.memory_space<vmem>>, vector<64x128xf32>,
    %cst_11 = arith.constant 0.000000e+00 : f32
    %10 = vector.broadcast %cst_11 : f32 to vector<16x128xf32>
    %c0_12 = arith.constant 0 : index
    %c0_13 = arith.constant 0 : index
    %11 = vector.load %arg6[%c0_12, %c0_13] : memref<64x128xf32, #tpu.memory_space<vmem>>, vector<1x128xf32>
    %12 = vector.extract_strided_slice %10 {offsets = [0, 0], sizes = [1, 128], strides = [1, 1]} : vector<16x128xf32> to vector<1x128xf32>
    %13 = arith.addf %11, %12 : vector<1x128xf32>
    %cst_14 = arith.constant 1.000000e+01 : f32
    %14 = vector.broadcast %cst_14 : f32 to vector<1x128xf32>
    %15 = arith.cmpf oge, %13, %14 : vector<1x128xf32>
    %16 = arith.extui %15 : vector<1x128xi1> to vector<1x128xi32>
    %17 = arith.sitofp %16 : vector<1x128xi32> to vector<1x128xf32>
    %cst_15 = arith.constant 1.000000e+00 : f32
    %18 = vector.broadcast %cst_15 : f32 to vector<1x128xf32>
    %19 = arith.mulf %17, %18 : vector<1x128xf32>
    %c0_16 = arith.constant 0 : index
    %c0_17 = arith.constant 0 : index
    %20 = vector.load %arg7[%c0_16, %c0_17] : memref<64x128xf32, #tpu.memory_space<vmem>>, vector<1x128xf32>
    tpu.vector_store %arg7[%c0_16, %c0_17], %19 {strides = array<i32>} : memref<64x128xf32, #tpu.memory_space<vmem>>, vector<1x128xf32>,
    %21 = vector.broadcast %17 : vector<1x128xf32> to vector<16x128xf32>
    %22 = arith.mulf %21, %3 : vector<16x128xf32>
    %23 = arith.addf %10, %22 : vector<16x128xf32>
    %24 = vector.extract_strided_slice %23 {offsets = [1, 0], sizes = [15, 128], strides = [1, 1]} : vector<16x128xf32> to vector<15x128xf32>
    %25 = tpu.concatenate %24, %4 in 0 : vector<15x128xf32>, vector<1x128xf32> -> vector<16x128xf32>
    %c1 = arith.constant 1 : index
    %c0_18 = arith.constant 0 : index
    %26 = vector.load %arg6[%c1, %c0_18] : memref<64x128xf32, #tpu.memory_space<vmem>>, vector<1x128xf32>
    %27 = vector.extract_strided_slice %25 {offsets = [0, 0], sizes = [1, 128], strides = [1, 1]} : vector<16x128xf32> to vector<1x128xf32>
    %28 = arith.addf %26, %27 : vector<1x128xf32>
    %cst_19 = arith.constant 1.000000e+01 : f32
    %29 = vector.broadcast %cst_19 : f32 to vector<1x128xf32>
    %30 = arith.cmpf oge, %28, %29 : vector<1x128xf32>
    %31 = arith.extui %30 : vector<1x128xi1> to vector<1x128xi32>
    %32 = arith.sitofp %31 : vector<1x128xi32> to vector<1x128xf32>
    %cst_20 = arith.constant 1.000000e+00 : f32
    %33 = vector.broadcast %cst_20 : f32 to vector<1x128xf32>
    %34 = arith.mulf %32, %33 : vector<1x128xf32>
    %c1_21 = arith.constant 1 : index
    %c0_22 = arith.constant 0 : index
    %35 = vector.load %arg7[%c1_21, %c0_22] : memref<64x128xf32, #tpu.memory_space<vmem>>, vector<1x128xf32>
    tpu.vector_store %arg7[%c1_21, %c0_22], %34 {strides = array<i32>} : memref<64x128xf32, #tpu.memory_space<vmem>>, vector<1x128xf32>,
    %36 = vector.broadcast %32 : vector<1x128xf32> to vector<16x128xf32>
    %37 = arith.mulf %36, %3 : vector<16x128xf32>
    %38 = arith.addf %25, %37 : vector<16x128xf32>
    %39 = vector.extract_strided_slice %38 {offsets = [1, 0], sizes = [15, 128], strides = [1, 1]} : vector<16x128xf32> to vector<15x128xf32>
    %40 = tpu.concatenate %39, %4 in 0 : vector<15x128xf32>, vector<1x128xf32> -> vector<16x128xf32>
    %c2 = arith.constant 2 : index
    %c0_23 = arith.constant 0 : index
    %41 = vector.load %arg6[%c2, %c0_23] : memref<64x128xf32, #tpu.memory_space<vmem>>, vector<1x128xf32>
    %42 = vector.extract_strided_slice %40 {offsets = [0, 0], sizes = [1, 128], strides = [1, 1]} : vector<16x128xf32> to vector<1x128xf32>
    %43 = arith.addf %41, %42 : vector<1x128xf32>
    %cst_24 = arith.constant 1.000000e+01 : f32
    %44 = vector.broadcast %cst_24 : f32 to vector<1x128xf32>
    %45 = arith.cmpf oge, %43, %44 : vector<1x128xf32>
    %46 = arith.extui %45 : vector<1x128xi1> to vector<1x128xi32>
    %47 = arith.sitofp %46 : vector<1x128xi32> to vector<1x128xf32>
    %cst_25 = arith.constant 1.000000e+00 : f32
    %48 = vector.broadcast %cst_25 : f32 to vector<1x128xf32>
    %49 = arith.mulf %47, %48 : vector<1x128xf32>
    %c2_26 = arith.constant 2 : index
    %c0_27 = arith.constant 0 : index
    %50 = vector.load %arg7[%c2_26, %c0_27] : memref<64x128xf32, #tpu.memory_space<vmem>>, vector<1x128xf32>
    tpu.vector_store %arg7[%c2_26, %c0_27], %49 {strides = array<i32>} : memref<64x128xf32, #tpu.memory_space<vmem>>, vector<1x128xf32>,
    %51 = vector.broadcast %47 : vector<1x128xf32> to vector<16x128xf32>
    %52 = arith.mulf %51, %3 : vector<16x128xf32>
    %53 = arith.addf %40, %52 : vector<16x128xf32>
    %54 = vector.extract_strided_slice %53 {offsets = [1, 0], sizes = [15, 128], strides = [1, 1]} : vector<16x128xf32> to vector<15x128xf32>
    %55 = tpu.concatenate %54, %4 in 0 : vector<15x128xf32>, vector<1x128xf32> -> vector<16x128xf32>
    %c3 = arith.constant 3 : index
    %c0_28 = arith.constant 0 : index
    %56 = vector.load %arg6[%c3, %c0_28] : memref<64x128xf32, #tpu.memory_space<vmem>>, vector<1x128xf32>
    %57 = vector.extract_strided_slice %55 {offsets = [0, 0], sizes = [1, 128], strides = [1, 1]} : vector<16x128xf32> to vector<1x128xf32>
    %58 = arith.addf %56, %57 : vector<1x128xf32>
    %cst_29 = arith.constant 1.000000e+01 : f32
    %59 = vector.broadcast %cst_29 : f32 to vector<1x128xf32>
    %60 = arith.cmpf oge, %58, %59 : vector<1x128xf32>
    %61 = arith.extui %60 : vector<1x128xi1> to vector<1x128xi32>
    %62 = arith.sitofp %61 : vector<1x128xi32> to vector<1x128xf32>
    %cst_30 = arith.constant 1.000000e+00 : f32
    %63 = vector.broadcast %cst_30 : f32 to vector<1x128xf32>
    %64 = arith.mulf %62, %63 : vector<1x128xf32>
    %c3_31 = arith.constant 3 : index
    %c0_32 = arith.constant 0 : index
    %65 = vector.load %arg7[%c3_31, %c0_32] : memref<64x128xf32, #tpu.memory_space<vmem>>, vector<1x128xf32>
    tpu.vector_store %arg7[%c3_31, %c0_32], %64 {strides = array<i32>} : memref<64x128xf32, #tpu.memory_space<vmem>>, vector<1x128xf32>,
    %66 = vector.broadcast %62 : vector<1x128xf32> to vector<16x128xf32>
    %67 = arith.mulf %66, %3 : vector<16x128xf32>
    %68 = arith.addf %55, %67 : vector<16x128xf32>
    %69 = vector.extract_strided_slice %68 {offsets = [1, 0], sizes = [15, 128], strides = [1, 1]} : vector<16x128xf32> to vector<15x128xf32>
    %70 = tpu.concatenate %69, %4 in 0 : vector<15x128xf32>, vector<1x128xf32> -> vector<16x128xf32>
    %c4 = arith.constant 4 : index
    %c0_33 = arith.constant 0 : index
    %71 = vector.load %arg6[%c4, %c0_33] : memref<64x128xf32, #tpu.memory_space<vmem>>, vector<1x128xf32>
    %72 = vector.extract_strided_slice %70 {offsets = [0, 0], sizes = [1, 128], strides = [1, 1]} : vector<16x128xf32> to vector<1x128xf32>
    %73 = arith.addf %71, %72 : vector<1x128xf32>
    %cst_34 = arith.constant 1.000000e+01 : f32
    %74 = vector.broadcast %cst_34 : f32 to vector<1x128xf32>
    %75 = arith.cmpf oge, %73, %74 : vector<1x128xf32>
    %76 = arith.extui %75 : vector<1x128xi1> to vector<1x128xi32>
    %77 = arith.sitofp %76 : vector<1x128xi32> to vector<1x128xf32>
    %cst_35 = arith.constant 1.000000e+00 : f32
    %78 = vector.broadcast %cst_35 : f32 to vector<1x128xf32>
    %79 = arith.mulf %77, %78 : vector<1x128xf32>
    %c4_36 = arith.constant 4 : index
    %c0_37 = arith.constant 0 : index
    %80 = vector.load %arg7[%c4_36, %c0_37] : memref<64x128xf32, #tpu.memory_space<vmem>>, vector<1x128xf32>
    tpu.vector_store %arg7[%c4_36, %c0_37], %79 {strides = array<i32>} : memref<64x128xf32, #tpu.memory_space<vmem>>, vector<1x128xf32>,
    %81 = vector.broadcast %77 : vector<1x128xf32> to vector<16x128xf32>
    %82 = arith.mulf %81, %3 : vector<16x128xf32>
    %83 = arith.addf %70, %82 : vector<16x128xf32>
    %84 = vector.extract_strided_slice %83 {offsets = [1, 0], sizes = [15, 128], strides = [1, 1]} : vector<16x128xf32> to vector<15x128xf32>
    %85 = tpu.concatenate %84, %4 in 0 : vector<15x128xf32>, vector<1x128xf32> -> vector<16x128xf32>
    %c5 = arith.constant 5 : index
    %c0_38 = arith.constant 0 : index
    %86 = vector.load %arg6[%c5, %c0_38] : memref<64x128xf32, #tpu.memory_space<vmem>>, vector<1x128xf32>
    %87 = vector.extract_strided_slice %85 {offsets = [0, 0], sizes = [1, 128], strides = [1, 1]} : vector<16x128xf32> to vector<1x128xf32>
    %88 = arith.addf %86, %87 : vector<1x128xf32>
    %cst_39 = arith.constant 1.000000e+01 : f32
    %89 = vector.broadcast %cst_39 : f32 to vector<1x128xf32>
    %90 = arith.cmpf oge, %88, %89 : vector<1x128xf32>
    %91 = arith.extui %90 : vector<1x128xi1> to vector<1x128xi32>
    %92 = arith.sitofp %91 : vector<1x128xi32> to vector<1x128xf32>
    %cst_40 = arith.constant 1.000000e+00 : f32
    %93 = vector.broadcast %cst_40 : f32 to vector<1x128xf32>
    %94 = arith.mulf %92, %93 : vector<1x128xf32>
    %c5_41 = arith.constant 5 : index
    %c0_42 = arith.constant 0 : index
    %95 = vector.load %arg7[%c5_41, %c0_42] : memref<64x128xf32, #tpu.memory_space<vmem>>, vector<1x128xf32>
    tpu.vector_store %arg7[%c5_41, %c0_42], %94 {strides = array<i32>} : memref<64x128xf32, #tpu.memory_space<vmem>>, vector<1x128xf32>,
    %96 = vector.broadcast %92 : vector<1x128xf32> to vector<16x128xf32>
    %97 = arith.mulf %96, %3 : vector<16x128xf32>
    %98 = arith.addf %85, %97 : vector<16x128xf32>
    %99 = vector.extract_strided_slice %98 {offsets = [1, 0], sizes = [15, 128], strides = [1, 1]} : vector<16x128xf32> to vector<15x128xf32>
    %100 = tpu.concatenate %99, %4 in 0 : vector<15x128xf32>, vector<1x128xf32> -> vector<16x128xf32>
    %c6 = arith.constant 6 : index
    %c0_43 = arith.constant 0 : index
    %101 = vector.load %arg6[%c6, %c0_43] : memref<64x128xf32, #tpu.memory_space<vmem>>, vector<1x128xf32>
    %102 = vector.extract_strided_slice %100 {offsets = [0, 0], sizes = [1, 128], strides = [1, 1]} : vector<16x128xf32> to vector<1x128xf32>
    %103 = arith.addf %101, %102 : vector<1x128xf32>
    %cst_44 = arith.constant 1.000000e+01 : f32
    %104 = vector.broadcast %cst_44 : f32 to vector<1x128xf32>
    %105 = arith.cmpf oge, %103, %104 : vector<1x128xf32>
    %106 = arith.extui %105 : vector<1x128xi1> to vector<1x128xi32>
    %107 = arith.sitofp %106 : vector<1x128xi32> to vector<1x128xf32>
    %cst_45 = arith.constant 1.000000e+00 : f32
    %108 = vector.broadcast %cst_45 : f32 to vector<1x128xf32>
    %109 = arith.mulf %107, %108 : vector<1x128xf32>
    %c6_46 = arith.constant 6 : index
    %c0_47 = arith.constant 0 : index
    %110 = vector.load %arg7[%c6_46, %c0_47] : memref<64x128xf32, #tpu.memory_space<vmem>>, vector<1x128xf32>
    tpu.vector_store %arg7[%c6_46, %c0_47], %109 {strides = array<i32>} : memref<64x128xf32, #tpu.memory_space<vmem>>, vector<1x128xf32>,
    %111 = vector.broadcast %107 : vector<1x128xf32> to vector<16x128xf32>
    %112 = arith.mulf %111, %3 : vector<16x128xf32>
    %113 = arith.addf %100, %112 : vector<16x128xf32>
    %114 = vector.extract_strided_slice %113 {offsets = [1, 0], sizes = [15, 128], strides = [1, 1]} : vector<16x128xf32> to vector<15x128xf32>
    %115 = tpu.concatenate %114, %4 in 0 : vector<15x128xf32>, vector<1x128xf32> -> vector<16x128xf32>
    %c7 = arith.constant 7 : index
    %c0_48 = arith.constant 0 : index
    %116 = vector.load %arg6[%c7, %c0_48] : memref<64x128xf32, #tpu.memory_space<vmem>>, vector<1x128xf32>
    %117 = vector.extract_strided_slice %115 {offsets = [0, 0], sizes = [1, 128], strides = [1, 1]} : vector<16x128xf32> to vector<1x128xf32>
    %118 = arith.addf %116, %117 : vector<1x128xf32>
    %cst_49 = arith.constant 1.000000e+01 : f32
    %119 = vector.broadcast %cst_49 : f32 to vector<1x128xf32>
    %120 = arith.cmpf oge, %118, %119 : vector<1x128xf32>
    %121 = arith.extui %120 : vector<1x128xi1> to vector<1x128xi32>
    %122 = arith.sitofp %121 : vector<1x128xi32> to vector<1x128xf32>
    %cst_50 = arith.constant 1.000000e+00 : f32
    %123 = vector.broadcast %cst_50 : f32 to vector<1x128xf32>
    %124 = arith.mulf %122, %123 : vector<1x128xf32>
    %c7_51 = arith.constant 7 : index
    %c0_52 = arith.constant 0 : index
    %125 = vector.load %arg7[%c7_51, %c0_52] : memref<64x128xf32, #tpu.memory_space<vmem>>, vector<1x128xf32>
    tpu.vector_store %arg7[%c7_51, %c0_52], %124 {strides = array<i32>} : memref<64x128xf32, #tpu.memory_space<vmem>>, vector<1x128xf32>,
    %126 = vector.broadcast %122 : vector<1x128xf32> to vector<16x128xf32>
    %127 = arith.mulf %126, %3 : vector<16x128xf32>
    %128 = arith.addf %115, %127 : vector<16x128xf32>
    %129 = vector.extract_strided_slice %128 {offsets = [1, 0], sizes = [15, 128], strides = [1, 1]} : vector<16x128xf32> to vector<15x128xf32>
    %130 = tpu.concatenate %129, %4 in 0 : vector<15x128xf32>, vector<1x128xf32> -> vector<16x128xf32>
    %c8 = arith.constant 8 : index
    %c0_53 = arith.constant 0 : index
    %131 = vector.load %arg6[%c8, %c0_53] : memref<64x128xf32, #tpu.memory_space<vmem>>, vector<1x128xf32>
    %132 = vector.extract_strided_slice %130 {offsets = [0, 0], sizes = [1, 128], strides = [1, 1]} : vector<16x128xf32> to vector<1x128xf32>
    %133 = arith.addf %131, %132 : vector<1x128xf32>
    %cst_54 = arith.constant 1.000000e+01 : f32
    %134 = vector.broadcast %cst_54 : f32 to vector<1x128xf32>
    %135 = arith.cmpf oge, %133, %134 : vector<1x128xf32>
    %136 = arith.extui %135 : vector<1x128xi1> to vector<1x128xi32>
    %137 = arith.sitofp %136 : vector<1x128xi32> to vector<1x128xf32>
    %cst_55 = arith.constant 1.000000e+00 : f32
    %138 = vector.broadcast %cst_55 : f32 to vector<1x128xf32>
    %139 = arith.mulf %137, %138 : vector<1x128xf32>
    %c8_56 = arith.constant 8 : index
    %c0_57 = arith.constant 0 : index
    %140 = vector.load %arg7[%c8_56, %c0_57] : memref<64x128xf32, #tpu.memory_space<vmem>>, vector<1x128xf32>
    tpu.vector_store %arg7[%c8_56, %c0_57], %139 {strides = array<i32>} : memref<64x128xf32, #tpu.memory_space<vmem>>, vector<1x128xf32>,
    %141 = vector.broadcast %137 : vector<1x128xf32> to vector<16x128xf32>
    %142 = arith.mulf %141, %3 : vector<16x128xf32>
    %143 = arith.addf %130, %142 : vector<16x128xf32>
    %144 = vector.extract_strided_slice %143 {offsets = [1, 0], sizes = [15, 128], strides = [1, 1]} : vector<16x128xf32> to vector<15x128xf32>
    %145 = tpu.concatenate %144, %4 in 0 : vector<15x128xf32>, vector<1x128xf32> -> vector<16x128xf32>
    %c9 = arith.constant 9 : index
    %c0_58 = arith.constant 0 : index
    %146 = vector.load %arg6[%c9, %c0_58] : memref<64x128xf32, #tpu.memory_space<vmem>>, vector<1x128xf32>
    %147 = vector.extract_strided_slice %145 {offsets = [0, 0], sizes = [1, 128], strides = [1, 1]} : vector<16x128xf32> to vector<1x128xf32>
    %148 = arith.addf %146, %147 : vector<1x128xf32>
    %cst_59 = arith.constant 1.000000e+01 : f32
    %149 = vector.broadcast %cst_59 : f32 to vector<1x128xf32>
    %150 = arith.cmpf oge, %148, %149 : vector<1x128xf32>
    %151 = arith.extui %150 : vector<1x128xi1> to vector<1x128xi32>
    %152 = arith.sitofp %151 : vector<1x128xi32> to vector<1x128xf32>
    %cst_60 = arith.constant 1.000000e+00 : f32
    %153 = vector.broadcast %cst_60 : f32 to vector<1x128xf32>
    %154 = arith.mulf %152, %153 : vector<1x128xf32>
    %c9_61 = arith.constant 9 : index
    %c0_62 = arith.constant 0 : index
    %155 = vector.load %arg7[%c9_61, %c0_62] : memref<64x128xf32, #tpu.memory_space<vmem>>, vector<1x128xf32>
    tpu.vector_store %arg7[%c9_61, %c0_62], %154 {strides = array<i32>} : memref<64x128xf32, #tpu.memory_space<vmem>>, vector<1x128xf32>,
    %156 = vector.broadcast %152 : vector<1x128xf32> to vector<16x128xf32>
    %157 = arith.mulf %156, %3 : vector<16x128xf32>
    %158 = arith.addf %145, %157 : vector<16x128xf32>
    %159 = vector.extract_strided_slice %158 {offsets = [1, 0], sizes = [15, 128], strides = [1, 1]} : vector<16x128xf32> to vector<15x128xf32>
    %160 = tpu.concatenate %159, %4 in 0 : vector<15x128xf32>, vector<1x128xf32> -> vector<16x128xf32>
    %c10 = arith.constant 10 : index
    %c0_63 = arith.constant 0 : index
    %161 = vector.load %arg6[%c10, %c0_63] : memref<64x128xf32, #tpu.memory_space<vmem>>, vector<1x128xf32>
    %162 = vector.extract_strided_slice %160 {offsets = [0, 0], sizes = [1, 128], strides = [1, 1]} : vector<16x128xf32> to vector<1x128xf32>
    %163 = arith.addf %161, %162 : vector<1x128xf32>
    %cst_64 = arith.constant 1.000000e+01 : f32
    %164 = vector.broadcast %cst_64 : f32 to vector<1x128xf32>
    %165 = arith.cmpf oge, %163, %164 : vector<1x128xf32>
    %166 = arith.extui %165 : vector<1x128xi1> to vector<1x128xi32>
    %167 = arith.sitofp %166 : vector<1x128xi32> to vector<1x128xf32>
    %cst_65 = arith.constant 1.000000e+00 : f32
    %168 = vector.broadcast %cst_65 : f32 to vector<1x128xf32>
    %169 = arith.mulf %167, %168 : vector<1x128xf32>
    %c10_66 = arith.constant 10 : index
    %c0_67 = arith.constant 0 : index
    %170 = vector.load %arg7[%c10_66, %c0_67] : memref<64x128xf32, #tpu.memory_space<vmem>>, vector<1x128xf32>
    tpu.vector_store %arg7[%c10_66, %c0_67], %169 {strides = array<i32>} : memref<64x128xf32, #tpu.memory_space<vmem>>, vector<1x128xf32>,
    %171 = vector.broadcast %167 : vector<1x128xf32> to vector<16x128xf32>
    %172 = arith.mulf %171, %3 : vector<16x128xf32>
    %173 = arith.addf %160, %172 : vector<16x128xf32>
    %174 = vector.extract_strided_slice %173 {offsets = [1, 0], sizes = [15, 128], strides = [1, 1]} : vector<16x128xf32> to vector<15x128xf32>
    %175 = tpu.concatenate %174, %4 in 0 : vector<15x128xf32>, vector<1x128xf32> -> vector<16x128xf32>
    %c11 = arith.constant 11 : index
    %c0_68 = arith.constant 0 : index
    %176 = vector.load %arg6[%c11, %c0_68] : memref<64x128xf32, #tpu.memory_space<vmem>>, vector<1x128xf32>
    %177 = vector.extract_strided_slice %175 {offsets = [0, 0], sizes = [1, 128], strides = [1, 1]} : vector<16x128xf32> to vector<1x128xf32>
    %178 = arith.addf %176, %177 : vector<1x128xf32>
    %cst_69 = arith.constant 1.000000e+01 : f32
    %179 = vector.broadcast %cst_69 : f32 to vector<1x128xf32>
    %180 = arith.cmpf oge, %178, %179 : vector<1x128xf32>
    %181 = arith.extui %180 : vector<1x128xi1> to vector<1x128xi32>
    %182 = arith.sitofp %181 : vector<1x128xi32> to vector<1x128xf32>
    %cst_70 = arith.constant 1.000000e+00 : f32
    %183 = vector.broadcast %cst_70 : f32 to vector<1x128xf32>
    %184 = arith.mulf %182, %183 : vector<1x128xf32>
    %c11_71 = arith.constant 11 : index
    %c0_72 = arith.constant 0 : index
    %185 = vector.load %arg7[%c11_71, %c0_72] : memref<64x128xf32, #tpu.memory_space<vmem>>, vector<1x128xf32>
    tpu.vector_store %arg7[%c11_71, %c0_72], %184 {strides = array<i32>} : memref<64x128xf32, #tpu.memory_space<vmem>>, vector<1x128xf32>,
    %186 = vector.broadcast %182 : vector<1x128xf32> to vector<16x128xf32>
    %187 = arith.mulf %186, %3 : vector<16x128xf32>
    %188 = arith.addf %175, %187 : vector<16x128xf32>
    %189 = vector.extract_strided_slice %188 {offsets = [1, 0], sizes = [15, 128], strides = [1, 1]} : vector<16x128xf32> to vector<15x128xf32>
    %190 = tpu.concatenate %189, %4 in 0 : vector<15x128xf32>, vector<1x128xf32> -> vector<16x128xf32>
    %c12 = arith.constant 12 : index
    %c0_73 = arith.constant 0 : index
    %191 = vector.load %arg6[%c12, %c0_73] : memref<64x128xf32, #tpu.memory_space<vmem>>, vector<1x128xf32>
    %192 = vector.extract_strided_slice %190 {offsets = [0, 0], sizes = [1, 128], strides = [1, 1]} : vector<16x128xf32> to vector<1x128xf32>
    %193 = arith.addf %191, %192 : vector<1x128xf32>
    %cst_74 = arith.constant 1.000000e+01 : f32
    %194 = vector.broadcast %cst_74 : f32 to vector<1x128xf32>
    %195 = arith.cmpf oge, %193, %194 : vector<1x128xf32>
    %196 = arith.extui %195 : vector<1x128xi1> to vector<1x128xi32>
    %197 = arith.sitofp %196 : vector<1x128xi32> to vector<1x128xf32>
    %cst_75 = arith.constant 1.000000e+00 : f32
    %198 = vector.broadcast %cst_75 : f32 to vector<1x128xf32>
    %199 = arith.mulf %197, %198 : vector<1x128xf32>
    %c12_76 = arith.constant 12 : index
    %c0_77 = arith.constant 0 : index
    %200 = vector.load %arg7[%c12_76, %c0_77] : memref<64x128xf32, #tpu.memory_space<vmem>>, vector<1x128xf32>
    tpu.vector_store %arg7[%c12_76, %c0_77], %199 {strides = array<i32>} : memref<64x128xf32, #tpu.memory_space<vmem>>, vector<1x128xf32>,
    %201 = vector.broadcast %197 : vector<1x128xf32> to vector<16x128xf32>
    %202 = arith.mulf %201, %3 : vector<16x128xf32>
    %203 = arith.addf %190, %202 : vector<16x128xf32>
    %204 = vector.extract_strided_slice %203 {offsets = [1, 0], sizes = [15, 128], strides = [1, 1]} : vector<16x128xf32> to vector<15x128xf32>
    %205 = tpu.concatenate %204, %4 in 0 : vector<15x128xf32>, vector<1x128xf32> -> vector<16x128xf32>
    %c13 = arith.constant 13 : index
    %c0_78 = arith.constant 0 : index
    %206 = vector.load %arg6[%c13, %c0_78] : memref<64x128xf32, #tpu.memory_space<vmem>>, vector<1x128xf32>
    %207 = vector.extract_strided_slice %205 {offsets = [0, 0], sizes = [1, 128], strides = [1, 1]} : vector<16x128xf32> to vector<1x128xf32>
    %208 = arith.addf %206, %207 : vector<1x128xf32>
    %cst_79 = arith.constant 1.000000e+01 : f32
    %209 = vector.broadcast %cst_79 : f32 to vector<1x128xf32>
    %210 = arith.cmpf oge, %208, %209 : vector<1x128xf32>
    %211 = arith.extui %210 : vector<1x128xi1> to vector<1x128xi32>
    %212 = arith.sitofp %211 : vector<1x128xi32> to vector<1x128xf32>
    %cst_80 = arith.constant 1.000000e+00 : f32
    %213 = vector.broadcast %cst_80 : f32 to vector<1x128xf32>
    %214 = arith.mulf %212, %213 : vector<1x128xf32>
    %c13_81 = arith.constant 13 : index
    %c0_82 = arith.constant 0 : index
    %215 = vector.load %arg7[%c13_81, %c0_82] : memref<64x128xf32, #tpu.memory_space<vmem>>, vector<1x128xf32>
    tpu.vector_store %arg7[%c13_81, %c0_82], %214 {strides = array<i32>} : memref<64x128xf32, #tpu.memory_space<vmem>>, vector<1x128xf32>,
    %216 = vector.broadcast %212 : vector<1x128xf32> to vector<16x128xf32>
    %217 = arith.mulf %216, %3 : vector<16x128xf32>
    %218 = arith.addf %205, %217 : vector<16x128xf32>
    %219 = vector.extract_strided_slice %218 {offsets = [1, 0], sizes = [15, 128], strides = [1, 1]} : vector<16x128xf32> to vector<15x128xf32>
    %220 = tpu.concatenate %219, %4 in 0 : vector<15x128xf32>, vector<1x128xf32> -> vector<16x128xf32>
    %c14 = arith.constant 14 : index
    %c0_83 = arith.constant 0 : index
    %221 = vector.load %arg6[%c14, %c0_83] : memref<64x128xf32, #tpu.memory_space<vmem>>, vector<1x128xf32>
    %222 = vector.extract_strided_slice %220 {offsets = [0, 0], sizes = [1, 128], strides = [1, 1]} : vector<16x128xf32> to vector<1x128xf32>
    %223 = arith.addf %221, %222 : vector<1x128xf32>
    %cst_84 = arith.constant 1.000000e+01 : f32
    %224 = vector.broadcast %cst_84 : f32 to vector<1x128xf32>
    %225 = arith.cmpf oge, %223, %224 : vector<1x128xf32>
    %226 = arith.extui %225 : vector<1x128xi1> to vector<1x128xi32>
    %227 = arith.sitofp %226 : vector<1x128xi32> to vector<1x128xf32>
    %cst_85 = arith.constant 1.000000e+00 : f32
    %228 = vector.broadcast %cst_85 : f32 to vector<1x128xf32>
    %229 = arith.mulf %227, %228 : vector<1x128xf32>
    %c14_86 = arith.constant 14 : index
    %c0_87 = arith.constant 0 : index
    %230 = vector.load %arg7[%c14_86, %c0_87] : memref<64x128xf32, #tpu.memory_space<vmem>>, vector<1x128xf32>
    tpu.vector_store %arg7[%c14_86, %c0_87], %229 {strides = array<i32>} : memref<64x128xf32, #tpu.memory_space<vmem>>, vector<1x128xf32>,
    %231 = vector.broadcast %227 : vector<1x128xf32> to vector<16x128xf32>
    %232 = arith.mulf %231, %3 : vector<16x128xf32>
    %233 = arith.addf %220, %232 : vector<16x128xf32>
    %234 = vector.extract_strided_slice %233 {offsets = [1, 0], sizes = [15, 128], strides = [1, 1]} : vector<16x128xf32> to vector<15x128xf32>
    %235 = tpu.concatenate %234, %4 in 0 : vector<15x128xf32>, vector<1x128xf32> -> vector<16x128xf32>
    %c15 = arith.constant 15 : index
    %c0_88 = arith.constant 0 : index
    %236 = vector.load %arg6[%c15, %c0_88] : memref<64x128xf32, #tpu.memory_space<vmem>>, vector<1x128xf32>
    %237 = vector.extract_strided_slice %235 {offsets = [0, 0], sizes = [1, 128], strides = [1, 1]} : vector<16x128xf32> to vector<1x128xf32>
    %238 = arith.addf %236, %237 : vector<1x128xf32>
    %cst_89 = arith.constant 1.000000e+01 : f32
    %239 = vector.broadcast %cst_89 : f32 to vector<1x128xf32>
    %240 = arith.cmpf oge, %238, %239 : vector<1x128xf32>
    %241 = arith.extui %240 : vector<1x128xi1> to vector<1x128xi32>
    %242 = arith.sitofp %241 : vector<1x128xi32> to vector<1x128xf32>
    %cst_90 = arith.constant 1.000000e+00 : f32
    %243 = vector.broadcast %cst_90 : f32 to vector<1x128xf32>
    %244 = arith.mulf %242, %243 : vector<1x128xf32>
    %c15_91 = arith.constant 15 : index
    %c0_92 = arith.constant 0 : index
    %245 = vector.load %arg7[%c15_91, %c0_92] : memref<64x128xf32, #tpu.memory_space<vmem>>, vector<1x128xf32>
    tpu.vector_store %arg7[%c15_91, %c0_92], %244 {strides = array<i32>} : memref<64x128xf32, #tpu.memory_space<vmem>>, vector<1x128xf32>,
    %246 = vector.broadcast %242 : vector<1x128xf32> to vector<16x128xf32>
    %247 = arith.mulf %246, %3 : vector<16x128xf32>
    %248 = arith.addf %235, %247 : vector<16x128xf32>
    %249 = vector.extract_strided_slice %248 {offsets = [1, 0], sizes = [15, 128], strides = [1, 1]} : vector<16x128xf32> to vector<15x128xf32>
    %250 = tpu.concatenate %249, %4 in 0 : vector<15x128xf32>, vector<1x128xf32> -> vector<16x128xf32>
    %c16 = arith.constant 16 : index
    %c0_93 = arith.constant 0 : index
    %251 = vector.load %arg6[%c16, %c0_93] : memref<64x128xf32, #tpu.memory_space<vmem>>, vector<1x128xf32>
    %252 = vector.extract_strided_slice %250 {offsets = [0, 0], sizes = [1, 128], strides = [1, 1]} : vector<16x128xf32> to vector<1x128xf32>
    %253 = arith.addf %251, %252 : vector<1x128xf32>
    %cst_94 = arith.constant 1.000000e+01 : f32
    %254 = vector.broadcast %cst_94 : f32 to vector<1x128xf32>
    %255 = arith.cmpf oge, %253, %254 : vector<1x128xf32>
    %256 = arith.extui %255 : vector<1x128xi1> to vector<1x128xi32>
    %257 = arith.sitofp %256 : vector<1x128xi32> to vector<1x128xf32>
    %cst_95 = arith.constant 1.000000e+00 : f32
    %258 = vector.broadcast %cst_95 : f32 to vector<1x128xf32>
    %259 = arith.mulf %257, %258 : vector<1x128xf32>
    %c16_96 = arith.constant 16 : index
    %c0_97 = arith.constant 0 : index
    %260 = vector.load %arg7[%c16_96, %c0_97] : memref<64x128xf32, #tpu.memory_space<vmem>>, vector<1x128xf32>
    tpu.vector_store %arg7[%c16_96, %c0_97], %259 {strides = array<i32>} : memref<64x128xf32, #tpu.memory_space<vmem>>, vector<1x128xf32>,
    %261 = vector.broadcast %257 : vector<1x128xf32> to vector<16x128xf32>
    %262 = arith.mulf %261, %3 : vector<16x128xf32>
    %263 = arith.addf %250, %262 : vector<16x128xf32>
    %264 = vector.extract_strided_slice %263 {offsets = [1, 0], sizes = [15, 128], strides = [1, 1]} : vector<16x128xf32> to vector<15x128xf32>
    %265 = tpu.concatenate %264, %4 in 0 : vector<15x128xf32>, vector<1x128xf32> -> vector<16x128xf32>
    %c17 = arith.constant 17 : index
    %c0_98 = arith.constant 0 : index
    %266 = vector.load %arg6[%c17, %c0_98] : memref<64x128xf32, #tpu.memory_space<vmem>>, vector<1x128xf32>
    %267 = vector.extract_strided_slice %265 {offsets = [0, 0], sizes = [1, 128], strides = [1, 1]} : vector<16x128xf32> to vector<1x128xf32>
    %268 = arith.addf %266, %267 : vector<1x128xf32>
    %cst_99 = arith.constant 1.000000e+01 : f32
    %269 = vector.broadcast %cst_99 : f32 to vector<1x128xf32>
    %270 = arith.cmpf oge, %268, %269 : vector<1x128xf32>
    %271 = arith.extui %270 : vector<1x128xi1> to vector<1x128xi32>
    %272 = arith.sitofp %271 : vector<1x128xi32> to vector<1x128xf32>
    %cst_100 = arith.constant 1.000000e+00 : f32
    %273 = vector.broadcast %cst_100 : f32 to vector<1x128xf32>
    %274 = arith.mulf %272, %273 : vector<1x128xf32>
    %c17_101 = arith.constant 17 : index
    %c0_102 = arith.constant 0 : index
    %275 = vector.load %arg7[%c17_101, %c0_102] : memref<64x128xf32, #tpu.memory_space<vmem>>, vector<1x128xf32>
    tpu.vector_store %arg7[%c17_101, %c0_102], %274 {strides = array<i32>} : memref<64x128xf32, #tpu.memory_space<vmem>>, vector<1x128xf32>,
    %276 = vector.broadcast %272 : vector<1x128xf32> to vector<16x128xf32>
    %277 = arith.mulf %276, %3 : vector<16x128xf32>
    %278 = arith.addf %265, %277 : vector<16x128xf32>
    %279 = vector.extract_strided_slice %278 {offsets = [1, 0], sizes = [15, 128], strides = [1, 1]} : vector<16x128xf32> to vector<15x128xf32>
    %280 = tpu.concatenate %279, %4 in 0 : vector<15x128xf32>, vector<1x128xf32> -> vector<16x128xf32>
    %c18 = arith.constant 18 : index
    %c0_103 = arith.constant 0 : index
    %281 = vector.load %arg6[%c18, %c0_103] : memref<64x128xf32, #tpu.memory_space<vmem>>, vector<1x128xf32>
    %282 = vector.extract_strided_slice %280 {offsets = [0, 0], sizes = [1, 128], strides = [1, 1]} : vector<16x128xf32> to vector<1x128xf32>
    %283 = arith.addf %281, %282 : vector<1x128xf32>
    %cst_104 = arith.constant 1.000000e+01 : f32
    %284 = vector.broadcast %cst_104 : f32 to vector<1x128xf32>
    %285 = arith.cmpf oge, %283, %284 : vector<1x128xf32>
    %286 = arith.extui %285 : vector<1x128xi1> to vector<1x128xi32>
    %287 = arith.sitofp %286 : vector<1x128xi32> to vector<1x128xf32>
    %cst_105 = arith.constant 1.000000e+00 : f32
    %288 = vector.broadcast %cst_105 : f32 to vector<1x128xf32>
    %289 = arith.mulf %287, %288 : vector<1x128xf32>
    %c18_106 = arith.constant 18 : index
    %c0_107 = arith.constant 0 : index
    %290 = vector.load %arg7[%c18_106, %c0_107] : memref<64x128xf32, #tpu.memory_space<vmem>>, vector<1x128xf32>
    tpu.vector_store %arg7[%c18_106, %c0_107], %289 {strides = array<i32>} : memref<64x128xf32, #tpu.memory_space<vmem>>, vector<1x128xf32>,
    %291 = vector.broadcast %287 : vector<1x128xf32> to vector<16x128xf32>
    %292 = arith.mulf %291, %3 : vector<16x128xf32>
    %293 = arith.addf %280, %292 : vector<16x128xf32>
    %294 = vector.extract_strided_slice %293 {offsets = [1, 0], sizes = [15, 128], strides = [1, 1]} : vector<16x128xf32> to vector<15x128xf32>
    %295 = tpu.concatenate %294, %4 in 0 : vector<15x128xf32>, vector<1x128xf32> -> vector<16x128xf32>
    %c19 = arith.constant 19 : index
    %c0_108 = arith.constant 0 : index
    %296 = vector.load %arg6[%c19, %c0_108] : memref<64x128xf32, #tpu.memory_space<vmem>>, vector<1x128xf32>
    %297 = vector.extract_strided_slice %295 {offsets = [0, 0], sizes = [1, 128], strides = [1, 1]} : vector<16x128xf32> to vector<1x128xf32>
    %298 = arith.addf %296, %297 : vector<1x128xf32>
    %cst_109 = arith.constant 1.000000e+01 : f32
    %299 = vector.broadcast %cst_109 : f32 to vector<1x128xf32>
    %300 = arith.cmpf oge, %298, %299 : vector<1x128xf32>
    %301 = arith.extui %300 : vector<1x128xi1> to vector<1x128xi32>
    %302 = arith.sitofp %301 : vector<1x128xi32> to vector<1x128xf32>
    %cst_110 = arith.constant 1.000000e+00 : f32
    %303 = vector.broadcast %cst_110 : f32 to vector<1x128xf32>
    %304 = arith.mulf %302, %303 : vector<1x128xf32>
    %c19_111 = arith.constant 19 : index
    %c0_112 = arith.constant 0 : index
    %305 = vector.load %arg7[%c19_111, %c0_112] : memref<64x128xf32, #tpu.memory_space<vmem>>, vector<1x128xf32>
    tpu.vector_store %arg7[%c19_111, %c0_112], %304 {strides = array<i32>} : memref<64x128xf32, #tpu.memory_space<vmem>>, vector<1x128xf32>,
    %306 = vector.broadcast %302 : vector<1x128xf32> to vector<16x128xf32>
    %307 = arith.mulf %306, %3 : vector<16x128xf32>
    %308 = arith.addf %295, %307 : vector<16x128xf32>
    %309 = vector.extract_strided_slice %308 {offsets = [1, 0], sizes = [15, 128], strides = [1, 1]} : vector<16x128xf32> to vector<15x128xf32>
    %310 = tpu.concatenate %309, %4 in 0 : vector<15x128xf32>, vector<1x128xf32> -> vector<16x128xf32>
    %c20 = arith.constant 20 : index
    %c0_113 = arith.constant 0 : index
    %311 = vector.load %arg6[%c20, %c0_113] : memref<64x128xf32, #tpu.memory_space<vmem>>, vector<1x128xf32>
    %312 = vector.extract_strided_slice %310 {offsets = [0, 0], sizes = [1, 128], strides = [1, 1]} : vector<16x128xf32> to vector<1x128xf32>
    %313 = arith.addf %311, %312 : vector<1x128xf32>
    %cst_114 = arith.constant 1.000000e+01 : f32
    %314 = vector.broadcast %cst_114 : f32 to vector<1x128xf32>
    %315 = arith.cmpf oge, %313, %314 : vector<1x128xf32>
    %316 = arith.extui %315 : vector<1x128xi1> to vector<1x128xi32>
    %317 = arith.sitofp %316 : vector<1x128xi32> to vector<1x128xf32>
    %cst_115 = arith.constant 1.000000e+00 : f32
    %318 = vector.broadcast %cst_115 : f32 to vector<1x128xf32>
    %319 = arith.mulf %317, %318 : vector<1x128xf32>
    %c20_116 = arith.constant 20 : index
    %c0_117 = arith.constant 0 : index
    %320 = vector.load %arg7[%c20_116, %c0_117] : memref<64x128xf32, #tpu.memory_space<vmem>>, vector<1x128xf32>
    tpu.vector_store %arg7[%c20_116, %c0_117], %319 {strides = array<i32>} : memref<64x128xf32, #tpu.memory_space<vmem>>, vector<1x128xf32>,
    %321 = vector.broadcast %317 : vector<1x128xf32> to vector<16x128xf32>
    %322 = arith.mulf %321, %3 : vector<16x128xf32>
    %323 = arith.addf %310, %322 : vector<16x128xf32>
    %324 = vector.extract_strided_slice %323 {offsets = [1, 0], sizes = [15, 128], strides = [1, 1]} : vector<16x128xf32> to vector<15x128xf32>
    %325 = tpu.concatenate %324, %4 in 0 : vector<15x128xf32>, vector<1x128xf32> -> vector<16x128xf32>
    %c21 = arith.constant 21 : index
    %c0_118 = arith.constant 0 : index
    %326 = vector.load %arg6[%c21, %c0_118] : memref<64x128xf32, #tpu.memory_space<vmem>>, vector<1x128xf32>
    %327 = vector.extract_strided_slice %325 {offsets = [0, 0], sizes = [1, 128], strides = [1, 1]} : vector<16x128xf32> to vector<1x128xf32>
    %328 = arith.addf %326, %327 : vector<1x128xf32>
    %cst_119 = arith.constant 1.000000e+01 : f32
    %329 = vector.broadcast %cst_119 : f32 to vector<1x128xf32>
    %330 = arith.cmpf oge, %328, %329 : vector<1x128xf32>
    %331 = arith.extui %330 : vector<1x128xi1> to vector<1x128xi32>
    %332 = arith.sitofp %331 : vector<1x128xi32> to vector<1x128xf32>
    %cst_120 = arith.constant 1.000000e+00 : f32
    %333 = vector.broadcast %cst_120 : f32 to vector<1x128xf32>
    %334 = arith.mulf %332, %333 : vector<1x128xf32>
    %c21_121 = arith.constant 21 : index
    %c0_122 = arith.constant 0 : index
    %335 = vector.load %arg7[%c21_121, %c0_122] : memref<64x128xf32, #tpu.memory_space<vmem>>, vector<1x128xf32>
    tpu.vector_store %arg7[%c21_121, %c0_122], %334 {strides = array<i32>} : memref<64x128xf32, #tpu.memory_space<vmem>>, vector<1x128xf32>,
    %336 = vector.broadcast %332 : vector<1x128xf32> to vector<16x128xf32>
    %337 = arith.mulf %336, %3 : vector<16x128xf32>
    %338 = arith.addf %325, %337 : vector<16x128xf32>
    %339 = vector.extract_strided_slice %338 {offsets = [1, 0], sizes = [15, 128], strides = [1, 1]} : vector<16x128xf32> to vector<15x128xf32>
    %340 = tpu.concatenate %339, %4 in 0 : vector<15x128xf32>, vector<1x128xf32> -> vector<16x128xf32>
    %c22 = arith.constant 22 : index
    %c0_123 = arith.constant 0 : index
    %341 = vector.load %arg6[%c22, %c0_123] : memref<64x128xf32, #tpu.memory_space<vmem>>, vector<1x128xf32>
    %342 = vector.extract_strided_slice %340 {offsets = [0, 0], sizes = [1, 128], strides = [1, 1]} : vector<16x128xf32> to vector<1x128xf32>
    %343 = arith.addf %341, %342 : vector<1x128xf32>
    %cst_124 = arith.constant 1.000000e+01 : f32
    %344 = vector.broadcast %cst_124 : f32 to vector<1x128xf32>
    %345 = arith.cmpf oge, %343, %344 : vector<1x128xf32>
    %346 = arith.extui %345 : vector<1x128xi1> to vector<1x128xi32>
    %347 = arith.sitofp %346 : vector<1x128xi32> to vector<1x128xf32>
    %cst_125 = arith.constant 1.000000e+00 : f32
    %348 = vector.broadcast %cst_125 : f32 to vector<1x128xf32>
    %349 = arith.mulf %347, %348 : vector<1x128xf32>
    %c22_126 = arith.constant 22 : index
    %c0_127 = arith.constant 0 : index
    %350 = vector.load %arg7[%c22_126, %c0_127] : memref<64x128xf32, #tpu.memory_space<vmem>>, vector<1x128xf32>
    tpu.vector_store %arg7[%c22_126, %c0_127], %349 {strides = array<i32>} : memref<64x128xf32, #tpu.memory_space<vmem>>, vector<1x128xf32>,
    %351 = vector.broadcast %347 : vector<1x128xf32> to vector<16x128xf32>
    %352 = arith.mulf %351, %3 : vector<16x128xf32>
    %353 = arith.addf %340, %352 : vector<16x128xf32>
    %354 = vector.extract_strided_slice %353 {offsets = [1, 0], sizes = [15, 128], strides = [1, 1]} : vector<16x128xf32> to vector<15x128xf32>
    %355 = tpu.concatenate %354, %4 in 0 : vector<15x128xf32>, vector<1x128xf32> -> vector<16x128xf32>
    %c23 = arith.constant 23 : index
    %c0_128 = arith.constant 0 : index
    %356 = vector.load %arg6[%c23, %c0_128] : memref<64x128xf32, #tpu.memory_space<vmem>>, vector<1x128xf32>
    %357 = vector.extract_strided_slice %355 {offsets = [0, 0], sizes = [1, 128], strides = [1, 1]} : vector<16x128xf32> to vector<1x128xf32>
    %358 = arith.addf %356, %357 : vector<1x128xf32>
    %cst_129 = arith.constant 1.000000e+01 : f32
    %359 = vector.broadcast %cst_129 : f32 to vector<1x128xf32>
    %360 = arith.cmpf oge, %358, %359 : vector<1x128xf32>
    %361 = arith.extui %360 : vector<1x128xi1> to vector<1x128xi32>
    %362 = arith.sitofp %361 : vector<1x128xi32> to vector<1x128xf32>
    %cst_130 = arith.constant 1.000000e+00 : f32
    %363 = vector.broadcast %cst_130 : f32 to vector<1x128xf32>
    %364 = arith.mulf %362, %363 : vector<1x128xf32>
    %c23_131 = arith.constant 23 : index
    %c0_132 = arith.constant 0 : index
    %365 = vector.load %arg7[%c23_131, %c0_132] : memref<64x128xf32, #tpu.memory_space<vmem>>, vector<1x128xf32>
    tpu.vector_store %arg7[%c23_131, %c0_132], %364 {strides = array<i32>} : memref<64x128xf32, #tpu.memory_space<vmem>>, vector<1x128xf32>,
    %366 = vector.broadcast %362 : vector<1x128xf32> to vector<16x128xf32>
    %367 = arith.mulf %366, %3 : vector<16x128xf32>
    %368 = arith.addf %355, %367 : vector<16x128xf32>
    %369 = vector.extract_strided_slice %368 {offsets = [1, 0], sizes = [15, 128], strides = [1, 1]} : vector<16x128xf32> to vector<15x128xf32>
    %370 = tpu.concatenate %369, %4 in 0 : vector<15x128xf32>, vector<1x128xf32> -> vector<16x128xf32>
    %c24 = arith.constant 24 : index
    %c0_133 = arith.constant 0 : index
    %371 = vector.load %arg6[%c24, %c0_133] : memref<64x128xf32, #tpu.memory_space<vmem>>, vector<1x128xf32>
    %372 = vector.extract_strided_slice %370 {offsets = [0, 0], sizes = [1, 128], strides = [1, 1]} : vector<16x128xf32> to vector<1x128xf32>
    %373 = arith.addf %371, %372 : vector<1x128xf32>
    %cst_134 = arith.constant 1.000000e+01 : f32
    %374 = vector.broadcast %cst_134 : f32 to vector<1x128xf32>
    %375 = arith.cmpf oge, %373, %374 : vector<1x128xf32>
    %376 = arith.extui %375 : vector<1x128xi1> to vector<1x128xi32>
    %377 = arith.sitofp %376 : vector<1x128xi32> to vector<1x128xf32>
    %cst_135 = arith.constant 1.000000e+00 : f32
    %378 = vector.broadcast %cst_135 : f32 to vector<1x128xf32>
    %379 = arith.mulf %377, %378 : vector<1x128xf32>
    %c24_136 = arith.constant 24 : index
    %c0_137 = arith.constant 0 : index
    %380 = vector.load %arg7[%c24_136, %c0_137] : memref<64x128xf32, #tpu.memory_space<vmem>>, vector<1x128xf32>
    tpu.vector_store %arg7[%c24_136, %c0_137], %379 {strides = array<i32>} : memref<64x128xf32, #tpu.memory_space<vmem>>, vector<1x128xf32>,
    %381 = vector.broadcast %377 : vector<1x128xf32> to vector<16x128xf32>
    %382 = arith.mulf %381, %3 : vector<16x128xf32>
    %383 = arith.addf %370, %382 : vector<16x128xf32>
    %384 = vector.extract_strided_slice %383 {offsets = [1, 0], sizes = [15, 128], strides = [1, 1]} : vector<16x128xf32> to vector<15x128xf32>
    %385 = tpu.concatenate %384, %4 in 0 : vector<15x128xf32>, vector<1x128xf32> -> vector<16x128xf32>
    %c25 = arith.constant 25 : index
    %c0_138 = arith.constant 0 : index
    %386 = vector.load %arg6[%c25, %c0_138] : memref<64x128xf32, #tpu.memory_space<vmem>>, vector<1x128xf32>
    %387 = vector.extract_strided_slice %385 {offsets = [0, 0], sizes = [1, 128], strides = [1, 1]} : vector<16x128xf32> to vector<1x128xf32>
    %388 = arith.addf %386, %387 : vector<1x128xf32>
    %cst_139 = arith.constant 1.000000e+01 : f32
    %389 = vector.broadcast %cst_139 : f32 to vector<1x128xf32>
    %390 = arith.cmpf oge, %388, %389 : vector<1x128xf32>
    %391 = arith.extui %390 : vector<1x128xi1> to vector<1x128xi32>
    %392 = arith.sitofp %391 : vector<1x128xi32> to vector<1x128xf32>
    %cst_140 = arith.constant 1.000000e+00 : f32
    %393 = vector.broadcast %cst_140 : f32 to vector<1x128xf32>
    %394 = arith.mulf %392, %393 : vector<1x128xf32>
    %c25_141 = arith.constant 25 : index
    %c0_142 = arith.constant 0 : index
    %395 = vector.load %arg7[%c25_141, %c0_142] : memref<64x128xf32, #tpu.memory_space<vmem>>, vector<1x128xf32>
    tpu.vector_store %arg7[%c25_141, %c0_142], %394 {strides = array<i32>} : memref<64x128xf32, #tpu.memory_space<vmem>>, vector<1x128xf32>,
    %396 = vector.broadcast %392 : vector<1x128xf32> to vector<16x128xf32>
    %397 = arith.mulf %396, %3 : vector<16x128xf32>
    %398 = arith.addf %385, %397 : vector<16x128xf32>
    %399 = vector.extract_strided_slice %398 {offsets = [1, 0], sizes = [15, 128], strides = [1, 1]} : vector<16x128xf32> to vector<15x128xf32>
    %400 = tpu.concatenate %399, %4 in 0 : vector<15x128xf32>, vector<1x128xf32> -> vector<16x128xf32>
    %c26 = arith.constant 26 : index
    %c0_143 = arith.constant 0 : index
    %401 = vector.load %arg6[%c26, %c0_143] : memref<64x128xf32, #tpu.memory_space<vmem>>, vector<1x128xf32>
    %402 = vector.extract_strided_slice %400 {offsets = [0, 0], sizes = [1, 128], strides = [1, 1]} : vector<16x128xf32> to vector<1x128xf32>
    %403 = arith.addf %401, %402 : vector<1x128xf32>
    %cst_144 = arith.constant 1.000000e+01 : f32
    %404 = vector.broadcast %cst_144 : f32 to vector<1x128xf32>
    %405 = arith.cmpf oge, %403, %404 : vector<1x128xf32>
    %406 = arith.extui %405 : vector<1x128xi1> to vector<1x128xi32>
    %407 = arith.sitofp %406 : vector<1x128xi32> to vector<1x128xf32>
    %cst_145 = arith.constant 1.000000e+00 : f32
    %408 = vector.broadcast %cst_145 : f32 to vector<1x128xf32>
    %409 = arith.mulf %407, %408 : vector<1x128xf32>
    %c26_146 = arith.constant 26 : index
    %c0_147 = arith.constant 0 : index
    %410 = vector.load %arg7[%c26_146, %c0_147] : memref<64x128xf32, #tpu.memory_space<vmem>>, vector<1x128xf32>
    tpu.vector_store %arg7[%c26_146, %c0_147], %409 {strides = array<i32>} : memref<64x128xf32, #tpu.memory_space<vmem>>, vector<1x128xf32>,
    %411 = vector.broadcast %407 : vector<1x128xf32> to vector<16x128xf32>
    %412 = arith.mulf %411, %3 : vector<16x128xf32>
    %413 = arith.addf %400, %412 : vector<16x128xf32>
    %414 = vector.extract_strided_slice %413 {offsets = [1, 0], sizes = [15, 128], strides = [1, 1]} : vector<16x128xf32> to vector<15x128xf32>
    %415 = tpu.concatenate %414, %4 in 0 : vector<15x128xf32>, vector<1x128xf32> -> vector<16x128xf32>
    %c27 = arith.constant 27 : index
    %c0_148 = arith.constant 0 : index
    %416 = vector.load %arg6[%c27, %c0_148] : memref<64x128xf32, #tpu.memory_space<vmem>>, vector<1x128xf32>
    %417 = vector.extract_strided_slice %415 {offsets = [0, 0], sizes = [1, 128], strides = [1, 1]} : vector<16x128xf32> to vector<1x128xf32>
    %418 = arith.addf %416, %417 : vector<1x128xf32>
    %cst_149 = arith.constant 1.000000e+01 : f32
    %419 = vector.broadcast %cst_149 : f32 to vector<1x128xf32>
    %420 = arith.cmpf oge, %418, %419 : vector<1x128xf32>
    %421 = arith.extui %420 : vector<1x128xi1> to vector<1x128xi32>
    %422 = arith.sitofp %421 : vector<1x128xi32> to vector<1x128xf32>
    %cst_150 = arith.constant 1.000000e+00 : f32
    %423 = vector.broadcast %cst_150 : f32 to vector<1x128xf32>
    %424 = arith.mulf %422, %423 : vector<1x128xf32>
    %c27_151 = arith.constant 27 : index
    %c0_152 = arith.constant 0 : index
    %425 = vector.load %arg7[%c27_151, %c0_152] : memref<64x128xf32, #tpu.memory_space<vmem>>, vector<1x128xf32>
    tpu.vector_store %arg7[%c27_151, %c0_152], %424 {strides = array<i32>} : memref<64x128xf32, #tpu.memory_space<vmem>>, vector<1x128xf32>,
    %426 = vector.broadcast %422 : vector<1x128xf32> to vector<16x128xf32>
    %427 = arith.mulf %426, %3 : vector<16x128xf32>
    %428 = arith.addf %415, %427 : vector<16x128xf32>
    %429 = vector.extract_strided_slice %428 {offsets = [1, 0], sizes = [15, 128], strides = [1, 1]} : vector<16x128xf32> to vector<15x128xf32>
    %430 = tpu.concatenate %429, %4 in 0 : vector<15x128xf32>, vector<1x128xf32> -> vector<16x128xf32>
    %c28 = arith.constant 28 : index
    %c0_153 = arith.constant 0 : index
    %431 = vector.load %arg6[%c28, %c0_153] : memref<64x128xf32, #tpu.memory_space<vmem>>, vector<1x128xf32>
    %432 = vector.extract_strided_slice %430 {offsets = [0, 0], sizes = [1, 128], strides = [1, 1]} : vector<16x128xf32> to vector<1x128xf32>
    %433 = arith.addf %431, %432 : vector<1x128xf32>
    %cst_154 = arith.constant 1.000000e+01 : f32
    %434 = vector.broadcast %cst_154 : f32 to vector<1x128xf32>
    %435 = arith.cmpf oge, %433, %434 : vector<1x128xf32>
    %436 = arith.extui %435 : vector<1x128xi1> to vector<1x128xi32>
    %437 = arith.sitofp %436 : vector<1x128xi32> to vector<1x128xf32>
    %cst_155 = arith.constant 1.000000e+00 : f32
    %438 = vector.broadcast %cst_155 : f32 to vector<1x128xf32>
    %439 = arith.mulf %437, %438 : vector<1x128xf32>
    %c28_156 = arith.constant 28 : index
    %c0_157 = arith.constant 0 : index
    %440 = vector.load %arg7[%c28_156, %c0_157] : memref<64x128xf32, #tpu.memory_space<vmem>>, vector<1x128xf32>
    tpu.vector_store %arg7[%c28_156, %c0_157], %439 {strides = array<i32>} : memref<64x128xf32, #tpu.memory_space<vmem>>, vector<1x128xf32>,
    %441 = vector.broadcast %437 : vector<1x128xf32> to vector<16x128xf32>
    %442 = arith.mulf %441, %3 : vector<16x128xf32>
    %443 = arith.addf %430, %442 : vector<16x128xf32>
    %444 = vector.extract_strided_slice %443 {offsets = [1, 0], sizes = [15, 128], strides = [1, 1]} : vector<16x128xf32> to vector<15x128xf32>
    %445 = tpu.concatenate %444, %4 in 0 : vector<15x128xf32>, vector<1x128xf32> -> vector<16x128xf32>
    %c29 = arith.constant 29 : index
    %c0_158 = arith.constant 0 : index
    %446 = vector.load %arg6[%c29, %c0_158] : memref<64x128xf32, #tpu.memory_space<vmem>>, vector<1x128xf32>
    %447 = vector.extract_strided_slice %445 {offsets = [0, 0], sizes = [1, 128], strides = [1, 1]} : vector<16x128xf32> to vector<1x128xf32>
    %448 = arith.addf %446, %447 : vector<1x128xf32>
    %cst_159 = arith.constant 1.000000e+01 : f32
    %449 = vector.broadcast %cst_159 : f32 to vector<1x128xf32>
    %450 = arith.cmpf oge, %448, %449 : vector<1x128xf32>
    %451 = arith.extui %450 : vector<1x128xi1> to vector<1x128xi32>
    %452 = arith.sitofp %451 : vector<1x128xi32> to vector<1x128xf32>
    %cst_160 = arith.constant 1.000000e+00 : f32
    %453 = vector.broadcast %cst_160 : f32 to vector<1x128xf32>
    %454 = arith.mulf %452, %453 : vector<1x128xf32>
    %c29_161 = arith.constant 29 : index
    %c0_162 = arith.constant 0 : index
    %455 = vector.load %arg7[%c29_161, %c0_162] : memref<64x128xf32, #tpu.memory_space<vmem>>, vector<1x128xf32>
    tpu.vector_store %arg7[%c29_161, %c0_162], %454 {strides = array<i32>} : memref<64x128xf32, #tpu.memory_space<vmem>>, vector<1x128xf32>,
    %456 = vector.broadcast %452 : vector<1x128xf32> to vector<16x128xf32>
    %457 = arith.mulf %456, %3 : vector<16x128xf32>
    %458 = arith.addf %445, %457 : vector<16x128xf32>
    %459 = vector.extract_strided_slice %458 {offsets = [1, 0], sizes = [15, 128], strides = [1, 1]} : vector<16x128xf32> to vector<15x128xf32>
    %460 = tpu.concatenate %459, %4 in 0 : vector<15x128xf32>, vector<1x128xf32> -> vector<16x128xf32>
    %c30 = arith.constant 30 : index
    %c0_163 = arith.constant 0 : index
    %461 = vector.load %arg6[%c30, %c0_163] : memref<64x128xf32, #tpu.memory_space<vmem>>, vector<1x128xf32>
    %462 = vector.extract_strided_slice %460 {offsets = [0, 0], sizes = [1, 128], strides = [1, 1]} : vector<16x128xf32> to vector<1x128xf32>
    %463 = arith.addf %461, %462 : vector<1x128xf32>
    %cst_164 = arith.constant 1.000000e+01 : f32
    %464 = vector.broadcast %cst_164 : f32 to vector<1x128xf32>
    %465 = arith.cmpf oge, %463, %464 : vector<1x128xf32>
    %466 = arith.extui %465 : vector<1x128xi1> to vector<1x128xi32>
    %467 = arith.sitofp %466 : vector<1x128xi32> to vector<1x128xf32>
    %cst_165 = arith.constant 1.000000e+00 : f32
    %468 = vector.broadcast %cst_165 : f32 to vector<1x128xf32>
    %469 = arith.mulf %467, %468 : vector<1x128xf32>
    %c30_166 = arith.constant 30 : index
    %c0_167 = arith.constant 0 : index
    %470 = vector.load %arg7[%c30_166, %c0_167] : memref<64x128xf32, #tpu.memory_space<vmem>>, vector<1x128xf32>
    tpu.vector_store %arg7[%c30_166, %c0_167], %469 {strides = array<i32>} : memref<64x128xf32, #tpu.memory_space<vmem>>, vector<1x128xf32>,
    %471 = vector.broadcast %467 : vector<1x128xf32> to vector<16x128xf32>
    %472 = arith.mulf %471, %3 : vector<16x128xf32>
    %473 = arith.addf %460, %472 : vector<16x128xf32>
    %474 = vector.extract_strided_slice %473 {offsets = [1, 0], sizes = [15, 128], strides = [1, 1]} : vector<16x128xf32> to vector<15x128xf32>
    %475 = tpu.concatenate %474, %4 in 0 : vector<15x128xf32>, vector<1x128xf32> -> vector<16x128xf32>
    %c31 = arith.constant 31 : index
    %c0_168 = arith.constant 0 : index
    %476 = vector.load %arg6[%c31, %c0_168] : memref<64x128xf32, #tpu.memory_space<vmem>>, vector<1x128xf32>
    %477 = vector.extract_strided_slice %475 {offsets = [0, 0], sizes = [1, 128], strides = [1, 1]} : vector<16x128xf32> to vector<1x128xf32>
    %478 = arith.addf %476, %477 : vector<1x128xf32>
    %cst_169 = arith.constant 1.000000e+01 : f32
    %479 = vector.broadcast %cst_169 : f32 to vector<1x128xf32>
    %480 = arith.cmpf oge, %478, %479 : vector<1x128xf32>
    %481 = arith.extui %480 : vector<1x128xi1> to vector<1x128xi32>
    %482 = arith.sitofp %481 : vector<1x128xi32> to vector<1x128xf32>
    %cst_170 = arith.constant 1.000000e+00 : f32
    %483 = vector.broadcast %cst_170 : f32 to vector<1x128xf32>
    %484 = arith.mulf %482, %483 : vector<1x128xf32>
    %c31_171 = arith.constant 31 : index
    %c0_172 = arith.constant 0 : index
    %485 = vector.load %arg7[%c31_171, %c0_172] : memref<64x128xf32, #tpu.memory_space<vmem>>, vector<1x128xf32>
    tpu.vector_store %arg7[%c31_171, %c0_172], %484 {strides = array<i32>} : memref<64x128xf32, #tpu.memory_space<vmem>>, vector<1x128xf32>,
    %486 = vector.broadcast %482 : vector<1x128xf32> to vector<16x128xf32>
    %487 = arith.mulf %486, %3 : vector<16x128xf32>
    %488 = arith.addf %475, %487 : vector<16x128xf32>
    %489 = vector.extract_strided_slice %488 {offsets = [1, 0], sizes = [15, 128], strides = [1, 1]} : vector<16x128xf32> to vector<15x128xf32>
    %490 = tpu.concatenate %489, %4 in 0 : vector<15x128xf32>, vector<1x128xf32> -> vector<16x128xf32>
    %c32 = arith.constant 32 : index
    %c0_173 = arith.constant 0 : index
    %491 = vector.load %arg6[%c32, %c0_173] : memref<64x128xf32, #tpu.memory_space<vmem>>, vector<1x128xf32>
    %492 = vector.extract_strided_slice %490 {offsets = [0, 0], sizes = [1, 128], strides = [1, 1]} : vector<16x128xf32> to vector<1x128xf32>
    %493 = arith.addf %491, %492 : vector<1x128xf32>
    %cst_174 = arith.constant 1.000000e+01 : f32
    %494 = vector.broadcast %cst_174 : f32 to vector<1x128xf32>
    %495 = arith.cmpf oge, %493, %494 : vector<1x128xf32>
    %496 = arith.extui %495 : vector<1x128xi1> to vector<1x128xi32>
    %497 = arith.sitofp %496 : vector<1x128xi32> to vector<1x128xf32>
    %cst_175 = arith.constant 1.000000e+00 : f32
    %498 = vector.broadcast %cst_175 : f32 to vector<1x128xf32>
    %499 = arith.mulf %497, %498 : vector<1x128xf32>
    %c32_176 = arith.constant 32 : index
    %c0_177 = arith.constant 0 : index
    %500 = vector.load %arg7[%c32_176, %c0_177] : memref<64x128xf32, #tpu.memory_space<vmem>>, vector<1x128xf32>
    tpu.vector_store %arg7[%c32_176, %c0_177], %499 {strides = array<i32>} : memref<64x128xf32, #tpu.memory_space<vmem>>, vector<1x128xf32>,
    %501 = vector.broadcast %497 : vector<1x128xf32> to vector<16x128xf32>
    %502 = arith.mulf %501, %3 : vector<16x128xf32>
    %503 = arith.addf %490, %502 : vector<16x128xf32>
    %504 = vector.extract_strided_slice %503 {offsets = [1, 0], sizes = [15, 128], strides = [1, 1]} : vector<16x128xf32> to vector<15x128xf32>
    %505 = tpu.concatenate %504, %4 in 0 : vector<15x128xf32>, vector<1x128xf32> -> vector<16x128xf32>
    %c33 = arith.constant 33 : index
    %c0_178 = arith.constant 0 : index
    %506 = vector.load %arg6[%c33, %c0_178] : memref<64x128xf32, #tpu.memory_space<vmem>>, vector<1x128xf32>
    %507 = vector.extract_strided_slice %505 {offsets = [0, 0], sizes = [1, 128], strides = [1, 1]} : vector<16x128xf32> to vector<1x128xf32>
    %508 = arith.addf %506, %507 : vector<1x128xf32>
    %cst_179 = arith.constant 1.000000e+01 : f32
    %509 = vector.broadcast %cst_179 : f32 to vector<1x128xf32>
    %510 = arith.cmpf oge, %508, %509 : vector<1x128xf32>
    %511 = arith.extui %510 : vector<1x128xi1> to vector<1x128xi32>
    %512 = arith.sitofp %511 : vector<1x128xi32> to vector<1x128xf32>
    %cst_180 = arith.constant 1.000000e+00 : f32
    %513 = vector.broadcast %cst_180 : f32 to vector<1x128xf32>
    %514 = arith.mulf %512, %513 : vector<1x128xf32>
    %c33_181 = arith.constant 33 : index
    %c0_182 = arith.constant 0 : index
    %515 = vector.load %arg7[%c33_181, %c0_182] : memref<64x128xf32, #tpu.memory_space<vmem>>, vector<1x128xf32>
    tpu.vector_store %arg7[%c33_181, %c0_182], %514 {strides = array<i32>} : memref<64x128xf32, #tpu.memory_space<vmem>>, vector<1x128xf32>,
    %516 = vector.broadcast %512 : vector<1x128xf32> to vector<16x128xf32>
    %517 = arith.mulf %516, %3 : vector<16x128xf32>
    %518 = arith.addf %505, %517 : vector<16x128xf32>
    %519 = vector.extract_strided_slice %518 {offsets = [1, 0], sizes = [15, 128], strides = [1, 1]} : vector<16x128xf32> to vector<15x128xf32>
    %520 = tpu.concatenate %519, %4 in 0 : vector<15x128xf32>, vector<1x128xf32> -> vector<16x128xf32>
    %c34 = arith.constant 34 : index
    %c0_183 = arith.constant 0 : index
    %521 = vector.load %arg6[%c34, %c0_183] : memref<64x128xf32, #tpu.memory_space<vmem>>, vector<1x128xf32>
    %522 = vector.extract_strided_slice %520 {offsets = [0, 0], sizes = [1, 128], strides = [1, 1]} : vector<16x128xf32> to vector<1x128xf32>
    %523 = arith.addf %521, %522 : vector<1x128xf32>
    %cst_184 = arith.constant 1.000000e+01 : f32
    %524 = vector.broadcast %cst_184 : f32 to vector<1x128xf32>
    %525 = arith.cmpf oge, %523, %524 : vector<1x128xf32>
    %526 = arith.extui %525 : vector<1x128xi1> to vector<1x128xi32>
    %527 = arith.sitofp %526 : vector<1x128xi32> to vector<1x128xf32>
    %cst_185 = arith.constant 1.000000e+00 : f32
    %528 = vector.broadcast %cst_185 : f32 to vector<1x128xf32>
    %529 = arith.mulf %527, %528 : vector<1x128xf32>
    %c34_186 = arith.constant 34 : index
    %c0_187 = arith.constant 0 : index
    %530 = vector.load %arg7[%c34_186, %c0_187] : memref<64x128xf32, #tpu.memory_space<vmem>>, vector<1x128xf32>
    tpu.vector_store %arg7[%c34_186, %c0_187], %529 {strides = array<i32>} : memref<64x128xf32, #tpu.memory_space<vmem>>, vector<1x128xf32>,
    %531 = vector.broadcast %527 : vector<1x128xf32> to vector<16x128xf32>
    %532 = arith.mulf %531, %3 : vector<16x128xf32>
    %533 = arith.addf %520, %532 : vector<16x128xf32>
    %534 = vector.extract_strided_slice %533 {offsets = [1, 0], sizes = [15, 128], strides = [1, 1]} : vector<16x128xf32> to vector<15x128xf32>
    %535 = tpu.concatenate %534, %4 in 0 : vector<15x128xf32>, vector<1x128xf32> -> vector<16x128xf32>
    %c35 = arith.constant 35 : index
    %c0_188 = arith.constant 0 : index
    %536 = vector.load %arg6[%c35, %c0_188] : memref<64x128xf32, #tpu.memory_space<vmem>>, vector<1x128xf32>
    %537 = vector.extract_strided_slice %535 {offsets = [0, 0], sizes = [1, 128], strides = [1, 1]} : vector<16x128xf32> to vector<1x128xf32>
    %538 = arith.addf %536, %537 : vector<1x128xf32>
    %cst_189 = arith.constant 1.000000e+01 : f32
    %539 = vector.broadcast %cst_189 : f32 to vector<1x128xf32>
    %540 = arith.cmpf oge, %538, %539 : vector<1x128xf32>
    %541 = arith.extui %540 : vector<1x128xi1> to vector<1x128xi32>
    %542 = arith.sitofp %541 : vector<1x128xi32> to vector<1x128xf32>
    %cst_190 = arith.constant 1.000000e+00 : f32
    %543 = vector.broadcast %cst_190 : f32 to vector<1x128xf32>
    %544 = arith.mulf %542, %543 : vector<1x128xf32>
    %c35_191 = arith.constant 35 : index
    %c0_192 = arith.constant 0 : index
    %545 = vector.load %arg7[%c35_191, %c0_192] : memref<64x128xf32, #tpu.memory_space<vmem>>, vector<1x128xf32>
    tpu.vector_store %arg7[%c35_191, %c0_192], %544 {strides = array<i32>} : memref<64x128xf32, #tpu.memory_space<vmem>>, vector<1x128xf32>,
    %546 = vector.broadcast %542 : vector<1x128xf32> to vector<16x128xf32>
    %547 = arith.mulf %546, %3 : vector<16x128xf32>
    %548 = arith.addf %535, %547 : vector<16x128xf32>
    %549 = vector.extract_strided_slice %548 {offsets = [1, 0], sizes = [15, 128], strides = [1, 1]} : vector<16x128xf32> to vector<15x128xf32>
    %550 = tpu.concatenate %549, %4 in 0 : vector<15x128xf32>, vector<1x128xf32> -> vector<16x128xf32>
    %c36 = arith.constant 36 : index
    %c0_193 = arith.constant 0 : index
    %551 = vector.load %arg6[%c36, %c0_193] : memref<64x128xf32, #tpu.memory_space<vmem>>, vector<1x128xf32>
    %552 = vector.extract_strided_slice %550 {offsets = [0, 0], sizes = [1, 128], strides = [1, 1]} : vector<16x128xf32> to vector<1x128xf32>
    %553 = arith.addf %551, %552 : vector<1x128xf32>
    %cst_194 = arith.constant 1.000000e+01 : f32
    %554 = vector.broadcast %cst_194 : f32 to vector<1x128xf32>
    %555 = arith.cmpf oge, %553, %554 : vector<1x128xf32>
    %556 = arith.extui %555 : vector<1x128xi1> to vector<1x128xi32>
    %557 = arith.sitofp %556 : vector<1x128xi32> to vector<1x128xf32>
    %cst_195 = arith.constant 1.000000e+00 : f32
    %558 = vector.broadcast %cst_195 : f32 to vector<1x128xf32>
    %559 = arith.mulf %557, %558 : vector<1x128xf32>
    %c36_196 = arith.constant 36 : index
    %c0_197 = arith.constant 0 : index
    %560 = vector.load %arg7[%c36_196, %c0_197] : memref<64x128xf32, #tpu.memory_space<vmem>>, vector<1x128xf32>
    tpu.vector_store %arg7[%c36_196, %c0_197], %559 {strides = array<i32>} : memref<64x128xf32, #tpu.memory_space<vmem>>, vector<1x128xf32>,
    %561 = vector.broadcast %557 : vector<1x128xf32> to vector<16x128xf32>
    %562 = arith.mulf %561, %3 : vector<16x128xf32>
    %563 = arith.addf %550, %562 : vector<16x128xf32>
    %564 = vector.extract_strided_slice %563 {offsets = [1, 0], sizes = [15, 128], strides = [1, 1]} : vector<16x128xf32> to vector<15x128xf32>
    %565 = tpu.concatenate %564, %4 in 0 : vector<15x128xf32>, vector<1x128xf32> -> vector<16x128xf32>
    %c37 = arith.constant 37 : index
    %c0_198 = arith.constant 0 : index
    %566 = vector.load %arg6[%c37, %c0_198] : memref<64x128xf32, #tpu.memory_space<vmem>>, vector<1x128xf32>
    %567 = vector.extract_strided_slice %565 {offsets = [0, 0], sizes = [1, 128], strides = [1, 1]} : vector<16x128xf32> to vector<1x128xf32>
    %568 = arith.addf %566, %567 : vector<1x128xf32>
    %cst_199 = arith.constant 1.000000e+01 : f32
    %569 = vector.broadcast %cst_199 : f32 to vector<1x128xf32>
    %570 = arith.cmpf oge, %568, %569 : vector<1x128xf32>
    %571 = arith.extui %570 : vector<1x128xi1> to vector<1x128xi32>
    %572 = arith.sitofp %571 : vector<1x128xi32> to vector<1x128xf32>
    %cst_200 = arith.constant 1.000000e+00 : f32
    %573 = vector.broadcast %cst_200 : f32 to vector<1x128xf32>
    %574 = arith.mulf %572, %573 : vector<1x128xf32>
    %c37_201 = arith.constant 37 : index
    %c0_202 = arith.constant 0 : index
    %575 = vector.load %arg7[%c37_201, %c0_202] : memref<64x128xf32, #tpu.memory_space<vmem>>, vector<1x128xf32>
    tpu.vector_store %arg7[%c37_201, %c0_202], %574 {strides = array<i32>} : memref<64x128xf32, #tpu.memory_space<vmem>>, vector<1x128xf32>,
    %576 = vector.broadcast %572 : vector<1x128xf32> to vector<16x128xf32>
    %577 = arith.mulf %576, %3 : vector<16x128xf32>
    %578 = arith.addf %565, %577 : vector<16x128xf32>
    %579 = vector.extract_strided_slice %578 {offsets = [1, 0], sizes = [15, 128], strides = [1, 1]} : vector<16x128xf32> to vector<15x128xf32>
    %580 = tpu.concatenate %579, %4 in 0 : vector<15x128xf32>, vector<1x128xf32> -> vector<16x128xf32>
    %c38 = arith.constant 38 : index
    %c0_203 = arith.constant 0 : index
    %581 = vector.load %arg6[%c38, %c0_203] : memref<64x128xf32, #tpu.memory_space<vmem>>, vector<1x128xf32>
    %582 = vector.extract_strided_slice %580 {offsets = [0, 0], sizes = [1, 128], strides = [1, 1]} : vector<16x128xf32> to vector<1x128xf32>
    %583 = arith.addf %581, %582 : vector<1x128xf32>
    %cst_204 = arith.constant 1.000000e+01 : f32
    %584 = vector.broadcast %cst_204 : f32 to vector<1x128xf32>
    %585 = arith.cmpf oge, %583, %584 : vector<1x128xf32>
    %586 = arith.extui %585 : vector<1x128xi1> to vector<1x128xi32>
    %587 = arith.sitofp %586 : vector<1x128xi32> to vector<1x128xf32>
    %cst_205 = arith.constant 1.000000e+00 : f32
    %588 = vector.broadcast %cst_205 : f32 to vector<1x128xf32>
    %589 = arith.mulf %587, %588 : vector<1x128xf32>
    %c38_206 = arith.constant 38 : index
    %c0_207 = arith.constant 0 : index
    %590 = vector.load %arg7[%c38_206, %c0_207] : memref<64x128xf32, #tpu.memory_space<vmem>>, vector<1x128xf32>
    tpu.vector_store %arg7[%c38_206, %c0_207], %589 {strides = array<i32>} : memref<64x128xf32, #tpu.memory_space<vmem>>, vector<1x128xf32>,
    %591 = vector.broadcast %587 : vector<1x128xf32> to vector<16x128xf32>
    %592 = arith.mulf %591, %3 : vector<16x128xf32>
    %593 = arith.addf %580, %592 : vector<16x128xf32>
    %594 = vector.extract_strided_slice %593 {offsets = [1, 0], sizes = [15, 128], strides = [1, 1]} : vector<16x128xf32> to vector<15x128xf32>
    %595 = tpu.concatenate %594, %4 in 0 : vector<15x128xf32>, vector<1x128xf32> -> vector<16x128xf32>
    %c39 = arith.constant 39 : index
    %c0_208 = arith.constant 0 : index
    %596 = vector.load %arg6[%c39, %c0_208] : memref<64x128xf32, #tpu.memory_space<vmem>>, vector<1x128xf32>
    %597 = vector.extract_strided_slice %595 {offsets = [0, 0], sizes = [1, 128], strides = [1, 1]} : vector<16x128xf32> to vector<1x128xf32>
    %598 = arith.addf %596, %597 : vector<1x128xf32>
    %cst_209 = arith.constant 1.000000e+01 : f32
    %599 = vector.broadcast %cst_209 : f32 to vector<1x128xf32>
    %600 = arith.cmpf oge, %598, %599 : vector<1x128xf32>
    %601 = arith.extui %600 : vector<1x128xi1> to vector<1x128xi32>
    %602 = arith.sitofp %601 : vector<1x128xi32> to vector<1x128xf32>
    %cst_210 = arith.constant 1.000000e+00 : f32
    %603 = vector.broadcast %cst_210 : f32 to vector<1x128xf32>
    %604 = arith.mulf %602, %603 : vector<1x128xf32>
    %c39_211 = arith.constant 39 : index
    %c0_212 = arith.constant 0 : index
    %605 = vector.load %arg7[%c39_211, %c0_212] : memref<64x128xf32, #tpu.memory_space<vmem>>, vector<1x128xf32>
    tpu.vector_store %arg7[%c39_211, %c0_212], %604 {strides = array<i32>} : memref<64x128xf32, #tpu.memory_space<vmem>>, vector<1x128xf32>,
    %606 = vector.broadcast %602 : vector<1x128xf32> to vector<16x128xf32>
    %607 = arith.mulf %606, %3 : vector<16x128xf32>
    %608 = arith.addf %595, %607 : vector<16x128xf32>
    %609 = vector.extract_strided_slice %608 {offsets = [1, 0], sizes = [15, 128], strides = [1, 1]} : vector<16x128xf32> to vector<15x128xf32>
    %610 = tpu.concatenate %609, %4 in 0 : vector<15x128xf32>, vector<1x128xf32> -> vector<16x128xf32>
    %c40 = arith.constant 40 : index
    %c0_213 = arith.constant 0 : index
    %611 = vector.load %arg6[%c40, %c0_213] : memref<64x128xf32, #tpu.memory_space<vmem>>, vector<1x128xf32>
    %612 = vector.extract_strided_slice %610 {offsets = [0, 0], sizes = [1, 128], strides = [1, 1]} : vector<16x128xf32> to vector<1x128xf32>
    %613 = arith.addf %611, %612 : vector<1x128xf32>
    %cst_214 = arith.constant 1.000000e+01 : f32
    %614 = vector.broadcast %cst_214 : f32 to vector<1x128xf32>
    %615 = arith.cmpf oge, %613, %614 : vector<1x128xf32>
    %616 = arith.extui %615 : vector<1x128xi1> to vector<1x128xi32>
    %617 = arith.sitofp %616 : vector<1x128xi32> to vector<1x128xf32>
    %cst_215 = arith.constant 1.000000e+00 : f32
    %618 = vector.broadcast %cst_215 : f32 to vector<1x128xf32>
    %619 = arith.mulf %617, %618 : vector<1x128xf32>
    %c40_216 = arith.constant 40 : index
    %c0_217 = arith.constant 0 : index
    %620 = vector.load %arg7[%c40_216, %c0_217] : memref<64x128xf32, #tpu.memory_space<vmem>>, vector<1x128xf32>
    tpu.vector_store %arg7[%c40_216, %c0_217], %619 {strides = array<i32>} : memref<64x128xf32, #tpu.memory_space<vmem>>, vector<1x128xf32>,
    %621 = vector.broadcast %617 : vector<1x128xf32> to vector<16x128xf32>
    %622 = arith.mulf %621, %3 : vector<16x128xf32>
    %623 = arith.addf %610, %622 : vector<16x128xf32>
    %624 = vector.extract_strided_slice %623 {offsets = [1, 0], sizes = [15, 128], strides = [1, 1]} : vector<16x128xf32> to vector<15x128xf32>
    %625 = tpu.concatenate %624, %4 in 0 : vector<15x128xf32>, vector<1x128xf32> -> vector<16x128xf32>
    %c41 = arith.constant 41 : index
    %c0_218 = arith.constant 0 : index
    %626 = vector.load %arg6[%c41, %c0_218] : memref<64x128xf32, #tpu.memory_space<vmem>>, vector<1x128xf32>
    %627 = vector.extract_strided_slice %625 {offsets = [0, 0], sizes = [1, 128], strides = [1, 1]} : vector<16x128xf32> to vector<1x128xf32>
    %628 = arith.addf %626, %627 : vector<1x128xf32>
    %cst_219 = arith.constant 1.000000e+01 : f32
    %629 = vector.broadcast %cst_219 : f32 to vector<1x128xf32>
    %630 = arith.cmpf oge, %628, %629 : vector<1x128xf32>
    %631 = arith.extui %630 : vector<1x128xi1> to vector<1x128xi32>
    %632 = arith.sitofp %631 : vector<1x128xi32> to vector<1x128xf32>
    %cst_220 = arith.constant 1.000000e+00 : f32
    %633 = vector.broadcast %cst_220 : f32 to vector<1x128xf32>
    %634 = arith.mulf %632, %633 : vector<1x128xf32>
    %c41_221 = arith.constant 41 : index
    %c0_222 = arith.constant 0 : index
    %635 = vector.load %arg7[%c41_221, %c0_222] : memref<64x128xf32, #tpu.memory_space<vmem>>, vector<1x128xf32>
    tpu.vector_store %arg7[%c41_221, %c0_222], %634 {strides = array<i32>} : memref<64x128xf32, #tpu.memory_space<vmem>>, vector<1x128xf32>,
    %636 = vector.broadcast %632 : vector<1x128xf32> to vector<16x128xf32>
    %637 = arith.mulf %636, %3 : vector<16x128xf32>
    %638 = arith.addf %625, %637 : vector<16x128xf32>
    %639 = vector.extract_strided_slice %638 {offsets = [1, 0], sizes = [15, 128], strides = [1, 1]} : vector<16x128xf32> to vector<15x128xf32>
    %640 = tpu.concatenate %639, %4 in 0 : vector<15x128xf32>, vector<1x128xf32> -> vector<16x128xf32>
    %c42 = arith.constant 42 : index
    %c0_223 = arith.constant 0 : index
    %641 = vector.load %arg6[%c42, %c0_223] : memref<64x128xf32, #tpu.memory_space<vmem>>, vector<1x128xf32>
    %642 = vector.extract_strided_slice %640 {offsets = [0, 0], sizes = [1, 128], strides = [1, 1]} : vector<16x128xf32> to vector<1x128xf32>
    %643 = arith.addf %641, %642 : vector<1x128xf32>
    %cst_224 = arith.constant 1.000000e+01 : f32
    %644 = vector.broadcast %cst_224 : f32 to vector<1x128xf32>
    %645 = arith.cmpf oge, %643, %644 : vector<1x128xf32>
    %646 = arith.extui %645 : vector<1x128xi1> to vector<1x128xi32>
    %647 = arith.sitofp %646 : vector<1x128xi32> to vector<1x128xf32>
    %cst_225 = arith.constant 1.000000e+00 : f32
    %648 = vector.broadcast %cst_225 : f32 to vector<1x128xf32>
    %649 = arith.mulf %647, %648 : vector<1x128xf32>
    %c42_226 = arith.constant 42 : index
    %c0_227 = arith.constant 0 : index
    %650 = vector.load %arg7[%c42_226, %c0_227] : memref<64x128xf32, #tpu.memory_space<vmem>>, vector<1x128xf32>
    tpu.vector_store %arg7[%c42_226, %c0_227], %649 {strides = array<i32>} : memref<64x128xf32, #tpu.memory_space<vmem>>, vector<1x128xf32>,
    %651 = vector.broadcast %647 : vector<1x128xf32> to vector<16x128xf32>
    %652 = arith.mulf %651, %3 : vector<16x128xf32>
    %653 = arith.addf %640, %652 : vector<16x128xf32>
    %654 = vector.extract_strided_slice %653 {offsets = [1, 0], sizes = [15, 128], strides = [1, 1]} : vector<16x128xf32> to vector<15x128xf32>
    %655 = tpu.concatenate %654, %4 in 0 : vector<15x128xf32>, vector<1x128xf32> -> vector<16x128xf32>
    %c43 = arith.constant 43 : index
    %c0_228 = arith.constant 0 : index
    %656 = vector.load %arg6[%c43, %c0_228] : memref<64x128xf32, #tpu.memory_space<vmem>>, vector<1x128xf32>
    %657 = vector.extract_strided_slice %655 {offsets = [0, 0], sizes = [1, 128], strides = [1, 1]} : vector<16x128xf32> to vector<1x128xf32>
    %658 = arith.addf %656, %657 : vector<1x128xf32>
    %cst_229 = arith.constant 1.000000e+01 : f32
    %659 = vector.broadcast %cst_229 : f32 to vector<1x128xf32>
    %660 = arith.cmpf oge, %658, %659 : vector<1x128xf32>
    %661 = arith.extui %660 : vector<1x128xi1> to vector<1x128xi32>
    %662 = arith.sitofp %661 : vector<1x128xi32> to vector<1x128xf32>
    %cst_230 = arith.constant 1.000000e+00 : f32
    %663 = vector.broadcast %cst_230 : f32 to vector<1x128xf32>
    %664 = arith.mulf %662, %663 : vector<1x128xf32>
    %c43_231 = arith.constant 43 : index
    %c0_232 = arith.constant 0 : index
    %665 = vector.load %arg7[%c43_231, %c0_232] : memref<64x128xf32, #tpu.memory_space<vmem>>, vector<1x128xf32>
    tpu.vector_store %arg7[%c43_231, %c0_232], %664 {strides = array<i32>} : memref<64x128xf32, #tpu.memory_space<vmem>>, vector<1x128xf32>,
    %666 = vector.broadcast %662 : vector<1x128xf32> to vector<16x128xf32>
    %667 = arith.mulf %666, %3 : vector<16x128xf32>
    %668 = arith.addf %655, %667 : vector<16x128xf32>
    %669 = vector.extract_strided_slice %668 {offsets = [1, 0], sizes = [15, 128], strides = [1, 1]} : vector<16x128xf32> to vector<15x128xf32>
    %670 = tpu.concatenate %669, %4 in 0 : vector<15x128xf32>, vector<1x128xf32> -> vector<16x128xf32>
    %c44 = arith.constant 44 : index
    %c0_233 = arith.constant 0 : index
    %671 = vector.load %arg6[%c44, %c0_233] : memref<64x128xf32, #tpu.memory_space<vmem>>, vector<1x128xf32>
    %672 = vector.extract_strided_slice %670 {offsets = [0, 0], sizes = [1, 128], strides = [1, 1]} : vector<16x128xf32> to vector<1x128xf32>
    %673 = arith.addf %671, %672 : vector<1x128xf32>
    %cst_234 = arith.constant 1.000000e+01 : f32
    %674 = vector.broadcast %cst_234 : f32 to vector<1x128xf32>
    %675 = arith.cmpf oge, %673, %674 : vector<1x128xf32>
    %676 = arith.extui %675 : vector<1x128xi1> to vector<1x128xi32>
    %677 = arith.sitofp %676 : vector<1x128xi32> to vector<1x128xf32>
    %cst_235 = arith.constant 1.000000e+00 : f32
    %678 = vector.broadcast %cst_235 : f32 to vector<1x128xf32>
    %679 = arith.mulf %677, %678 : vector<1x128xf32>
    %c44_236 = arith.constant 44 : index
    %c0_237 = arith.constant 0 : index
    %680 = vector.load %arg7[%c44_236, %c0_237] : memref<64x128xf32, #tpu.memory_space<vmem>>, vector<1x128xf32>
    tpu.vector_store %arg7[%c44_236, %c0_237], %679 {strides = array<i32>} : memref<64x128xf32, #tpu.memory_space<vmem>>, vector<1x128xf32>,
    %681 = vector.broadcast %677 : vector<1x128xf32> to vector<16x128xf32>
    %682 = arith.mulf %681, %3 : vector<16x128xf32>
    %683 = arith.addf %670, %682 : vector<16x128xf32>
    %684 = vector.extract_strided_slice %683 {offsets = [1, 0], sizes = [15, 128], strides = [1, 1]} : vector<16x128xf32> to vector<15x128xf32>
    %685 = tpu.concatenate %684, %4 in 0 : vector<15x128xf32>, vector<1x128xf32> -> vector<16x128xf32>
    %c45 = arith.constant 45 : index
    %c0_238 = arith.constant 0 : index
    %686 = vector.load %arg6[%c45, %c0_238] : memref<64x128xf32, #tpu.memory_space<vmem>>, vector<1x128xf32>
    %687 = vector.extract_strided_slice %685 {offsets = [0, 0], sizes = [1, 128], strides = [1, 1]} : vector<16x128xf32> to vector<1x128xf32>
    %688 = arith.addf %686, %687 : vector<1x128xf32>
    %cst_239 = arith.constant 1.000000e+01 : f32
    %689 = vector.broadcast %cst_239 : f32 to vector<1x128xf32>
    %690 = arith.cmpf oge, %688, %689 : vector<1x128xf32>
    %691 = arith.extui %690 : vector<1x128xi1> to vector<1x128xi32>
    %692 = arith.sitofp %691 : vector<1x128xi32> to vector<1x128xf32>
    %cst_240 = arith.constant 1.000000e+00 : f32
    %693 = vector.broadcast %cst_240 : f32 to vector<1x128xf32>
    %694 = arith.mulf %692, %693 : vector<1x128xf32>
    %c45_241 = arith.constant 45 : index
    %c0_242 = arith.constant 0 : index
    %695 = vector.load %arg7[%c45_241, %c0_242] : memref<64x128xf32, #tpu.memory_space<vmem>>, vector<1x128xf32>
    tpu.vector_store %arg7[%c45_241, %c0_242], %694 {strides = array<i32>} : memref<64x128xf32, #tpu.memory_space<vmem>>, vector<1x128xf32>,
    %696 = vector.broadcast %692 : vector<1x128xf32> to vector<16x128xf32>
    %697 = arith.mulf %696, %3 : vector<16x128xf32>
    %698 = arith.addf %685, %697 : vector<16x128xf32>
    %699 = vector.extract_strided_slice %698 {offsets = [1, 0], sizes = [15, 128], strides = [1, 1]} : vector<16x128xf32> to vector<15x128xf32>
    %700 = tpu.concatenate %699, %4 in 0 : vector<15x128xf32>, vector<1x128xf32> -> vector<16x128xf32>
    %c46 = arith.constant 46 : index
    %c0_243 = arith.constant 0 : index
    %701 = vector.load %arg6[%c46, %c0_243] : memref<64x128xf32, #tpu.memory_space<vmem>>, vector<1x128xf32>
    %702 = vector.extract_strided_slice %700 {offsets = [0, 0], sizes = [1, 128], strides = [1, 1]} : vector<16x128xf32> to vector<1x128xf32>
    %703 = arith.addf %701, %702 : vector<1x128xf32>
    %cst_244 = arith.constant 1.000000e+01 : f32
    %704 = vector.broadcast %cst_244 : f32 to vector<1x128xf32>
    %705 = arith.cmpf oge, %703, %704 : vector<1x128xf32>
    %706 = arith.extui %705 : vector<1x128xi1> to vector<1x128xi32>
    %707 = arith.sitofp %706 : vector<1x128xi32> to vector<1x128xf32>
    %cst_245 = arith.constant 1.000000e+00 : f32
    %708 = vector.broadcast %cst_245 : f32 to vector<1x128xf32>
    %709 = arith.mulf %707, %708 : vector<1x128xf32>
    %c46_246 = arith.constant 46 : index
    %c0_247 = arith.constant 0 : index
    %710 = vector.load %arg7[%c46_246, %c0_247] : memref<64x128xf32, #tpu.memory_space<vmem>>, vector<1x128xf32>
    tpu.vector_store %arg7[%c46_246, %c0_247], %709 {strides = array<i32>} : memref<64x128xf32, #tpu.memory_space<vmem>>, vector<1x128xf32>,
    %711 = vector.broadcast %707 : vector<1x128xf32> to vector<16x128xf32>
    %712 = arith.mulf %711, %3 : vector<16x128xf32>
    %713 = arith.addf %700, %712 : vector<16x128xf32>
    %714 = vector.extract_strided_slice %713 {offsets = [1, 0], sizes = [15, 128], strides = [1, 1]} : vector<16x128xf32> to vector<15x128xf32>
    %715 = tpu.concatenate %714, %4 in 0 : vector<15x128xf32>, vector<1x128xf32> -> vector<16x128xf32>
    %c47 = arith.constant 47 : index
    %c0_248 = arith.constant 0 : index
    %716 = vector.load %arg6[%c47, %c0_248] : memref<64x128xf32, #tpu.memory_space<vmem>>, vector<1x128xf32>
    %717 = vector.extract_strided_slice %715 {offsets = [0, 0], sizes = [1, 128], strides = [1, 1]} : vector<16x128xf32> to vector<1x128xf32>
    %718 = arith.addf %716, %717 : vector<1x128xf32>
    %cst_249 = arith.constant 1.000000e+01 : f32
    %719 = vector.broadcast %cst_249 : f32 to vector<1x128xf32>
    %720 = arith.cmpf oge, %718, %719 : vector<1x128xf32>
    %721 = arith.extui %720 : vector<1x128xi1> to vector<1x128xi32>
    %722 = arith.sitofp %721 : vector<1x128xi32> to vector<1x128xf32>
    %cst_250 = arith.constant 1.000000e+00 : f32
    %723 = vector.broadcast %cst_250 : f32 to vector<1x128xf32>
    %724 = arith.mulf %722, %723 : vector<1x128xf32>
    %c47_251 = arith.constant 47 : index
    %c0_252 = arith.constant 0 : index
    %725 = vector.load %arg7[%c47_251, %c0_252] : memref<64x128xf32, #tpu.memory_space<vmem>>, vector<1x128xf32>
    tpu.vector_store %arg7[%c47_251, %c0_252], %724 {strides = array<i32>} : memref<64x128xf32, #tpu.memory_space<vmem>>, vector<1x128xf32>,
    %726 = vector.broadcast %722 : vector<1x128xf32> to vector<16x128xf32>
    %727 = arith.mulf %726, %3 : vector<16x128xf32>
    %728 = arith.addf %715, %727 : vector<16x128xf32>
    %729 = vector.extract_strided_slice %728 {offsets = [1, 0], sizes = [15, 128], strides = [1, 1]} : vector<16x128xf32> to vector<15x128xf32>
    %730 = tpu.concatenate %729, %4 in 0 : vector<15x128xf32>, vector<1x128xf32> -> vector<16x128xf32>
    %c48 = arith.constant 48 : index
    %c0_253 = arith.constant 0 : index
    %731 = vector.load %arg6[%c48, %c0_253] : memref<64x128xf32, #tpu.memory_space<vmem>>, vector<1x128xf32>
    %732 = vector.extract_strided_slice %730 {offsets = [0, 0], sizes = [1, 128], strides = [1, 1]} : vector<16x128xf32> to vector<1x128xf32>
    %733 = arith.addf %731, %732 : vector<1x128xf32>
    %cst_254 = arith.constant 1.000000e+01 : f32
    %734 = vector.broadcast %cst_254 : f32 to vector<1x128xf32>
    %735 = arith.cmpf oge, %733, %734 : vector<1x128xf32>
    %736 = arith.extui %735 : vector<1x128xi1> to vector<1x128xi32>
    %737 = arith.sitofp %736 : vector<1x128xi32> to vector<1x128xf32>
    %cst_255 = arith.constant 1.000000e+00 : f32
    %738 = vector.broadcast %cst_255 : f32 to vector<1x128xf32>
    %739 = arith.mulf %737, %738 : vector<1x128xf32>
    %c48_256 = arith.constant 48 : index
    %c0_257 = arith.constant 0 : index
    %740 = vector.load %arg7[%c48_256, %c0_257] : memref<64x128xf32, #tpu.memory_space<vmem>>, vector<1x128xf32>
    tpu.vector_store %arg7[%c48_256, %c0_257], %739 {strides = array<i32>} : memref<64x128xf32, #tpu.memory_space<vmem>>, vector<1x128xf32>,
    %741 = vector.broadcast %737 : vector<1x128xf32> to vector<16x128xf32>
    %742 = arith.mulf %741, %3 : vector<16x128xf32>
    %743 = arith.addf %730, %742 : vector<16x128xf32>
    %744 = vector.extract_strided_slice %743 {offsets = [1, 0], sizes = [15, 128], strides = [1, 1]} : vector<16x128xf32> to vector<15x128xf32>
    %745 = tpu.concatenate %744, %4 in 0 : vector<15x128xf32>, vector<1x128xf32> -> vector<16x128xf32>
    %c49 = arith.constant 49 : index
    %c0_258 = arith.constant 0 : index
    %746 = vector.load %arg6[%c49, %c0_258] : memref<64x128xf32, #tpu.memory_space<vmem>>, vector<1x128xf32>
    %747 = vector.extract_strided_slice %745 {offsets = [0, 0], sizes = [1, 128], strides = [1, 1]} : vector<16x128xf32> to vector<1x128xf32>
    %748 = arith.addf %746, %747 : vector<1x128xf32>
    %cst_259 = arith.constant 1.000000e+01 : f32
    %749 = vector.broadcast %cst_259 : f32 to vector<1x128xf32>
    %750 = arith.cmpf oge, %748, %749 : vector<1x128xf32>
    %751 = arith.extui %750 : vector<1x128xi1> to vector<1x128xi32>
    %752 = arith.sitofp %751 : vector<1x128xi32> to vector<1x128xf32>
    %cst_260 = arith.constant 1.000000e+00 : f32
    %753 = vector.broadcast %cst_260 : f32 to vector<1x128xf32>
    %754 = arith.mulf %752, %753 : vector<1x128xf32>
    %c49_261 = arith.constant 49 : index
    %c0_262 = arith.constant 0 : index
    %755 = vector.load %arg7[%c49_261, %c0_262] : memref<64x128xf32, #tpu.memory_space<vmem>>, vector<1x128xf32>
    tpu.vector_store %arg7[%c49_261, %c0_262], %754 {strides = array<i32>} : memref<64x128xf32, #tpu.memory_space<vmem>>, vector<1x128xf32>,
    %756 = vector.broadcast %752 : vector<1x128xf32> to vector<16x128xf32>
    %757 = arith.mulf %756, %3 : vector<16x128xf32>
    %758 = arith.addf %745, %757 : vector<16x128xf32>
    %759 = vector.extract_strided_slice %758 {offsets = [1, 0], sizes = [15, 128], strides = [1, 1]} : vector<16x128xf32> to vector<15x128xf32>
    %760 = tpu.concatenate %759, %4 in 0 : vector<15x128xf32>, vector<1x128xf32> -> vector<16x128xf32>
    %c50 = arith.constant 50 : index
    %c0_263 = arith.constant 0 : index
    %761 = vector.load %arg6[%c50, %c0_263] : memref<64x128xf32, #tpu.memory_space<vmem>>, vector<1x128xf32>
    %762 = vector.extract_strided_slice %760 {offsets = [0, 0], sizes = [1, 128], strides = [1, 1]} : vector<16x128xf32> to vector<1x128xf32>
    %763 = arith.addf %761, %762 : vector<1x128xf32>
    %cst_264 = arith.constant 1.000000e+01 : f32
    %764 = vector.broadcast %cst_264 : f32 to vector<1x128xf32>
    %765 = arith.cmpf oge, %763, %764 : vector<1x128xf32>
    %766 = arith.extui %765 : vector<1x128xi1> to vector<1x128xi32>
    %767 = arith.sitofp %766 : vector<1x128xi32> to vector<1x128xf32>
    %cst_265 = arith.constant 1.000000e+00 : f32
    %768 = vector.broadcast %cst_265 : f32 to vector<1x128xf32>
    %769 = arith.mulf %767, %768 : vector<1x128xf32>
    %c50_266 = arith.constant 50 : index
    %c0_267 = arith.constant 0 : index
    %770 = vector.load %arg7[%c50_266, %c0_267] : memref<64x128xf32, #tpu.memory_space<vmem>>, vector<1x128xf32>
    tpu.vector_store %arg7[%c50_266, %c0_267], %769 {strides = array<i32>} : memref<64x128xf32, #tpu.memory_space<vmem>>, vector<1x128xf32>,
    %771 = vector.broadcast %767 : vector<1x128xf32> to vector<16x128xf32>
    %772 = arith.mulf %771, %3 : vector<16x128xf32>
    %773 = arith.addf %760, %772 : vector<16x128xf32>
    %774 = vector.extract_strided_slice %773 {offsets = [1, 0], sizes = [15, 128], strides = [1, 1]} : vector<16x128xf32> to vector<15x128xf32>
    %775 = tpu.concatenate %774, %4 in 0 : vector<15x128xf32>, vector<1x128xf32> -> vector<16x128xf32>
    %c51 = arith.constant 51 : index
    %c0_268 = arith.constant 0 : index
    %776 = vector.load %arg6[%c51, %c0_268] : memref<64x128xf32, #tpu.memory_space<vmem>>, vector<1x128xf32>
    %777 = vector.extract_strided_slice %775 {offsets = [0, 0], sizes = [1, 128], strides = [1, 1]} : vector<16x128xf32> to vector<1x128xf32>
    %778 = arith.addf %776, %777 : vector<1x128xf32>
    %cst_269 = arith.constant 1.000000e+01 : f32
    %779 = vector.broadcast %cst_269 : f32 to vector<1x128xf32>
    %780 = arith.cmpf oge, %778, %779 : vector<1x128xf32>
    %781 = arith.extui %780 : vector<1x128xi1> to vector<1x128xi32>
    %782 = arith.sitofp %781 : vector<1x128xi32> to vector<1x128xf32>
    %cst_270 = arith.constant 1.000000e+00 : f32
    %783 = vector.broadcast %cst_270 : f32 to vector<1x128xf32>
    %784 = arith.mulf %782, %783 : vector<1x128xf32>
    %c51_271 = arith.constant 51 : index
    %c0_272 = arith.constant 0 : index
    %785 = vector.load %arg7[%c51_271, %c0_272] : memref<64x128xf32, #tpu.memory_space<vmem>>, vector<1x128xf32>
    tpu.vector_store %arg7[%c51_271, %c0_272], %784 {strides = array<i32>} : memref<64x128xf32, #tpu.memory_space<vmem>>, vector<1x128xf32>,
    %786 = vector.broadcast %782 : vector<1x128xf32> to vector<16x128xf32>
    %787 = arith.mulf %786, %3 : vector<16x128xf32>
    %788 = arith.addf %775, %787 : vector<16x128xf32>
    %789 = vector.extract_strided_slice %788 {offsets = [1, 0], sizes = [15, 128], strides = [1, 1]} : vector<16x128xf32> to vector<15x128xf32>
    %790 = tpu.concatenate %789, %4 in 0 : vector<15x128xf32>, vector<1x128xf32> -> vector<16x128xf32>
    %c52 = arith.constant 52 : index
    %c0_273 = arith.constant 0 : index
    %791 = vector.load %arg6[%c52, %c0_273] : memref<64x128xf32, #tpu.memory_space<vmem>>, vector<1x128xf32>
    %792 = vector.extract_strided_slice %790 {offsets = [0, 0], sizes = [1, 128], strides = [1, 1]} : vector<16x128xf32> to vector<1x128xf32>
    %793 = arith.addf %791, %792 : vector<1x128xf32>
    %cst_274 = arith.constant 1.000000e+01 : f32
    %794 = vector.broadcast %cst_274 : f32 to vector<1x128xf32>
    %795 = arith.cmpf oge, %793, %794 : vector<1x128xf32>
    %796 = arith.extui %795 : vector<1x128xi1> to vector<1x128xi32>
    %797 = arith.sitofp %796 : vector<1x128xi32> to vector<1x128xf32>
    %cst_275 = arith.constant 1.000000e+00 : f32
    %798 = vector.broadcast %cst_275 : f32 to vector<1x128xf32>
    %799 = arith.mulf %797, %798 : vector<1x128xf32>
    %c52_276 = arith.constant 52 : index
    %c0_277 = arith.constant 0 : index
    %800 = vector.load %arg7[%c52_276, %c0_277] : memref<64x128xf32, #tpu.memory_space<vmem>>, vector<1x128xf32>
    tpu.vector_store %arg7[%c52_276, %c0_277], %799 {strides = array<i32>} : memref<64x128xf32, #tpu.memory_space<vmem>>, vector<1x128xf32>,
    %801 = vector.broadcast %797 : vector<1x128xf32> to vector<16x128xf32>
    %802 = arith.mulf %801, %3 : vector<16x128xf32>
    %803 = arith.addf %790, %802 : vector<16x128xf32>
    %804 = vector.extract_strided_slice %803 {offsets = [1, 0], sizes = [15, 128], strides = [1, 1]} : vector<16x128xf32> to vector<15x128xf32>
    %805 = tpu.concatenate %804, %4 in 0 : vector<15x128xf32>, vector<1x128xf32> -> vector<16x128xf32>
    %c53 = arith.constant 53 : index
    %c0_278 = arith.constant 0 : index
    %806 = vector.load %arg6[%c53, %c0_278] : memref<64x128xf32, #tpu.memory_space<vmem>>, vector<1x128xf32>
    %807 = vector.extract_strided_slice %805 {offsets = [0, 0], sizes = [1, 128], strides = [1, 1]} : vector<16x128xf32> to vector<1x128xf32>
    %808 = arith.addf %806, %807 : vector<1x128xf32>
    %cst_279 = arith.constant 1.000000e+01 : f32
    %809 = vector.broadcast %cst_279 : f32 to vector<1x128xf32>
    %810 = arith.cmpf oge, %808, %809 : vector<1x128xf32>
    %811 = arith.extui %810 : vector<1x128xi1> to vector<1x128xi32>
    %812 = arith.sitofp %811 : vector<1x128xi32> to vector<1x128xf32>
    %cst_280 = arith.constant 1.000000e+00 : f32
    %813 = vector.broadcast %cst_280 : f32 to vector<1x128xf32>
    %814 = arith.mulf %812, %813 : vector<1x128xf32>
    %c53_281 = arith.constant 53 : index
    %c0_282 = arith.constant 0 : index
    %815 = vector.load %arg7[%c53_281, %c0_282] : memref<64x128xf32, #tpu.memory_space<vmem>>, vector<1x128xf32>
    tpu.vector_store %arg7[%c53_281, %c0_282], %814 {strides = array<i32>} : memref<64x128xf32, #tpu.memory_space<vmem>>, vector<1x128xf32>,
    %816 = vector.broadcast %812 : vector<1x128xf32> to vector<16x128xf32>
    %817 = arith.mulf %816, %3 : vector<16x128xf32>
    %818 = arith.addf %805, %817 : vector<16x128xf32>
    %819 = vector.extract_strided_slice %818 {offsets = [1, 0], sizes = [15, 128], strides = [1, 1]} : vector<16x128xf32> to vector<15x128xf32>
    %820 = tpu.concatenate %819, %4 in 0 : vector<15x128xf32>, vector<1x128xf32> -> vector<16x128xf32>
    %c54 = arith.constant 54 : index
    %c0_283 = arith.constant 0 : index
    %821 = vector.load %arg6[%c54, %c0_283] : memref<64x128xf32, #tpu.memory_space<vmem>>, vector<1x128xf32>
    %822 = vector.extract_strided_slice %820 {offsets = [0, 0], sizes = [1, 128], strides = [1, 1]} : vector<16x128xf32> to vector<1x128xf32>
    %823 = arith.addf %821, %822 : vector<1x128xf32>
    %cst_284 = arith.constant 1.000000e+01 : f32
    %824 = vector.broadcast %cst_284 : f32 to vector<1x128xf32>
    %825 = arith.cmpf oge, %823, %824 : vector<1x128xf32>
    %826 = arith.extui %825 : vector<1x128xi1> to vector<1x128xi32>
    %827 = arith.sitofp %826 : vector<1x128xi32> to vector<1x128xf32>
    %cst_285 = arith.constant 1.000000e+00 : f32
    %828 = vector.broadcast %cst_285 : f32 to vector<1x128xf32>
    %829 = arith.mulf %827, %828 : vector<1x128xf32>
    %c54_286 = arith.constant 54 : index
    %c0_287 = arith.constant 0 : index
    %830 = vector.load %arg7[%c54_286, %c0_287] : memref<64x128xf32, #tpu.memory_space<vmem>>, vector<1x128xf32>
    tpu.vector_store %arg7[%c54_286, %c0_287], %829 {strides = array<i32>} : memref<64x128xf32, #tpu.memory_space<vmem>>, vector<1x128xf32>,
    %831 = vector.broadcast %827 : vector<1x128xf32> to vector<16x128xf32>
    %832 = arith.mulf %831, %3 : vector<16x128xf32>
    %833 = arith.addf %820, %832 : vector<16x128xf32>
    %834 = vector.extract_strided_slice %833 {offsets = [1, 0], sizes = [15, 128], strides = [1, 1]} : vector<16x128xf32> to vector<15x128xf32>
    %835 = tpu.concatenate %834, %4 in 0 : vector<15x128xf32>, vector<1x128xf32> -> vector<16x128xf32>
    %c55 = arith.constant 55 : index
    %c0_288 = arith.constant 0 : index
    %836 = vector.load %arg6[%c55, %c0_288] : memref<64x128xf32, #tpu.memory_space<vmem>>, vector<1x128xf32>
    %837 = vector.extract_strided_slice %835 {offsets = [0, 0], sizes = [1, 128], strides = [1, 1]} : vector<16x128xf32> to vector<1x128xf32>
    %838 = arith.addf %836, %837 : vector<1x128xf32>
    %cst_289 = arith.constant 1.000000e+01 : f32
    %839 = vector.broadcast %cst_289 : f32 to vector<1x128xf32>
    %840 = arith.cmpf oge, %838, %839 : vector<1x128xf32>
    %841 = arith.extui %840 : vector<1x128xi1> to vector<1x128xi32>
    %842 = arith.sitofp %841 : vector<1x128xi32> to vector<1x128xf32>
    %cst_290 = arith.constant 1.000000e+00 : f32
    %843 = vector.broadcast %cst_290 : f32 to vector<1x128xf32>
    %844 = arith.mulf %842, %843 : vector<1x128xf32>
    %c55_291 = arith.constant 55 : index
    %c0_292 = arith.constant 0 : index
    %845 = vector.load %arg7[%c55_291, %c0_292] : memref<64x128xf32, #tpu.memory_space<vmem>>, vector<1x128xf32>
    tpu.vector_store %arg7[%c55_291, %c0_292], %844 {strides = array<i32>} : memref<64x128xf32, #tpu.memory_space<vmem>>, vector<1x128xf32>,
    %846 = vector.broadcast %842 : vector<1x128xf32> to vector<16x128xf32>
    %847 = arith.mulf %846, %3 : vector<16x128xf32>
    %848 = arith.addf %835, %847 : vector<16x128xf32>
    %849 = vector.extract_strided_slice %848 {offsets = [1, 0], sizes = [15, 128], strides = [1, 1]} : vector<16x128xf32> to vector<15x128xf32>
    %850 = tpu.concatenate %849, %4 in 0 : vector<15x128xf32>, vector<1x128xf32> -> vector<16x128xf32>
    %c56 = arith.constant 56 : index
    %c0_293 = arith.constant 0 : index
    %851 = vector.load %arg6[%c56, %c0_293] : memref<64x128xf32, #tpu.memory_space<vmem>>, vector<1x128xf32>
    %852 = vector.extract_strided_slice %850 {offsets = [0, 0], sizes = [1, 128], strides = [1, 1]} : vector<16x128xf32> to vector<1x128xf32>
    %853 = arith.addf %851, %852 : vector<1x128xf32>
    %cst_294 = arith.constant 1.000000e+01 : f32
    %854 = vector.broadcast %cst_294 : f32 to vector<1x128xf32>
    %855 = arith.cmpf oge, %853, %854 : vector<1x128xf32>
    %856 = arith.extui %855 : vector<1x128xi1> to vector<1x128xi32>
    %857 = arith.sitofp %856 : vector<1x128xi32> to vector<1x128xf32>
    %cst_295 = arith.constant 1.000000e+00 : f32
    %858 = vector.broadcast %cst_295 : f32 to vector<1x128xf32>
    %859 = arith.mulf %857, %858 : vector<1x128xf32>
    %c56_296 = arith.constant 56 : index
    %c0_297 = arith.constant 0 : index
    %860 = vector.load %arg7[%c56_296, %c0_297] : memref<64x128xf32, #tpu.memory_space<vmem>>, vector<1x128xf32>
    tpu.vector_store %arg7[%c56_296, %c0_297], %859 {strides = array<i32>} : memref<64x128xf32, #tpu.memory_space<vmem>>, vector<1x128xf32>,
    %861 = vector.broadcast %857 : vector<1x128xf32> to vector<16x128xf32>
    %862 = arith.mulf %861, %3 : vector<16x128xf32>
    %863 = arith.addf %850, %862 : vector<16x128xf32>
    %864 = vector.extract_strided_slice %863 {offsets = [1, 0], sizes = [15, 128], strides = [1, 1]} : vector<16x128xf32> to vector<15x128xf32>
    %865 = tpu.concatenate %864, %4 in 0 : vector<15x128xf32>, vector<1x128xf32> -> vector<16x128xf32>
    %c57 = arith.constant 57 : index
    %c0_298 = arith.constant 0 : index
    %866 = vector.load %arg6[%c57, %c0_298] : memref<64x128xf32, #tpu.memory_space<vmem>>, vector<1x128xf32>
    %867 = vector.extract_strided_slice %865 {offsets = [0, 0], sizes = [1, 128], strides = [1, 1]} : vector<16x128xf32> to vector<1x128xf32>
    %868 = arith.addf %866, %867 : vector<1x128xf32>
    %cst_299 = arith.constant 1.000000e+01 : f32
    %869 = vector.broadcast %cst_299 : f32 to vector<1x128xf32>
    %870 = arith.cmpf oge, %868, %869 : vector<1x128xf32>
    %871 = arith.extui %870 : vector<1x128xi1> to vector<1x128xi32>
    %872 = arith.sitofp %871 : vector<1x128xi32> to vector<1x128xf32>
    %cst_300 = arith.constant 1.000000e+00 : f32
    %873 = vector.broadcast %cst_300 : f32 to vector<1x128xf32>
    %874 = arith.mulf %872, %873 : vector<1x128xf32>
    %c57_301 = arith.constant 57 : index
    %c0_302 = arith.constant 0 : index
    %875 = vector.load %arg7[%c57_301, %c0_302] : memref<64x128xf32, #tpu.memory_space<vmem>>, vector<1x128xf32>
    tpu.vector_store %arg7[%c57_301, %c0_302], %874 {strides = array<i32>} : memref<64x128xf32, #tpu.memory_space<vmem>>, vector<1x128xf32>,
    %876 = vector.broadcast %872 : vector<1x128xf32> to vector<16x128xf32>
    %877 = arith.mulf %876, %3 : vector<16x128xf32>
    %878 = arith.addf %865, %877 : vector<16x128xf32>
    %879 = vector.extract_strided_slice %878 {offsets = [1, 0], sizes = [15, 128], strides = [1, 1]} : vector<16x128xf32> to vector<15x128xf32>
    %880 = tpu.concatenate %879, %4 in 0 : vector<15x128xf32>, vector<1x128xf32> -> vector<16x128xf32>
    %c58 = arith.constant 58 : index
    %c0_303 = arith.constant 0 : index
    %881 = vector.load %arg6[%c58, %c0_303] : memref<64x128xf32, #tpu.memory_space<vmem>>, vector<1x128xf32>
    %882 = vector.extract_strided_slice %880 {offsets = [0, 0], sizes = [1, 128], strides = [1, 1]} : vector<16x128xf32> to vector<1x128xf32>
    %883 = arith.addf %881, %882 : vector<1x128xf32>
    %cst_304 = arith.constant 1.000000e+01 : f32
    %884 = vector.broadcast %cst_304 : f32 to vector<1x128xf32>
    %885 = arith.cmpf oge, %883, %884 : vector<1x128xf32>
    %886 = arith.extui %885 : vector<1x128xi1> to vector<1x128xi32>
    %887 = arith.sitofp %886 : vector<1x128xi32> to vector<1x128xf32>
    %cst_305 = arith.constant 1.000000e+00 : f32
    %888 = vector.broadcast %cst_305 : f32 to vector<1x128xf32>
    %889 = arith.mulf %887, %888 : vector<1x128xf32>
    %c58_306 = arith.constant 58 : index
    %c0_307 = arith.constant 0 : index
    %890 = vector.load %arg7[%c58_306, %c0_307] : memref<64x128xf32, #tpu.memory_space<vmem>>, vector<1x128xf32>
    tpu.vector_store %arg7[%c58_306, %c0_307], %889 {strides = array<i32>} : memref<64x128xf32, #tpu.memory_space<vmem>>, vector<1x128xf32>,
    %891 = vector.broadcast %887 : vector<1x128xf32> to vector<16x128xf32>
    %892 = arith.mulf %891, %3 : vector<16x128xf32>
    %893 = arith.addf %880, %892 : vector<16x128xf32>
    %894 = vector.extract_strided_slice %893 {offsets = [1, 0], sizes = [15, 128], strides = [1, 1]} : vector<16x128xf32> to vector<15x128xf32>
    %895 = tpu.concatenate %894, %4 in 0 : vector<15x128xf32>, vector<1x128xf32> -> vector<16x128xf32>
    %c59 = arith.constant 59 : index
    %c0_308 = arith.constant 0 : index
    %896 = vector.load %arg6[%c59, %c0_308] : memref<64x128xf32, #tpu.memory_space<vmem>>, vector<1x128xf32>
    %897 = vector.extract_strided_slice %895 {offsets = [0, 0], sizes = [1, 128], strides = [1, 1]} : vector<16x128xf32> to vector<1x128xf32>
    %898 = arith.addf %896, %897 : vector<1x128xf32>
    %cst_309 = arith.constant 1.000000e+01 : f32
    %899 = vector.broadcast %cst_309 : f32 to vector<1x128xf32>
    %900 = arith.cmpf oge, %898, %899 : vector<1x128xf32>
    %901 = arith.extui %900 : vector<1x128xi1> to vector<1x128xi32>
    %902 = arith.sitofp %901 : vector<1x128xi32> to vector<1x128xf32>
    %cst_310 = arith.constant 1.000000e+00 : f32
    %903 = vector.broadcast %cst_310 : f32 to vector<1x128xf32>
    %904 = arith.mulf %902, %903 : vector<1x128xf32>
    %c59_311 = arith.constant 59 : index
    %c0_312 = arith.constant 0 : index
    %905 = vector.load %arg7[%c59_311, %c0_312] : memref<64x128xf32, #tpu.memory_space<vmem>>, vector<1x128xf32>
    tpu.vector_store %arg7[%c59_311, %c0_312], %904 {strides = array<i32>} : memref<64x128xf32, #tpu.memory_space<vmem>>, vector<1x128xf32>,
    %906 = vector.broadcast %902 : vector<1x128xf32> to vector<16x128xf32>
    %907 = arith.mulf %906, %3 : vector<16x128xf32>
    %908 = arith.addf %895, %907 : vector<16x128xf32>
    %909 = vector.extract_strided_slice %908 {offsets = [1, 0], sizes = [15, 128], strides = [1, 1]} : vector<16x128xf32> to vector<15x128xf32>
    %910 = tpu.concatenate %909, %4 in 0 : vector<15x128xf32>, vector<1x128xf32> -> vector<16x128xf32>
    %c60 = arith.constant 60 : index
    %c0_313 = arith.constant 0 : index
    %911 = vector.load %arg6[%c60, %c0_313] : memref<64x128xf32, #tpu.memory_space<vmem>>, vector<1x128xf32>
    %912 = vector.extract_strided_slice %910 {offsets = [0, 0], sizes = [1, 128], strides = [1, 1]} : vector<16x128xf32> to vector<1x128xf32>
    %913 = arith.addf %911, %912 : vector<1x128xf32>
    %cst_314 = arith.constant 1.000000e+01 : f32
    %914 = vector.broadcast %cst_314 : f32 to vector<1x128xf32>
    %915 = arith.cmpf oge, %913, %914 : vector<1x128xf32>
    %916 = arith.extui %915 : vector<1x128xi1> to vector<1x128xi32>
    %917 = arith.sitofp %916 : vector<1x128xi32> to vector<1x128xf32>
    %cst_315 = arith.constant 1.000000e+00 : f32
    %918 = vector.broadcast %cst_315 : f32 to vector<1x128xf32>
    %919 = arith.mulf %917, %918 : vector<1x128xf32>
    %c60_316 = arith.constant 60 : index
    %c0_317 = arith.constant 0 : index
    %920 = vector.load %arg7[%c60_316, %c0_317] : memref<64x128xf32, #tpu.memory_space<vmem>>, vector<1x128xf32>
    tpu.vector_store %arg7[%c60_316, %c0_317], %919 {strides = array<i32>} : memref<64x128xf32, #tpu.memory_space<vmem>>, vector<1x128xf32>,
    %921 = vector.broadcast %917 : vector<1x128xf32> to vector<16x128xf32>
    %922 = arith.mulf %921, %3 : vector<16x128xf32>
    %923 = arith.addf %910, %922 : vector<16x128xf32>
    %924 = vector.extract_strided_slice %923 {offsets = [1, 0], sizes = [15, 128], strides = [1, 1]} : vector<16x128xf32> to vector<15x128xf32>
    %925 = tpu.concatenate %924, %4 in 0 : vector<15x128xf32>, vector<1x128xf32> -> vector<16x128xf32>
    %c61 = arith.constant 61 : index
    %c0_318 = arith.constant 0 : index
    %926 = vector.load %arg6[%c61, %c0_318] : memref<64x128xf32, #tpu.memory_space<vmem>>, vector<1x128xf32>
    %927 = vector.extract_strided_slice %925 {offsets = [0, 0], sizes = [1, 128], strides = [1, 1]} : vector<16x128xf32> to vector<1x128xf32>
    %928 = arith.addf %926, %927 : vector<1x128xf32>
    %cst_319 = arith.constant 1.000000e+01 : f32
    %929 = vector.broadcast %cst_319 : f32 to vector<1x128xf32>
    %930 = arith.cmpf oge, %928, %929 : vector<1x128xf32>
    %931 = arith.extui %930 : vector<1x128xi1> to vector<1x128xi32>
    %932 = arith.sitofp %931 : vector<1x128xi32> to vector<1x128xf32>
    %cst_320 = arith.constant 1.000000e+00 : f32
    %933 = vector.broadcast %cst_320 : f32 to vector<1x128xf32>
    %934 = arith.mulf %932, %933 : vector<1x128xf32>
    %c61_321 = arith.constant 61 : index
    %c0_322 = arith.constant 0 : index
    %935 = vector.load %arg7[%c61_321, %c0_322] : memref<64x128xf32, #tpu.memory_space<vmem>>, vector<1x128xf32>
    tpu.vector_store %arg7[%c61_321, %c0_322], %934 {strides = array<i32>} : memref<64x128xf32, #tpu.memory_space<vmem>>, vector<1x128xf32>,
    %936 = vector.broadcast %932 : vector<1x128xf32> to vector<16x128xf32>
    %937 = arith.mulf %936, %3 : vector<16x128xf32>
    %938 = arith.addf %925, %937 : vector<16x128xf32>
    %939 = vector.extract_strided_slice %938 {offsets = [1, 0], sizes = [15, 128], strides = [1, 1]} : vector<16x128xf32> to vector<15x128xf32>
    %940 = tpu.concatenate %939, %4 in 0 : vector<15x128xf32>, vector<1x128xf32> -> vector<16x128xf32>
    %c62 = arith.constant 62 : index
    %c0_323 = arith.constant 0 : index
    %941 = vector.load %arg6[%c62, %c0_323] : memref<64x128xf32, #tpu.memory_space<vmem>>, vector<1x128xf32>
    %942 = vector.extract_strided_slice %940 {offsets = [0, 0], sizes = [1, 128], strides = [1, 1]} : vector<16x128xf32> to vector<1x128xf32>
    %943 = arith.addf %941, %942 : vector<1x128xf32>
    %cst_324 = arith.constant 1.000000e+01 : f32
    %944 = vector.broadcast %cst_324 : f32 to vector<1x128xf32>
    %945 = arith.cmpf oge, %943, %944 : vector<1x128xf32>
    %946 = arith.extui %945 : vector<1x128xi1> to vector<1x128xi32>
    %947 = arith.sitofp %946 : vector<1x128xi32> to vector<1x128xf32>
    %cst_325 = arith.constant 1.000000e+00 : f32
    %948 = vector.broadcast %cst_325 : f32 to vector<1x128xf32>
    %949 = arith.mulf %947, %948 : vector<1x128xf32>
    %c62_326 = arith.constant 62 : index
    %c0_327 = arith.constant 0 : index
    %950 = vector.load %arg7[%c62_326, %c0_327] : memref<64x128xf32, #tpu.memory_space<vmem>>, vector<1x128xf32>
    tpu.vector_store %arg7[%c62_326, %c0_327], %949 {strides = array<i32>} : memref<64x128xf32, #tpu.memory_space<vmem>>, vector<1x128xf32>,
    %951 = vector.broadcast %947 : vector<1x128xf32> to vector<16x128xf32>
    %952 = arith.mulf %951, %3 : vector<16x128xf32>
    %953 = arith.addf %940, %952 : vector<16x128xf32>
    %954 = vector.extract_strided_slice %953 {offsets = [1, 0], sizes = [15, 128], strides = [1, 1]} : vector<16x128xf32> to vector<15x128xf32>
    %955 = tpu.concatenate %954, %4 in 0 : vector<15x128xf32>, vector<1x128xf32> -> vector<16x128xf32>
    %c63 = arith.constant 63 : index
    %c0_328 = arith.constant 0 : index
    %956 = vector.load %arg6[%c63, %c0_328] : memref<64x128xf32, #tpu.memory_space<vmem>>, vector<1x128xf32>
    %957 = vector.extract_strided_slice %955 {offsets = [0, 0], sizes = [1, 128], strides = [1, 1]} : vector<16x128xf32> to vector<1x128xf32>
    %958 = arith.addf %956, %957 : vector<1x128xf32>
    %cst_329 = arith.constant 1.000000e+01 : f32
    %959 = vector.broadcast %cst_329 : f32 to vector<1x128xf32>
    %960 = arith.cmpf oge, %958, %959 : vector<1x128xf32>
    %961 = arith.extui %960 : vector<1x128xi1> to vector<1x128xi32>
    %962 = arith.sitofp %961 : vector<1x128xi32> to vector<1x128xf32>
    %cst_330 = arith.constant 1.000000e+00 : f32
    %963 = vector.broadcast %cst_330 : f32 to vector<1x128xf32>
    %964 = arith.mulf %962, %963 : vector<1x128xf32>
    %c63_331 = arith.constant 63 : index
    %c0_332 = arith.constant 0 : index
    %965 = vector.load %arg7[%c63_331, %c0_332] : memref<64x128xf32, #tpu.memory_space<vmem>>, vector<1x128xf32>
    tpu.vector_store %arg7[%c63_331, %c0_332], %964 {strides = array<i32>} : memref<64x128xf32, #tpu.memory_space<vmem>>, vector<1x128xf32>,
    %c0_333 = arith.constant 0 : index
    %c0_334 = arith.constant 0 : index
    %966 = vector.load %arg7[%c0_333, %c0_334] : memref<64x128xf32, #tpu.memory_space<vmem>>, vector<64x128xf32>
    %c0_335 = arith.constant 0 : index
    %c0_336 = arith.constant 0 : index
    %967 = vector.load %arg3[%c0_335, %c0_336] : memref<128x128xf32, #tpu.memory_space<vmem>>, vector<128x128xf32>
    %cst_337 = arith.constant dense<0.000000e+00> : vector<64x128xf32>
    %968 = tpu.matmul %966, %967, %cst_337 {dimension_numbers = #tpu.dot_dimension_numbers<[1], [0], [0], [1], [0, 0, 1, 1], [], []>} : vector<64x128xf32>, vector<128x128xf32>, vector<64x128xf32> -> vector<64x128xf32>
    %cst_338 = arith.constant dense<0.000000e+00> : vector<64x128xf32>
    %969 = tpu.matmul %0, %968, %cst_338 {dimension_numbers = #tpu.dot_dimension_numbers<[1], [0], [0], [1], [0, 0, 1, 1], [], []>} : vector<64x64xf32>, vector<64x128xf32>, vector<64x128xf32> -> vector<64x128xf32>
    %c0_339 = arith.constant 0 : index
    %c0_340 = arith.constant 0 : index
    %970 = vector.load %arg6[%c0_339, %c0_340] : memref<64x128xf32, #tpu.memory_space<vmem>>, vector<64x128xf32>
    tpu.vector_store %arg6[%c0_339, %c0_340], %969 {strides = array<i32>} : memref<64x128xf32, #tpu.memory_space<vmem>>, vector<64x128xf32>,
    %cst_341 = arith.constant 0.000000e+00 : f32
    %971 = vector.broadcast %cst_341 : f32 to vector<16x128xf32>
    %c0_342 = arith.constant 0 : index
    %c0_343 = arith.constant 0 : index
    %972 = vector.load %arg6[%c0_342, %c0_343] : memref<64x128xf32, #tpu.memory_space<vmem>>, vector<1x128xf32>
    %973 = vector.extract_strided_slice %971 {offsets = [0, 0], sizes = [1, 128], strides = [1, 1]} : vector<16x128xf32> to vector<1x128xf32>
    %974 = arith.addf %972, %973 : vector<1x128xf32>
    %cst_344 = arith.constant 1.000000e+01 : f32
    %975 = vector.broadcast %cst_344 : f32 to vector<1x128xf32>
    %976 = arith.cmpf oge, %974, %975 : vector<1x128xf32>
    %977 = arith.extui %976 : vector<1x128xi1> to vector<1x128xi32>
    %978 = arith.sitofp %977 : vector<1x128xi32> to vector<1x128xf32>
    %cst_345 = arith.constant 1.000000e+00 : f32
    %979 = vector.broadcast %cst_345 : f32 to vector<1x128xf32>
    %980 = arith.mulf %978, %979 : vector<1x128xf32>
    %c0_346 = arith.constant 0 : index
    %c0_347 = arith.constant 0 : index
    %981 = vector.load %arg5[%c0_346, %c0_347] : memref<64x128xf32, #tpu.memory_space<vmem>>, vector<1x128xf32>
    tpu.vector_store %arg5[%c0_346, %c0_347], %980 {strides = array<i32>} : memref<64x128xf32, #tpu.memory_space<vmem>>, vector<1x128xf32>,
    %982 = vector.broadcast %978 : vector<1x128xf32> to vector<16x128xf32>
    %983 = arith.mulf %982, %3 : vector<16x128xf32>
    %984 = arith.addf %971, %983 : vector<16x128xf32>
    %985 = vector.extract_strided_slice %984 {offsets = [1, 0], sizes = [15, 128], strides = [1, 1]} : vector<16x128xf32> to vector<15x128xf32>
    %986 = tpu.concatenate %985, %4 in 0 : vector<15x128xf32>, vector<1x128xf32> -> vector<16x128xf32>
    %c1_348 = arith.constant 1 : index
    %c0_349 = arith.constant 0 : index
    %987 = vector.load %arg6[%c1_348, %c0_349] : memref<64x128xf32, #tpu.memory_space<vmem>>, vector<1x128xf32>
    %988 = vector.extract_strided_slice %986 {offsets = [0, 0], sizes = [1, 128], strides = [1, 1]} : vector<16x128xf32> to vector<1x128xf32>
    %989 = arith.addf %987, %988 : vector<1x128xf32>
    %cst_350 = arith.constant 1.000000e+01 : f32
    %990 = vector.broadcast %cst_350 : f32 to vector<1x128xf32>
    %991 = arith.cmpf oge, %989, %990 : vector<1x128xf32>
    %992 = arith.extui %991 : vector<1x128xi1> to vector<1x128xi32>
    %993 = arith.sitofp %992 : vector<1x128xi32> to vector<1x128xf32>
    %cst_351 = arith.constant 1.000000e+00 : f32
    %994 = vector.broadcast %cst_351 : f32 to vector<1x128xf32>
    %995 = arith.mulf %993, %994 : vector<1x128xf32>
    %c1_352 = arith.constant 1 : index
    %c0_353 = arith.constant 0 : index
    %996 = vector.load %arg5[%c1_352, %c0_353] : memref<64x128xf32, #tpu.memory_space<vmem>>, vector<1x128xf32>
    tpu.vector_store %arg5[%c1_352, %c0_353], %995 {strides = array<i32>} : memref<64x128xf32, #tpu.memory_space<vmem>>, vector<1x128xf32>,
    %997 = vector.broadcast %993 : vector<1x128xf32> to vector<16x128xf32>
    %998 = arith.mulf %997, %3 : vector<16x128xf32>
    %999 = arith.addf %986, %998 : vector<16x128xf32>
    %1000 = vector.extract_strided_slice %999 {offsets = [1, 0], sizes = [15, 128], strides = [1, 1]} : vector<16x128xf32> to vector<15x128xf32>
    %1001 = tpu.concatenate %1000, %4 in 0 : vector<15x128xf32>, vector<1x128xf32> -> vector<16x128xf32>
    %c2_354 = arith.constant 2 : index
    %c0_355 = arith.constant 0 : index
    %1002 = vector.load %arg6[%c2_354, %c0_355] : memref<64x128xf32, #tpu.memory_space<vmem>>, vector<1x128xf32>
    %1003 = vector.extract_strided_slice %1001 {offsets = [0, 0], sizes = [1, 128], strides = [1, 1]} : vector<16x128xf32> to vector<1x128xf32>
    %1004 = arith.addf %1002, %1003 : vector<1x128xf32>
    %cst_356 = arith.constant 1.000000e+01 : f32
    %1005 = vector.broadcast %cst_356 : f32 to vector<1x128xf32>
    %1006 = arith.cmpf oge, %1004, %1005 : vector<1x128xf32>
    %1007 = arith.extui %1006 : vector<1x128xi1> to vector<1x128xi32>
    %1008 = arith.sitofp %1007 : vector<1x128xi32> to vector<1x128xf32>
    %cst_357 = arith.constant 1.000000e+00 : f32
    %1009 = vector.broadcast %cst_357 : f32 to vector<1x128xf32>
    %1010 = arith.mulf %1008, %1009 : vector<1x128xf32>
    %c2_358 = arith.constant 2 : index
    %c0_359 = arith.constant 0 : index
    %1011 = vector.load %arg5[%c2_358, %c0_359] : memref<64x128xf32, #tpu.memory_space<vmem>>, vector<1x128xf32>
    tpu.vector_store %arg5[%c2_358, %c0_359], %1010 {strides = array<i32>} : memref<64x128xf32, #tpu.memory_space<vmem>>, vector<1x128xf32>,
    %1012 = vector.broadcast %1008 : vector<1x128xf32> to vector<16x128xf32>
    %1013 = arith.mulf %1012, %3 : vector<16x128xf32>
    %1014 = arith.addf %1001, %1013 : vector<16x128xf32>
    %1015 = vector.extract_strided_slice %1014 {offsets = [1, 0], sizes = [15, 128], strides = [1, 1]} : vector<16x128xf32> to vector<15x128xf32>
    %1016 = tpu.concatenate %1015, %4 in 0 : vector<15x128xf32>, vector<1x128xf32> -> vector<16x128xf32>
    %c3_360 = arith.constant 3 : index
    %c0_361 = arith.constant 0 : index
    %1017 = vector.load %arg6[%c3_360, %c0_361] : memref<64x128xf32, #tpu.memory_space<vmem>>, vector<1x128xf32>
    %1018 = vector.extract_strided_slice %1016 {offsets = [0, 0], sizes = [1, 128], strides = [1, 1]} : vector<16x128xf32> to vector<1x128xf32>
    %1019 = arith.addf %1017, %1018 : vector<1x128xf32>
    %cst_362 = arith.constant 1.000000e+01 : f32
    %1020 = vector.broadcast %cst_362 : f32 to vector<1x128xf32>
    %1021 = arith.cmpf oge, %1019, %1020 : vector<1x128xf32>
    %1022 = arith.extui %1021 : vector<1x128xi1> to vector<1x128xi32>
    %1023 = arith.sitofp %1022 : vector<1x128xi32> to vector<1x128xf32>
    %cst_363 = arith.constant 1.000000e+00 : f32
    %1024 = vector.broadcast %cst_363 : f32 to vector<1x128xf32>
    %1025 = arith.mulf %1023, %1024 : vector<1x128xf32>
    %c3_364 = arith.constant 3 : index
    %c0_365 = arith.constant 0 : index
    %1026 = vector.load %arg5[%c3_364, %c0_365] : memref<64x128xf32, #tpu.memory_space<vmem>>, vector<1x128xf32>
    tpu.vector_store %arg5[%c3_364, %c0_365], %1025 {strides = array<i32>} : memref<64x128xf32, #tpu.memory_space<vmem>>, vector<1x128xf32>,
    %1027 = vector.broadcast %1023 : vector<1x128xf32> to vector<16x128xf32>
    %1028 = arith.mulf %1027, %3 : vector<16x128xf32>
    %1029 = arith.addf %1016, %1028 : vector<16x128xf32>
    %1030 = vector.extract_strided_slice %1029 {offsets = [1, 0], sizes = [15, 128], strides = [1, 1]} : vector<16x128xf32> to vector<15x128xf32>
    %1031 = tpu.concatenate %1030, %4 in 0 : vector<15x128xf32>, vector<1x128xf32> -> vector<16x128xf32>
    %c4_366 = arith.constant 4 : index
    %c0_367 = arith.constant 0 : index
    %1032 = vector.load %arg6[%c4_366, %c0_367] : memref<64x128xf32, #tpu.memory_space<vmem>>, vector<1x128xf32>
    %1033 = vector.extract_strided_slice %1031 {offsets = [0, 0], sizes = [1, 128], strides = [1, 1]} : vector<16x128xf32> to vector<1x128xf32>
    %1034 = arith.addf %1032, %1033 : vector<1x128xf32>
    %cst_368 = arith.constant 1.000000e+01 : f32
    %1035 = vector.broadcast %cst_368 : f32 to vector<1x128xf32>
    %1036 = arith.cmpf oge, %1034, %1035 : vector<1x128xf32>
    %1037 = arith.extui %1036 : vector<1x128xi1> to vector<1x128xi32>
    %1038 = arith.sitofp %1037 : vector<1x128xi32> to vector<1x128xf32>
    %cst_369 = arith.constant 1.000000e+00 : f32
    %1039 = vector.broadcast %cst_369 : f32 to vector<1x128xf32>
    %1040 = arith.mulf %1038, %1039 : vector<1x128xf32>
    %c4_370 = arith.constant 4 : index
    %c0_371 = arith.constant 0 : index
    %1041 = vector.load %arg5[%c4_370, %c0_371] : memref<64x128xf32, #tpu.memory_space<vmem>>, vector<1x128xf32>
    tpu.vector_store %arg5[%c4_370, %c0_371], %1040 {strides = array<i32>} : memref<64x128xf32, #tpu.memory_space<vmem>>, vector<1x128xf32>,
    %1042 = vector.broadcast %1038 : vector<1x128xf32> to vector<16x128xf32>
    %1043 = arith.mulf %1042, %3 : vector<16x128xf32>
    %1044 = arith.addf %1031, %1043 : vector<16x128xf32>
    %1045 = vector.extract_strided_slice %1044 {offsets = [1, 0], sizes = [15, 128], strides = [1, 1]} : vector<16x128xf32> to vector<15x128xf32>
    %1046 = tpu.concatenate %1045, %4 in 0 : vector<15x128xf32>, vector<1x128xf32> -> vector<16x128xf32>
    %c5_372 = arith.constant 5 : index
    %c0_373 = arith.constant 0 : index
    %1047 = vector.load %arg6[%c5_372, %c0_373] : memref<64x128xf32, #tpu.memory_space<vmem>>, vector<1x128xf32>
    %1048 = vector.extract_strided_slice %1046 {offsets = [0, 0], sizes = [1, 128], strides = [1, 1]} : vector<16x128xf32> to vector<1x128xf32>
    %1049 = arith.addf %1047, %1048 : vector<1x128xf32>
    %cst_374 = arith.constant 1.000000e+01 : f32
    %1050 = vector.broadcast %cst_374 : f32 to vector<1x128xf32>
    %1051 = arith.cmpf oge, %1049, %1050 : vector<1x128xf32>
    %1052 = arith.extui %1051 : vector<1x128xi1> to vector<1x128xi32>
    %1053 = arith.sitofp %1052 : vector<1x128xi32> to vector<1x128xf32>
    %cst_375 = arith.constant 1.000000e+00 : f32
    %1054 = vector.broadcast %cst_375 : f32 to vector<1x128xf32>
    %1055 = arith.mulf %1053, %1054 : vector<1x128xf32>
    %c5_376 = arith.constant 5 : index
    %c0_377 = arith.constant 0 : index
    %1056 = vector.load %arg5[%c5_376, %c0_377] : memref<64x128xf32, #tpu.memory_space<vmem>>, vector<1x128xf32>
    tpu.vector_store %arg5[%c5_376, %c0_377], %1055 {strides = array<i32>} : memref<64x128xf32, #tpu.memory_space<vmem>>, vector<1x128xf32>,
    %1057 = vector.broadcast %1053 : vector<1x128xf32> to vector<16x128xf32>
    %1058 = arith.mulf %1057, %3 : vector<16x128xf32>
    %1059 = arith.addf %1046, %1058 : vector<16x128xf32>
    %1060 = vector.extract_strided_slice %1059 {offsets = [1, 0], sizes = [15, 128], strides = [1, 1]} : vector<16x128xf32> to vector<15x128xf32>
    %1061 = tpu.concatenate %1060, %4 in 0 : vector<15x128xf32>, vector<1x128xf32> -> vector<16x128xf32>
    %c6_378 = arith.constant 6 : index
    %c0_379 = arith.constant 0 : index
    %1062 = vector.load %arg6[%c6_378, %c0_379] : memref<64x128xf32, #tpu.memory_space<vmem>>, vector<1x128xf32>
    %1063 = vector.extract_strided_slice %1061 {offsets = [0, 0], sizes = [1, 128], strides = [1, 1]} : vector<16x128xf32> to vector<1x128xf32>
    %1064 = arith.addf %1062, %1063 : vector<1x128xf32>
    %cst_380 = arith.constant 1.000000e+01 : f32
    %1065 = vector.broadcast %cst_380 : f32 to vector<1x128xf32>
    %1066 = arith.cmpf oge, %1064, %1065 : vector<1x128xf32>
    %1067 = arith.extui %1066 : vector<1x128xi1> to vector<1x128xi32>
    %1068 = arith.sitofp %1067 : vector<1x128xi32> to vector<1x128xf32>
    %cst_381 = arith.constant 1.000000e+00 : f32
    %1069 = vector.broadcast %cst_381 : f32 to vector<1x128xf32>
    %1070 = arith.mulf %1068, %1069 : vector<1x128xf32>
    %c6_382 = arith.constant 6 : index
    %c0_383 = arith.constant 0 : index
    %1071 = vector.load %arg5[%c6_382, %c0_383] : memref<64x128xf32, #tpu.memory_space<vmem>>, vector<1x128xf32>
    tpu.vector_store %arg5[%c6_382, %c0_383], %1070 {strides = array<i32>} : memref<64x128xf32, #tpu.memory_space<vmem>>, vector<1x128xf32>,
    %1072 = vector.broadcast %1068 : vector<1x128xf32> to vector<16x128xf32>
    %1073 = arith.mulf %1072, %3 : vector<16x128xf32>
    %1074 = arith.addf %1061, %1073 : vector<16x128xf32>
    %1075 = vector.extract_strided_slice %1074 {offsets = [1, 0], sizes = [15, 128], strides = [1, 1]} : vector<16x128xf32> to vector<15x128xf32>
    %1076 = tpu.concatenate %1075, %4 in 0 : vector<15x128xf32>, vector<1x128xf32> -> vector<16x128xf32>
    %c7_384 = arith.constant 7 : index
    %c0_385 = arith.constant 0 : index
    %1077 = vector.load %arg6[%c7_384, %c0_385] : memref<64x128xf32, #tpu.memory_space<vmem>>, vector<1x128xf32>
    %1078 = vector.extract_strided_slice %1076 {offsets = [0, 0], sizes = [1, 128], strides = [1, 1]} : vector<16x128xf32> to vector<1x128xf32>
    %1079 = arith.addf %1077, %1078 : vector<1x128xf32>
    %cst_386 = arith.constant 1.000000e+01 : f32
    %1080 = vector.broadcast %cst_386 : f32 to vector<1x128xf32>
    %1081 = arith.cmpf oge, %1079, %1080 : vector<1x128xf32>
    %1082 = arith.extui %1081 : vector<1x128xi1> to vector<1x128xi32>
    %1083 = arith.sitofp %1082 : vector<1x128xi32> to vector<1x128xf32>
    %cst_387 = arith.constant 1.000000e+00 : f32
    %1084 = vector.broadcast %cst_387 : f32 to vector<1x128xf32>
    %1085 = arith.mulf %1083, %1084 : vector<1x128xf32>
    %c7_388 = arith.constant 7 : index
    %c0_389 = arith.constant 0 : index
    %1086 = vector.load %arg5[%c7_388, %c0_389] : memref<64x128xf32, #tpu.memory_space<vmem>>, vector<1x128xf32>
    tpu.vector_store %arg5[%c7_388, %c0_389], %1085 {strides = array<i32>} : memref<64x128xf32, #tpu.memory_space<vmem>>, vector<1x128xf32>,
    %1087 = vector.broadcast %1083 : vector<1x128xf32> to vector<16x128xf32>
    %1088 = arith.mulf %1087, %3 : vector<16x128xf32>
    %1089 = arith.addf %1076, %1088 : vector<16x128xf32>
    %1090 = vector.extract_strided_slice %1089 {offsets = [1, 0], sizes = [15, 128], strides = [1, 1]} : vector<16x128xf32> to vector<15x128xf32>
    %1091 = tpu.concatenate %1090, %4 in 0 : vector<15x128xf32>, vector<1x128xf32> -> vector<16x128xf32>
    %c8_390 = arith.constant 8 : index
    %c0_391 = arith.constant 0 : index
    %1092 = vector.load %arg6[%c8_390, %c0_391] : memref<64x128xf32, #tpu.memory_space<vmem>>, vector<1x128xf32>
    %1093 = vector.extract_strided_slice %1091 {offsets = [0, 0], sizes = [1, 128], strides = [1, 1]} : vector<16x128xf32> to vector<1x128xf32>
    %1094 = arith.addf %1092, %1093 : vector<1x128xf32>
    %cst_392 = arith.constant 1.000000e+01 : f32
    %1095 = vector.broadcast %cst_392 : f32 to vector<1x128xf32>
    %1096 = arith.cmpf oge, %1094, %1095 : vector<1x128xf32>
    %1097 = arith.extui %1096 : vector<1x128xi1> to vector<1x128xi32>
    %1098 = arith.sitofp %1097 : vector<1x128xi32> to vector<1x128xf32>
    %cst_393 = arith.constant 1.000000e+00 : f32
    %1099 = vector.broadcast %cst_393 : f32 to vector<1x128xf32>
    %1100 = arith.mulf %1098, %1099 : vector<1x128xf32>
    %c8_394 = arith.constant 8 : index
    %c0_395 = arith.constant 0 : index
    %1101 = vector.load %arg5[%c8_394, %c0_395] : memref<64x128xf32, #tpu.memory_space<vmem>>, vector<1x128xf32>
    tpu.vector_store %arg5[%c8_394, %c0_395], %1100 {strides = array<i32>} : memref<64x128xf32, #tpu.memory_space<vmem>>, vector<1x128xf32>,
    %1102 = vector.broadcast %1098 : vector<1x128xf32> to vector<16x128xf32>
    %1103 = arith.mulf %1102, %3 : vector<16x128xf32>
    %1104 = arith.addf %1091, %1103 : vector<16x128xf32>
    %1105 = vector.extract_strided_slice %1104 {offsets = [1, 0], sizes = [15, 128], strides = [1, 1]} : vector<16x128xf32> to vector<15x128xf32>
    %1106 = tpu.concatenate %1105, %4 in 0 : vector<15x128xf32>, vector<1x128xf32> -> vector<16x128xf32>
    %c9_396 = arith.constant 9 : index
    %c0_397 = arith.constant 0 : index
    %1107 = vector.load %arg6[%c9_396, %c0_397] : memref<64x128xf32, #tpu.memory_space<vmem>>, vector<1x128xf32>
    %1108 = vector.extract_strided_slice %1106 {offsets = [0, 0], sizes = [1, 128], strides = [1, 1]} : vector<16x128xf32> to vector<1x128xf32>
    %1109 = arith.addf %1107, %1108 : vector<1x128xf32>
    %cst_398 = arith.constant 1.000000e+01 : f32
    %1110 = vector.broadcast %cst_398 : f32 to vector<1x128xf32>
    %1111 = arith.cmpf oge, %1109, %1110 : vector<1x128xf32>
    %1112 = arith.extui %1111 : vector<1x128xi1> to vector<1x128xi32>
    %1113 = arith.sitofp %1112 : vector<1x128xi32> to vector<1x128xf32>
    %cst_399 = arith.constant 1.000000e+00 : f32
    %1114 = vector.broadcast %cst_399 : f32 to vector<1x128xf32>
    %1115 = arith.mulf %1113, %1114 : vector<1x128xf32>
    %c9_400 = arith.constant 9 : index
    %c0_401 = arith.constant 0 : index
    %1116 = vector.load %arg5[%c9_400, %c0_401] : memref<64x128xf32, #tpu.memory_space<vmem>>, vector<1x128xf32>
    tpu.vector_store %arg5[%c9_400, %c0_401], %1115 {strides = array<i32>} : memref<64x128xf32, #tpu.memory_space<vmem>>, vector<1x128xf32>,
    %1117 = vector.broadcast %1113 : vector<1x128xf32> to vector<16x128xf32>
    %1118 = arith.mulf %1117, %3 : vector<16x128xf32>
    %1119 = arith.addf %1106, %1118 : vector<16x128xf32>
    %1120 = vector.extract_strided_slice %1119 {offsets = [1, 0], sizes = [15, 128], strides = [1, 1]} : vector<16x128xf32> to vector<15x128xf32>
    %1121 = tpu.concatenate %1120, %4 in 0 : vector<15x128xf32>, vector<1x128xf32> -> vector<16x128xf32>
    %c10_402 = arith.constant 10 : index
    %c0_403 = arith.constant 0 : index
    %1122 = vector.load %arg6[%c10_402, %c0_403] : memref<64x128xf32, #tpu.memory_space<vmem>>, vector<1x128xf32>
    %1123 = vector.extract_strided_slice %1121 {offsets = [0, 0], sizes = [1, 128], strides = [1, 1]} : vector<16x128xf32> to vector<1x128xf32>
    %1124 = arith.addf %1122, %1123 : vector<1x128xf32>
    %cst_404 = arith.constant 1.000000e+01 : f32
    %1125 = vector.broadcast %cst_404 : f32 to vector<1x128xf32>
    %1126 = arith.cmpf oge, %1124, %1125 : vector<1x128xf32>
    %1127 = arith.extui %1126 : vector<1x128xi1> to vector<1x128xi32>
    %1128 = arith.sitofp %1127 : vector<1x128xi32> to vector<1x128xf32>
    %cst_405 = arith.constant 1.000000e+00 : f32
    %1129 = vector.broadcast %cst_405 : f32 to vector<1x128xf32>
    %1130 = arith.mulf %1128, %1129 : vector<1x128xf32>
    %c10_406 = arith.constant 10 : index
    %c0_407 = arith.constant 0 : index
    %1131 = vector.load %arg5[%c10_406, %c0_407] : memref<64x128xf32, #tpu.memory_space<vmem>>, vector<1x128xf32>
    tpu.vector_store %arg5[%c10_406, %c0_407], %1130 {strides = array<i32>} : memref<64x128xf32, #tpu.memory_space<vmem>>, vector<1x128xf32>,
    %1132 = vector.broadcast %1128 : vector<1x128xf32> to vector<16x128xf32>
    %1133 = arith.mulf %1132, %3 : vector<16x128xf32>
    %1134 = arith.addf %1121, %1133 : vector<16x128xf32>
    %1135 = vector.extract_strided_slice %1134 {offsets = [1, 0], sizes = [15, 128], strides = [1, 1]} : vector<16x128xf32> to vector<15x128xf32>
    %1136 = tpu.concatenate %1135, %4 in 0 : vector<15x128xf32>, vector<1x128xf32> -> vector<16x128xf32>
    %c11_408 = arith.constant 11 : index
    %c0_409 = arith.constant 0 : index
    %1137 = vector.load %arg6[%c11_408, %c0_409] : memref<64x128xf32, #tpu.memory_space<vmem>>, vector<1x128xf32>
    %1138 = vector.extract_strided_slice %1136 {offsets = [0, 0], sizes = [1, 128], strides = [1, 1]} : vector<16x128xf32> to vector<1x128xf32>
    %1139 = arith.addf %1137, %1138 : vector<1x128xf32>
    %cst_410 = arith.constant 1.000000e+01 : f32
    %1140 = vector.broadcast %cst_410 : f32 to vector<1x128xf32>
    %1141 = arith.cmpf oge, %1139, %1140 : vector<1x128xf32>
    %1142 = arith.extui %1141 : vector<1x128xi1> to vector<1x128xi32>
    %1143 = arith.sitofp %1142 : vector<1x128xi32> to vector<1x128xf32>
    %cst_411 = arith.constant 1.000000e+00 : f32
    %1144 = vector.broadcast %cst_411 : f32 to vector<1x128xf32>
    %1145 = arith.mulf %1143, %1144 : vector<1x128xf32>
    %c11_412 = arith.constant 11 : index
    %c0_413 = arith.constant 0 : index
    %1146 = vector.load %arg5[%c11_412, %c0_413] : memref<64x128xf32, #tpu.memory_space<vmem>>, vector<1x128xf32>
    tpu.vector_store %arg5[%c11_412, %c0_413], %1145 {strides = array<i32>} : memref<64x128xf32, #tpu.memory_space<vmem>>, vector<1x128xf32>,
    %1147 = vector.broadcast %1143 : vector<1x128xf32> to vector<16x128xf32>
    %1148 = arith.mulf %1147, %3 : vector<16x128xf32>
    %1149 = arith.addf %1136, %1148 : vector<16x128xf32>
    %1150 = vector.extract_strided_slice %1149 {offsets = [1, 0], sizes = [15, 128], strides = [1, 1]} : vector<16x128xf32> to vector<15x128xf32>
    %1151 = tpu.concatenate %1150, %4 in 0 : vector<15x128xf32>, vector<1x128xf32> -> vector<16x128xf32>
    %c12_414 = arith.constant 12 : index
    %c0_415 = arith.constant 0 : index
    %1152 = vector.load %arg6[%c12_414, %c0_415] : memref<64x128xf32, #tpu.memory_space<vmem>>, vector<1x128xf32>
    %1153 = vector.extract_strided_slice %1151 {offsets = [0, 0], sizes = [1, 128], strides = [1, 1]} : vector<16x128xf32> to vector<1x128xf32>
    %1154 = arith.addf %1152, %1153 : vector<1x128xf32>
    %cst_416 = arith.constant 1.000000e+01 : f32
    %1155 = vector.broadcast %cst_416 : f32 to vector<1x128xf32>
    %1156 = arith.cmpf oge, %1154, %1155 : vector<1x128xf32>
    %1157 = arith.extui %1156 : vector<1x128xi1> to vector<1x128xi32>
    %1158 = arith.sitofp %1157 : vector<1x128xi32> to vector<1x128xf32>
    %cst_417 = arith.constant 1.000000e+00 : f32
    %1159 = vector.broadcast %cst_417 : f32 to vector<1x128xf32>
    %1160 = arith.mulf %1158, %1159 : vector<1x128xf32>
    %c12_418 = arith.constant 12 : index
    %c0_419 = arith.constant 0 : index
    %1161 = vector.load %arg5[%c12_418, %c0_419] : memref<64x128xf32, #tpu.memory_space<vmem>>, vector<1x128xf32>
    tpu.vector_store %arg5[%c12_418, %c0_419], %1160 {strides = array<i32>} : memref<64x128xf32, #tpu.memory_space<vmem>>, vector<1x128xf32>,
    %1162 = vector.broadcast %1158 : vector<1x128xf32> to vector<16x128xf32>
    %1163 = arith.mulf %1162, %3 : vector<16x128xf32>
    %1164 = arith.addf %1151, %1163 : vector<16x128xf32>
    %1165 = vector.extract_strided_slice %1164 {offsets = [1, 0], sizes = [15, 128], strides = [1, 1]} : vector<16x128xf32> to vector<15x128xf32>
    %1166 = tpu.concatenate %1165, %4 in 0 : vector<15x128xf32>, vector<1x128xf32> -> vector<16x128xf32>
    %c13_420 = arith.constant 13 : index
    %c0_421 = arith.constant 0 : index
    %1167 = vector.load %arg6[%c13_420, %c0_421] : memref<64x128xf32, #tpu.memory_space<vmem>>, vector<1x128xf32>
    %1168 = vector.extract_strided_slice %1166 {offsets = [0, 0], sizes = [1, 128], strides = [1, 1]} : vector<16x128xf32> to vector<1x128xf32>
    %1169 = arith.addf %1167, %1168 : vector<1x128xf32>
    %cst_422 = arith.constant 1.000000e+01 : f32
    %1170 = vector.broadcast %cst_422 : f32 to vector<1x128xf32>
    %1171 = arith.cmpf oge, %1169, %1170 : vector<1x128xf32>
    %1172 = arith.extui %1171 : vector<1x128xi1> to vector<1x128xi32>
    %1173 = arith.sitofp %1172 : vector<1x128xi32> to vector<1x128xf32>
    %cst_423 = arith.constant 1.000000e+00 : f32
    %1174 = vector.broadcast %cst_423 : f32 to vector<1x128xf32>
    %1175 = arith.mulf %1173, %1174 : vector<1x128xf32>
    %c13_424 = arith.constant 13 : index
    %c0_425 = arith.constant 0 : index
    %1176 = vector.load %arg5[%c13_424, %c0_425] : memref<64x128xf32, #tpu.memory_space<vmem>>, vector<1x128xf32>
    tpu.vector_store %arg5[%c13_424, %c0_425], %1175 {strides = array<i32>} : memref<64x128xf32, #tpu.memory_space<vmem>>, vector<1x128xf32>,
    %1177 = vector.broadcast %1173 : vector<1x128xf32> to vector<16x128xf32>
    %1178 = arith.mulf %1177, %3 : vector<16x128xf32>
    %1179 = arith.addf %1166, %1178 : vector<16x128xf32>
    %1180 = vector.extract_strided_slice %1179 {offsets = [1, 0], sizes = [15, 128], strides = [1, 1]} : vector<16x128xf32> to vector<15x128xf32>
    %1181 = tpu.concatenate %1180, %4 in 0 : vector<15x128xf32>, vector<1x128xf32> -> vector<16x128xf32>
    %c14_426 = arith.constant 14 : index
    %c0_427 = arith.constant 0 : index
    %1182 = vector.load %arg6[%c14_426, %c0_427] : memref<64x128xf32, #tpu.memory_space<vmem>>, vector<1x128xf32>
    %1183 = vector.extract_strided_slice %1181 {offsets = [0, 0], sizes = [1, 128], strides = [1, 1]} : vector<16x128xf32> to vector<1x128xf32>
    %1184 = arith.addf %1182, %1183 : vector<1x128xf32>
    %cst_428 = arith.constant 1.000000e+01 : f32
    %1185 = vector.broadcast %cst_428 : f32 to vector<1x128xf32>
    %1186 = arith.cmpf oge, %1184, %1185 : vector<1x128xf32>
    %1187 = arith.extui %1186 : vector<1x128xi1> to vector<1x128xi32>
    %1188 = arith.sitofp %1187 : vector<1x128xi32> to vector<1x128xf32>
    %cst_429 = arith.constant 1.000000e+00 : f32
    %1189 = vector.broadcast %cst_429 : f32 to vector<1x128xf32>
    %1190 = arith.mulf %1188, %1189 : vector<1x128xf32>
    %c14_430 = arith.constant 14 : index
    %c0_431 = arith.constant 0 : index
    %1191 = vector.load %arg5[%c14_430, %c0_431] : memref<64x128xf32, #tpu.memory_space<vmem>>, vector<1x128xf32>
    tpu.vector_store %arg5[%c14_430, %c0_431], %1190 {strides = array<i32>} : memref<64x128xf32, #tpu.memory_space<vmem>>, vector<1x128xf32>,
    %1192 = vector.broadcast %1188 : vector<1x128xf32> to vector<16x128xf32>
    %1193 = arith.mulf %1192, %3 : vector<16x128xf32>
    %1194 = arith.addf %1181, %1193 : vector<16x128xf32>
    %1195 = vector.extract_strided_slice %1194 {offsets = [1, 0], sizes = [15, 128], strides = [1, 1]} : vector<16x128xf32> to vector<15x128xf32>
    %1196 = tpu.concatenate %1195, %4 in 0 : vector<15x128xf32>, vector<1x128xf32> -> vector<16x128xf32>
    %c15_432 = arith.constant 15 : index
    %c0_433 = arith.constant 0 : index
    %1197 = vector.load %arg6[%c15_432, %c0_433] : memref<64x128xf32, #tpu.memory_space<vmem>>, vector<1x128xf32>
    %1198 = vector.extract_strided_slice %1196 {offsets = [0, 0], sizes = [1, 128], strides = [1, 1]} : vector<16x128xf32> to vector<1x128xf32>
    %1199 = arith.addf %1197, %1198 : vector<1x128xf32>
    %cst_434 = arith.constant 1.000000e+01 : f32
    %1200 = vector.broadcast %cst_434 : f32 to vector<1x128xf32>
    %1201 = arith.cmpf oge, %1199, %1200 : vector<1x128xf32>
    %1202 = arith.extui %1201 : vector<1x128xi1> to vector<1x128xi32>
    %1203 = arith.sitofp %1202 : vector<1x128xi32> to vector<1x128xf32>
    %cst_435 = arith.constant 1.000000e+00 : f32
    %1204 = vector.broadcast %cst_435 : f32 to vector<1x128xf32>
    %1205 = arith.mulf %1203, %1204 : vector<1x128xf32>
    %c15_436 = arith.constant 15 : index
    %c0_437 = arith.constant 0 : index
    %1206 = vector.load %arg5[%c15_436, %c0_437] : memref<64x128xf32, #tpu.memory_space<vmem>>, vector<1x128xf32>
    tpu.vector_store %arg5[%c15_436, %c0_437], %1205 {strides = array<i32>} : memref<64x128xf32, #tpu.memory_space<vmem>>, vector<1x128xf32>,
    %1207 = vector.broadcast %1203 : vector<1x128xf32> to vector<16x128xf32>
    %1208 = arith.mulf %1207, %3 : vector<16x128xf32>
    %1209 = arith.addf %1196, %1208 : vector<16x128xf32>
    %1210 = vector.extract_strided_slice %1209 {offsets = [1, 0], sizes = [15, 128], strides = [1, 1]} : vector<16x128xf32> to vector<15x128xf32>
    %1211 = tpu.concatenate %1210, %4 in 0 : vector<15x128xf32>, vector<1x128xf32> -> vector<16x128xf32>
    %c16_438 = arith.constant 16 : index
    %c0_439 = arith.constant 0 : index
    %1212 = vector.load %arg6[%c16_438, %c0_439] : memref<64x128xf32, #tpu.memory_space<vmem>>, vector<1x128xf32>
    %1213 = vector.extract_strided_slice %1211 {offsets = [0, 0], sizes = [1, 128], strides = [1, 1]} : vector<16x128xf32> to vector<1x128xf32>
    %1214 = arith.addf %1212, %1213 : vector<1x128xf32>
    %cst_440 = arith.constant 1.000000e+01 : f32
    %1215 = vector.broadcast %cst_440 : f32 to vector<1x128xf32>
    %1216 = arith.cmpf oge, %1214, %1215 : vector<1x128xf32>
    %1217 = arith.extui %1216 : vector<1x128xi1> to vector<1x128xi32>
    %1218 = arith.sitofp %1217 : vector<1x128xi32> to vector<1x128xf32>
    %cst_441 = arith.constant 1.000000e+00 : f32
    %1219 = vector.broadcast %cst_441 : f32 to vector<1x128xf32>
    %1220 = arith.mulf %1218, %1219 : vector<1x128xf32>
    %c16_442 = arith.constant 16 : index
    %c0_443 = arith.constant 0 : index
    %1221 = vector.load %arg5[%c16_442, %c0_443] : memref<64x128xf32, #tpu.memory_space<vmem>>, vector<1x128xf32>
    tpu.vector_store %arg5[%c16_442, %c0_443], %1220 {strides = array<i32>} : memref<64x128xf32, #tpu.memory_space<vmem>>, vector<1x128xf32>,
    %1222 = vector.broadcast %1218 : vector<1x128xf32> to vector<16x128xf32>
    %1223 = arith.mulf %1222, %3 : vector<16x128xf32>
    %1224 = arith.addf %1211, %1223 : vector<16x128xf32>
    %1225 = vector.extract_strided_slice %1224 {offsets = [1, 0], sizes = [15, 128], strides = [1, 1]} : vector<16x128xf32> to vector<15x128xf32>
    %1226 = tpu.concatenate %1225, %4 in 0 : vector<15x128xf32>, vector<1x128xf32> -> vector<16x128xf32>
    %c17_444 = arith.constant 17 : index
    %c0_445 = arith.constant 0 : index
    %1227 = vector.load %arg6[%c17_444, %c0_445] : memref<64x128xf32, #tpu.memory_space<vmem>>, vector<1x128xf32>
    %1228 = vector.extract_strided_slice %1226 {offsets = [0, 0], sizes = [1, 128], strides = [1, 1]} : vector<16x128xf32> to vector<1x128xf32>
    %1229 = arith.addf %1227, %1228 : vector<1x128xf32>
    %cst_446 = arith.constant 1.000000e+01 : f32
    %1230 = vector.broadcast %cst_446 : f32 to vector<1x128xf32>
    %1231 = arith.cmpf oge, %1229, %1230 : vector<1x128xf32>
    %1232 = arith.extui %1231 : vector<1x128xi1> to vector<1x128xi32>
    %1233 = arith.sitofp %1232 : vector<1x128xi32> to vector<1x128xf32>
    %cst_447 = arith.constant 1.000000e+00 : f32
    %1234 = vector.broadcast %cst_447 : f32 to vector<1x128xf32>
    %1235 = arith.mulf %1233, %1234 : vector<1x128xf32>
    %c17_448 = arith.constant 17 : index
    %c0_449 = arith.constant 0 : index
    %1236 = vector.load %arg5[%c17_448, %c0_449] : memref<64x128xf32, #tpu.memory_space<vmem>>, vector<1x128xf32>
    tpu.vector_store %arg5[%c17_448, %c0_449], %1235 {strides = array<i32>} : memref<64x128xf32, #tpu.memory_space<vmem>>, vector<1x128xf32>,
    %1237 = vector.broadcast %1233 : vector<1x128xf32> to vector<16x128xf32>
    %1238 = arith.mulf %1237, %3 : vector<16x128xf32>
    %1239 = arith.addf %1226, %1238 : vector<16x128xf32>
    %1240 = vector.extract_strided_slice %1239 {offsets = [1, 0], sizes = [15, 128], strides = [1, 1]} : vector<16x128xf32> to vector<15x128xf32>
    %1241 = tpu.concatenate %1240, %4 in 0 : vector<15x128xf32>, vector<1x128xf32> -> vector<16x128xf32>
    %c18_450 = arith.constant 18 : index
    %c0_451 = arith.constant 0 : index
    %1242 = vector.load %arg6[%c18_450, %c0_451] : memref<64x128xf32, #tpu.memory_space<vmem>>, vector<1x128xf32>
    %1243 = vector.extract_strided_slice %1241 {offsets = [0, 0], sizes = [1, 128], strides = [1, 1]} : vector<16x128xf32> to vector<1x128xf32>
    %1244 = arith.addf %1242, %1243 : vector<1x128xf32>
    %cst_452 = arith.constant 1.000000e+01 : f32
    %1245 = vector.broadcast %cst_452 : f32 to vector<1x128xf32>
    %1246 = arith.cmpf oge, %1244, %1245 : vector<1x128xf32>
    %1247 = arith.extui %1246 : vector<1x128xi1> to vector<1x128xi32>
    %1248 = arith.sitofp %1247 : vector<1x128xi32> to vector<1x128xf32>
    %cst_453 = arith.constant 1.000000e+00 : f32
    %1249 = vector.broadcast %cst_453 : f32 to vector<1x128xf32>
    %1250 = arith.mulf %1248, %1249 : vector<1x128xf32>
    %c18_454 = arith.constant 18 : index
    %c0_455 = arith.constant 0 : index
    %1251 = vector.load %arg5[%c18_454, %c0_455] : memref<64x128xf32, #tpu.memory_space<vmem>>, vector<1x128xf32>
    tpu.vector_store %arg5[%c18_454, %c0_455], %1250 {strides = array<i32>} : memref<64x128xf32, #tpu.memory_space<vmem>>, vector<1x128xf32>,
    %1252 = vector.broadcast %1248 : vector<1x128xf32> to vector<16x128xf32>
    %1253 = arith.mulf %1252, %3 : vector<16x128xf32>
    %1254 = arith.addf %1241, %1253 : vector<16x128xf32>
    %1255 = vector.extract_strided_slice %1254 {offsets = [1, 0], sizes = [15, 128], strides = [1, 1]} : vector<16x128xf32> to vector<15x128xf32>
    %1256 = tpu.concatenate %1255, %4 in 0 : vector<15x128xf32>, vector<1x128xf32> -> vector<16x128xf32>
    %c19_456 = arith.constant 19 : index
    %c0_457 = arith.constant 0 : index
    %1257 = vector.load %arg6[%c19_456, %c0_457] : memref<64x128xf32, #tpu.memory_space<vmem>>, vector<1x128xf32>
    %1258 = vector.extract_strided_slice %1256 {offsets = [0, 0], sizes = [1, 128], strides = [1, 1]} : vector<16x128xf32> to vector<1x128xf32>
    %1259 = arith.addf %1257, %1258 : vector<1x128xf32>
    %cst_458 = arith.constant 1.000000e+01 : f32
    %1260 = vector.broadcast %cst_458 : f32 to vector<1x128xf32>
    %1261 = arith.cmpf oge, %1259, %1260 : vector<1x128xf32>
    %1262 = arith.extui %1261 : vector<1x128xi1> to vector<1x128xi32>
    %1263 = arith.sitofp %1262 : vector<1x128xi32> to vector<1x128xf32>
    %cst_459 = arith.constant 1.000000e+00 : f32
    %1264 = vector.broadcast %cst_459 : f32 to vector<1x128xf32>
    %1265 = arith.mulf %1263, %1264 : vector<1x128xf32>
    %c19_460 = arith.constant 19 : index
    %c0_461 = arith.constant 0 : index
    %1266 = vector.load %arg5[%c19_460, %c0_461] : memref<64x128xf32, #tpu.memory_space<vmem>>, vector<1x128xf32>
    tpu.vector_store %arg5[%c19_460, %c0_461], %1265 {strides = array<i32>} : memref<64x128xf32, #tpu.memory_space<vmem>>, vector<1x128xf32>,
    %1267 = vector.broadcast %1263 : vector<1x128xf32> to vector<16x128xf32>
    %1268 = arith.mulf %1267, %3 : vector<16x128xf32>
    %1269 = arith.addf %1256, %1268 : vector<16x128xf32>
    %1270 = vector.extract_strided_slice %1269 {offsets = [1, 0], sizes = [15, 128], strides = [1, 1]} : vector<16x128xf32> to vector<15x128xf32>
    %1271 = tpu.concatenate %1270, %4 in 0 : vector<15x128xf32>, vector<1x128xf32> -> vector<16x128xf32>
    %c20_462 = arith.constant 20 : index
    %c0_463 = arith.constant 0 : index
    %1272 = vector.load %arg6[%c20_462, %c0_463] : memref<64x128xf32, #tpu.memory_space<vmem>>, vector<1x128xf32>
    %1273 = vector.extract_strided_slice %1271 {offsets = [0, 0], sizes = [1, 128], strides = [1, 1]} : vector<16x128xf32> to vector<1x128xf32>
    %1274 = arith.addf %1272, %1273 : vector<1x128xf32>
    %cst_464 = arith.constant 1.000000e+01 : f32
    %1275 = vector.broadcast %cst_464 : f32 to vector<1x128xf32>
    %1276 = arith.cmpf oge, %1274, %1275 : vector<1x128xf32>
    %1277 = arith.extui %1276 : vector<1x128xi1> to vector<1x128xi32>
    %1278 = arith.sitofp %1277 : vector<1x128xi32> to vector<1x128xf32>
    %cst_465 = arith.constant 1.000000e+00 : f32
    %1279 = vector.broadcast %cst_465 : f32 to vector<1x128xf32>
    %1280 = arith.mulf %1278, %1279 : vector<1x128xf32>
    %c20_466 = arith.constant 20 : index
    %c0_467 = arith.constant 0 : index
    %1281 = vector.load %arg5[%c20_466, %c0_467] : memref<64x128xf32, #tpu.memory_space<vmem>>, vector<1x128xf32>
    tpu.vector_store %arg5[%c20_466, %c0_467], %1280 {strides = array<i32>} : memref<64x128xf32, #tpu.memory_space<vmem>>, vector<1x128xf32>,
    %1282 = vector.broadcast %1278 : vector<1x128xf32> to vector<16x128xf32>
    %1283 = arith.mulf %1282, %3 : vector<16x128xf32>
    %1284 = arith.addf %1271, %1283 : vector<16x128xf32>
    %1285 = vector.extract_strided_slice %1284 {offsets = [1, 0], sizes = [15, 128], strides = [1, 1]} : vector<16x128xf32> to vector<15x128xf32>
    %1286 = tpu.concatenate %1285, %4 in 0 : vector<15x128xf32>, vector<1x128xf32> -> vector<16x128xf32>
    %c21_468 = arith.constant 21 : index
    %c0_469 = arith.constant 0 : index
    %1287 = vector.load %arg6[%c21_468, %c0_469] : memref<64x128xf32, #tpu.memory_space<vmem>>, vector<1x128xf32>
    %1288 = vector.extract_strided_slice %1286 {offsets = [0, 0], sizes = [1, 128], strides = [1, 1]} : vector<16x128xf32> to vector<1x128xf32>
    %1289 = arith.addf %1287, %1288 : vector<1x128xf32>
    %cst_470 = arith.constant 1.000000e+01 : f32
    %1290 = vector.broadcast %cst_470 : f32 to vector<1x128xf32>
    %1291 = arith.cmpf oge, %1289, %1290 : vector<1x128xf32>
    %1292 = arith.extui %1291 : vector<1x128xi1> to vector<1x128xi32>
    %1293 = arith.sitofp %1292 : vector<1x128xi32> to vector<1x128xf32>
    %cst_471 = arith.constant 1.000000e+00 : f32
    %1294 = vector.broadcast %cst_471 : f32 to vector<1x128xf32>
    %1295 = arith.mulf %1293, %1294 : vector<1x128xf32>
    %c21_472 = arith.constant 21 : index
    %c0_473 = arith.constant 0 : index
    %1296 = vector.load %arg5[%c21_472, %c0_473] : memref<64x128xf32, #tpu.memory_space<vmem>>, vector<1x128xf32>
    tpu.vector_store %arg5[%c21_472, %c0_473], %1295 {strides = array<i32>} : memref<64x128xf32, #tpu.memory_space<vmem>>, vector<1x128xf32>,
    %1297 = vector.broadcast %1293 : vector<1x128xf32> to vector<16x128xf32>
    %1298 = arith.mulf %1297, %3 : vector<16x128xf32>
    %1299 = arith.addf %1286, %1298 : vector<16x128xf32>
    %1300 = vector.extract_strided_slice %1299 {offsets = [1, 0], sizes = [15, 128], strides = [1, 1]} : vector<16x128xf32> to vector<15x128xf32>
    %1301 = tpu.concatenate %1300, %4 in 0 : vector<15x128xf32>, vector<1x128xf32> -> vector<16x128xf32>
    %c22_474 = arith.constant 22 : index
    %c0_475 = arith.constant 0 : index
    %1302 = vector.load %arg6[%c22_474, %c0_475] : memref<64x128xf32, #tpu.memory_space<vmem>>, vector<1x128xf32>
    %1303 = vector.extract_strided_slice %1301 {offsets = [0, 0], sizes = [1, 128], strides = [1, 1]} : vector<16x128xf32> to vector<1x128xf32>
    %1304 = arith.addf %1302, %1303 : vector<1x128xf32>
    %cst_476 = arith.constant 1.000000e+01 : f32
    %1305 = vector.broadcast %cst_476 : f32 to vector<1x128xf32>
    %1306 = arith.cmpf oge, %1304, %1305 : vector<1x128xf32>
    %1307 = arith.extui %1306 : vector<1x128xi1> to vector<1x128xi32>
    %1308 = arith.sitofp %1307 : vector<1x128xi32> to vector<1x128xf32>
    %cst_477 = arith.constant 1.000000e+00 : f32
    %1309 = vector.broadcast %cst_477 : f32 to vector<1x128xf32>
    %1310 = arith.mulf %1308, %1309 : vector<1x128xf32>
    %c22_478 = arith.constant 22 : index
    %c0_479 = arith.constant 0 : index
    %1311 = vector.load %arg5[%c22_478, %c0_479] : memref<64x128xf32, #tpu.memory_space<vmem>>, vector<1x128xf32>
    tpu.vector_store %arg5[%c22_478, %c0_479], %1310 {strides = array<i32>} : memref<64x128xf32, #tpu.memory_space<vmem>>, vector<1x128xf32>,
    %1312 = vector.broadcast %1308 : vector<1x128xf32> to vector<16x128xf32>
    %1313 = arith.mulf %1312, %3 : vector<16x128xf32>
    %1314 = arith.addf %1301, %1313 : vector<16x128xf32>
    %1315 = vector.extract_strided_slice %1314 {offsets = [1, 0], sizes = [15, 128], strides = [1, 1]} : vector<16x128xf32> to vector<15x128xf32>
    %1316 = tpu.concatenate %1315, %4 in 0 : vector<15x128xf32>, vector<1x128xf32> -> vector<16x128xf32>
    %c23_480 = arith.constant 23 : index
    %c0_481 = arith.constant 0 : index
    %1317 = vector.load %arg6[%c23_480, %c0_481] : memref<64x128xf32, #tpu.memory_space<vmem>>, vector<1x128xf32>
    %1318 = vector.extract_strided_slice %1316 {offsets = [0, 0], sizes = [1, 128], strides = [1, 1]} : vector<16x128xf32> to vector<1x128xf32>
    %1319 = arith.addf %1317, %1318 : vector<1x128xf32>
    %cst_482 = arith.constant 1.000000e+01 : f32
    %1320 = vector.broadcast %cst_482 : f32 to vector<1x128xf32>
    %1321 = arith.cmpf oge, %1319, %1320 : vector<1x128xf32>
    %1322 = arith.extui %1321 : vector<1x128xi1> to vector<1x128xi32>
    %1323 = arith.sitofp %1322 : vector<1x128xi32> to vector<1x128xf32>
    %cst_483 = arith.constant 1.000000e+00 : f32
    %1324 = vector.broadcast %cst_483 : f32 to vector<1x128xf32>
    %1325 = arith.mulf %1323, %1324 : vector<1x128xf32>
    %c23_484 = arith.constant 23 : index
    %c0_485 = arith.constant 0 : index
    %1326 = vector.load %arg5[%c23_484, %c0_485] : memref<64x128xf32, #tpu.memory_space<vmem>>, vector<1x128xf32>
    tpu.vector_store %arg5[%c23_484, %c0_485], %1325 {strides = array<i32>} : memref<64x128xf32, #tpu.memory_space<vmem>>, vector<1x128xf32>,
    %1327 = vector.broadcast %1323 : vector<1x128xf32> to vector<16x128xf32>
    %1328 = arith.mulf %1327, %3 : vector<16x128xf32>
    %1329 = arith.addf %1316, %1328 : vector<16x128xf32>
    %1330 = vector.extract_strided_slice %1329 {offsets = [1, 0], sizes = [15, 128], strides = [1, 1]} : vector<16x128xf32> to vector<15x128xf32>
    %1331 = tpu.concatenate %1330, %4 in 0 : vector<15x128xf32>, vector<1x128xf32> -> vector<16x128xf32>
    %c24_486 = arith.constant 24 : index
    %c0_487 = arith.constant 0 : index
    %1332 = vector.load %arg6[%c24_486, %c0_487] : memref<64x128xf32, #tpu.memory_space<vmem>>, vector<1x128xf32>
    %1333 = vector.extract_strided_slice %1331 {offsets = [0, 0], sizes = [1, 128], strides = [1, 1]} : vector<16x128xf32> to vector<1x128xf32>
    %1334 = arith.addf %1332, %1333 : vector<1x128xf32>
    %cst_488 = arith.constant 1.000000e+01 : f32
    %1335 = vector.broadcast %cst_488 : f32 to vector<1x128xf32>
    %1336 = arith.cmpf oge, %1334, %1335 : vector<1x128xf32>
    %1337 = arith.extui %1336 : vector<1x128xi1> to vector<1x128xi32>
    %1338 = arith.sitofp %1337 : vector<1x128xi32> to vector<1x128xf32>
    %cst_489 = arith.constant 1.000000e+00 : f32
    %1339 = vector.broadcast %cst_489 : f32 to vector<1x128xf32>
    %1340 = arith.mulf %1338, %1339 : vector<1x128xf32>
    %c24_490 = arith.constant 24 : index
    %c0_491 = arith.constant 0 : index
    %1341 = vector.load %arg5[%c24_490, %c0_491] : memref<64x128xf32, #tpu.memory_space<vmem>>, vector<1x128xf32>
    tpu.vector_store %arg5[%c24_490, %c0_491], %1340 {strides = array<i32>} : memref<64x128xf32, #tpu.memory_space<vmem>>, vector<1x128xf32>,
    %1342 = vector.broadcast %1338 : vector<1x128xf32> to vector<16x128xf32>
    %1343 = arith.mulf %1342, %3 : vector<16x128xf32>
    %1344 = arith.addf %1331, %1343 : vector<16x128xf32>
    %1345 = vector.extract_strided_slice %1344 {offsets = [1, 0], sizes = [15, 128], strides = [1, 1]} : vector<16x128xf32> to vector<15x128xf32>
    %1346 = tpu.concatenate %1345, %4 in 0 : vector<15x128xf32>, vector<1x128xf32> -> vector<16x128xf32>
    %c25_492 = arith.constant 25 : index
    %c0_493 = arith.constant 0 : index
    %1347 = vector.load %arg6[%c25_492, %c0_493] : memref<64x128xf32, #tpu.memory_space<vmem>>, vector<1x128xf32>
    %1348 = vector.extract_strided_slice %1346 {offsets = [0, 0], sizes = [1, 128], strides = [1, 1]} : vector<16x128xf32> to vector<1x128xf32>
    %1349 = arith.addf %1347, %1348 : vector<1x128xf32>
    %cst_494 = arith.constant 1.000000e+01 : f32
    %1350 = vector.broadcast %cst_494 : f32 to vector<1x128xf32>
    %1351 = arith.cmpf oge, %1349, %1350 : vector<1x128xf32>
    %1352 = arith.extui %1351 : vector<1x128xi1> to vector<1x128xi32>
    %1353 = arith.sitofp %1352 : vector<1x128xi32> to vector<1x128xf32>
    %cst_495 = arith.constant 1.000000e+00 : f32
    %1354 = vector.broadcast %cst_495 : f32 to vector<1x128xf32>
    %1355 = arith.mulf %1353, %1354 : vector<1x128xf32>
    %c25_496 = arith.constant 25 : index
    %c0_497 = arith.constant 0 : index
    %1356 = vector.load %arg5[%c25_496, %c0_497] : memref<64x128xf32, #tpu.memory_space<vmem>>, vector<1x128xf32>
    tpu.vector_store %arg5[%c25_496, %c0_497], %1355 {strides = array<i32>} : memref<64x128xf32, #tpu.memory_space<vmem>>, vector<1x128xf32>,
    %1357 = vector.broadcast %1353 : vector<1x128xf32> to vector<16x128xf32>
    %1358 = arith.mulf %1357, %3 : vector<16x128xf32>
    %1359 = arith.addf %1346, %1358 : vector<16x128xf32>
    %1360 = vector.extract_strided_slice %1359 {offsets = [1, 0], sizes = [15, 128], strides = [1, 1]} : vector<16x128xf32> to vector<15x128xf32>
    %1361 = tpu.concatenate %1360, %4 in 0 : vector<15x128xf32>, vector<1x128xf32> -> vector<16x128xf32>
    %c26_498 = arith.constant 26 : index
    %c0_499 = arith.constant 0 : index
    %1362 = vector.load %arg6[%c26_498, %c0_499] : memref<64x128xf32, #tpu.memory_space<vmem>>, vector<1x128xf32>
    %1363 = vector.extract_strided_slice %1361 {offsets = [0, 0], sizes = [1, 128], strides = [1, 1]} : vector<16x128xf32> to vector<1x128xf32>
    %1364 = arith.addf %1362, %1363 : vector<1x128xf32>
    %cst_500 = arith.constant 1.000000e+01 : f32
    %1365 = vector.broadcast %cst_500 : f32 to vector<1x128xf32>
    %1366 = arith.cmpf oge, %1364, %1365 : vector<1x128xf32>
    %1367 = arith.extui %1366 : vector<1x128xi1> to vector<1x128xi32>
    %1368 = arith.sitofp %1367 : vector<1x128xi32> to vector<1x128xf32>
    %cst_501 = arith.constant 1.000000e+00 : f32
    %1369 = vector.broadcast %cst_501 : f32 to vector<1x128xf32>
    %1370 = arith.mulf %1368, %1369 : vector<1x128xf32>
    %c26_502 = arith.constant 26 : index
    %c0_503 = arith.constant 0 : index
    %1371 = vector.load %arg5[%c26_502, %c0_503] : memref<64x128xf32, #tpu.memory_space<vmem>>, vector<1x128xf32>
    tpu.vector_store %arg5[%c26_502, %c0_503], %1370 {strides = array<i32>} : memref<64x128xf32, #tpu.memory_space<vmem>>, vector<1x128xf32>,
    %1372 = vector.broadcast %1368 : vector<1x128xf32> to vector<16x128xf32>
    %1373 = arith.mulf %1372, %3 : vector<16x128xf32>
    %1374 = arith.addf %1361, %1373 : vector<16x128xf32>
    %1375 = vector.extract_strided_slice %1374 {offsets = [1, 0], sizes = [15, 128], strides = [1, 1]} : vector<16x128xf32> to vector<15x128xf32>
    %1376 = tpu.concatenate %1375, %4 in 0 : vector<15x128xf32>, vector<1x128xf32> -> vector<16x128xf32>
    %c27_504 = arith.constant 27 : index
    %c0_505 = arith.constant 0 : index
    %1377 = vector.load %arg6[%c27_504, %c0_505] : memref<64x128xf32, #tpu.memory_space<vmem>>, vector<1x128xf32>
    %1378 = vector.extract_strided_slice %1376 {offsets = [0, 0], sizes = [1, 128], strides = [1, 1]} : vector<16x128xf32> to vector<1x128xf32>
    %1379 = arith.addf %1377, %1378 : vector<1x128xf32>
    %cst_506 = arith.constant 1.000000e+01 : f32
    %1380 = vector.broadcast %cst_506 : f32 to vector<1x128xf32>
    %1381 = arith.cmpf oge, %1379, %1380 : vector<1x128xf32>
    %1382 = arith.extui %1381 : vector<1x128xi1> to vector<1x128xi32>
    %1383 = arith.sitofp %1382 : vector<1x128xi32> to vector<1x128xf32>
    %cst_507 = arith.constant 1.000000e+00 : f32
    %1384 = vector.broadcast %cst_507 : f32 to vector<1x128xf32>
    %1385 = arith.mulf %1383, %1384 : vector<1x128xf32>
    %c27_508 = arith.constant 27 : index
    %c0_509 = arith.constant 0 : index
    %1386 = vector.load %arg5[%c27_508, %c0_509] : memref<64x128xf32, #tpu.memory_space<vmem>>, vector<1x128xf32>
    tpu.vector_store %arg5[%c27_508, %c0_509], %1385 {strides = array<i32>} : memref<64x128xf32, #tpu.memory_space<vmem>>, vector<1x128xf32>,
    %1387 = vector.broadcast %1383 : vector<1x128xf32> to vector<16x128xf32>
    %1388 = arith.mulf %1387, %3 : vector<16x128xf32>
    %1389 = arith.addf %1376, %1388 : vector<16x128xf32>
    %1390 = vector.extract_strided_slice %1389 {offsets = [1, 0], sizes = [15, 128], strides = [1, 1]} : vector<16x128xf32> to vector<15x128xf32>
    %1391 = tpu.concatenate %1390, %4 in 0 : vector<15x128xf32>, vector<1x128xf32> -> vector<16x128xf32>
    %c28_510 = arith.constant 28 : index
    %c0_511 = arith.constant 0 : index
    %1392 = vector.load %arg6[%c28_510, %c0_511] : memref<64x128xf32, #tpu.memory_space<vmem>>, vector<1x128xf32>
    %1393 = vector.extract_strided_slice %1391 {offsets = [0, 0], sizes = [1, 128], strides = [1, 1]} : vector<16x128xf32> to vector<1x128xf32>
    %1394 = arith.addf %1392, %1393 : vector<1x128xf32>
    %cst_512 = arith.constant 1.000000e+01 : f32
    %1395 = vector.broadcast %cst_512 : f32 to vector<1x128xf32>
    %1396 = arith.cmpf oge, %1394, %1395 : vector<1x128xf32>
    %1397 = arith.extui %1396 : vector<1x128xi1> to vector<1x128xi32>
    %1398 = arith.sitofp %1397 : vector<1x128xi32> to vector<1x128xf32>
    %cst_513 = arith.constant 1.000000e+00 : f32
    %1399 = vector.broadcast %cst_513 : f32 to vector<1x128xf32>
    %1400 = arith.mulf %1398, %1399 : vector<1x128xf32>
    %c28_514 = arith.constant 28 : index
    %c0_515 = arith.constant 0 : index
    %1401 = vector.load %arg5[%c28_514, %c0_515] : memref<64x128xf32, #tpu.memory_space<vmem>>, vector<1x128xf32>
    tpu.vector_store %arg5[%c28_514, %c0_515], %1400 {strides = array<i32>} : memref<64x128xf32, #tpu.memory_space<vmem>>, vector<1x128xf32>,
    %1402 = vector.broadcast %1398 : vector<1x128xf32> to vector<16x128xf32>
    %1403 = arith.mulf %1402, %3 : vector<16x128xf32>
    %1404 = arith.addf %1391, %1403 : vector<16x128xf32>
    %1405 = vector.extract_strided_slice %1404 {offsets = [1, 0], sizes = [15, 128], strides = [1, 1]} : vector<16x128xf32> to vector<15x128xf32>
    %1406 = tpu.concatenate %1405, %4 in 0 : vector<15x128xf32>, vector<1x128xf32> -> vector<16x128xf32>
    %c29_516 = arith.constant 29 : index
    %c0_517 = arith.constant 0 : index
    %1407 = vector.load %arg6[%c29_516, %c0_517] : memref<64x128xf32, #tpu.memory_space<vmem>>, vector<1x128xf32>
    %1408 = vector.extract_strided_slice %1406 {offsets = [0, 0], sizes = [1, 128], strides = [1, 1]} : vector<16x128xf32> to vector<1x128xf32>
    %1409 = arith.addf %1407, %1408 : vector<1x128xf32>
    %cst_518 = arith.constant 1.000000e+01 : f32
    %1410 = vector.broadcast %cst_518 : f32 to vector<1x128xf32>
    %1411 = arith.cmpf oge, %1409, %1410 : vector<1x128xf32>
    %1412 = arith.extui %1411 : vector<1x128xi1> to vector<1x128xi32>
    %1413 = arith.sitofp %1412 : vector<1x128xi32> to vector<1x128xf32>
    %cst_519 = arith.constant 1.000000e+00 : f32
    %1414 = vector.broadcast %cst_519 : f32 to vector<1x128xf32>
    %1415 = arith.mulf %1413, %1414 : vector<1x128xf32>
    %c29_520 = arith.constant 29 : index
    %c0_521 = arith.constant 0 : index
    %1416 = vector.load %arg5[%c29_520, %c0_521] : memref<64x128xf32, #tpu.memory_space<vmem>>, vector<1x128xf32>
    tpu.vector_store %arg5[%c29_520, %c0_521], %1415 {strides = array<i32>} : memref<64x128xf32, #tpu.memory_space<vmem>>, vector<1x128xf32>,
    %1417 = vector.broadcast %1413 : vector<1x128xf32> to vector<16x128xf32>
    %1418 = arith.mulf %1417, %3 : vector<16x128xf32>
    %1419 = arith.addf %1406, %1418 : vector<16x128xf32>
    %1420 = vector.extract_strided_slice %1419 {offsets = [1, 0], sizes = [15, 128], strides = [1, 1]} : vector<16x128xf32> to vector<15x128xf32>
    %1421 = tpu.concatenate %1420, %4 in 0 : vector<15x128xf32>, vector<1x128xf32> -> vector<16x128xf32>
    %c30_522 = arith.constant 30 : index
    %c0_523 = arith.constant 0 : index
    %1422 = vector.load %arg6[%c30_522, %c0_523] : memref<64x128xf32, #tpu.memory_space<vmem>>, vector<1x128xf32>
    %1423 = vector.extract_strided_slice %1421 {offsets = [0, 0], sizes = [1, 128], strides = [1, 1]} : vector<16x128xf32> to vector<1x128xf32>
    %1424 = arith.addf %1422, %1423 : vector<1x128xf32>
    %cst_524 = arith.constant 1.000000e+01 : f32
    %1425 = vector.broadcast %cst_524 : f32 to vector<1x128xf32>
    %1426 = arith.cmpf oge, %1424, %1425 : vector<1x128xf32>
    %1427 = arith.extui %1426 : vector<1x128xi1> to vector<1x128xi32>
    %1428 = arith.sitofp %1427 : vector<1x128xi32> to vector<1x128xf32>
    %cst_525 = arith.constant 1.000000e+00 : f32
    %1429 = vector.broadcast %cst_525 : f32 to vector<1x128xf32>
    %1430 = arith.mulf %1428, %1429 : vector<1x128xf32>
    %c30_526 = arith.constant 30 : index
    %c0_527 = arith.constant 0 : index
    %1431 = vector.load %arg5[%c30_526, %c0_527] : memref<64x128xf32, #tpu.memory_space<vmem>>, vector<1x128xf32>
    tpu.vector_store %arg5[%c30_526, %c0_527], %1430 {strides = array<i32>} : memref<64x128xf32, #tpu.memory_space<vmem>>, vector<1x128xf32>,
    %1432 = vector.broadcast %1428 : vector<1x128xf32> to vector<16x128xf32>
    %1433 = arith.mulf %1432, %3 : vector<16x128xf32>
    %1434 = arith.addf %1421, %1433 : vector<16x128xf32>
    %1435 = vector.extract_strided_slice %1434 {offsets = [1, 0], sizes = [15, 128], strides = [1, 1]} : vector<16x128xf32> to vector<15x128xf32>
    %1436 = tpu.concatenate %1435, %4 in 0 : vector<15x128xf32>, vector<1x128xf32> -> vector<16x128xf32>
    %c31_528 = arith.constant 31 : index
    %c0_529 = arith.constant 0 : index
    %1437 = vector.load %arg6[%c31_528, %c0_529] : memref<64x128xf32, #tpu.memory_space<vmem>>, vector<1x128xf32>
    %1438 = vector.extract_strided_slice %1436 {offsets = [0, 0], sizes = [1, 128], strides = [1, 1]} : vector<16x128xf32> to vector<1x128xf32>
    %1439 = arith.addf %1437, %1438 : vector<1x128xf32>
    %cst_530 = arith.constant 1.000000e+01 : f32
    %1440 = vector.broadcast %cst_530 : f32 to vector<1x128xf32>
    %1441 = arith.cmpf oge, %1439, %1440 : vector<1x128xf32>
    %1442 = arith.extui %1441 : vector<1x128xi1> to vector<1x128xi32>
    %1443 = arith.sitofp %1442 : vector<1x128xi32> to vector<1x128xf32>
    %cst_531 = arith.constant 1.000000e+00 : f32
    %1444 = vector.broadcast %cst_531 : f32 to vector<1x128xf32>
    %1445 = arith.mulf %1443, %1444 : vector<1x128xf32>
    %c31_532 = arith.constant 31 : index
    %c0_533 = arith.constant 0 : index
    %1446 = vector.load %arg5[%c31_532, %c0_533] : memref<64x128xf32, #tpu.memory_space<vmem>>, vector<1x128xf32>
    tpu.vector_store %arg5[%c31_532, %c0_533], %1445 {strides = array<i32>} : memref<64x128xf32, #tpu.memory_space<vmem>>, vector<1x128xf32>,
    %1447 = vector.broadcast %1443 : vector<1x128xf32> to vector<16x128xf32>
    %1448 = arith.mulf %1447, %3 : vector<16x128xf32>
    %1449 = arith.addf %1436, %1448 : vector<16x128xf32>
    %1450 = vector.extract_strided_slice %1449 {offsets = [1, 0], sizes = [15, 128], strides = [1, 1]} : vector<16x128xf32> to vector<15x128xf32>
    %1451 = tpu.concatenate %1450, %4 in 0 : vector<15x128xf32>, vector<1x128xf32> -> vector<16x128xf32>
    %c32_534 = arith.constant 32 : index
    %c0_535 = arith.constant 0 : index
    %1452 = vector.load %arg6[%c32_534, %c0_535] : memref<64x128xf32, #tpu.memory_space<vmem>>, vector<1x128xf32>
    %1453 = vector.extract_strided_slice %1451 {offsets = [0, 0], sizes = [1, 128], strides = [1, 1]} : vector<16x128xf32> to vector<1x128xf32>
    %1454 = arith.addf %1452, %1453 : vector<1x128xf32>
    %cst_536 = arith.constant 1.000000e+01 : f32
    %1455 = vector.broadcast %cst_536 : f32 to vector<1x128xf32>
    %1456 = arith.cmpf oge, %1454, %1455 : vector<1x128xf32>
    %1457 = arith.extui %1456 : vector<1x128xi1> to vector<1x128xi32>
    %1458 = arith.sitofp %1457 : vector<1x128xi32> to vector<1x128xf32>
    %cst_537 = arith.constant 1.000000e+00 : f32
    %1459 = vector.broadcast %cst_537 : f32 to vector<1x128xf32>
    %1460 = arith.mulf %1458, %1459 : vector<1x128xf32>
    %c32_538 = arith.constant 32 : index
    %c0_539 = arith.constant 0 : index
    %1461 = vector.load %arg5[%c32_538, %c0_539] : memref<64x128xf32, #tpu.memory_space<vmem>>, vector<1x128xf32>
    tpu.vector_store %arg5[%c32_538, %c0_539], %1460 {strides = array<i32>} : memref<64x128xf32, #tpu.memory_space<vmem>>, vector<1x128xf32>,
    %1462 = vector.broadcast %1458 : vector<1x128xf32> to vector<16x128xf32>
    %1463 = arith.mulf %1462, %3 : vector<16x128xf32>
    %1464 = arith.addf %1451, %1463 : vector<16x128xf32>
    %1465 = vector.extract_strided_slice %1464 {offsets = [1, 0], sizes = [15, 128], strides = [1, 1]} : vector<16x128xf32> to vector<15x128xf32>
    %1466 = tpu.concatenate %1465, %4 in 0 : vector<15x128xf32>, vector<1x128xf32> -> vector<16x128xf32>
    %c33_540 = arith.constant 33 : index
    %c0_541 = arith.constant 0 : index
    %1467 = vector.load %arg6[%c33_540, %c0_541] : memref<64x128xf32, #tpu.memory_space<vmem>>, vector<1x128xf32>
    %1468 = vector.extract_strided_slice %1466 {offsets = [0, 0], sizes = [1, 128], strides = [1, 1]} : vector<16x128xf32> to vector<1x128xf32>
    %1469 = arith.addf %1467, %1468 : vector<1x128xf32>
    %cst_542 = arith.constant 1.000000e+01 : f32
    %1470 = vector.broadcast %cst_542 : f32 to vector<1x128xf32>
    %1471 = arith.cmpf oge, %1469, %1470 : vector<1x128xf32>
    %1472 = arith.extui %1471 : vector<1x128xi1> to vector<1x128xi32>
    %1473 = arith.sitofp %1472 : vector<1x128xi32> to vector<1x128xf32>
    %cst_543 = arith.constant 1.000000e+00 : f32
    %1474 = vector.broadcast %cst_543 : f32 to vector<1x128xf32>
    %1475 = arith.mulf %1473, %1474 : vector<1x128xf32>
    %c33_544 = arith.constant 33 : index
    %c0_545 = arith.constant 0 : index
    %1476 = vector.load %arg5[%c33_544, %c0_545] : memref<64x128xf32, #tpu.memory_space<vmem>>, vector<1x128xf32>
    tpu.vector_store %arg5[%c33_544, %c0_545], %1475 {strides = array<i32>} : memref<64x128xf32, #tpu.memory_space<vmem>>, vector<1x128xf32>,
    %1477 = vector.broadcast %1473 : vector<1x128xf32> to vector<16x128xf32>
    %1478 = arith.mulf %1477, %3 : vector<16x128xf32>
    %1479 = arith.addf %1466, %1478 : vector<16x128xf32>
    %1480 = vector.extract_strided_slice %1479 {offsets = [1, 0], sizes = [15, 128], strides = [1, 1]} : vector<16x128xf32> to vector<15x128xf32>
    %1481 = tpu.concatenate %1480, %4 in 0 : vector<15x128xf32>, vector<1x128xf32> -> vector<16x128xf32>
    %c34_546 = arith.constant 34 : index
    %c0_547 = arith.constant 0 : index
    %1482 = vector.load %arg6[%c34_546, %c0_547] : memref<64x128xf32, #tpu.memory_space<vmem>>, vector<1x128xf32>
    %1483 = vector.extract_strided_slice %1481 {offsets = [0, 0], sizes = [1, 128], strides = [1, 1]} : vector<16x128xf32> to vector<1x128xf32>
    %1484 = arith.addf %1482, %1483 : vector<1x128xf32>
    %cst_548 = arith.constant 1.000000e+01 : f32
    %1485 = vector.broadcast %cst_548 : f32 to vector<1x128xf32>
    %1486 = arith.cmpf oge, %1484, %1485 : vector<1x128xf32>
    %1487 = arith.extui %1486 : vector<1x128xi1> to vector<1x128xi32>
    %1488 = arith.sitofp %1487 : vector<1x128xi32> to vector<1x128xf32>
    %cst_549 = arith.constant 1.000000e+00 : f32
    %1489 = vector.broadcast %cst_549 : f32 to vector<1x128xf32>
    %1490 = arith.mulf %1488, %1489 : vector<1x128xf32>
    %c34_550 = arith.constant 34 : index
    %c0_551 = arith.constant 0 : index
    %1491 = vector.load %arg5[%c34_550, %c0_551] : memref<64x128xf32, #tpu.memory_space<vmem>>, vector<1x128xf32>
    tpu.vector_store %arg5[%c34_550, %c0_551], %1490 {strides = array<i32>} : memref<64x128xf32, #tpu.memory_space<vmem>>, vector<1x128xf32>,
    %1492 = vector.broadcast %1488 : vector<1x128xf32> to vector<16x128xf32>
    %1493 = arith.mulf %1492, %3 : vector<16x128xf32>
    %1494 = arith.addf %1481, %1493 : vector<16x128xf32>
    %1495 = vector.extract_strided_slice %1494 {offsets = [1, 0], sizes = [15, 128], strides = [1, 1]} : vector<16x128xf32> to vector<15x128xf32>
    %1496 = tpu.concatenate %1495, %4 in 0 : vector<15x128xf32>, vector<1x128xf32> -> vector<16x128xf32>
    %c35_552 = arith.constant 35 : index
    %c0_553 = arith.constant 0 : index
    %1497 = vector.load %arg6[%c35_552, %c0_553] : memref<64x128xf32, #tpu.memory_space<vmem>>, vector<1x128xf32>
    %1498 = vector.extract_strided_slice %1496 {offsets = [0, 0], sizes = [1, 128], strides = [1, 1]} : vector<16x128xf32> to vector<1x128xf32>
    %1499 = arith.addf %1497, %1498 : vector<1x128xf32>
    %cst_554 = arith.constant 1.000000e+01 : f32
    %1500 = vector.broadcast %cst_554 : f32 to vector<1x128xf32>
    %1501 = arith.cmpf oge, %1499, %1500 : vector<1x128xf32>
    %1502 = arith.extui %1501 : vector<1x128xi1> to vector<1x128xi32>
    %1503 = arith.sitofp %1502 : vector<1x128xi32> to vector<1x128xf32>
    %cst_555 = arith.constant 1.000000e+00 : f32
    %1504 = vector.broadcast %cst_555 : f32 to vector<1x128xf32>
    %1505 = arith.mulf %1503, %1504 : vector<1x128xf32>
    %c35_556 = arith.constant 35 : index
    %c0_557 = arith.constant 0 : index
    %1506 = vector.load %arg5[%c35_556, %c0_557] : memref<64x128xf32, #tpu.memory_space<vmem>>, vector<1x128xf32>
    tpu.vector_store %arg5[%c35_556, %c0_557], %1505 {strides = array<i32>} : memref<64x128xf32, #tpu.memory_space<vmem>>, vector<1x128xf32>,
    %1507 = vector.broadcast %1503 : vector<1x128xf32> to vector<16x128xf32>
    %1508 = arith.mulf %1507, %3 : vector<16x128xf32>
    %1509 = arith.addf %1496, %1508 : vector<16x128xf32>
    %1510 = vector.extract_strided_slice %1509 {offsets = [1, 0], sizes = [15, 128], strides = [1, 1]} : vector<16x128xf32> to vector<15x128xf32>
    %1511 = tpu.concatenate %1510, %4 in 0 : vector<15x128xf32>, vector<1x128xf32> -> vector<16x128xf32>
    %c36_558 = arith.constant 36 : index
    %c0_559 = arith.constant 0 : index
    %1512 = vector.load %arg6[%c36_558, %c0_559] : memref<64x128xf32, #tpu.memory_space<vmem>>, vector<1x128xf32>
    %1513 = vector.extract_strided_slice %1511 {offsets = [0, 0], sizes = [1, 128], strides = [1, 1]} : vector<16x128xf32> to vector<1x128xf32>
    %1514 = arith.addf %1512, %1513 : vector<1x128xf32>
    %cst_560 = arith.constant 1.000000e+01 : f32
    %1515 = vector.broadcast %cst_560 : f32 to vector<1x128xf32>
    %1516 = arith.cmpf oge, %1514, %1515 : vector<1x128xf32>
    %1517 = arith.extui %1516 : vector<1x128xi1> to vector<1x128xi32>
    %1518 = arith.sitofp %1517 : vector<1x128xi32> to vector<1x128xf32>
    %cst_561 = arith.constant 1.000000e+00 : f32
    %1519 = vector.broadcast %cst_561 : f32 to vector<1x128xf32>
    %1520 = arith.mulf %1518, %1519 : vector<1x128xf32>
    %c36_562 = arith.constant 36 : index
    %c0_563 = arith.constant 0 : index
    %1521 = vector.load %arg5[%c36_562, %c0_563] : memref<64x128xf32, #tpu.memory_space<vmem>>, vector<1x128xf32>
    tpu.vector_store %arg5[%c36_562, %c0_563], %1520 {strides = array<i32>} : memref<64x128xf32, #tpu.memory_space<vmem>>, vector<1x128xf32>,
    %1522 = vector.broadcast %1518 : vector<1x128xf32> to vector<16x128xf32>
    %1523 = arith.mulf %1522, %3 : vector<16x128xf32>
    %1524 = arith.addf %1511, %1523 : vector<16x128xf32>
    %1525 = vector.extract_strided_slice %1524 {offsets = [1, 0], sizes = [15, 128], strides = [1, 1]} : vector<16x128xf32> to vector<15x128xf32>
    %1526 = tpu.concatenate %1525, %4 in 0 : vector<15x128xf32>, vector<1x128xf32> -> vector<16x128xf32>
    %c37_564 = arith.constant 37 : index
    %c0_565 = arith.constant 0 : index
    %1527 = vector.load %arg6[%c37_564, %c0_565] : memref<64x128xf32, #tpu.memory_space<vmem>>, vector<1x128xf32>
    %1528 = vector.extract_strided_slice %1526 {offsets = [0, 0], sizes = [1, 128], strides = [1, 1]} : vector<16x128xf32> to vector<1x128xf32>
    %1529 = arith.addf %1527, %1528 : vector<1x128xf32>
    %cst_566 = arith.constant 1.000000e+01 : f32
    %1530 = vector.broadcast %cst_566 : f32 to vector<1x128xf32>
    %1531 = arith.cmpf oge, %1529, %1530 : vector<1x128xf32>
    %1532 = arith.extui %1531 : vector<1x128xi1> to vector<1x128xi32>
    %1533 = arith.sitofp %1532 : vector<1x128xi32> to vector<1x128xf32>
    %cst_567 = arith.constant 1.000000e+00 : f32
    %1534 = vector.broadcast %cst_567 : f32 to vector<1x128xf32>
    %1535 = arith.mulf %1533, %1534 : vector<1x128xf32>
    %c37_568 = arith.constant 37 : index
    %c0_569 = arith.constant 0 : index
    %1536 = vector.load %arg5[%c37_568, %c0_569] : memref<64x128xf32, #tpu.memory_space<vmem>>, vector<1x128xf32>
    tpu.vector_store %arg5[%c37_568, %c0_569], %1535 {strides = array<i32>} : memref<64x128xf32, #tpu.memory_space<vmem>>, vector<1x128xf32>,
    %1537 = vector.broadcast %1533 : vector<1x128xf32> to vector<16x128xf32>
    %1538 = arith.mulf %1537, %3 : vector<16x128xf32>
    %1539 = arith.addf %1526, %1538 : vector<16x128xf32>
    %1540 = vector.extract_strided_slice %1539 {offsets = [1, 0], sizes = [15, 128], strides = [1, 1]} : vector<16x128xf32> to vector<15x128xf32>
    %1541 = tpu.concatenate %1540, %4 in 0 : vector<15x128xf32>, vector<1x128xf32> -> vector<16x128xf32>
    %c38_570 = arith.constant 38 : index
    %c0_571 = arith.constant 0 : index
    %1542 = vector.load %arg6[%c38_570, %c0_571] : memref<64x128xf32, #tpu.memory_space<vmem>>, vector<1x128xf32>
    %1543 = vector.extract_strided_slice %1541 {offsets = [0, 0], sizes = [1, 128], strides = [1, 1]} : vector<16x128xf32> to vector<1x128xf32>
    %1544 = arith.addf %1542, %1543 : vector<1x128xf32>
    %cst_572 = arith.constant 1.000000e+01 : f32
    %1545 = vector.broadcast %cst_572 : f32 to vector<1x128xf32>
    %1546 = arith.cmpf oge, %1544, %1545 : vector<1x128xf32>
    %1547 = arith.extui %1546 : vector<1x128xi1> to vector<1x128xi32>
    %1548 = arith.sitofp %1547 : vector<1x128xi32> to vector<1x128xf32>
    %cst_573 = arith.constant 1.000000e+00 : f32
    %1549 = vector.broadcast %cst_573 : f32 to vector<1x128xf32>
    %1550 = arith.mulf %1548, %1549 : vector<1x128xf32>
    %c38_574 = arith.constant 38 : index
    %c0_575 = arith.constant 0 : index
    %1551 = vector.load %arg5[%c38_574, %c0_575] : memref<64x128xf32, #tpu.memory_space<vmem>>, vector<1x128xf32>
    tpu.vector_store %arg5[%c38_574, %c0_575], %1550 {strides = array<i32>} : memref<64x128xf32, #tpu.memory_space<vmem>>, vector<1x128xf32>,
    %1552 = vector.broadcast %1548 : vector<1x128xf32> to vector<16x128xf32>
    %1553 = arith.mulf %1552, %3 : vector<16x128xf32>
    %1554 = arith.addf %1541, %1553 : vector<16x128xf32>
    %1555 = vector.extract_strided_slice %1554 {offsets = [1, 0], sizes = [15, 128], strides = [1, 1]} : vector<16x128xf32> to vector<15x128xf32>
    %1556 = tpu.concatenate %1555, %4 in 0 : vector<15x128xf32>, vector<1x128xf32> -> vector<16x128xf32>
    %c39_576 = arith.constant 39 : index
    %c0_577 = arith.constant 0 : index
    %1557 = vector.load %arg6[%c39_576, %c0_577] : memref<64x128xf32, #tpu.memory_space<vmem>>, vector<1x128xf32>
    %1558 = vector.extract_strided_slice %1556 {offsets = [0, 0], sizes = [1, 128], strides = [1, 1]} : vector<16x128xf32> to vector<1x128xf32>
    %1559 = arith.addf %1557, %1558 : vector<1x128xf32>
    %cst_578 = arith.constant 1.000000e+01 : f32
    %1560 = vector.broadcast %cst_578 : f32 to vector<1x128xf32>
    %1561 = arith.cmpf oge, %1559, %1560 : vector<1x128xf32>
    %1562 = arith.extui %1561 : vector<1x128xi1> to vector<1x128xi32>
    %1563 = arith.sitofp %1562 : vector<1x128xi32> to vector<1x128xf32>
    %cst_579 = arith.constant 1.000000e+00 : f32
    %1564 = vector.broadcast %cst_579 : f32 to vector<1x128xf32>
    %1565 = arith.mulf %1563, %1564 : vector<1x128xf32>
    %c39_580 = arith.constant 39 : index
    %c0_581 = arith.constant 0 : index
    %1566 = vector.load %arg5[%c39_580, %c0_581] : memref<64x128xf32, #tpu.memory_space<vmem>>, vector<1x128xf32>
    tpu.vector_store %arg5[%c39_580, %c0_581], %1565 {strides = array<i32>} : memref<64x128xf32, #tpu.memory_space<vmem>>, vector<1x128xf32>,
    %1567 = vector.broadcast %1563 : vector<1x128xf32> to vector<16x128xf32>
    %1568 = arith.mulf %1567, %3 : vector<16x128xf32>
    %1569 = arith.addf %1556, %1568 : vector<16x128xf32>
    %1570 = vector.extract_strided_slice %1569 {offsets = [1, 0], sizes = [15, 128], strides = [1, 1]} : vector<16x128xf32> to vector<15x128xf32>
    %1571 = tpu.concatenate %1570, %4 in 0 : vector<15x128xf32>, vector<1x128xf32> -> vector<16x128xf32>
    %c40_582 = arith.constant 40 : index
    %c0_583 = arith.constant 0 : index
    %1572 = vector.load %arg6[%c40_582, %c0_583] : memref<64x128xf32, #tpu.memory_space<vmem>>, vector<1x128xf32>
    %1573 = vector.extract_strided_slice %1571 {offsets = [0, 0], sizes = [1, 128], strides = [1, 1]} : vector<16x128xf32> to vector<1x128xf32>
    %1574 = arith.addf %1572, %1573 : vector<1x128xf32>
    %cst_584 = arith.constant 1.000000e+01 : f32
    %1575 = vector.broadcast %cst_584 : f32 to vector<1x128xf32>
    %1576 = arith.cmpf oge, %1574, %1575 : vector<1x128xf32>
    %1577 = arith.extui %1576 : vector<1x128xi1> to vector<1x128xi32>
    %1578 = arith.sitofp %1577 : vector<1x128xi32> to vector<1x128xf32>
    %cst_585 = arith.constant 1.000000e+00 : f32
    %1579 = vector.broadcast %cst_585 : f32 to vector<1x128xf32>
    %1580 = arith.mulf %1578, %1579 : vector<1x128xf32>
    %c40_586 = arith.constant 40 : index
    %c0_587 = arith.constant 0 : index
    %1581 = vector.load %arg5[%c40_586, %c0_587] : memref<64x128xf32, #tpu.memory_space<vmem>>, vector<1x128xf32>
    tpu.vector_store %arg5[%c40_586, %c0_587], %1580 {strides = array<i32>} : memref<64x128xf32, #tpu.memory_space<vmem>>, vector<1x128xf32>,
    %1582 = vector.broadcast %1578 : vector<1x128xf32> to vector<16x128xf32>
    %1583 = arith.mulf %1582, %3 : vector<16x128xf32>
    %1584 = arith.addf %1571, %1583 : vector<16x128xf32>
    %1585 = vector.extract_strided_slice %1584 {offsets = [1, 0], sizes = [15, 128], strides = [1, 1]} : vector<16x128xf32> to vector<15x128xf32>
    %1586 = tpu.concatenate %1585, %4 in 0 : vector<15x128xf32>, vector<1x128xf32> -> vector<16x128xf32>
    %c41_588 = arith.constant 41 : index
    %c0_589 = arith.constant 0 : index
    %1587 = vector.load %arg6[%c41_588, %c0_589] : memref<64x128xf32, #tpu.memory_space<vmem>>, vector<1x128xf32>
    %1588 = vector.extract_strided_slice %1586 {offsets = [0, 0], sizes = [1, 128], strides = [1, 1]} : vector<16x128xf32> to vector<1x128xf32>
    %1589 = arith.addf %1587, %1588 : vector<1x128xf32>
    %cst_590 = arith.constant 1.000000e+01 : f32
    %1590 = vector.broadcast %cst_590 : f32 to vector<1x128xf32>
    %1591 = arith.cmpf oge, %1589, %1590 : vector<1x128xf32>
    %1592 = arith.extui %1591 : vector<1x128xi1> to vector<1x128xi32>
    %1593 = arith.sitofp %1592 : vector<1x128xi32> to vector<1x128xf32>
    %cst_591 = arith.constant 1.000000e+00 : f32
    %1594 = vector.broadcast %cst_591 : f32 to vector<1x128xf32>
    %1595 = arith.mulf %1593, %1594 : vector<1x128xf32>
    %c41_592 = arith.constant 41 : index
    %c0_593 = arith.constant 0 : index
    %1596 = vector.load %arg5[%c41_592, %c0_593] : memref<64x128xf32, #tpu.memory_space<vmem>>, vector<1x128xf32>
    tpu.vector_store %arg5[%c41_592, %c0_593], %1595 {strides = array<i32>} : memref<64x128xf32, #tpu.memory_space<vmem>>, vector<1x128xf32>,
    %1597 = vector.broadcast %1593 : vector<1x128xf32> to vector<16x128xf32>
    %1598 = arith.mulf %1597, %3 : vector<16x128xf32>
    %1599 = arith.addf %1586, %1598 : vector<16x128xf32>
    %1600 = vector.extract_strided_slice %1599 {offsets = [1, 0], sizes = [15, 128], strides = [1, 1]} : vector<16x128xf32> to vector<15x128xf32>
    %1601 = tpu.concatenate %1600, %4 in 0 : vector<15x128xf32>, vector<1x128xf32> -> vector<16x128xf32>
    %c42_594 = arith.constant 42 : index
    %c0_595 = arith.constant 0 : index
    %1602 = vector.load %arg6[%c42_594, %c0_595] : memref<64x128xf32, #tpu.memory_space<vmem>>, vector<1x128xf32>
    %1603 = vector.extract_strided_slice %1601 {offsets = [0, 0], sizes = [1, 128], strides = [1, 1]} : vector<16x128xf32> to vector<1x128xf32>
    %1604 = arith.addf %1602, %1603 : vector<1x128xf32>
    %cst_596 = arith.constant 1.000000e+01 : f32
    %1605 = vector.broadcast %cst_596 : f32 to vector<1x128xf32>
    %1606 = arith.cmpf oge, %1604, %1605 : vector<1x128xf32>
    %1607 = arith.extui %1606 : vector<1x128xi1> to vector<1x128xi32>
    %1608 = arith.sitofp %1607 : vector<1x128xi32> to vector<1x128xf32>
    %cst_597 = arith.constant 1.000000e+00 : f32
    %1609 = vector.broadcast %cst_597 : f32 to vector<1x128xf32>
    %1610 = arith.mulf %1608, %1609 : vector<1x128xf32>
    %c42_598 = arith.constant 42 : index
    %c0_599 = arith.constant 0 : index
    %1611 = vector.load %arg5[%c42_598, %c0_599] : memref<64x128xf32, #tpu.memory_space<vmem>>, vector<1x128xf32>
    tpu.vector_store %arg5[%c42_598, %c0_599], %1610 {strides = array<i32>} : memref<64x128xf32, #tpu.memory_space<vmem>>, vector<1x128xf32>,
    %1612 = vector.broadcast %1608 : vector<1x128xf32> to vector<16x128xf32>
    %1613 = arith.mulf %1612, %3 : vector<16x128xf32>
    %1614 = arith.addf %1601, %1613 : vector<16x128xf32>
    %1615 = vector.extract_strided_slice %1614 {offsets = [1, 0], sizes = [15, 128], strides = [1, 1]} : vector<16x128xf32> to vector<15x128xf32>
    %1616 = tpu.concatenate %1615, %4 in 0 : vector<15x128xf32>, vector<1x128xf32> -> vector<16x128xf32>
    %c43_600 = arith.constant 43 : index
    %c0_601 = arith.constant 0 : index
    %1617 = vector.load %arg6[%c43_600, %c0_601] : memref<64x128xf32, #tpu.memory_space<vmem>>, vector<1x128xf32>
    %1618 = vector.extract_strided_slice %1616 {offsets = [0, 0], sizes = [1, 128], strides = [1, 1]} : vector<16x128xf32> to vector<1x128xf32>
    %1619 = arith.addf %1617, %1618 : vector<1x128xf32>
    %cst_602 = arith.constant 1.000000e+01 : f32
    %1620 = vector.broadcast %cst_602 : f32 to vector<1x128xf32>
    %1621 = arith.cmpf oge, %1619, %1620 : vector<1x128xf32>
    %1622 = arith.extui %1621 : vector<1x128xi1> to vector<1x128xi32>
    %1623 = arith.sitofp %1622 : vector<1x128xi32> to vector<1x128xf32>
    %cst_603 = arith.constant 1.000000e+00 : f32
    %1624 = vector.broadcast %cst_603 : f32 to vector<1x128xf32>
    %1625 = arith.mulf %1623, %1624 : vector<1x128xf32>
    %c43_604 = arith.constant 43 : index
    %c0_605 = arith.constant 0 : index
    %1626 = vector.load %arg5[%c43_604, %c0_605] : memref<64x128xf32, #tpu.memory_space<vmem>>, vector<1x128xf32>
    tpu.vector_store %arg5[%c43_604, %c0_605], %1625 {strides = array<i32>} : memref<64x128xf32, #tpu.memory_space<vmem>>, vector<1x128xf32>,
    %1627 = vector.broadcast %1623 : vector<1x128xf32> to vector<16x128xf32>
    %1628 = arith.mulf %1627, %3 : vector<16x128xf32>
    %1629 = arith.addf %1616, %1628 : vector<16x128xf32>
    %1630 = vector.extract_strided_slice %1629 {offsets = [1, 0], sizes = [15, 128], strides = [1, 1]} : vector<16x128xf32> to vector<15x128xf32>
    %1631 = tpu.concatenate %1630, %4 in 0 : vector<15x128xf32>, vector<1x128xf32> -> vector<16x128xf32>
    %c44_606 = arith.constant 44 : index
    %c0_607 = arith.constant 0 : index
    %1632 = vector.load %arg6[%c44_606, %c0_607] : memref<64x128xf32, #tpu.memory_space<vmem>>, vector<1x128xf32>
    %1633 = vector.extract_strided_slice %1631 {offsets = [0, 0], sizes = [1, 128], strides = [1, 1]} : vector<16x128xf32> to vector<1x128xf32>
    %1634 = arith.addf %1632, %1633 : vector<1x128xf32>
    %cst_608 = arith.constant 1.000000e+01 : f32
    %1635 = vector.broadcast %cst_608 : f32 to vector<1x128xf32>
    %1636 = arith.cmpf oge, %1634, %1635 : vector<1x128xf32>
    %1637 = arith.extui %1636 : vector<1x128xi1> to vector<1x128xi32>
    %1638 = arith.sitofp %1637 : vector<1x128xi32> to vector<1x128xf32>
    %cst_609 = arith.constant 1.000000e+00 : f32
    %1639 = vector.broadcast %cst_609 : f32 to vector<1x128xf32>
    %1640 = arith.mulf %1638, %1639 : vector<1x128xf32>
    %c44_610 = arith.constant 44 : index
    %c0_611 = arith.constant 0 : index
    %1641 = vector.load %arg5[%c44_610, %c0_611] : memref<64x128xf32, #tpu.memory_space<vmem>>, vector<1x128xf32>
    tpu.vector_store %arg5[%c44_610, %c0_611], %1640 {strides = array<i32>} : memref<64x128xf32, #tpu.memory_space<vmem>>, vector<1x128xf32>,
    %1642 = vector.broadcast %1638 : vector<1x128xf32> to vector<16x128xf32>
    %1643 = arith.mulf %1642, %3 : vector<16x128xf32>
    %1644 = arith.addf %1631, %1643 : vector<16x128xf32>
    %1645 = vector.extract_strided_slice %1644 {offsets = [1, 0], sizes = [15, 128], strides = [1, 1]} : vector<16x128xf32> to vector<15x128xf32>
    %1646 = tpu.concatenate %1645, %4 in 0 : vector<15x128xf32>, vector<1x128xf32> -> vector<16x128xf32>
    %c45_612 = arith.constant 45 : index
    %c0_613 = arith.constant 0 : index
    %1647 = vector.load %arg6[%c45_612, %c0_613] : memref<64x128xf32, #tpu.memory_space<vmem>>, vector<1x128xf32>
    %1648 = vector.extract_strided_slice %1646 {offsets = [0, 0], sizes = [1, 128], strides = [1, 1]} : vector<16x128xf32> to vector<1x128xf32>
    %1649 = arith.addf %1647, %1648 : vector<1x128xf32>
    %cst_614 = arith.constant 1.000000e+01 : f32
    %1650 = vector.broadcast %cst_614 : f32 to vector<1x128xf32>
    %1651 = arith.cmpf oge, %1649, %1650 : vector<1x128xf32>
    %1652 = arith.extui %1651 : vector<1x128xi1> to vector<1x128xi32>
    %1653 = arith.sitofp %1652 : vector<1x128xi32> to vector<1x128xf32>
    %cst_615 = arith.constant 1.000000e+00 : f32
    %1654 = vector.broadcast %cst_615 : f32 to vector<1x128xf32>
    %1655 = arith.mulf %1653, %1654 : vector<1x128xf32>
    %c45_616 = arith.constant 45 : index
    %c0_617 = arith.constant 0 : index
    %1656 = vector.load %arg5[%c45_616, %c0_617] : memref<64x128xf32, #tpu.memory_space<vmem>>, vector<1x128xf32>
    tpu.vector_store %arg5[%c45_616, %c0_617], %1655 {strides = array<i32>} : memref<64x128xf32, #tpu.memory_space<vmem>>, vector<1x128xf32>,
    %1657 = vector.broadcast %1653 : vector<1x128xf32> to vector<16x128xf32>
    %1658 = arith.mulf %1657, %3 : vector<16x128xf32>
    %1659 = arith.addf %1646, %1658 : vector<16x128xf32>
    %1660 = vector.extract_strided_slice %1659 {offsets = [1, 0], sizes = [15, 128], strides = [1, 1]} : vector<16x128xf32> to vector<15x128xf32>
    %1661 = tpu.concatenate %1660, %4 in 0 : vector<15x128xf32>, vector<1x128xf32> -> vector<16x128xf32>
    %c46_618 = arith.constant 46 : index
    %c0_619 = arith.constant 0 : index
    %1662 = vector.load %arg6[%c46_618, %c0_619] : memref<64x128xf32, #tpu.memory_space<vmem>>, vector<1x128xf32>
    %1663 = vector.extract_strided_slice %1661 {offsets = [0, 0], sizes = [1, 128], strides = [1, 1]} : vector<16x128xf32> to vector<1x128xf32>
    %1664 = arith.addf %1662, %1663 : vector<1x128xf32>
    %cst_620 = arith.constant 1.000000e+01 : f32
    %1665 = vector.broadcast %cst_620 : f32 to vector<1x128xf32>
    %1666 = arith.cmpf oge, %1664, %1665 : vector<1x128xf32>
    %1667 = arith.extui %1666 : vector<1x128xi1> to vector<1x128xi32>
    %1668 = arith.sitofp %1667 : vector<1x128xi32> to vector<1x128xf32>
    %cst_621 = arith.constant 1.000000e+00 : f32
    %1669 = vector.broadcast %cst_621 : f32 to vector<1x128xf32>
    %1670 = arith.mulf %1668, %1669 : vector<1x128xf32>
    %c46_622 = arith.constant 46 : index
    %c0_623 = arith.constant 0 : index
    %1671 = vector.load %arg5[%c46_622, %c0_623] : memref<64x128xf32, #tpu.memory_space<vmem>>, vector<1x128xf32>
    tpu.vector_store %arg5[%c46_622, %c0_623], %1670 {strides = array<i32>} : memref<64x128xf32, #tpu.memory_space<vmem>>, vector<1x128xf32>,
    %1672 = vector.broadcast %1668 : vector<1x128xf32> to vector<16x128xf32>
    %1673 = arith.mulf %1672, %3 : vector<16x128xf32>
    %1674 = arith.addf %1661, %1673 : vector<16x128xf32>
    %1675 = vector.extract_strided_slice %1674 {offsets = [1, 0], sizes = [15, 128], strides = [1, 1]} : vector<16x128xf32> to vector<15x128xf32>
    %1676 = tpu.concatenate %1675, %4 in 0 : vector<15x128xf32>, vector<1x128xf32> -> vector<16x128xf32>
    %c47_624 = arith.constant 47 : index
    %c0_625 = arith.constant 0 : index
    %1677 = vector.load %arg6[%c47_624, %c0_625] : memref<64x128xf32, #tpu.memory_space<vmem>>, vector<1x128xf32>
    %1678 = vector.extract_strided_slice %1676 {offsets = [0, 0], sizes = [1, 128], strides = [1, 1]} : vector<16x128xf32> to vector<1x128xf32>
    %1679 = arith.addf %1677, %1678 : vector<1x128xf32>
    %cst_626 = arith.constant 1.000000e+01 : f32
    %1680 = vector.broadcast %cst_626 : f32 to vector<1x128xf32>
    %1681 = arith.cmpf oge, %1679, %1680 : vector<1x128xf32>
    %1682 = arith.extui %1681 : vector<1x128xi1> to vector<1x128xi32>
    %1683 = arith.sitofp %1682 : vector<1x128xi32> to vector<1x128xf32>
    %cst_627 = arith.constant 1.000000e+00 : f32
    %1684 = vector.broadcast %cst_627 : f32 to vector<1x128xf32>
    %1685 = arith.mulf %1683, %1684 : vector<1x128xf32>
    %c47_628 = arith.constant 47 : index
    %c0_629 = arith.constant 0 : index
    %1686 = vector.load %arg5[%c47_628, %c0_629] : memref<64x128xf32, #tpu.memory_space<vmem>>, vector<1x128xf32>
    tpu.vector_store %arg5[%c47_628, %c0_629], %1685 {strides = array<i32>} : memref<64x128xf32, #tpu.memory_space<vmem>>, vector<1x128xf32>,
    %1687 = vector.broadcast %1683 : vector<1x128xf32> to vector<16x128xf32>
    %1688 = arith.mulf %1687, %3 : vector<16x128xf32>
    %1689 = arith.addf %1676, %1688 : vector<16x128xf32>
    %1690 = vector.extract_strided_slice %1689 {offsets = [1, 0], sizes = [15, 128], strides = [1, 1]} : vector<16x128xf32> to vector<15x128xf32>
    %1691 = tpu.concatenate %1690, %4 in 0 : vector<15x128xf32>, vector<1x128xf32> -> vector<16x128xf32>
    %c48_630 = arith.constant 48 : index
    %c0_631 = arith.constant 0 : index
    %1692 = vector.load %arg6[%c48_630, %c0_631] : memref<64x128xf32, #tpu.memory_space<vmem>>, vector<1x128xf32>
    %1693 = vector.extract_strided_slice %1691 {offsets = [0, 0], sizes = [1, 128], strides = [1, 1]} : vector<16x128xf32> to vector<1x128xf32>
    %1694 = arith.addf %1692, %1693 : vector<1x128xf32>
    %cst_632 = arith.constant 1.000000e+01 : f32
    %1695 = vector.broadcast %cst_632 : f32 to vector<1x128xf32>
    %1696 = arith.cmpf oge, %1694, %1695 : vector<1x128xf32>
    %1697 = arith.extui %1696 : vector<1x128xi1> to vector<1x128xi32>
    %1698 = arith.sitofp %1697 : vector<1x128xi32> to vector<1x128xf32>
    %cst_633 = arith.constant 1.000000e+00 : f32
    %1699 = vector.broadcast %cst_633 : f32 to vector<1x128xf32>
    %1700 = arith.mulf %1698, %1699 : vector<1x128xf32>
    %c48_634 = arith.constant 48 : index
    %c0_635 = arith.constant 0 : index
    %1701 = vector.load %arg5[%c48_634, %c0_635] : memref<64x128xf32, #tpu.memory_space<vmem>>, vector<1x128xf32>
    tpu.vector_store %arg5[%c48_634, %c0_635], %1700 {strides = array<i32>} : memref<64x128xf32, #tpu.memory_space<vmem>>, vector<1x128xf32>,
    %1702 = vector.broadcast %1698 : vector<1x128xf32> to vector<16x128xf32>
    %1703 = arith.mulf %1702, %3 : vector<16x128xf32>
    %1704 = arith.addf %1691, %1703 : vector<16x128xf32>
    %1705 = vector.extract_strided_slice %1704 {offsets = [1, 0], sizes = [15, 128], strides = [1, 1]} : vector<16x128xf32> to vector<15x128xf32>
    %1706 = tpu.concatenate %1705, %4 in 0 : vector<15x128xf32>, vector<1x128xf32> -> vector<16x128xf32>
    %c49_636 = arith.constant 49 : index
    %c0_637 = arith.constant 0 : index
    %1707 = vector.load %arg6[%c49_636, %c0_637] : memref<64x128xf32, #tpu.memory_space<vmem>>, vector<1x128xf32>
    %1708 = vector.extract_strided_slice %1706 {offsets = [0, 0], sizes = [1, 128], strides = [1, 1]} : vector<16x128xf32> to vector<1x128xf32>
    %1709 = arith.addf %1707, %1708 : vector<1x128xf32>
    %cst_638 = arith.constant 1.000000e+01 : f32
    %1710 = vector.broadcast %cst_638 : f32 to vector<1x128xf32>
    %1711 = arith.cmpf oge, %1709, %1710 : vector<1x128xf32>
    %1712 = arith.extui %1711 : vector<1x128xi1> to vector<1x128xi32>
    %1713 = arith.sitofp %1712 : vector<1x128xi32> to vector<1x128xf32>
    %cst_639 = arith.constant 1.000000e+00 : f32
    %1714 = vector.broadcast %cst_639 : f32 to vector<1x128xf32>
    %1715 = arith.mulf %1713, %1714 : vector<1x128xf32>
    %c49_640 = arith.constant 49 : index
    %c0_641 = arith.constant 0 : index
    %1716 = vector.load %arg5[%c49_640, %c0_641] : memref<64x128xf32, #tpu.memory_space<vmem>>, vector<1x128xf32>
    tpu.vector_store %arg5[%c49_640, %c0_641], %1715 {strides = array<i32>} : memref<64x128xf32, #tpu.memory_space<vmem>>, vector<1x128xf32>,
    %1717 = vector.broadcast %1713 : vector<1x128xf32> to vector<16x128xf32>
    %1718 = arith.mulf %1717, %3 : vector<16x128xf32>
    %1719 = arith.addf %1706, %1718 : vector<16x128xf32>
    %1720 = vector.extract_strided_slice %1719 {offsets = [1, 0], sizes = [15, 128], strides = [1, 1]} : vector<16x128xf32> to vector<15x128xf32>
    %1721 = tpu.concatenate %1720, %4 in 0 : vector<15x128xf32>, vector<1x128xf32> -> vector<16x128xf32>
    %c50_642 = arith.constant 50 : index
    %c0_643 = arith.constant 0 : index
    %1722 = vector.load %arg6[%c50_642, %c0_643] : memref<64x128xf32, #tpu.memory_space<vmem>>, vector<1x128xf32>
    %1723 = vector.extract_strided_slice %1721 {offsets = [0, 0], sizes = [1, 128], strides = [1, 1]} : vector<16x128xf32> to vector<1x128xf32>
    %1724 = arith.addf %1722, %1723 : vector<1x128xf32>
    %cst_644 = arith.constant 1.000000e+01 : f32
    %1725 = vector.broadcast %cst_644 : f32 to vector<1x128xf32>
    %1726 = arith.cmpf oge, %1724, %1725 : vector<1x128xf32>
    %1727 = arith.extui %1726 : vector<1x128xi1> to vector<1x128xi32>
    %1728 = arith.sitofp %1727 : vector<1x128xi32> to vector<1x128xf32>
    %cst_645 = arith.constant 1.000000e+00 : f32
    %1729 = vector.broadcast %cst_645 : f32 to vector<1x128xf32>
    %1730 = arith.mulf %1728, %1729 : vector<1x128xf32>
    %c50_646 = arith.constant 50 : index
    %c0_647 = arith.constant 0 : index
    %1731 = vector.load %arg5[%c50_646, %c0_647] : memref<64x128xf32, #tpu.memory_space<vmem>>, vector<1x128xf32>
    tpu.vector_store %arg5[%c50_646, %c0_647], %1730 {strides = array<i32>} : memref<64x128xf32, #tpu.memory_space<vmem>>, vector<1x128xf32>,
    %1732 = vector.broadcast %1728 : vector<1x128xf32> to vector<16x128xf32>
    %1733 = arith.mulf %1732, %3 : vector<16x128xf32>
    %1734 = arith.addf %1721, %1733 : vector<16x128xf32>
    %1735 = vector.extract_strided_slice %1734 {offsets = [1, 0], sizes = [15, 128], strides = [1, 1]} : vector<16x128xf32> to vector<15x128xf32>
    %1736 = tpu.concatenate %1735, %4 in 0 : vector<15x128xf32>, vector<1x128xf32> -> vector<16x128xf32>
    %c51_648 = arith.constant 51 : index
    %c0_649 = arith.constant 0 : index
    %1737 = vector.load %arg6[%c51_648, %c0_649] : memref<64x128xf32, #tpu.memory_space<vmem>>, vector<1x128xf32>
    %1738 = vector.extract_strided_slice %1736 {offsets = [0, 0], sizes = [1, 128], strides = [1, 1]} : vector<16x128xf32> to vector<1x128xf32>
    %1739 = arith.addf %1737, %1738 : vector<1x128xf32>
    %cst_650 = arith.constant 1.000000e+01 : f32
    %1740 = vector.broadcast %cst_650 : f32 to vector<1x128xf32>
    %1741 = arith.cmpf oge, %1739, %1740 : vector<1x128xf32>
    %1742 = arith.extui %1741 : vector<1x128xi1> to vector<1x128xi32>
    %1743 = arith.sitofp %1742 : vector<1x128xi32> to vector<1x128xf32>
    %cst_651 = arith.constant 1.000000e+00 : f32
    %1744 = vector.broadcast %cst_651 : f32 to vector<1x128xf32>
    %1745 = arith.mulf %1743, %1744 : vector<1x128xf32>
    %c51_652 = arith.constant 51 : index
    %c0_653 = arith.constant 0 : index
    %1746 = vector.load %arg5[%c51_652, %c0_653] : memref<64x128xf32, #tpu.memory_space<vmem>>, vector<1x128xf32>
    tpu.vector_store %arg5[%c51_652, %c0_653], %1745 {strides = array<i32>} : memref<64x128xf32, #tpu.memory_space<vmem>>, vector<1x128xf32>,
    %1747 = vector.broadcast %1743 : vector<1x128xf32> to vector<16x128xf32>
    %1748 = arith.mulf %1747, %3 : vector<16x128xf32>
    %1749 = arith.addf %1736, %1748 : vector<16x128xf32>
    %1750 = vector.extract_strided_slice %1749 {offsets = [1, 0], sizes = [15, 128], strides = [1, 1]} : vector<16x128xf32> to vector<15x128xf32>
    %1751 = tpu.concatenate %1750, %4 in 0 : vector<15x128xf32>, vector<1x128xf32> -> vector<16x128xf32>
    %c52_654 = arith.constant 52 : index
    %c0_655 = arith.constant 0 : index
    %1752 = vector.load %arg6[%c52_654, %c0_655] : memref<64x128xf32, #tpu.memory_space<vmem>>, vector<1x128xf32>
    %1753 = vector.extract_strided_slice %1751 {offsets = [0, 0], sizes = [1, 128], strides = [1, 1]} : vector<16x128xf32> to vector<1x128xf32>
    %1754 = arith.addf %1752, %1753 : vector<1x128xf32>
    %cst_656 = arith.constant 1.000000e+01 : f32
    %1755 = vector.broadcast %cst_656 : f32 to vector<1x128xf32>
    %1756 = arith.cmpf oge, %1754, %1755 : vector<1x128xf32>
    %1757 = arith.extui %1756 : vector<1x128xi1> to vector<1x128xi32>
    %1758 = arith.sitofp %1757 : vector<1x128xi32> to vector<1x128xf32>
    %cst_657 = arith.constant 1.000000e+00 : f32
    %1759 = vector.broadcast %cst_657 : f32 to vector<1x128xf32>
    %1760 = arith.mulf %1758, %1759 : vector<1x128xf32>
    %c52_658 = arith.constant 52 : index
    %c0_659 = arith.constant 0 : index
    %1761 = vector.load %arg5[%c52_658, %c0_659] : memref<64x128xf32, #tpu.memory_space<vmem>>, vector<1x128xf32>
    tpu.vector_store %arg5[%c52_658, %c0_659], %1760 {strides = array<i32>} : memref<64x128xf32, #tpu.memory_space<vmem>>, vector<1x128xf32>,
    %1762 = vector.broadcast %1758 : vector<1x128xf32> to vector<16x128xf32>
    %1763 = arith.mulf %1762, %3 : vector<16x128xf32>
    %1764 = arith.addf %1751, %1763 : vector<16x128xf32>
    %1765 = vector.extract_strided_slice %1764 {offsets = [1, 0], sizes = [15, 128], strides = [1, 1]} : vector<16x128xf32> to vector<15x128xf32>
    %1766 = tpu.concatenate %1765, %4 in 0 : vector<15x128xf32>, vector<1x128xf32> -> vector<16x128xf32>
    %c53_660 = arith.constant 53 : index
    %c0_661 = arith.constant 0 : index
    %1767 = vector.load %arg6[%c53_660, %c0_661] : memref<64x128xf32, #tpu.memory_space<vmem>>, vector<1x128xf32>
    %1768 = vector.extract_strided_slice %1766 {offsets = [0, 0], sizes = [1, 128], strides = [1, 1]} : vector<16x128xf32> to vector<1x128xf32>
    %1769 = arith.addf %1767, %1768 : vector<1x128xf32>
    %cst_662 = arith.constant 1.000000e+01 : f32
    %1770 = vector.broadcast %cst_662 : f32 to vector<1x128xf32>
    %1771 = arith.cmpf oge, %1769, %1770 : vector<1x128xf32>
    %1772 = arith.extui %1771 : vector<1x128xi1> to vector<1x128xi32>
    %1773 = arith.sitofp %1772 : vector<1x128xi32> to vector<1x128xf32>
    %cst_663 = arith.constant 1.000000e+00 : f32
    %1774 = vector.broadcast %cst_663 : f32 to vector<1x128xf32>
    %1775 = arith.mulf %1773, %1774 : vector<1x128xf32>
    %c53_664 = arith.constant 53 : index
    %c0_665 = arith.constant 0 : index
    %1776 = vector.load %arg5[%c53_664, %c0_665] : memref<64x128xf32, #tpu.memory_space<vmem>>, vector<1x128xf32>
    tpu.vector_store %arg5[%c53_664, %c0_665], %1775 {strides = array<i32>} : memref<64x128xf32, #tpu.memory_space<vmem>>, vector<1x128xf32>,
    %1777 = vector.broadcast %1773 : vector<1x128xf32> to vector<16x128xf32>
    %1778 = arith.mulf %1777, %3 : vector<16x128xf32>
    %1779 = arith.addf %1766, %1778 : vector<16x128xf32>
    %1780 = vector.extract_strided_slice %1779 {offsets = [1, 0], sizes = [15, 128], strides = [1, 1]} : vector<16x128xf32> to vector<15x128xf32>
    %1781 = tpu.concatenate %1780, %4 in 0 : vector<15x128xf32>, vector<1x128xf32> -> vector<16x128xf32>
    %c54_666 = arith.constant 54 : index
    %c0_667 = arith.constant 0 : index
    %1782 = vector.load %arg6[%c54_666, %c0_667] : memref<64x128xf32, #tpu.memory_space<vmem>>, vector<1x128xf32>
    %1783 = vector.extract_strided_slice %1781 {offsets = [0, 0], sizes = [1, 128], strides = [1, 1]} : vector<16x128xf32> to vector<1x128xf32>
    %1784 = arith.addf %1782, %1783 : vector<1x128xf32>
    %cst_668 = arith.constant 1.000000e+01 : f32
    %1785 = vector.broadcast %cst_668 : f32 to vector<1x128xf32>
    %1786 = arith.cmpf oge, %1784, %1785 : vector<1x128xf32>
    %1787 = arith.extui %1786 : vector<1x128xi1> to vector<1x128xi32>
    %1788 = arith.sitofp %1787 : vector<1x128xi32> to vector<1x128xf32>
    %cst_669 = arith.constant 1.000000e+00 : f32
    %1789 = vector.broadcast %cst_669 : f32 to vector<1x128xf32>
    %1790 = arith.mulf %1788, %1789 : vector<1x128xf32>
    %c54_670 = arith.constant 54 : index
    %c0_671 = arith.constant 0 : index
    %1791 = vector.load %arg5[%c54_670, %c0_671] : memref<64x128xf32, #tpu.memory_space<vmem>>, vector<1x128xf32>
    tpu.vector_store %arg5[%c54_670, %c0_671], %1790 {strides = array<i32>} : memref<64x128xf32, #tpu.memory_space<vmem>>, vector<1x128xf32>,
    %1792 = vector.broadcast %1788 : vector<1x128xf32> to vector<16x128xf32>
    %1793 = arith.mulf %1792, %3 : vector<16x128xf32>
    %1794 = arith.addf %1781, %1793 : vector<16x128xf32>
    %1795 = vector.extract_strided_slice %1794 {offsets = [1, 0], sizes = [15, 128], strides = [1, 1]} : vector<16x128xf32> to vector<15x128xf32>
    %1796 = tpu.concatenate %1795, %4 in 0 : vector<15x128xf32>, vector<1x128xf32> -> vector<16x128xf32>
    %c55_672 = arith.constant 55 : index
    %c0_673 = arith.constant 0 : index
    %1797 = vector.load %arg6[%c55_672, %c0_673] : memref<64x128xf32, #tpu.memory_space<vmem>>, vector<1x128xf32>
    %1798 = vector.extract_strided_slice %1796 {offsets = [0, 0], sizes = [1, 128], strides = [1, 1]} : vector<16x128xf32> to vector<1x128xf32>
    %1799 = arith.addf %1797, %1798 : vector<1x128xf32>
    %cst_674 = arith.constant 1.000000e+01 : f32
    %1800 = vector.broadcast %cst_674 : f32 to vector<1x128xf32>
    %1801 = arith.cmpf oge, %1799, %1800 : vector<1x128xf32>
    %1802 = arith.extui %1801 : vector<1x128xi1> to vector<1x128xi32>
    %1803 = arith.sitofp %1802 : vector<1x128xi32> to vector<1x128xf32>
    %cst_675 = arith.constant 1.000000e+00 : f32
    %1804 = vector.broadcast %cst_675 : f32 to vector<1x128xf32>
    %1805 = arith.mulf %1803, %1804 : vector<1x128xf32>
    %c55_676 = arith.constant 55 : index
    %c0_677 = arith.constant 0 : index
    %1806 = vector.load %arg5[%c55_676, %c0_677] : memref<64x128xf32, #tpu.memory_space<vmem>>, vector<1x128xf32>
    tpu.vector_store %arg5[%c55_676, %c0_677], %1805 {strides = array<i32>} : memref<64x128xf32, #tpu.memory_space<vmem>>, vector<1x128xf32>,
    %1807 = vector.broadcast %1803 : vector<1x128xf32> to vector<16x128xf32>
    %1808 = arith.mulf %1807, %3 : vector<16x128xf32>
    %1809 = arith.addf %1796, %1808 : vector<16x128xf32>
    %1810 = vector.extract_strided_slice %1809 {offsets = [1, 0], sizes = [15, 128], strides = [1, 1]} : vector<16x128xf32> to vector<15x128xf32>
    %1811 = tpu.concatenate %1810, %4 in 0 : vector<15x128xf32>, vector<1x128xf32> -> vector<16x128xf32>
    %c56_678 = arith.constant 56 : index
    %c0_679 = arith.constant 0 : index
    %1812 = vector.load %arg6[%c56_678, %c0_679] : memref<64x128xf32, #tpu.memory_space<vmem>>, vector<1x128xf32>
    %1813 = vector.extract_strided_slice %1811 {offsets = [0, 0], sizes = [1, 128], strides = [1, 1]} : vector<16x128xf32> to vector<1x128xf32>
    %1814 = arith.addf %1812, %1813 : vector<1x128xf32>
    %cst_680 = arith.constant 1.000000e+01 : f32
    %1815 = vector.broadcast %cst_680 : f32 to vector<1x128xf32>
    %1816 = arith.cmpf oge, %1814, %1815 : vector<1x128xf32>
    %1817 = arith.extui %1816 : vector<1x128xi1> to vector<1x128xi32>
    %1818 = arith.sitofp %1817 : vector<1x128xi32> to vector<1x128xf32>
    %cst_681 = arith.constant 1.000000e+00 : f32
    %1819 = vector.broadcast %cst_681 : f32 to vector<1x128xf32>
    %1820 = arith.mulf %1818, %1819 : vector<1x128xf32>
    %c56_682 = arith.constant 56 : index
    %c0_683 = arith.constant 0 : index
    %1821 = vector.load %arg5[%c56_682, %c0_683] : memref<64x128xf32, #tpu.memory_space<vmem>>, vector<1x128xf32>
    tpu.vector_store %arg5[%c56_682, %c0_683], %1820 {strides = array<i32>} : memref<64x128xf32, #tpu.memory_space<vmem>>, vector<1x128xf32>,
    %1822 = vector.broadcast %1818 : vector<1x128xf32> to vector<16x128xf32>
    %1823 = arith.mulf %1822, %3 : vector<16x128xf32>
    %1824 = arith.addf %1811, %1823 : vector<16x128xf32>
    %1825 = vector.extract_strided_slice %1824 {offsets = [1, 0], sizes = [15, 128], strides = [1, 1]} : vector<16x128xf32> to vector<15x128xf32>
    %1826 = tpu.concatenate %1825, %4 in 0 : vector<15x128xf32>, vector<1x128xf32> -> vector<16x128xf32>
    %c57_684 = arith.constant 57 : index
    %c0_685 = arith.constant 0 : index
    %1827 = vector.load %arg6[%c57_684, %c0_685] : memref<64x128xf32, #tpu.memory_space<vmem>>, vector<1x128xf32>
    %1828 = vector.extract_strided_slice %1826 {offsets = [0, 0], sizes = [1, 128], strides = [1, 1]} : vector<16x128xf32> to vector<1x128xf32>
    %1829 = arith.addf %1827, %1828 : vector<1x128xf32>
    %cst_686 = arith.constant 1.000000e+01 : f32
    %1830 = vector.broadcast %cst_686 : f32 to vector<1x128xf32>
    %1831 = arith.cmpf oge, %1829, %1830 : vector<1x128xf32>
    %1832 = arith.extui %1831 : vector<1x128xi1> to vector<1x128xi32>
    %1833 = arith.sitofp %1832 : vector<1x128xi32> to vector<1x128xf32>
    %cst_687 = arith.constant 1.000000e+00 : f32
    %1834 = vector.broadcast %cst_687 : f32 to vector<1x128xf32>
    %1835 = arith.mulf %1833, %1834 : vector<1x128xf32>
    %c57_688 = arith.constant 57 : index
    %c0_689 = arith.constant 0 : index
    %1836 = vector.load %arg5[%c57_688, %c0_689] : memref<64x128xf32, #tpu.memory_space<vmem>>, vector<1x128xf32>
    tpu.vector_store %arg5[%c57_688, %c0_689], %1835 {strides = array<i32>} : memref<64x128xf32, #tpu.memory_space<vmem>>, vector<1x128xf32>,
    %1837 = vector.broadcast %1833 : vector<1x128xf32> to vector<16x128xf32>
    %1838 = arith.mulf %1837, %3 : vector<16x128xf32>
    %1839 = arith.addf %1826, %1838 : vector<16x128xf32>
    %1840 = vector.extract_strided_slice %1839 {offsets = [1, 0], sizes = [15, 128], strides = [1, 1]} : vector<16x128xf32> to vector<15x128xf32>
    %1841 = tpu.concatenate %1840, %4 in 0 : vector<15x128xf32>, vector<1x128xf32> -> vector<16x128xf32>
    %c58_690 = arith.constant 58 : index
    %c0_691 = arith.constant 0 : index
    %1842 = vector.load %arg6[%c58_690, %c0_691] : memref<64x128xf32, #tpu.memory_space<vmem>>, vector<1x128xf32>
    %1843 = vector.extract_strided_slice %1841 {offsets = [0, 0], sizes = [1, 128], strides = [1, 1]} : vector<16x128xf32> to vector<1x128xf32>
    %1844 = arith.addf %1842, %1843 : vector<1x128xf32>
    %cst_692 = arith.constant 1.000000e+01 : f32
    %1845 = vector.broadcast %cst_692 : f32 to vector<1x128xf32>
    %1846 = arith.cmpf oge, %1844, %1845 : vector<1x128xf32>
    %1847 = arith.extui %1846 : vector<1x128xi1> to vector<1x128xi32>
    %1848 = arith.sitofp %1847 : vector<1x128xi32> to vector<1x128xf32>
    %cst_693 = arith.constant 1.000000e+00 : f32
    %1849 = vector.broadcast %cst_693 : f32 to vector<1x128xf32>
    %1850 = arith.mulf %1848, %1849 : vector<1x128xf32>
    %c58_694 = arith.constant 58 : index
    %c0_695 = arith.constant 0 : index
    %1851 = vector.load %arg5[%c58_694, %c0_695] : memref<64x128xf32, #tpu.memory_space<vmem>>, vector<1x128xf32>
    tpu.vector_store %arg5[%c58_694, %c0_695], %1850 {strides = array<i32>} : memref<64x128xf32, #tpu.memory_space<vmem>>, vector<1x128xf32>,
    %1852 = vector.broadcast %1848 : vector<1x128xf32> to vector<16x128xf32>
    %1853 = arith.mulf %1852, %3 : vector<16x128xf32>
    %1854 = arith.addf %1841, %1853 : vector<16x128xf32>
    %1855 = vector.extract_strided_slice %1854 {offsets = [1, 0], sizes = [15, 128], strides = [1, 1]} : vector<16x128xf32> to vector<15x128xf32>
    %1856 = tpu.concatenate %1855, %4 in 0 : vector<15x128xf32>, vector<1x128xf32> -> vector<16x128xf32>
    %c59_696 = arith.constant 59 : index
    %c0_697 = arith.constant 0 : index
    %1857 = vector.load %arg6[%c59_696, %c0_697] : memref<64x128xf32, #tpu.memory_space<vmem>>, vector<1x128xf32>
    %1858 = vector.extract_strided_slice %1856 {offsets = [0, 0], sizes = [1, 128], strides = [1, 1]} : vector<16x128xf32> to vector<1x128xf32>
    %1859 = arith.addf %1857, %1858 : vector<1x128xf32>
    %cst_698 = arith.constant 1.000000e+01 : f32
    %1860 = vector.broadcast %cst_698 : f32 to vector<1x128xf32>
    %1861 = arith.cmpf oge, %1859, %1860 : vector<1x128xf32>
    %1862 = arith.extui %1861 : vector<1x128xi1> to vector<1x128xi32>
    %1863 = arith.sitofp %1862 : vector<1x128xi32> to vector<1x128xf32>
    %cst_699 = arith.constant 1.000000e+00 : f32
    %1864 = vector.broadcast %cst_699 : f32 to vector<1x128xf32>
    %1865 = arith.mulf %1863, %1864 : vector<1x128xf32>
    %c59_700 = arith.constant 59 : index
    %c0_701 = arith.constant 0 : index
    %1866 = vector.load %arg5[%c59_700, %c0_701] : memref<64x128xf32, #tpu.memory_space<vmem>>, vector<1x128xf32>
    tpu.vector_store %arg5[%c59_700, %c0_701], %1865 {strides = array<i32>} : memref<64x128xf32, #tpu.memory_space<vmem>>, vector<1x128xf32>,
    %1867 = vector.broadcast %1863 : vector<1x128xf32> to vector<16x128xf32>
    %1868 = arith.mulf %1867, %3 : vector<16x128xf32>
    %1869 = arith.addf %1856, %1868 : vector<16x128xf32>
    %1870 = vector.extract_strided_slice %1869 {offsets = [1, 0], sizes = [15, 128], strides = [1, 1]} : vector<16x128xf32> to vector<15x128xf32>
    %1871 = tpu.concatenate %1870, %4 in 0 : vector<15x128xf32>, vector<1x128xf32> -> vector<16x128xf32>
    %c60_702 = arith.constant 60 : index
    %c0_703 = arith.constant 0 : index
    %1872 = vector.load %arg6[%c60_702, %c0_703] : memref<64x128xf32, #tpu.memory_space<vmem>>, vector<1x128xf32>
    %1873 = vector.extract_strided_slice %1871 {offsets = [0, 0], sizes = [1, 128], strides = [1, 1]} : vector<16x128xf32> to vector<1x128xf32>
    %1874 = arith.addf %1872, %1873 : vector<1x128xf32>
    %cst_704 = arith.constant 1.000000e+01 : f32
    %1875 = vector.broadcast %cst_704 : f32 to vector<1x128xf32>
    %1876 = arith.cmpf oge, %1874, %1875 : vector<1x128xf32>
    %1877 = arith.extui %1876 : vector<1x128xi1> to vector<1x128xi32>
    %1878 = arith.sitofp %1877 : vector<1x128xi32> to vector<1x128xf32>
    %cst_705 = arith.constant 1.000000e+00 : f32
    %1879 = vector.broadcast %cst_705 : f32 to vector<1x128xf32>
    %1880 = arith.mulf %1878, %1879 : vector<1x128xf32>
    %c60_706 = arith.constant 60 : index
    %c0_707 = arith.constant 0 : index
    %1881 = vector.load %arg5[%c60_706, %c0_707] : memref<64x128xf32, #tpu.memory_space<vmem>>, vector<1x128xf32>
    tpu.vector_store %arg5[%c60_706, %c0_707], %1880 {strides = array<i32>} : memref<64x128xf32, #tpu.memory_space<vmem>>, vector<1x128xf32>,
    %1882 = vector.broadcast %1878 : vector<1x128xf32> to vector<16x128xf32>
    %1883 = arith.mulf %1882, %3 : vector<16x128xf32>
    %1884 = arith.addf %1871, %1883 : vector<16x128xf32>
    %1885 = vector.extract_strided_slice %1884 {offsets = [1, 0], sizes = [15, 128], strides = [1, 1]} : vector<16x128xf32> to vector<15x128xf32>
    %1886 = tpu.concatenate %1885, %4 in 0 : vector<15x128xf32>, vector<1x128xf32> -> vector<16x128xf32>
    %c61_708 = arith.constant 61 : index
    %c0_709 = arith.constant 0 : index
    %1887 = vector.load %arg6[%c61_708, %c0_709] : memref<64x128xf32, #tpu.memory_space<vmem>>, vector<1x128xf32>
    %1888 = vector.extract_strided_slice %1886 {offsets = [0, 0], sizes = [1, 128], strides = [1, 1]} : vector<16x128xf32> to vector<1x128xf32>
    %1889 = arith.addf %1887, %1888 : vector<1x128xf32>
    %cst_710 = arith.constant 1.000000e+01 : f32
    %1890 = vector.broadcast %cst_710 : f32 to vector<1x128xf32>
    %1891 = arith.cmpf oge, %1889, %1890 : vector<1x128xf32>
    %1892 = arith.extui %1891 : vector<1x128xi1> to vector<1x128xi32>
    %1893 = arith.sitofp %1892 : vector<1x128xi32> to vector<1x128xf32>
    %cst_711 = arith.constant 1.000000e+00 : f32
    %1894 = vector.broadcast %cst_711 : f32 to vector<1x128xf32>
    %1895 = arith.mulf %1893, %1894 : vector<1x128xf32>
    %c61_712 = arith.constant 61 : index
    %c0_713 = arith.constant 0 : index
    %1896 = vector.load %arg5[%c61_712, %c0_713] : memref<64x128xf32, #tpu.memory_space<vmem>>, vector<1x128xf32>
    tpu.vector_store %arg5[%c61_712, %c0_713], %1895 {strides = array<i32>} : memref<64x128xf32, #tpu.memory_space<vmem>>, vector<1x128xf32>,
    %1897 = vector.broadcast %1893 : vector<1x128xf32> to vector<16x128xf32>
    %1898 = arith.mulf %1897, %3 : vector<16x128xf32>
    %1899 = arith.addf %1886, %1898 : vector<16x128xf32>
    %1900 = vector.extract_strided_slice %1899 {offsets = [1, 0], sizes = [15, 128], strides = [1, 1]} : vector<16x128xf32> to vector<15x128xf32>
    %1901 = tpu.concatenate %1900, %4 in 0 : vector<15x128xf32>, vector<1x128xf32> -> vector<16x128xf32>
    %c62_714 = arith.constant 62 : index
    %c0_715 = arith.constant 0 : index
    %1902 = vector.load %arg6[%c62_714, %c0_715] : memref<64x128xf32, #tpu.memory_space<vmem>>, vector<1x128xf32>
    %1903 = vector.extract_strided_slice %1901 {offsets = [0, 0], sizes = [1, 128], strides = [1, 1]} : vector<16x128xf32> to vector<1x128xf32>
    %1904 = arith.addf %1902, %1903 : vector<1x128xf32>
    %cst_716 = arith.constant 1.000000e+01 : f32
    %1905 = vector.broadcast %cst_716 : f32 to vector<1x128xf32>
    %1906 = arith.cmpf oge, %1904, %1905 : vector<1x128xf32>
    %1907 = arith.extui %1906 : vector<1x128xi1> to vector<1x128xi32>
    %1908 = arith.sitofp %1907 : vector<1x128xi32> to vector<1x128xf32>
    %cst_717 = arith.constant 1.000000e+00 : f32
    %1909 = vector.broadcast %cst_717 : f32 to vector<1x128xf32>
    %1910 = arith.mulf %1908, %1909 : vector<1x128xf32>
    %c62_718 = arith.constant 62 : index
    %c0_719 = arith.constant 0 : index
    %1911 = vector.load %arg5[%c62_718, %c0_719] : memref<64x128xf32, #tpu.memory_space<vmem>>, vector<1x128xf32>
    tpu.vector_store %arg5[%c62_718, %c0_719], %1910 {strides = array<i32>} : memref<64x128xf32, #tpu.memory_space<vmem>>, vector<1x128xf32>,
    %1912 = vector.broadcast %1908 : vector<1x128xf32> to vector<16x128xf32>
    %1913 = arith.mulf %1912, %3 : vector<16x128xf32>
    %1914 = arith.addf %1901, %1913 : vector<16x128xf32>
    %1915 = vector.extract_strided_slice %1914 {offsets = [1, 0], sizes = [15, 128], strides = [1, 1]} : vector<16x128xf32> to vector<15x128xf32>
    %1916 = tpu.concatenate %1915, %4 in 0 : vector<15x128xf32>, vector<1x128xf32> -> vector<16x128xf32>
    %c63_720 = arith.constant 63 : index
    %c0_721 = arith.constant 0 : index
    %1917 = vector.load %arg6[%c63_720, %c0_721] : memref<64x128xf32, #tpu.memory_space<vmem>>, vector<1x128xf32>
    %1918 = vector.extract_strided_slice %1916 {offsets = [0, 0], sizes = [1, 128], strides = [1, 1]} : vector<16x128xf32> to vector<1x128xf32>
    %1919 = arith.addf %1917, %1918 : vector<1x128xf32>
    %cst_722 = arith.constant 1.000000e+01 : f32
    %1920 = vector.broadcast %cst_722 : f32 to vector<1x128xf32>
    %1921 = arith.cmpf oge, %1919, %1920 : vector<1x128xf32>
    %1922 = arith.extui %1921 : vector<1x128xi1> to vector<1x128xi32>
    %1923 = arith.sitofp %1922 : vector<1x128xi32> to vector<1x128xf32>
    %cst_723 = arith.constant 1.000000e+00 : f32
    %1924 = vector.broadcast %cst_723 : f32 to vector<1x128xf32>
    %1925 = arith.mulf %1923, %1924 : vector<1x128xf32>
    %c63_724 = arith.constant 63 : index
    %c0_725 = arith.constant 0 : index
    %1926 = vector.load %arg5[%c63_724, %c0_725] : memref<64x128xf32, #tpu.memory_space<vmem>>, vector<1x128xf32>
    tpu.vector_store %arg5[%c63_724, %c0_725], %1925 {strides = array<i32>} : memref<64x128xf32, #tpu.memory_space<vmem>>, vector<1x128xf32>,
    return
  }
}

</mosaic_0001>

<llo_original>
// kernel: network_forward.1
$region0: #{network_forward.1}
  #allocation0 [shape = 'u32[]', space=smem, size = 0x4, offset = 0x4, fixed_abs, tag = 'smem constant byte address 0x4 - core index']
  #allocation1 [shape = 'u32[144,128]{1,0:T(1,128)}', space=vmem, size = 0x12000, scoped, tag = 'internal scratch']
  #allocation2 [shape = 'f32[64,128]{1,0:T(8,128)}', space=vmem, size = 0x8000, scoped, tag = 'scratch operand']
  #allocation3 [shape = 'f32[64,128]{1,0:T(8,128)}', space=vmem, size = 0x8000, scoped, tag = 'scratch operand']
  %s0 = inlined_call_operand.vmem [shape: f32[64,64], index: 0, kind: input, shape index: {}]
  %s1 = inlined_call_operand.hbm [shape: f32[64,64], index: 1, kind: input, shape index: {}]
  %s2 = inlined_call_operand.hbm [shape: f32[64,128], index: 2, kind: input, shape index: {}]
  %s3 = inlined_call_operand.vmem [shape: f32[128,128], index: 3, kind: input, shape index: {}]
  %s4 = inlined_call_operand.vmem [shape: f32[16,1], index: 4, kind: input, shape index: {}]
  %s5 = inlined_call_operand.vmem [shape: f32[64,128], index: 5, kind: output, shape index: {}]
  %s6 = sld [smem:[#allocation0]]
  $region38: #{network_forward.1} parent=0
    _
  %s8 = ssub.s32 1, %s6
  %s9 = scalar_select 0, %s8, %s6
  $region1: #{network_forward.1} parent=0
    #allocation4 [shape = 'u8[32768]{0}', space=vmem, size = 0x8000, scoped, tag = 'input window, operand 1, single buffered']
    #allocation5 [shape = 's32[1]{0}', space=sflag, size = 0x4, scoped, tag = 'scoped memory for network_forward.1']
    #allocation6 [shape = 'u8[32768]{0}', space=vmem, size = 0x8000, scoped, tag = 'input window, operand 2, single buffered']
    #allocation7 [shape = 's32[1]{0}', space=sflag, size = 0x4, scoped, tag = 'scoped memory for network_forward.1']
    %10 = vsyncpa [#allocation5], 0
    %11 = vsyncpa [#allocation7], 0
    // Predicated region
    $region2: #{network_forward.1} parent=1 // pred_check
      _
    $region3: #{network_forward.1} parent=1 // pred_check_branch
      %13 = sbr.rel (0) target = $region5
    $region4: #{network_forward.1} parent=1 // pred_region
      _
    $region5: #{network_forward.1} parent=1 // pred_fallthru
      _
    // Predicated region
    $region6: #{network_forward.1} parent=1 // pred_check
      _
    $region7: #{network_forward.1} parent=1 // pred_check_branch
      %15 = sbr.rel (0) target = $region9
    $region8: #{network_forward.1} parent=1 // pred_region
      %s17 = ssub.s32 1024, 1024
      %18 = vsyncadd [#allocation5], %s17
      %s19 = sshll.u32 [#allocation4], 4
      %s20 = int_to_ptr.vmem [resolvable:$true] %s19
      %25 = dma.hbm_to_vmem [thread:$0]  %s1, 1024, %s20, [#allocation5], 128, 128, 8
    $region9: #{network_forward.1} parent=1 // pred_fallthru
      _
    // Predicated region
    $region10: #{network_forward.1} parent=1 // pred_check
      _
    $region11: #{network_forward.1} parent=1 // pred_check_branch
      %27 = sbr.rel (0) target = $region13
    $region12: #{network_forward.1} parent=1 // pred_region
      %s29 = ssub.s32 1024, 1024
      %30 = vsyncadd [#allocation7], %s29
      %s31 = sshll.u32 [#allocation6], 4
      %s32 = int_to_ptr.vmem [resolvable:$true] %s31
      %37 = dma.hbm_to_vmem [thread:$0]  %s2, 1024, %s32, [#allocation7], 128, 128, 8
    $region13: #{network_forward.1} parent=1 // pred_fallthru
      _
    // Predicated region
    $region14: #{network_forward.1} parent=1 // pred_check
      _
    $region15: #{network_forward.1} parent=1 // pred_check_branch
      %39 = sbr.rel (0) target = $region17
    $region16: #{network_forward.1} parent=1 // pred_region
      _
    $region17: #{network_forward.1} parent=1 // pred_fallthru
      _
    // Predicated region
    $region18: #{network_forward.1} parent=1 // pred_check
      _
    $region19: #{network_forward.1} parent=1 // pred_check_branch
      %41 = sbr.rel (0) target = $region21
    $region20: #{network_forward.1} parent=1 // pred_region
      _
    $region21: #{network_forward.1} parent=1 // pred_fallthru
      _
    // Predicated region
    $region22: #{network_forward.1} parent=1 // pred_check
      _
    $region23: #{network_forward.1} parent=1 // pred_check_branch
      %43 = sbr.rel (0) target = $region25
    $region24: #{network_forward.1} parent=1 // pred_region
      %44 = dma.done [#allocation5], 1024
    $region25: #{network_forward.1} parent=1 // pred_fallthru
      _
    // Predicated region
    $region26: #{network_forward.1} parent=1 // pred_check
      _
    $region27: #{network_forward.1} parent=1 // pred_check_branch
      %46 = sbr.rel (0) target = $region29
    $region28: #{network_forward.1} parent=1 // pred_region
      %47 = dma.done [#allocation7], 1024
    $region29: #{network_forward.1} parent=1 // pred_fallthru
      _
    %v48 = vld [vmem:[#allocation4] sm:$0xff]
    %v49 = vld [vmem:[#allocation4 + $0x8] sm:$0xff]
    %v50 = vld [vmem:[#allocation4 + $0x10] sm:$0xff]
    %v51 = vld [vmem:[#allocation4 + $0x18] sm:$0xff]
    %v52 = vld [vmem:[#allocation4 + $0x20] sm:$0xff]
    %v53 = vld [vmem:[#allocation4 + $0x28] sm:$0xff]
    %v54 = vld [vmem:[#allocation4 + $0x30] sm:$0xff]
    %v55 = vld [vmem:[#allocation4 + $0x38] sm:$0xff]
    %v56 = vld [vmem:[%s4] sm:$0xff]
    %v57 = vld [vmem:[%s4 + $0x8] sm:$0xff]
    %59 = vset.pattern.permute.xlu0 0
    %60 = vperm.xlu0 %59, %v56
    %v61 = vpop.permute.xlu0 %60
    %64 = vset.pattern.permute.xlu0 0
    %65 = vperm.xlu0 %64, %v57
    %v66 = vpop.permute.xlu0 %65
    %v68 = vld [vmem:[%s0] sm:$0xff]
    %v69 = vld [vmem:[%s0 + $0x8] sm:$0xff]
    %v70 = vld [vmem:[%s0 + $0x10] sm:$0xff]
    %v71 = vld [vmem:[%s0 + $0x18] sm:$0xff]
    %v72 = vld [vmem:[%s0 + $0x20] sm:$0xff]
    %v73 = vld [vmem:[%s0 + $0x28] sm:$0xff]
    %v74 = vld [vmem:[%s0 + $0x30] sm:$0xff]
    %v75 = vld [vmem:[%s0 + $0x38] sm:$0xff]
    %v76 = vld [vmem:[#allocation6] sm:$0xff]
    %v77 = vld [vmem:[#allocation6 + $0x8] sm:$0xff]
    %v78 = vld [vmem:[#allocation6 + $0x10] sm:$0xff]
    %v79 = vld [vmem:[#allocation6 + $0x18] sm:$0xff]
    %v80 = vld [vmem:[#allocation6 + $0x20] sm:$0xff]
    %v81 = vld [vmem:[#allocation6 + $0x28] sm:$0xff]
    %v82 = vld [vmem:[#allocation6 + $0x30] sm:$0xff]
    %v83 = vld [vmem:[#allocation6 + $0x38] sm:$0xff]
    %vm84 = vcmask 523264
    %v86 = vsel %vm84, %v68, 0
    %v89 = vsel %vm84, %v69, 0
    %v92 = vsel %vm84, %v70, 0
    %v95 = vsel %vm84, %v71, 0
    %v98 = vsel %vm84, %v72, 0
    %v101 = vsel %vm84, %v73, 0
    %v104 = vsel %vm84, %v74, 0
    %v107 = vsel %vm84, %v75, 0
    %109 = vmatprep.subr.mxu0 0.0
    %110 = vmatpush1.msra.mxu0 0.0
    %111 = vmatprep.subr.mxu0 0.0
    %112 = vmatpush1.msra.mxu0 0.0
    %113 = vmatprep.subr.mxu0 0.0
    %114 = vmatpush1.msra.mxu0 0.0
    %115 = vmatprep.subr.mxu0 0.0
    %116 = vmatpush1.msra.mxu0 0.0
    %117 = vmatprep.subr.mxu0 0.0
    %118 = vmatpush1.msra.mxu0 0.0
    %119 = vmatprep.subr.mxu0 0.0
    %120 = vmatpush1.msra.mxu0 0.0
    %121 = vmatprep.subr.mxu0 0.0
    %122 = vmatpush1.msra.mxu0 0.0
    %123 = vmatprep.subr.mxu0 0.0
    %124 = vmatpush1.msra.mxu0 0.0
    %125 = vmatprep.subr.mxu0 0.0
    %126 = vmatpush1.msra.mxu0 %v83
    %127 = vmatprep.subr.mxu0 0.0
    %128 = vmatpush1.msra.mxu0 %v82
    %129 = vmatprep.subr.mxu0 0.0
    %130 = vmatpush1.msra.mxu0 %v81
    %131 = vmatprep.subr.mxu0 0.0
    %132 = vmatpush1.msra.mxu0 %v80
    %133 = vmatprep.subr.mxu0 0.0
    %134 = vmatpush1.msra.mxu0 %v79
    %135 = vmatprep.subr.mxu0 0.0
    %136 = vmatpush1.msra.mxu0 %v78
    %137 = vmatprep.subr.mxu0 0.0
    %138 = vmatpush1.msra.mxu0 %v77
    %139 = vmatprep.subr.mxu0 0.0
    %140 = vmatpush1.msra.mxu0 %v76
    %141 = vmatprep.subr.mxu0 0.0
    %142 = vmatpush2.msra.mxu0 0.0
    %143 = vmatprep.subr.mxu0 0.0
    %144 = vmatpush2.msra.mxu0 0.0
    %145 = vmatprep.subr.mxu0 0.0
    %146 = vmatpush2.msra.mxu0 0.0
    %147 = vmatprep.subr.mxu0 0.0
    %148 = vmatpush2.msra.mxu0 0.0
    %149 = vmatprep.subr.mxu0 0.0
    %150 = vmatpush2.msra.mxu0 0.0
    %151 = vmatprep.subr.mxu0 0.0
    %152 = vmatpush2.msra.mxu0 0.0
    %153 = vmatprep.subr.mxu0 0.0
    %154 = vmatpush2.msra.mxu0 0.0
    %155 = vmatprep.subr.mxu0 0.0
    %156 = vmatpush2.msra.mxu0 0.0
    %157 = vmatprep.subr.mxu0 0.0
    %158 = vmatpush2.msra.mxu0 0.0
    %159 = vmatprep.subr.mxu0 0.0
    %160 = vmatpush2.msra.mxu0 0.0
    %161 = vmatprep.subr.mxu0 0.0
    %162 = vmatpush2.msra.mxu0 0.0
    %163 = vmatprep.subr.mxu0 0.0
    %164 = vmatpush2.msra.mxu0 0.0
    %165 = vmatprep.subr.mxu0 0.0
    %166 = vmatpush2.msra.mxu0 0.0
    %167 = vmatprep.subr.mxu0 0.0
    %168 = vmatpush2.msra.mxu0 0.0
    %169 = vmatprep.subr.mxu0 0.0
    %170 = vmatpush2.msra.mxu0 0.0
    %171 = vmatprep.subr.mxu0 0.0
    %172 = vmatpush2.msra.mxu0 0.0
    %173 = vmatprep.mubr.f32.mxu0 0.0
    %174 = vmatmul.mubr.f32.gmra.mxu0 %v86
    %v175 = vpop.f32.mrf.mxu0
    %v176 = vadd.f32 0.0, %v175
    %v177 = vpop.f32.mrf.mxu0
    %178 = vmatprep.mubr.f32.mxu0 0.0
    %179 = vmatmul.mubr.f32.gmra.mxu0 %v89
    %v180 = vpop.f32.mrf.mxu0
    %v181 = vadd.f32 0.0, %v180
    %v182 = vpop.f32.mrf.mxu0
    %183 = vmatprep.mubr.f32.mxu0 0.0
    %184 = vmatmul.mubr.f32.gmra.mxu0 %v92
    %v185 = vpop.f32.mrf.mxu0
    %v186 = vadd.f32 0.0, %v185
    %v187 = vpop.f32.mrf.mxu0
    %188 = vmatprep.mubr.f32.mxu0 0.0
    %189 = vmatmul.mubr.f32.gmra.mxu0 %v95
    %v190 = vpop.f32.mrf.mxu0
    %v191 = vadd.f32 0.0, %v190
    %v192 = vpop.f32.mrf.mxu0
    %193 = vmatprep.mubr.f32.mxu0 0.0
    %194 = vmatmul.mubr.f32.gmra.mxu0 %v98
    %v195 = vpop.f32.mrf.mxu0
    %v196 = vadd.f32 0.0, %v195
    %v197 = vpop.f32.mrf.mxu0
    %198 = vmatprep.mubr.f32.mxu0 0.0
    %199 = vmatmul.mubr.f32.gmra.mxu0 %v101
    %v200 = vpop.f32.mrf.mxu0
    %v201 = vadd.f32 0.0, %v200
    %v202 = vpop.f32.mrf.mxu0
    %203 = vmatprep.mubr.f32.mxu0 0.0
    %204 = vmatmul.mubr.f32.gmra.mxu0 %v104
    %v205 = vpop.f32.mrf.mxu0
    %v206 = vadd.f32 0.0, %v205
    %v207 = vpop.f32.mrf.mxu0
    %208 = vmatprep.mubr.f32.mxu0 0.0
    %209 = vmatmul.mubr.f32.gmra.mxu0 %v107
    %v210 = vpop.f32.mrf.mxu0
    %v211 = vadd.f32 0.0, %v210
    %v212 = vpop.f32.mrf.mxu0
    %213 = vdwg.mxu0
    %v215 = vsel %vm84, %v48, 0
    %v218 = vsel %vm84, %v49, 0
    %v221 = vsel %vm84, %v50, 0
    %v224 = vsel %vm84, %v51, 0
    %v227 = vsel %vm84, %v52, 0
    %v230 = vsel %vm84, %v53, 0
    %v233 = vsel %vm84, %v54, 0
    %v236 = vsel %vm84, %v55, 0
    %238 = vmatprep.subr.mxu0 0.0
    %239 = vmatpush1.msra.mxu0 0.0
    %240 = vmatprep.subr.mxu0 0.0
    %241 = vmatpush1.msra.mxu0 0.0
    %242 = vmatprep.subr.mxu0 0.0
    %243 = vmatpush1.msra.mxu0 0.0
    %244 = vmatprep.subr.mxu0 0.0
    %245 = vmatpush1.msra.mxu0 0.0
    %246 = vmatprep.subr.mxu0 0.0
    %247 = vmatpush1.msra.mxu0 0.0
    %248 = vmatprep.subr.mxu0 0.0
    %249 = vmatpush1.msra.mxu0 0.0
    %250 = vmatprep.subr.mxu0 0.0
    %251 = vmatpush1.msra.mxu0 0.0
    %252 = vmatprep.subr.mxu0 0.0
    %253 = vmatpush1.msra.mxu0 0.0
    %254 = vmatprep.subr.mxu0 0.0
    %255 = vmatpush1.msra.mxu0 %v211
    %256 = vmatprep.subr.mxu0 0.0
    %257 = vmatpush1.msra.mxu0 %v206
    %258 = vmatprep.subr.mxu0 0.0
    %259 = vmatpush1.msra.mxu0 %v201
    %260 = vmatprep.subr.mxu0 0.0
    %261 = vmatpush1.msra.mxu0 %v196
    %262 = vmatprep.subr.mxu0 0.0
    %263 = vmatpush1.msra.mxu0 %v191
    %264 = vmatprep.subr.mxu0 0.0
    %265 = vmatpush1.msra.mxu0 %v186
    %266 = vmatprep.subr.mxu0 0.0
    %267 = vmatpush1.msra.mxu0 %v181
    %268 = vmatprep.subr.mxu0 0.0
    %269 = vmatpush1.msra.mxu0 %v176
    %270 = vmatprep.subr.mxu0 0.0
    %271 = vmatpush2.msra.mxu0 0.0
    %272 = vmatprep.subr.mxu0 0.0
    %273 = vmatpush2.msra.mxu0 0.0
    %274 = vmatprep.subr.mxu0 0.0
    %275 = vmatpush2.msra.mxu0 0.0
    %276 = vmatprep.subr.mxu0 0.0
    %277 = vmatpush2.msra.mxu0 0.0
    %278 = vmatprep.subr.mxu0 0.0
    %279 = vmatpush2.msra.mxu0 0.0
    %280 = vmatprep.subr.mxu0 0.0
    %281 = vmatpush2.msra.mxu0 0.0
    %282 = vmatprep.subr.mxu0 0.0
    %283 = vmatpush2.msra.mxu0 0.0
    %284 = vmatprep.subr.mxu0 0.0
    %285 = vmatpush2.msra.mxu0 0.0
    %286 = vmatprep.subr.mxu0 0.0
    %287 = vmatpush2.msra.mxu0 0.0
    %288 = vmatprep.subr.mxu0 0.0
    %289 = vmatpush2.msra.mxu0 0.0
    %290 = vmatprep.subr.mxu0 0.0
    %291 = vmatpush2.msra.mxu0 0.0
    %292 = vmatprep.subr.mxu0 0.0
    %293 = vmatpush2.msra.mxu0 0.0
    %294 = vmatprep.subr.mxu0 0.0
    %295 = vmatpush2.msra.mxu0 0.0
    %296 = vmatprep.subr.mxu0 0.0
    %297 = vmatpush2.msra.mxu0 0.0
    %298 = vmatprep.subr.mxu0 0.0
    %299 = vmatpush2.msra.mxu0 0.0
    %300 = vmatprep.subr.mxu0 0.0
    %301 = vmatpush2.msra.mxu0 0.0
    %302 = vmatprep.mubr.f32.mxu0 0.0
    %303 = vmatmul.mubr.f32.gmra.mxu0 %v215
    %v304 = vpop.f32.mrf.mxu0
    %v305 = vadd.f32 0.0, %v304
    %v306 = vpop.f32.mrf.mxu0
    %307 = vmatprep.mubr.f32.mxu0 0.0
    %308 = vmatmul.mubr.f32.gmra.mxu0 %v218
    %v309 = vpop.f32.mrf.mxu0
    %v310 = vadd.f32 0.0, %v309
    %v311 = vpop.f32.mrf.mxu0
    %312 = vmatprep.mubr.f32.mxu0 0.0
    %313 = vmatmul.mubr.f32.gmra.mxu0 %v221
    %v314 = vpop.f32.mrf.mxu0
    %v315 = vadd.f32 0.0, %v314
    %v316 = vpop.f32.mrf.mxu0
    %317 = vmatprep.mubr.f32.mxu0 0.0
    %318 = vmatmul.mubr.f32.gmra.mxu0 %v224
    %v319 = vpop.f32.mrf.mxu0
    %v320 = vadd.f32 0.0, %v319
    %v321 = vpop.f32.mrf.mxu0
    %322 = vmatprep.mubr.f32.mxu0 0.0
    %323 = vmatmul.mubr.f32.gmra.mxu0 %v227
    %v324 = vpop.f32.mrf.mxu0
    %v325 = vadd.f32 0.0, %v324
    %v326 = vpop.f32.mrf.mxu0
    %327 = vmatprep.mubr.f32.mxu0 0.0
    %328 = vmatmul.mubr.f32.gmra.mxu0 %v230
    %v329 = vpop.f32.mrf.mxu0
    %v330 = vadd.f32 0.0, %v329
    %v331 = vpop.f32.mrf.mxu0
    %332 = vmatprep.mubr.f32.mxu0 0.0
    %333 = vmatmul.mubr.f32.gmra.mxu0 %v233
    %v334 = vpop.f32.mrf.mxu0
    %v335 = vadd.f32 0.0, %v334
    %v336 = vpop.f32.mrf.mxu0
    %337 = vmatprep.mubr.f32.mxu0 0.0
    %338 = vmatmul.mubr.f32.gmra.mxu0 %v236
    %v339 = vpop.f32.mrf.mxu0
    %v340 = vadd.f32 0.0, %v339
    %v341 = vpop.f32.mrf.mxu0
    %342 = vdwg.mxu0
    %343 = vst [vmem:[#allocation2] sm:$0xff] %v305
    %344 = vst [vmem:[#allocation2 + $0x8] sm:$0xff] %v310
    %345 = vst [vmem:[#allocation2 + $0x10] sm:$0xff] %v315
    %346 = vst [vmem:[#allocation2 + $0x18] sm:$0xff] %v320
    %347 = vst [vmem:[#allocation2 + $0x20] sm:$0xff] %v325
    %348 = vst [vmem:[#allocation2 + $0x28] sm:$0xff] %v330
    %349 = vst [vmem:[#allocation2 + $0x30] sm:$0xff] %v335
    %350 = vst [vmem:[#allocation2 + $0x38] sm:$0xff] %v340
    %v351 = vld [vmem:[#allocation2] sm:$0x1]
    %v352 = vadd.f32 %v351, 0.0
    %vm353 = vcmp.ge.f32.partialorder %v352, 10.0
    %v354 = vsel %vm353, 1, 0
    %v355 = vcvt.s32.f32 %v354
    %356 = vst [vmem:[#allocation3] sm:$0x1] %v355
    %v357 = vlaneseq
    %v358 = vshrl.u32 %v357, 7
    %v359 = vsub.s32 0, %v358
    %v360 = vrot.slane %v355, %v359
    %v361 = vmul.f32 %v360, %v61
    %v362 = vmul.f32 %v360, %v66
    %v363 = vadd.f32 %v361, 0.0
    %v364 = vadd.f32 %v362, 0.0
    %vm367 = vcmask 1046528
    %v368 = vrot.slane %v363, 1
    %v369 = vrot.slane %v364, 1
    %v370 = vsel %vm367, %v368, %v369
    %v373 = vsel %vm367, %v369, 0.0
    %v374 = vld [vmem:[#allocation2 + $0x1] sm:$0x1]
    %v375 = vadd.f32 %v374, %v370
    %vm376 = vcmp.ge.f32.partialorder %v375, 10.0
    %v377 = vsel %vm376, 1, 0
    %v378 = vcvt.s32.f32 %v377
    %379 = vst [vmem:[#allocation3 + $0x1] sm:$0x1] %v378
    %v380 = vlaneseq
    %v381 = vshrl.u32 %v380, 7
    %v382 = vsub.s32 0, %v381
    %v383 = vrot.slane %v378, %v382
    %v384 = vmul.f32 %v383, %v61
    %v385 = vmul.f32 %v383, %v66
    %v386 = vadd.f32 %v370, %v384
    %v387 = vadd.f32 %v373, %v385
    %v390 = vrot.slane %v386, 1
    %v391 = vrot.slane %v387, 1
    %v392 = vsel %vm367, %v390, %v391
    %v395 = vsel %vm367, %v391, 0.0
    %v396 = vld [vmem:[#allocation2 + $0x2] sm:$0x1]
    %v397 = vadd.f32 %v396, %v392
    %vm398 = vcmp.ge.f32.partialorder %v397, 10.0
    %v399 = vsel %vm398, 1, 0
    %v400 = vcvt.s32.f32 %v399
    %401 = vst [vmem:[#allocation3 + $0x2] sm:$0x1] %v400
    %v402 = vlaneseq
    %v403 = vshrl.u32 %v402, 7
    %v404 = vsub.s32 0, %v403
    %v405 = vrot.slane %v400, %v404
    %v406 = vmul.f32 %v405, %v61
    %v407 = vmul.f32 %v405, %v66
    %v408 = vadd.f32 %v392, %v406
    %v409 = vadd.f32 %v395, %v407
    %v412 = vrot.slane %v408, 1
    %v413 = vrot.slane %v409, 1
    %v414 = vsel %vm367, %v412, %v413
    %v417 = vsel %vm367, %v413, 0.0
    %v418 = vld [vmem:[#allocation2 + $0x3] sm:$0x1]
    %v419 = vadd.f32 %v418, %v414
    %vm420 = vcmp.ge.f32.partialorder %v419, 10.0
    %v421 = vsel %vm420, 1, 0
    %v422 = vcvt.s32.f32 %v421
    %423 = vst [vmem:[#allocation3 + $0x3] sm:$0x1] %v422
    %v424 = vlaneseq
    %v425 = vshrl.u32 %v424, 7
    %v426 = vsub.s32 0, %v425
    %v427 = vrot.slane %v422, %v426
    %v428 = vmul.f32 %v427, %v61
    %v429 = vmul.f32 %v427, %v66
    %v430 = vadd.f32 %v414, %v428
    %v431 = vadd.f32 %v417, %v429
    %v434 = vrot.slane %v430, 1
    %v435 = vrot.slane %v431, 1
    %v436 = vsel %vm367, %v434, %v435
    %v439 = vsel %vm367, %v435, 0.0
    %v440 = vld [vmem:[#allocation2 + $0x4] sm:$0x1]
    %v441 = vadd.f32 %v440, %v436
    %vm442 = vcmp.ge.f32.partialorder %v441, 10.0
    %v443 = vsel %vm442, 1, 0
    %v444 = vcvt.s32.f32 %v443
    %445 = vst [vmem:[#allocation3 + $0x4] sm:$0x1] %v444
    %v446 = vlaneseq
    %v447 = vshrl.u32 %v446, 7
    %v448 = vsub.s32 0, %v447
    %v449 = vrot.slane %v444, %v448
    %v450 = vmul.f32 %v449, %v61
    %v451 = vmul.f32 %v449, %v66
    %v452 = vadd.f32 %v436, %v450
    %v453 = vadd.f32 %v439, %v451
    %v456 = vrot.slane %v452, 1
    %v457 = vrot.slane %v453, 1
    %v458 = vsel %vm367, %v456, %v457
    %v461 = vsel %vm367, %v457, 0.0
    %v462 = vld [vmem:[#allocation2 + $0x5] sm:$0x1]
    %v463 = vadd.f32 %v462, %v458
    %vm464 = vcmp.ge.f32.partialorder %v463, 10.0
    %v465 = vsel %vm464, 1, 0
    %v466 = vcvt.s32.f32 %v465
    %467 = vst [vmem:[#allocation3 + $0x5] sm:$0x1] %v466
    %v468 = vlaneseq
    %v469 = vshrl.u32 %v468, 7
    %v470 = vsub.s32 0, %v469
    %v471 = vrot.slane %v466, %v470
    %v472 = vmul.f32 %v471, %v61
    %v473 = vmul.f32 %v471, %v66
    %v474 = vadd.f32 %v458, %v472
    %v475 = vadd.f32 %v461, %v473
    %v478 = vrot.slane %v474, 1
    %v479 = vrot.slane %v475, 1
    %v480 = vsel %vm367, %v478, %v479
    %v483 = vsel %vm367, %v479, 0.0
    %v484 = vld [vmem:[#allocation2 + $0x6] sm:$0x1]
    %v485 = vadd.f32 %v484, %v480
    %vm486 = vcmp.ge.f32.partialorder %v485, 10.0
    %v487 = vsel %vm486, 1, 0
    %v488 = vcvt.s32.f32 %v487
    %489 = vst [vmem:[#allocation3 + $0x6] sm:$0x1] %v488
    %v490 = vlaneseq
    %v491 = vshrl.u32 %v490, 7
    %v492 = vsub.s32 0, %v491
    %v493 = vrot.slane %v488, %v492
    %v494 = vmul.f32 %v493, %v61
    %v495 = vmul.f32 %v493, %v66
    %v496 = vadd.f32 %v480, %v494
    %v497 = vadd.f32 %v483, %v495
    %v500 = vrot.slane %v496, 1
    %v501 = vrot.slane %v497, 1
    %v502 = vsel %vm367, %v500, %v501
    %v505 = vsel %vm367, %v501, 0.0
    %v506 = vld [vmem:[#allocation2 + $0x7] sm:$0x1]
    %v507 = vadd.f32 %v506, %v502
    %vm508 = vcmp.ge.f32.partialorder %v507, 10.0
    %v509 = vsel %vm508, 1, 0
    %v510 = vcvt.s32.f32 %v509
    %511 = vst [vmem:[#allocation3 + $0x7] sm:$0x1] %v510
    %v512 = vlaneseq
    %v513 = vshrl.u32 %v512, 7
    %v514 = vsub.s32 0, %v513
    %v515 = vrot.slane %v510, %v514
    %v516 = vmul.f32 %v515, %v61
    %v517 = vmul.f32 %v515, %v66
    %v518 = vadd.f32 %v502, %v516
    %v519 = vadd.f32 %v505, %v517
    %v522 = vrot.slane %v518, 1
    %v523 = vrot.slane %v519, 1
    %v524 = vsel %vm367, %v522, %v523
    %v527 = vsel %vm367, %v523, 0.0
    %v528 = vld [vmem:[#allocation2 + $0x8] sm:$0x1]
    %v529 = vadd.f32 %v528, %v524
    %vm530 = vcmp.ge.f32.partialorder %v529, 10.0
    %v531 = vsel %vm530, 1, 0
    %v532 = vcvt.s32.f32 %v531
    %533 = vst [vmem:[#allocation3 + $0x8] sm:$0x1] %v532
    %v534 = vlaneseq
    %v535 = vshrl.u32 %v534, 7
    %v536 = vsub.s32 0, %v535
    %v537 = vrot.slane %v532, %v536
    %v538 = vmul.f32 %v537, %v61
    %v539 = vmul.f32 %v537, %v66
    %v540 = vadd.f32 %v524, %v538
    %v541 = vadd.f32 %v527, %v539
    %v544 = vrot.slane %v540, 1
    %v545 = vrot.slane %v541, 1
    %v546 = vsel %vm367, %v544, %v545
    %v549 = vsel %vm367, %v545, 0.0
    %v550 = vld [vmem:[#allocation2 + $0x9] sm:$0x1]
    %v551 = vadd.f32 %v550, %v546
    %vm552 = vcmp.ge.f32.partialorder %v551, 10.0
    %v553 = vsel %vm552, 1, 0
    %v554 = vcvt.s32.f32 %v553
    %555 = vst [vmem:[#allocation3 + $0x9] sm:$0x1] %v554
    %v556 = vlaneseq
    %v557 = vshrl.u32 %v556, 7
    %v558 = vsub.s32 0, %v557
    %v559 = vrot.slane %v554, %v558
    %v560 = vmul.f32 %v559, %v61
    %v561 = vmul.f32 %v559, %v66
    %v562 = vadd.f32 %v546, %v560
    %v563 = vadd.f32 %v549, %v561
    %v566 = vrot.slane %v562, 1
    %v567 = vrot.slane %v563, 1
    %v568 = vsel %vm367, %v566, %v567
    %v571 = vsel %vm367, %v567, 0.0
    %v572 = vld [vmem:[#allocation2 + $0xa] sm:$0x1]
    %v573 = vadd.f32 %v572, %v568
    %vm574 = vcmp.ge.f32.partialorder %v573, 10.0
    %v575 = vsel %vm574, 1, 0
    %v576 = vcvt.s32.f32 %v575
    %577 = vst [vmem:[#allocation3 + $0xa] sm:$0x1] %v576
    %v578 = vlaneseq
    %v579 = vshrl.u32 %v578, 7
    %v580 = vsub.s32 0, %v579
    %v581 = vrot.slane %v576, %v580
    %v582 = vmul.f32 %v581, %v61
    %v583 = vmul.f32 %v581, %v66
    %v584 = vadd.f32 %v568, %v582
    %v585 = vadd.f32 %v571, %v583
    %v588 = vrot.slane %v584, 1
    %v589 = vrot.slane %v585, 1
    %v590 = vsel %vm367, %v588, %v589
    %v593 = vsel %vm367, %v589, 0.0
    %v594 = vld [vmem:[#allocation2 + $0xb] sm:$0x1]
    %v595 = vadd.f32 %v594, %v590
    %vm596 = vcmp.ge.f32.partialorder %v595, 10.0
    %v597 = vsel %vm596, 1, 0
    %v598 = vcvt.s32.f32 %v597
    %599 = vst [vmem:[#allocation3 + $0xb] sm:$0x1] %v598
    %v600 = vlaneseq
    %v601 = vshrl.u32 %v600, 7
    %v602 = vsub.s32 0, %v601
    %v603 = vrot.slane %v598, %v602
    %v604 = vmul.f32 %v603, %v61
    %v605 = vmul.f32 %v603, %v66
    %v606 = vadd.f32 %v590, %v604
    %v607 = vadd.f32 %v593, %v605
    %v610 = vrot.slane %v606, 1
    %v611 = vrot.slane %v607, 1
    %v612 = vsel %vm367, %v610, %v611
    %v615 = vsel %vm367, %v611, 0.0
    %v616 = vld [vmem:[#allocation2 + $0xc] sm:$0x1]
    %v617 = vadd.f32 %v616, %v612
    %vm618 = vcmp.ge.f32.partialorder %v617, 10.0
    %v619 = vsel %vm618, 1, 0
    %v620 = vcvt.s32.f32 %v619
    %621 = vst [vmem:[#allocation3 + $0xc] sm:$0x1] %v620
    %v622 = vlaneseq
    %v623 = vshrl.u32 %v622, 7
    %v624 = vsub.s32 0, %v623
    %v625 = vrot.slane %v620, %v624
    %v626 = vmul.f32 %v625, %v61
    %v627 = vmul.f32 %v625, %v66
    %v628 = vadd.f32 %v612, %v626
    %v629 = vadd.f32 %v615, %v627
    %v632 = vrot.slane %v628, 1
    %v633 = vrot.slane %v629, 1
    %v634 = vsel %vm367, %v632, %v633
    %v637 = vsel %vm367, %v633, 0.0
    %v638 = vld [vmem:[#allocation2 + $0xd] sm:$0x1]
    %v639 = vadd.f32 %v638, %v634
    %vm640 = vcmp.ge.f32.partialorder %v639, 10.0
    %v641 = vsel %vm640, 1, 0
    %v642 = vcvt.s32.f32 %v641
    %643 = vst [vmem:[#allocation3 + $0xd] sm:$0x1] %v642
    %v644 = vlaneseq
    %v645 = vshrl.u32 %v644, 7
    %v646 = vsub.s32 0, %v645
    %v647 = vrot.slane %v642, %v646
    %v648 = vmul.f32 %v647, %v61
    %v649 = vmul.f32 %v647, %v66
    %v650 = vadd.f32 %v634, %v648
    %v651 = vadd.f32 %v637, %v649
    %v654 = vrot.slane %v650, 1
    %v655 = vrot.slane %v651, 1
    %v656 = vsel %vm367, %v654, %v655
    %v659 = vsel %vm367, %v655, 0.0
    %v660 = vld [vmem:[#allocation2 + $0xe] sm:$0x1]
    %v661 = vadd.f32 %v660, %v656
    %vm662 = vcmp.ge.f32.partialorder %v661, 10.0
    %v663 = vsel %vm662, 1, 0
    %v664 = vcvt.s32.f32 %v663
    %665 = vst [vmem:[#allocation3 + $0xe] sm:$0x1] %v664
    %v666 = vlaneseq
    %v667 = vshrl.u32 %v666, 7
    %v668 = vsub.s32 0, %v667
    %v669 = vrot.slane %v664, %v668
    %v670 = vmul.f32 %v669, %v61
    %v671 = vmul.f32 %v669, %v66
    %v672 = vadd.f32 %v656, %v670
    %v673 = vadd.f32 %v659, %v671
    %v676 = vrot.slane %v672, 1
    %v677 = vrot.slane %v673, 1
    %v678 = vsel %vm367, %v676, %v677
    %v681 = vsel %vm367, %v677, 0.0
    %v682 = vld [vmem:[#allocation2 + $0xf] sm:$0x1]
    %v683 = vadd.f32 %v682, %v678
    %vm684 = vcmp.ge.f32.partialorder %v683, 10.0
    %v685 = vsel %vm684, 1, 0
    %v686 = vcvt.s32.f32 %v685
    %687 = vst [vmem:[#allocation3 + $0xf] sm:$0x1] %v686
    %v688 = vlaneseq
    %v689 = vshrl.u32 %v688, 7
    %v690 = vsub.s32 0, %v689
    %v691 = vrot.slane %v686, %v690
    %v692 = vmul.f32 %v691, %v61
    %v693 = vmul.f32 %v691, %v66
    %v694 = vadd.f32 %v678, %v692
    %v695 = vadd.f32 %v681, %v693
    %v698 = vrot.slane %v694, 1
    %v699 = vrot.slane %v695, 1
    %v700 = vsel %vm367, %v698, %v699
    %v703 = vsel %vm367, %v699, 0.0
    %v704 = vld [vmem:[#allocation2 + $0x10] sm:$0x1]
    %v705 = vadd.f32 %v704, %v700
    %vm706 = vcmp.ge.f32.partialorder %v705, 10.0
    %v707 = vsel %vm706, 1, 0
    %v708 = vcvt.s32.f32 %v707
    %709 = vst [vmem:[#allocation3 + $0x10] sm:$0x1] %v708
    %v710 = vlaneseq
    %v711 = vshrl.u32 %v710, 7
    %v712 = vsub.s32 0, %v711
    %v713 = vrot.slane %v708, %v712
    %v714 = vmul.f32 %v713, %v61
    %v715 = vmul.f32 %v713, %v66
    %v716 = vadd.f32 %v700, %v714
    %v717 = vadd.f32 %v703, %v715
    %v720 = vrot.slane %v716, 1
    %v721 = vrot.slane %v717, 1
    %v722 = vsel %vm367, %v720, %v721
    %v725 = vsel %vm367, %v721, 0.0
    %v726 = vld [vmem:[#allocation2 + $0x11] sm:$0x1]
    %v727 = vadd.f32 %v726, %v722
    %vm728 = vcmp.ge.f32.partialorder %v727, 10.0
    %v729 = vsel %vm728, 1, 0
    %v730 = vcvt.s32.f32 %v729
    %731 = vst [vmem:[#allocation3 + $0x11] sm:$0x1] %v730
    %v732 = vlaneseq
    %v733 = vshrl.u32 %v732, 7
    %v734 = vsub.s32 0, %v733
    %v735 = vrot.slane %v730, %v734
    %v736 = vmul.f32 %v735, %v61
    %v737 = vmul.f32 %v735, %v66
    %v738 = vadd.f32 %v722, %v736
    %v739 = vadd.f32 %v725, %v737
    %v742 = vrot.slane %v738, 1
    %v743 = vrot.slane %v739, 1
    %v744 = vsel %vm367, %v742, %v743
    %v747 = vsel %vm367, %v743, 0.0
    %v748 = vld [vmem:[#allocation2 + $0x12] sm:$0x1]
    %v749 = vadd.f32 %v748, %v744
    %vm750 = vcmp.ge.f32.partialorder %v749, 10.0
    %v751 = vsel %vm750, 1, 0
    %v752 = vcvt.s32.f32 %v751
    %753 = vst [vmem:[#allocation3 + $0x12] sm:$0x1] %v752
    %v754 = vlaneseq
    %v755 = vshrl.u32 %v754, 7
    %v756 = vsub.s32 0, %v755
    %v757 = vrot.slane %v752, %v756
    %v758 = vmul.f32 %v757, %v61
    %v759 = vmul.f32 %v757, %v66
    %v760 = vadd.f32 %v744, %v758
    %v761 = vadd.f32 %v747, %v759
    %v764 = vrot.slane %v760, 1
    %v765 = vrot.slane %v761, 1
    %v766 = vsel %vm367, %v764, %v765
    %v769 = vsel %vm367, %v765, 0.0
    %v770 = vld [vmem:[#allocation2 + $0x13] sm:$0x1]
    %v771 = vadd.f32 %v770, %v766
    %vm772 = vcmp.ge.f32.partialorder %v771, 10.0
    %v773 = vsel %vm772, 1, 0
    %v774 = vcvt.s32.f32 %v773
    %775 = vst [vmem:[#allocation3 + $0x13] sm:$0x1] %v774
    %v776 = vlaneseq
    %v777 = vshrl.u32 %v776, 7
    %v778 = vsub.s32 0, %v777
    %v779 = vrot.slane %v774, %v778
    %v780 = vmul.f32 %v779, %v61
    %v781 = vmul.f32 %v779, %v66
    %v782 = vadd.f32 %v766, %v780
    %v783 = vadd.f32 %v769, %v781
    %v786 = vrot.slane %v782, 1
    %v787 = vrot.slane %v783, 1
    %v788 = vsel %vm367, %v786, %v787
    %v791 = vsel %vm367, %v787, 0.0
    %v792 = vld [vmem:[#allocation2 + $0x14] sm:$0x1]
    %v793 = vadd.f32 %v792, %v788
    %vm794 = vcmp.ge.f32.partialorder %v793, 10.0
    %v795 = vsel %vm794, 1, 0
    %v796 = vcvt.s32.f32 %v795
    %797 = vst [vmem:[#allocation3 + $0x14] sm:$0x1] %v796
    %v798 = vlaneseq
    %v799 = vshrl.u32 %v798, 7
    %v800 = vsub.s32 0, %v799
    %v801 = vrot.slane %v796, %v800
    %v802 = vmul.f32 %v801, %v61
    %v803 = vmul.f32 %v801, %v66
    %v804 = vadd.f32 %v788, %v802
    %v805 = vadd.f32 %v791, %v803
    %v808 = vrot.slane %v804, 1
    %v809 = vrot.slane %v805, 1
    %v810 = vsel %vm367, %v808, %v809
    %v813 = vsel %vm367, %v809, 0.0
    %v814 = vld [vmem:[#allocation2 + $0x15] sm:$0x1]
    %v815 = vadd.f32 %v814, %v810
    %vm816 = vcmp.ge.f32.partialorder %v815, 10.0
    %v817 = vsel %vm816, 1, 0
    %v818 = vcvt.s32.f32 %v817
    %819 = vst [vmem:[#allocation3 + $0x15] sm:$0x1] %v818
    %v820 = vlaneseq
    %v821 = vshrl.u32 %v820, 7
    %v822 = vsub.s32 0, %v821
    %v823 = vrot.slane %v818, %v822
    %v824 = vmul.f32 %v823, %v61
    %v825 = vmul.f32 %v823, %v66
    %v826 = vadd.f32 %v810, %v824
    %v827 = vadd.f32 %v813, %v825
    %v830 = vrot.slane %v826, 1
    %v831 = vrot.slane %v827, 1
    %v832 = vsel %vm367, %v830, %v831
    %v835 = vsel %vm367, %v831, 0.0
    %v836 = vld [vmem:[#allocation2 + $0x16] sm:$0x1]
    %v837 = vadd.f32 %v836, %v832
    %vm838 = vcmp.ge.f32.partialorder %v837, 10.0
    %v839 = vsel %vm838, 1, 0
    %v840 = vcvt.s32.f32 %v839
    %841 = vst [vmem:[#allocation3 + $0x16] sm:$0x1] %v840
    %v842 = vlaneseq
    %v843 = vshrl.u32 %v842, 7
    %v844 = vsub.s32 0, %v843
    %v845 = vrot.slane %v840, %v844
    %v846 = vmul.f32 %v845, %v61
    %v847 = vmul.f32 %v845, %v66
    %v848 = vadd.f32 %v832, %v846
    %v849 = vadd.f32 %v835, %v847
    %v852 = vrot.slane %v848, 1
    %v853 = vrot.slane %v849, 1
    %v854 = vsel %vm367, %v852, %v853
    %v857 = vsel %vm367, %v853, 0.0
    %v858 = vld [vmem:[#allocation2 + $0x17] sm:$0x1]
    %v859 = vadd.f32 %v858, %v854
    %vm860 = vcmp.ge.f32.partialorder %v859, 10.0
    %v861 = vsel %vm860, 1, 0
    %v862 = vcvt.s32.f32 %v861
    %863 = vst [vmem:[#allocation3 + $0x17] sm:$0x1] %v862
    %v864 = vlaneseq
    %v865 = vshrl.u32 %v864, 7
    %v866 = vsub.s32 0, %v865
    %v867 = vrot.slane %v862, %v866
    %v868 = vmul.f32 %v867, %v61
    %v869 = vmul.f32 %v867, %v66
    %v870 = vadd.f32 %v854, %v868
    %v871 = vadd.f32 %v857, %v869
    %v874 = vrot.slane %v870, 1
    %v875 = vrot.slane %v871, 1
    %v876 = vsel %vm367, %v874, %v875
    %v879 = vsel %vm367, %v875, 0.0
    %v880 = vld [vmem:[#allocation2 + $0x18] sm:$0x1]
    %v881 = vadd.f32 %v880, %v876
    %vm882 = vcmp.ge.f32.partialorder %v881, 10.0
    %v883 = vsel %vm882, 1, 0
    %v884 = vcvt.s32.f32 %v883
    %885 = vst [vmem:[#allocation3 + $0x18] sm:$0x1] %v884
    %v886 = vlaneseq
    %v887 = vshrl.u32 %v886, 7
    %v888 = vsub.s32 0, %v887
    %v889 = vrot.slane %v884, %v888
    %v890 = vmul.f32 %v889, %v61
    %v891 = vmul.f32 %v889, %v66
    %v892 = vadd.f32 %v876, %v890
    %v893 = vadd.f32 %v879, %v891
    %v896 = vrot.slane %v892, 1
    %v897 = vrot.slane %v893, 1
    %v898 = vsel %vm367, %v896, %v897
    %v901 = vsel %vm367, %v897, 0.0
    %v902 = vld [vmem:[#allocation2 + $0x19] sm:$0x1]
    %v903 = vadd.f32 %v902, %v898
    %vm904 = vcmp.ge.f32.partialorder %v903, 10.0
    %v905 = vsel %vm904, 1, 0
    %v906 = vcvt.s32.f32 %v905
    %907 = vst [vmem:[#allocation3 + $0x19] sm:$0x1] %v906
    %v908 = vlaneseq
    %v909 = vshrl.u32 %v908, 7
    %v910 = vsub.s32 0, %v909
    %v911 = vrot.slane %v906, %v910
    %v912 = vmul.f32 %v911, %v61
    %v913 = vmul.f32 %v911, %v66
    %v914 = vadd.f32 %v898, %v912
    %v915 = vadd.f32 %v901, %v913
    %v918 = vrot.slane %v914, 1
    %v919 = vrot.slane %v915, 1
    %v920 = vsel %vm367, %v918, %v919
    %v923 = vsel %vm367, %v919, 0.0
    %v924 = vld [vmem:[#allocation2 + $0x1a] sm:$0x1]
    %v925 = vadd.f32 %v924, %v920
    %vm926 = vcmp.ge.f32.partialorder %v925, 10.0
    %v927 = vsel %vm926, 1, 0
    %v928 = vcvt.s32.f32 %v927
    %929 = vst [vmem:[#allocation3 + $0x1a] sm:$0x1] %v928
    %v930 = vlaneseq
    %v931 = vshrl.u32 %v930, 7
    %v932 = vsub.s32 0, %v931
    %v933 = vrot.slane %v928, %v932
    %v934 = vmul.f32 %v933, %v61
    %v935 = vmul.f32 %v933, %v66
    %v936 = vadd.f32 %v920, %v934
    %v937 = vadd.f32 %v923, %v935
    %v940 = vrot.slane %v936, 1
    %v941 = vrot.slane %v937, 1
    %v942 = vsel %vm367, %v940, %v941
    %v945 = vsel %vm367, %v941, 0.0
    %v946 = vld [vmem:[#allocation2 + $0x1b] sm:$0x1]
    %v947 = vadd.f32 %v946, %v942
    %vm948 = vcmp.ge.f32.partialorder %v947, 10.0
    %v949 = vsel %vm948, 1, 0
    %v950 = vcvt.s32.f32 %v949
    %951 = vst [vmem:[#allocation3 + $0x1b] sm:$0x1] %v950
    %v952 = vlaneseq
    %v953 = vshrl.u32 %v952, 7
    %v954 = vsub.s32 0, %v953
    %v955 = vrot.slane %v950, %v954
    %v956 = vmul.f32 %v955, %v61
    %v957 = vmul.f32 %v955, %v66
    %v958 = vadd.f32 %v942, %v956
    %v959 = vadd.f32 %v945, %v957
    %v962 = vrot.slane %v958, 1
    %v963 = vrot.slane %v959, 1
    %v964 = vsel %vm367, %v962, %v963
    %v967 = vsel %vm367, %v963, 0.0
    %v968 = vld [vmem:[#allocation2 + $0x1c] sm:$0x1]
    %v969 = vadd.f32 %v968, %v964
    %vm970 = vcmp.ge.f32.partialorder %v969, 10.0
    %v971 = vsel %vm970, 1, 0
    %v972 = vcvt.s32.f32 %v971
    %973 = vst [vmem:[#allocation3 + $0x1c] sm:$0x1] %v972
    %v974 = vlaneseq
    %v975 = vshrl.u32 %v974, 7
    %v976 = vsub.s32 0, %v975
    %v977 = vrot.slane %v972, %v976
    %v978 = vmul.f32 %v977, %v61
    %v979 = vmul.f32 %v977, %v66
    %v980 = vadd.f32 %v964, %v978
    %v981 = vadd.f32 %v967, %v979
    %v984 = vrot.slane %v980, 1
    %v985 = vrot.slane %v981, 1
    %v986 = vsel %vm367, %v984, %v985
    %v989 = vsel %vm367, %v985, 0.0
    %v990 = vld [vmem:[#allocation2 + $0x1d] sm:$0x1]
    %v991 = vadd.f32 %v990, %v986
    %vm992 = vcmp.ge.f32.partialorder %v991, 10.0
    %v993 = vsel %vm992, 1, 0
    %v994 = vcvt.s32.f32 %v993
    %995 = vst [vmem:[#allocation3 + $0x1d] sm:$0x1] %v994
    %v996 = vlaneseq
    %v997 = vshrl.u32 %v996, 7
    %v998 = vsub.s32 0, %v997
    %v999 = vrot.slane %v994, %v998
    %v1000 = vmul.f32 %v999, %v61
    %v1001 = vmul.f32 %v999, %v66
    %v1002 = vadd.f32 %v986, %v1000
    %v1003 = vadd.f32 %v989, %v1001
    %v1006 = vrot.slane %v1002, 1
    %v1007 = vrot.slane %v1003, 1
    %v1008 = vsel %vm367, %v1006, %v1007
    %v1011 = vsel %vm367, %v1007, 0.0
    %v1012 = vld [vmem:[#allocation2 + $0x1e] sm:$0x1]
    %v1013 = vadd.f32 %v1012, %v1008
    %vm1014 = vcmp.ge.f32.partialorder %v1013, 10.0
    %v1015 = vsel %vm1014, 1, 0
    %v1016 = vcvt.s32.f32 %v1015
    %1017 = vst [vmem:[#allocation3 + $0x1e] sm:$0x1] %v1016
    %v1018 = vlaneseq
    %v1019 = vshrl.u32 %v1018, 7
    %v1020 = vsub.s32 0, %v1019
    %v1021 = vrot.slane %v1016, %v1020
    %v1022 = vmul.f32 %v1021, %v61
    %v1023 = vmul.f32 %v1021, %v66
    %v1024 = vadd.f32 %v1008, %v1022
    %v1025 = vadd.f32 %v1011, %v1023
    %v1028 = vrot.slane %v1024, 1
    %v1029 = vrot.slane %v1025, 1
    %v1030 = vsel %vm367, %v1028, %v1029
    %v1033 = vsel %vm367, %v1029, 0.0
    %v1034 = vld [vmem:[#allocation2 + $0x1f] sm:$0x1]
    %v1035 = vadd.f32 %v1034, %v1030
    %vm1036 = vcmp.ge.f32.partialorder %v1035, 10.0
    %v1037 = vsel %vm1036, 1, 0
    %v1038 = vcvt.s32.f32 %v1037
    %1039 = vst [vmem:[#allocation3 + $0x1f] sm:$0x1] %v1038
    %v1040 = vlaneseq
    %v1041 = vshrl.u32 %v1040, 7
    %v1042 = vsub.s32 0, %v1041
    %v1043 = vrot.slane %v1038, %v1042
    %v1044 = vmul.f32 %v1043, %v61
    %v1045 = vmul.f32 %v1043, %v66
    %v1046 = vadd.f32 %v1030, %v1044
    %v1047 = vadd.f32 %v1033, %v1045
    %v1050 = vrot.slane %v1046, 1
    %v1051 = vrot.slane %v1047, 1
    %v1052 = vsel %vm367, %v1050, %v1051
    %v1055 = vsel %vm367, %v1051, 0.0
    %v1056 = vld [vmem:[#allocation2 + $0x20] sm:$0x1]
    %v1057 = vadd.f32 %v1056, %v1052
    %vm1058 = vcmp.ge.f32.partialorder %v1057, 10.0
    %v1059 = vsel %vm1058, 1, 0
    %v1060 = vcvt.s32.f32 %v1059
    %1061 = vst [vmem:[#allocation3 + $0x20] sm:$0x1] %v1060
    %v1062 = vlaneseq
    %v1063 = vshrl.u32 %v1062, 7
    %v1064 = vsub.s32 0, %v1063
    %v1065 = vrot.slane %v1060, %v1064
    %v1066 = vmul.f32 %v1065, %v61
    %v1067 = vmul.f32 %v1065, %v66
    %v1068 = vadd.f32 %v1052, %v1066
    %v1069 = vadd.f32 %v1055, %v1067
    %v1072 = vrot.slane %v1068, 1
    %v1073 = vrot.slane %v1069, 1
    %v1074 = vsel %vm367, %v1072, %v1073
    %v1077 = vsel %vm367, %v1073, 0.0
    %v1078 = vld [vmem:[#allocation2 + $0x21] sm:$0x1]
    %v1079 = vadd.f32 %v1078, %v1074
    %vm1080 = vcmp.ge.f32.partialorder %v1079, 10.0
    %v1081 = vsel %vm1080, 1, 0
    %v1082 = vcvt.s32.f32 %v1081
    %1083 = vst [vmem:[#allocation3 + $0x21] sm:$0x1] %v1082
    %v1084 = vlaneseq
    %v1085 = vshrl.u32 %v1084, 7
    %v1086 = vsub.s32 0, %v1085
    %v1087 = vrot.slane %v1082, %v1086
    %v1088 = vmul.f32 %v1087, %v61
    %v1089 = vmul.f32 %v1087, %v66
    %v1090 = vadd.f32 %v1074, %v1088
    %v1091 = vadd.f32 %v1077, %v1089
    %v1094 = vrot.slane %v1090, 1
    %v1095 = vrot.slane %v1091, 1
    %v1096 = vsel %vm367, %v1094, %v1095
    %v1099 = vsel %vm367, %v1095, 0.0
    %v1100 = vld [vmem:[#allocation2 + $0x22] sm:$0x1]
    %v1101 = vadd.f32 %v1100, %v1096
    %vm1102 = vcmp.ge.f32.partialorder %v1101, 10.0
    %v1103 = vsel %vm1102, 1, 0
    %v1104 = vcvt.s32.f32 %v1103
    %1105 = vst [vmem:[#allocation3 + $0x22] sm:$0x1] %v1104
    %v1106 = vlaneseq
    %v1107 = vshrl.u32 %v1106, 7
    %v1108 = vsub.s32 0, %v1107
    %v1109 = vrot.slane %v1104, %v1108
    %v1110 = vmul.f32 %v1109, %v61
    %v1111 = vmul.f32 %v1109, %v66
    %v1112 = vadd.f32 %v1096, %v1110
    %v1113 = vadd.f32 %v1099, %v1111
    %v1116 = vrot.slane %v1112, 1
    %v1117 = vrot.slane %v1113, 1
    %v1118 = vsel %vm367, %v1116, %v1117
    %v1121 = vsel %vm367, %v1117, 0.0
    %v1122 = vld [vmem:[#allocation2 + $0x23] sm:$0x1]
    %v1123 = vadd.f32 %v1122, %v1118
    %vm1124 = vcmp.ge.f32.partialorder %v1123, 10.0
    %v1125 = vsel %vm1124, 1, 0
    %v1126 = vcvt.s32.f32 %v1125
    %1127 = vst [vmem:[#allocation3 + $0x23] sm:$0x1] %v1126
    %v1128 = vlaneseq
    %v1129 = vshrl.u32 %v1128, 7
    %v1130 = vsub.s32 0, %v1129
    %v1131 = vrot.slane %v1126, %v1130
    %v1132 = vmul.f32 %v1131, %v61
    %v1133 = vmul.f32 %v1131, %v66
    %v1134 = vadd.f32 %v1118, %v1132
    %v1135 = vadd.f32 %v1121, %v1133
    %v1138 = vrot.slane %v1134, 1
    %v1139 = vrot.slane %v1135, 1
    %v1140 = vsel %vm367, %v1138, %v1139
    %v1143 = vsel %vm367, %v1139, 0.0
    %v1144 = vld [vmem:[#allocation2 + $0x24] sm:$0x1]
    %v1145 = vadd.f32 %v1144, %v1140
    %vm1146 = vcmp.ge.f32.partialorder %v1145, 10.0
    %v1147 = vsel %vm1146, 1, 0
    %v1148 = vcvt.s32.f32 %v1147
    %1149 = vst [vmem:[#allocation3 + $0x24] sm:$0x1] %v1148
    %v1150 = vlaneseq
    %v1151 = vshrl.u32 %v1150, 7
    %v1152 = vsub.s32 0, %v1151
    %v1153 = vrot.slane %v1148, %v1152
    %v1154 = vmul.f32 %v1153, %v61
    %v1155 = vmul.f32 %v1153, %v66
    %v1156 = vadd.f32 %v1140, %v1154
    %v1157 = vadd.f32 %v1143, %v1155
    %v1160 = vrot.slane %v1156, 1
    %v1161 = vrot.slane %v1157, 1
    %v1162 = vsel %vm367, %v1160, %v1161
    %v1165 = vsel %vm367, %v1161, 0.0
    %v1166 = vld [vmem:[#allocation2 + $0x25] sm:$0x1]
    %v1167 = vadd.f32 %v1166, %v1162
    %vm1168 = vcmp.ge.f32.partialorder %v1167, 10.0
    %v1169 = vsel %vm1168, 1, 0
    %v1170 = vcvt.s32.f32 %v1169
    %1171 = vst [vmem:[#allocation3 + $0x25] sm:$0x1] %v1170
    %v1172 = vlaneseq
    %v1173 = vshrl.u32 %v1172, 7
    %v1174 = vsub.s32 0, %v1173
    %v1175 = vrot.slane %v1170, %v1174
    %v1176 = vmul.f32 %v1175, %v61
    %v1177 = vmul.f32 %v1175, %v66
    %v1178 = vadd.f32 %v1162, %v1176
    %v1179 = vadd.f32 %v1165, %v1177
    %v1182 = vrot.slane %v1178, 1
    %v1183 = vrot.slane %v1179, 1
    %v1184 = vsel %vm367, %v1182, %v1183
    %v1187 = vsel %vm367, %v1183, 0.0
    %v1188 = vld [vmem:[#allocation2 + $0x26] sm:$0x1]
    %v1189 = vadd.f32 %v1188, %v1184
    %vm1190 = vcmp.ge.f32.partialorder %v1189, 10.0
    %v1191 = vsel %vm1190, 1, 0
    %v1192 = vcvt.s32.f32 %v1191
    %1193 = vst [vmem:[#allocation3 + $0x26] sm:$0x1] %v1192
    %v1194 = vlaneseq
    %v1195 = vshrl.u32 %v1194, 7
    %v1196 = vsub.s32 0, %v1195
    %v1197 = vrot.slane %v1192, %v1196
    %v1198 = vmul.f32 %v1197, %v61
    %v1199 = vmul.f32 %v1197, %v66
    %v1200 = vadd.f32 %v1184, %v1198
    %v1201 = vadd.f32 %v1187, %v1199
    %v1204 = vrot.slane %v1200, 1
    %v1205 = vrot.slane %v1201, 1
    %v1206 = vsel %vm367, %v1204, %v1205
    %v1209 = vsel %vm367, %v1205, 0.0
    %v1210 = vld [vmem:[#allocation2 + $0x27] sm:$0x1]
    %v1211 = vadd.f32 %v1210, %v1206
    %vm1212 = vcmp.ge.f32.partialorder %v1211, 10.0
    %v1213 = vsel %vm1212, 1, 0
    %v1214 = vcvt.s32.f32 %v1213
    %1215 = vst [vmem:[#allocation3 + $0x27] sm:$0x1] %v1214
    %v1216 = vlaneseq
    %v1217 = vshrl.u32 %v1216, 7
    %v1218 = vsub.s32 0, %v1217
    %v1219 = vrot.slane %v1214, %v1218
    %v1220 = vmul.f32 %v1219, %v61
    %v1221 = vmul.f32 %v1219, %v66
    %v1222 = vadd.f32 %v1206, %v1220
    %v1223 = vadd.f32 %v1209, %v1221
    %v1226 = vrot.slane %v1222, 1
    %v1227 = vrot.slane %v1223, 1
    %v1228 = vsel %vm367, %v1226, %v1227
    %v1231 = vsel %vm367, %v1227, 0.0
    %v1232 = vld [vmem:[#allocation2 + $0x28] sm:$0x1]
    %v1233 = vadd.f32 %v1232, %v1228
    %vm1234 = vcmp.ge.f32.partialorder %v1233, 10.0
    %v1235 = vsel %vm1234, 1, 0
    %v1236 = vcvt.s32.f32 %v1235
    %1237 = vst [vmem:[#allocation3 + $0x28] sm:$0x1] %v1236
    %v1238 = vlaneseq
    %v1239 = vshrl.u32 %v1238, 7
    %v1240 = vsub.s32 0, %v1239
    %v1241 = vrot.slane %v1236, %v1240
    %v1242 = vmul.f32 %v1241, %v61
    %v1243 = vmul.f32 %v1241, %v66
    %v1244 = vadd.f32 %v1228, %v1242
    %v1245 = vadd.f32 %v1231, %v1243
    %v1248 = vrot.slane %v1244, 1
    %v1249 = vrot.slane %v1245, 1
    %v1250 = vsel %vm367, %v1248, %v1249
    %v1253 = vsel %vm367, %v1249, 0.0
    %v1254 = vld [vmem:[#allocation2 + $0x29] sm:$0x1]
    %v1255 = vadd.f32 %v1254, %v1250
    %vm1256 = vcmp.ge.f32.partialorder %v1255, 10.0
    %v1257 = vsel %vm1256, 1, 0
    %v1258 = vcvt.s32.f32 %v1257
    %1259 = vst [vmem:[#allocation3 + $0x29] sm:$0x1] %v1258
    %v1260 = vlaneseq
    %v1261 = vshrl.u32 %v1260, 7
    %v1262 = vsub.s32 0, %v1261
    %v1263 = vrot.slane %v1258, %v1262
    %v1264 = vmul.f32 %v1263, %v61
    %v1265 = vmul.f32 %v1263, %v66
    %v1266 = vadd.f32 %v1250, %v1264
    %v1267 = vadd.f32 %v1253, %v1265
    %v1270 = vrot.slane %v1266, 1
    %v1271 = vrot.slane %v1267, 1
    %v1272 = vsel %vm367, %v1270, %v1271
    %v1275 = vsel %vm367, %v1271, 0.0
    %v1276 = vld [vmem:[#allocation2 + $0x2a] sm:$0x1]
    %v1277 = vadd.f32 %v1276, %v1272
    %vm1278 = vcmp.ge.f32.partialorder %v1277, 10.0
    %v1279 = vsel %vm1278, 1, 0
    %v1280 = vcvt.s32.f32 %v1279
    %1281 = vst [vmem:[#allocation3 + $0x2a] sm:$0x1] %v1280
    %v1282 = vlaneseq
    %v1283 = vshrl.u32 %v1282, 7
    %v1284 = vsub.s32 0, %v1283
    %v1285 = vrot.slane %v1280, %v1284
    %v1286 = vmul.f32 %v1285, %v61
    %v1287 = vmul.f32 %v1285, %v66
    %v1288 = vadd.f32 %v1272, %v1286
    %v1289 = vadd.f32 %v1275, %v1287
    %v1292 = vrot.slane %v1288, 1
    %v1293 = vrot.slane %v1289, 1
    %v1294 = vsel %vm367, %v1292, %v1293
    %v1297 = vsel %vm367, %v1293, 0.0
    %v1298 = vld [vmem:[#allocation2 + $0x2b] sm:$0x1]
    %v1299 = vadd.f32 %v1298, %v1294
    %vm1300 = vcmp.ge.f32.partialorder %v1299, 10.0
    %v1301 = vsel %vm1300, 1, 0
    %v1302 = vcvt.s32.f32 %v1301
    %1303 = vst [vmem:[#allocation3 + $0x2b] sm:$0x1] %v1302
    %v1304 = vlaneseq
    %v1305 = vshrl.u32 %v1304, 7
    %v1306 = vsub.s32 0, %v1305
    %v1307 = vrot.slane %v1302, %v1306
    %v1308 = vmul.f32 %v1307, %v61
    %v1309 = vmul.f32 %v1307, %v66
    %v1310 = vadd.f32 %v1294, %v1308
    %v1311 = vadd.f32 %v1297, %v1309
    %v1314 = vrot.slane %v1310, 1
    %v1315 = vrot.slane %v1311, 1
    %v1316 = vsel %vm367, %v1314, %v1315
    %v1319 = vsel %vm367, %v1315, 0.0
    %v1320 = vld [vmem:[#allocation2 + $0x2c] sm:$0x1]
    %v1321 = vadd.f32 %v1320, %v1316
    %vm1322 = vcmp.ge.f32.partialorder %v1321, 10.0
    %v1323 = vsel %vm1322, 1, 0
    %v1324 = vcvt.s32.f32 %v1323
    %1325 = vst [vmem:[#allocation3 + $0x2c] sm:$0x1] %v1324
    %v1326 = vlaneseq
    %v1327 = vshrl.u32 %v1326, 7
    %v1328 = vsub.s32 0, %v1327
    %v1329 = vrot.slane %v1324, %v1328
    %v1330 = vmul.f32 %v1329, %v61
    %v1331 = vmul.f32 %v1329, %v66
    %v1332 = vadd.f32 %v1316, %v1330
    %v1333 = vadd.f32 %v1319, %v1331
    %v1336 = vrot.slane %v1332, 1
    %v1337 = vrot.slane %v1333, 1
    %v1338 = vsel %vm367, %v1336, %v1337
    %v1341 = vsel %vm367, %v1337, 0.0
    %v1342 = vld [vmem:[#allocation2 + $0x2d] sm:$0x1]
    %v1343 = vadd.f32 %v1342, %v1338
    %vm1344 = vcmp.ge.f32.partialorder %v1343, 10.0
    %v1345 = vsel %vm1344, 1, 0
    %v1346 = vcvt.s32.f32 %v1345
    %1347 = vst [vmem:[#allocation3 + $0x2d] sm:$0x1] %v1346
    %v1348 = vlaneseq
    %v1349 = vshrl.u32 %v1348, 7
    %v1350 = vsub.s32 0, %v1349
    %v1351 = vrot.slane %v1346, %v1350
    %v1352 = vmul.f32 %v1351, %v61
    %v1353 = vmul.f32 %v1351, %v66
    %v1354 = vadd.f32 %v1338, %v1352
    %v1355 = vadd.f32 %v1341, %v1353
    %v1358 = vrot.slane %v1354, 1
    %v1359 = vrot.slane %v1355, 1
    %v1360 = vsel %vm367, %v1358, %v1359
    %v1363 = vsel %vm367, %v1359, 0.0
    %v1364 = vld [vmem:[#allocation2 + $0x2e] sm:$0x1]
    %v1365 = vadd.f32 %v1364, %v1360
    %vm1366 = vcmp.ge.f32.partialorder %v1365, 10.0
    %v1367 = vsel %vm1366, 1, 0
    %v1368 = vcvt.s32.f32 %v1367
    %1369 = vst [vmem:[#allocation3 + $0x2e] sm:$0x1] %v1368
    %v1370 = vlaneseq
    %v1371 = vshrl.u32 %v1370, 7
    %v1372 = vsub.s32 0, %v1371
    %v1373 = vrot.slane %v1368, %v1372
    %v1374 = vmul.f32 %v1373, %v61
    %v1375 = vmul.f32 %v1373, %v66
    %v1376 = vadd.f32 %v1360, %v1374
    %v1377 = vadd.f32 %v1363, %v1375
    %v1380 = vrot.slane %v1376, 1
    %v1381 = vrot.slane %v1377, 1
    %v1382 = vsel %vm367, %v1380, %v1381
    %v1385 = vsel %vm367, %v1381, 0.0
    %v1386 = vld [vmem:[#allocation2 + $0x2f] sm:$0x1]
    %v1387 = vadd.f32 %v1386, %v1382
    %vm1388 = vcmp.ge.f32.partialorder %v1387, 10.0
    %v1389 = vsel %vm1388, 1, 0
    %v1390 = vcvt.s32.f32 %v1389
    %1391 = vst [vmem:[#allocation3 + $0x2f] sm:$0x1] %v1390
    %v1392 = vlaneseq
    %v1393 = vshrl.u32 %v1392, 7
    %v1394 = vsub.s32 0, %v1393
    %v1395 = vrot.slane %v1390, %v1394
    %v1396 = vmul.f32 %v1395, %v61
    %v1397 = vmul.f32 %v1395, %v66
    %v1398 = vadd.f32 %v1382, %v1396
    %v1399 = vadd.f32 %v1385, %v1397
    %v1402 = vrot.slane %v1398, 1
    %v1403 = vrot.slane %v1399, 1
    %v1404 = vsel %vm367, %v1402, %v1403
    %v1407 = vsel %vm367, %v1403, 0.0
    %v1408 = vld [vmem:[#allocation2 + $0x30] sm:$0x1]
    %v1409 = vadd.f32 %v1408, %v1404
    %vm1410 = vcmp.ge.f32.partialorder %v1409, 10.0
    %v1411 = vsel %vm1410, 1, 0
    %v1412 = vcvt.s32.f32 %v1411
    %1413 = vst [vmem:[#allocation3 + $0x30] sm:$0x1] %v1412
    %v1414 = vlaneseq
    %v1415 = vshrl.u32 %v1414, 7
    %v1416 = vsub.s32 0, %v1415
    %v1417 = vrot.slane %v1412, %v1416
    %v1418 = vmul.f32 %v1417, %v61
    %v1419 = vmul.f32 %v1417, %v66
    %v1420 = vadd.f32 %v1404, %v1418
    %v1421 = vadd.f32 %v1407, %v1419
    %v1424 = vrot.slane %v1420, 1
    %v1425 = vrot.slane %v1421, 1
    %v1426 = vsel %vm367, %v1424, %v1425
    %v1429 = vsel %vm367, %v1425, 0.0
    %v1430 = vld [vmem:[#allocation2 + $0x31] sm:$0x1]
    %v1431 = vadd.f32 %v1430, %v1426
    %vm1432 = vcmp.ge.f32.partialorder %v1431, 10.0
    %v1433 = vsel %vm1432, 1, 0
    %v1434 = vcvt.s32.f32 %v1433
    %1435 = vst [vmem:[#allocation3 + $0x31] sm:$0x1] %v1434
    %v1436 = vlaneseq
    %v1437 = vshrl.u32 %v1436, 7
    %v1438 = vsub.s32 0, %v1437
    %v1439 = vrot.slane %v1434, %v1438
    %v1440 = vmul.f32 %v1439, %v61
    %v1441 = vmul.f32 %v1439, %v66
    %v1442 = vadd.f32 %v1426, %v1440
    %v1443 = vadd.f32 %v1429, %v1441
    %v1446 = vrot.slane %v1442, 1
    %v1447 = vrot.slane %v1443, 1
    %v1448 = vsel %vm367, %v1446, %v1447
    %v1451 = vsel %vm367, %v1447, 0.0
    %v1452 = vld [vmem:[#allocation2 + $0x32] sm:$0x1]
    %v1453 = vadd.f32 %v1452, %v1448
    %vm1454 = vcmp.ge.f32.partialorder %v1453, 10.0
    %v1455 = vsel %vm1454, 1, 0
    %v1456 = vcvt.s32.f32 %v1455
    %1457 = vst [vmem:[#allocation3 + $0x32] sm:$0x1] %v1456
    %v1458 = vlaneseq
    %v1459 = vshrl.u32 %v1458, 7
    %v1460 = vsub.s32 0, %v1459
    %v1461 = vrot.slane %v1456, %v1460
    %v1462 = vmul.f32 %v1461, %v61
    %v1463 = vmul.f32 %v1461, %v66
    %v1464 = vadd.f32 %v1448, %v1462
    %v1465 = vadd.f32 %v1451, %v1463
    %v1468 = vrot.slane %v1464, 1
    %v1469 = vrot.slane %v1465, 1
    %v1470 = vsel %vm367, %v1468, %v1469
    %v1473 = vsel %vm367, %v1469, 0.0
    %v1474 = vld [vmem:[#allocation2 + $0x33] sm:$0x1]
    %v1475 = vadd.f32 %v1474, %v1470
    %vm1476 = vcmp.ge.f32.partialorder %v1475, 10.0
    %v1477 = vsel %vm1476, 1, 0
    %v1478 = vcvt.s32.f32 %v1477
    %1479 = vst [vmem:[#allocation3 + $0x33] sm:$0x1] %v1478
    %v1480 = vlaneseq
    %v1481 = vshrl.u32 %v1480, 7
    %v1482 = vsub.s32 0, %v1481
    %v1483 = vrot.slane %v1478, %v1482
    %v1484 = vmul.f32 %v1483, %v61
    %v1485 = vmul.f32 %v1483, %v66
    %v1486 = vadd.f32 %v1470, %v1484
    %v1487 = vadd.f32 %v1473, %v1485
    %v1490 = vrot.slane %v1486, 1
    %v1491 = vrot.slane %v1487, 1
    %v1492 = vsel %vm367, %v1490, %v1491
    %v1495 = vsel %vm367, %v1491, 0.0
    %v1496 = vld [vmem:[#allocation2 + $0x34] sm:$0x1]
    %v1497 = vadd.f32 %v1496, %v1492
    %vm1498 = vcmp.ge.f32.partialorder %v1497, 10.0
    %v1499 = vsel %vm1498, 1, 0
    %v1500 = vcvt.s32.f32 %v1499
    %1501 = vst [vmem:[#allocation3 + $0x34] sm:$0x1] %v1500
    %v1502 = vlaneseq
    %v1503 = vshrl.u32 %v1502, 7
    %v1504 = vsub.s32 0, %v1503
    %v1505 = vrot.slane %v1500, %v1504
    %v1506 = vmul.f32 %v1505, %v61
    %v1507 = vmul.f32 %v1505, %v66
    %v1508 = vadd.f32 %v1492, %v1506
    %v1509 = vadd.f32 %v1495, %v1507
    %v1512 = vrot.slane %v1508, 1
    %v1513 = vrot.slane %v1509, 1
    %v1514 = vsel %vm367, %v1512, %v1513
    %v1517 = vsel %vm367, %v1513, 0.0
    %v1518 = vld [vmem:[#allocation2 + $0x35] sm:$0x1]
    %v1519 = vadd.f32 %v1518, %v1514
    %vm1520 = vcmp.ge.f32.partialorder %v1519, 10.0
    %v1521 = vsel %vm1520, 1, 0
    %v1522 = vcvt.s32.f32 %v1521
    %1523 = vst [vmem:[#allocation3 + $0x35] sm:$0x1] %v1522
    %v1524 = vlaneseq
    %v1525 = vshrl.u32 %v1524, 7
    %v1526 = vsub.s32 0, %v1525
    %v1527 = vrot.slane %v1522, %v1526
    %v1528 = vmul.f32 %v1527, %v61
    %v1529 = vmul.f32 %v1527, %v66
    %v1530 = vadd.f32 %v1514, %v1528
    %v1531 = vadd.f32 %v1517, %v1529
    %v1534 = vrot.slane %v1530, 1
    %v1535 = vrot.slane %v1531, 1
    %v1536 = vsel %vm367, %v1534, %v1535
    %v1539 = vsel %vm367, %v1535, 0.0
    %v1540 = vld [vmem:[#allocation2 + $0x36] sm:$0x1]
    %v1541 = vadd.f32 %v1540, %v1536
    %vm1542 = vcmp.ge.f32.partialorder %v1541, 10.0
    %v1543 = vsel %vm1542, 1, 0
    %v1544 = vcvt.s32.f32 %v1543
    %1545 = vst [vmem:[#allocation3 + $0x36] sm:$0x1] %v1544
    %v1546 = vlaneseq
    %v1547 = vshrl.u32 %v1546, 7
    %v1548 = vsub.s32 0, %v1547
    %v1549 = vrot.slane %v1544, %v1548
    %v1550 = vmul.f32 %v1549, %v61
    %v1551 = vmul.f32 %v1549, %v66
    %v1552 = vadd.f32 %v1536, %v1550
    %v1553 = vadd.f32 %v1539, %v1551
    %v1556 = vrot.slane %v1552, 1
    %v1557 = vrot.slane %v1553, 1
    %v1558 = vsel %vm367, %v1556, %v1557
    %v1561 = vsel %vm367, %v1557, 0.0
    %v1562 = vld [vmem:[#allocation2 + $0x37] sm:$0x1]
    %v1563 = vadd.f32 %v1562, %v1558
    %vm1564 = vcmp.ge.f32.partialorder %v1563, 10.0
    %v1565 = vsel %vm1564, 1, 0
    %v1566 = vcvt.s32.f32 %v1565
    %1567 = vst [vmem:[#allocation3 + $0x37] sm:$0x1] %v1566
    %v1568 = vlaneseq
    %v1569 = vshrl.u32 %v1568, 7
    %v1570 = vsub.s32 0, %v1569
    %v1571 = vrot.slane %v1566, %v1570
    %v1572 = vmul.f32 %v1571, %v61
    %v1573 = vmul.f32 %v1571, %v66
    %v1574 = vadd.f32 %v1558, %v1572
    %v1575 = vadd.f32 %v1561, %v1573
    %v1578 = vrot.slane %v1574, 1
    %v1579 = vrot.slane %v1575, 1
    %v1580 = vsel %vm367, %v1578, %v1579
    %v1583 = vsel %vm367, %v1579, 0.0
    %v1584 = vld [vmem:[#allocation2 + $0x38] sm:$0x1]
    %v1585 = vadd.f32 %v1584, %v1580
    %vm1586 = vcmp.ge.f32.partialorder %v1585, 10.0
    %v1587 = vsel %vm1586, 1, 0
    %v1588 = vcvt.s32.f32 %v1587
    %1589 = vst [vmem:[#allocation3 + $0x38] sm:$0x1] %v1588
    %v1590 = vlaneseq
    %v1591 = vshrl.u32 %v1590, 7
    %v1592 = vsub.s32 0, %v1591
    %v1593 = vrot.slane %v1588, %v1592
    %v1594 = vmul.f32 %v1593, %v61
    %v1595 = vmul.f32 %v1593, %v66
    %v1596 = vadd.f32 %v1580, %v1594
    %v1597 = vadd.f32 %v1583, %v1595
    %v1600 = vrot.slane %v1596, 1
    %v1601 = vrot.slane %v1597, 1
    %v1602 = vsel %vm367, %v1600, %v1601
    %v1605 = vsel %vm367, %v1601, 0.0
    %v1606 = vld [vmem:[#allocation2 + $0x39] sm:$0x1]
    %v1607 = vadd.f32 %v1606, %v1602
    %vm1608 = vcmp.ge.f32.partialorder %v1607, 10.0
    %v1609 = vsel %vm1608, 1, 0
    %v1610 = vcvt.s32.f32 %v1609
    %1611 = vst [vmem:[#allocation3 + $0x39] sm:$0x1] %v1610
    %v1612 = vlaneseq
    %v1613 = vshrl.u32 %v1612, 7
    %v1614 = vsub.s32 0, %v1613
    %v1615 = vrot.slane %v1610, %v1614
    %v1616 = vmul.f32 %v1615, %v61
    %v1617 = vmul.f32 %v1615, %v66
    %v1618 = vadd.f32 %v1602, %v1616
    %v1619 = vadd.f32 %v1605, %v1617
    %v1622 = vrot.slane %v1618, 1
    %v1623 = vrot.slane %v1619, 1
    %v1624 = vsel %vm367, %v1622, %v1623
    %v1627 = vsel %vm367, %v1623, 0.0
    %v1628 = vld [vmem:[#allocation2 + $0x3a] sm:$0x1]
    %v1629 = vadd.f32 %v1628, %v1624
    %vm1630 = vcmp.ge.f32.partialorder %v1629, 10.0
    %v1631 = vsel %vm1630, 1, 0
    %v1632 = vcvt.s32.f32 %v1631
    %1633 = vst [vmem:[#allocation3 + $0x3a] sm:$0x1] %v1632
    %v1634 = vlaneseq
    %v1635 = vshrl.u32 %v1634, 7
    %v1636 = vsub.s32 0, %v1635
    %v1637 = vrot.slane %v1632, %v1636
    %v1638 = vmul.f32 %v1637, %v61
    %v1639 = vmul.f32 %v1637, %v66
    %v1640 = vadd.f32 %v1624, %v1638
    %v1641 = vadd.f32 %v1627, %v1639
    %v1644 = vrot.slane %v1640, 1
    %v1645 = vrot.slane %v1641, 1
    %v1646 = vsel %vm367, %v1644, %v1645
    %v1649 = vsel %vm367, %v1645, 0.0
    %v1650 = vld [vmem:[#allocation2 + $0x3b] sm:$0x1]
    %v1651 = vadd.f32 %v1650, %v1646
    %vm1652 = vcmp.ge.f32.partialorder %v1651, 10.0
    %v1653 = vsel %vm1652, 1, 0
    %v1654 = vcvt.s32.f32 %v1653
    %1655 = vst [vmem:[#allocation3 + $0x3b] sm:$0x1] %v1654
    %v1656 = vlaneseq
    %v1657 = vshrl.u32 %v1656, 7
    %v1658 = vsub.s32 0, %v1657
    %v1659 = vrot.slane %v1654, %v1658
    %v1660 = vmul.f32 %v1659, %v61
    %v1661 = vmul.f32 %v1659, %v66
    %v1662 = vadd.f32 %v1646, %v1660
    %v1663 = vadd.f32 %v1649, %v1661
    %v1666 = vrot.slane %v1662, 1
    %v1667 = vrot.slane %v1663, 1
    %v1668 = vsel %vm367, %v1666, %v1667
    %v1671 = vsel %vm367, %v1667, 0.0
    %v1672 = vld [vmem:[#allocation2 + $0x3c] sm:$0x1]
    %v1673 = vadd.f32 %v1672, %v1668
    %vm1674 = vcmp.ge.f32.partialorder %v1673, 10.0
    %v1675 = vsel %vm1674, 1, 0
    %v1676 = vcvt.s32.f32 %v1675
    %1677 = vst [vmem:[#allocation3 + $0x3c] sm:$0x1] %v1676
    %v1678 = vlaneseq
    %v1679 = vshrl.u32 %v1678, 7
    %v1680 = vsub.s32 0, %v1679
    %v1681 = vrot.slane %v1676, %v1680
    %v1682 = vmul.f32 %v1681, %v61
    %v1683 = vmul.f32 %v1681, %v66
    %v1684 = vadd.f32 %v1668, %v1682
    %v1685 = vadd.f32 %v1671, %v1683
    %v1688 = vrot.slane %v1684, 1
    %v1689 = vrot.slane %v1685, 1
    %v1690 = vsel %vm367, %v1688, %v1689
    %v1693 = vsel %vm367, %v1689, 0.0
    %v1694 = vld [vmem:[#allocation2 + $0x3d] sm:$0x1]
    %v1695 = vadd.f32 %v1694, %v1690
    %vm1696 = vcmp.ge.f32.partialorder %v1695, 10.0
    %v1697 = vsel %vm1696, 1, 0
    %v1698 = vcvt.s32.f32 %v1697
    %1699 = vst [vmem:[#allocation3 + $0x3d] sm:$0x1] %v1698
    %v1700 = vlaneseq
    %v1701 = vshrl.u32 %v1700, 7
    %v1702 = vsub.s32 0, %v1701
    %v1703 = vrot.slane %v1698, %v1702
    %v1704 = vmul.f32 %v1703, %v61
    %v1705 = vmul.f32 %v1703, %v66
    %v1706 = vadd.f32 %v1690, %v1704
    %v1707 = vadd.f32 %v1693, %v1705
    %v1710 = vrot.slane %v1706, 1
    %v1711 = vrot.slane %v1707, 1
    %v1712 = vsel %vm367, %v1710, %v1711
    %v1715 = vsel %vm367, %v1711, 0.0
    %v1716 = vld [vmem:[#allocation2 + $0x3e] sm:$0x1]
    %v1717 = vadd.f32 %v1716, %v1712
    %vm1718 = vcmp.ge.f32.partialorder %v1717, 10.0
    %v1719 = vsel %vm1718, 1, 0
    %v1720 = vcvt.s32.f32 %v1719
    %1721 = vst [vmem:[#allocation3 + $0x3e] sm:$0x1] %v1720
    %v1722 = vlaneseq
    %v1723 = vshrl.u32 %v1722, 7
    %v1724 = vsub.s32 0, %v1723
    %v1725 = vrot.slane %v1720, %v1724
    %v1726 = vmul.f32 %v1725, %v61
    %v1727 = vmul.f32 %v1725, %v66
    %v1728 = vadd.f32 %v1712, %v1726
    %v1729 = vadd.f32 %v1715, %v1727
    %v1732 = vrot.slane %v1728, 1
    %v1733 = vrot.slane %v1729, 1
    %v1734 = vsel %vm367, %v1732, %v1733
    %v1736 = vld [vmem:[#allocation2 + $0x3f] sm:$0x1]
    %v1737 = vadd.f32 %v1736, %v1734
    %vm1738 = vcmp.ge.f32.partialorder %v1737, 10.0
    %v1739 = vsel %vm1738, 1, 0
    %v1740 = vcvt.s32.f32 %v1739
    %1741 = vst [vmem:[#allocation3 + $0x3f] sm:$0x1] %v1740
    %v1742 = vld [vmem:[#allocation3] sm:$0xff]
    %v1743 = vld [vmem:[#allocation3 + $0x8] sm:$0xff]
    %v1744 = vld [vmem:[#allocation3 + $0x10] sm:$0xff]
    %v1745 = vld [vmem:[#allocation3 + $0x18] sm:$0xff]
    %v1746 = vld [vmem:[#allocation3 + $0x20] sm:$0xff]
    %v1747 = vld [vmem:[#allocation3 + $0x28] sm:$0xff]
    %v1748 = vld [vmem:[#allocation3 + $0x30] sm:$0xff]
    %v1749 = vld [vmem:[#allocation3 + $0x38] sm:$0xff]
    %v1750 = vld [vmem:[%s3] sm:$0xff]
    %v1751 = vld [vmem:[%s3 + $0x8] sm:$0xff]
    %v1752 = vld [vmem:[%s3 + $0x10] sm:$0xff]
    %v1753 = vld [vmem:[%s3 + $0x18] sm:$0xff]
    %v1754 = vld [vmem:[%s3 + $0x20] sm:$0xff]
    %v1755 = vld [vmem:[%s3 + $0x28] sm:$0xff]
    %v1756 = vld [vmem:[%s3 + $0x30] sm:$0xff]
    %v1757 = vld [vmem:[%s3 + $0x38] sm:$0xff]
    %v1758 = vld [vmem:[%s3 + $0x40] sm:$0xff]
    %v1759 = vld [vmem:[%s3 + $0x48] sm:$0xff]
    %v1760 = vld [vmem:[%s3 + $0x50] sm:$0xff]
    %v1761 = vld [vmem:[%s3 + $0x58] sm:$0xff]
    %v1762 = vld [vmem:[%s3 + $0x60] sm:$0xff]
    %v1763 = vld [vmem:[%s3 + $0x68] sm:$0xff]
    %v1764 = vld [vmem:[%s3 + $0x70] sm:$0xff]
    %v1765 = vld [vmem:[%s3 + $0x78] sm:$0xff]
    %1766 = vmatprep.subr.mxu0 0.0
    %1767 = vmatpush1.msra.mxu0 %v1765
    %1768 = vmatprep.subr.mxu0 0.0
    %1769 = vmatpush1.msra.mxu0 %v1764
    %1770 = vmatprep.subr.mxu0 0.0
    %1771 = vmatpush1.msra.mxu0 %v1763
    %1772 = vmatprep.subr.mxu0 0.0
    %1773 = vmatpush1.msra.mxu0 %v1762
    %1774 = vmatprep.subr.mxu0 0.0
    %1775 = vmatpush1.msra.mxu0 %v1761
    %1776 = vmatprep.subr.mxu0 0.0
    %1777 = vmatpush1.msra.mxu0 %v1760
    %1778 = vmatprep.subr.mxu0 0.0
    %1779 = vmatpush1.msra.mxu0 %v1759
    %1780 = vmatprep.subr.mxu0 0.0
    %1781 = vmatpush1.msra.mxu0 %v1758
    %1782 = vmatprep.subr.mxu0 0.0
    %1783 = vmatpush1.msra.mxu0 %v1757
    %1784 = vmatprep.subr.mxu0 0.0
    %1785 = vmatpush1.msra.mxu0 %v1756
    %1786 = vmatprep.subr.mxu0 0.0
    %1787 = vmatpush1.msra.mxu0 %v1755
    %1788 = vmatprep.subr.mxu0 0.0
    %1789 = vmatpush1.msra.mxu0 %v1754
    %1790 = vmatprep.subr.mxu0 0.0
    %1791 = vmatpush1.msra.mxu0 %v1753
    %1792 = vmatprep.subr.mxu0 0.0
    %1793 = vmatpush1.msra.mxu0 %v1752
    %1794 = vmatprep.subr.mxu0 0.0
    %1795 = vmatpush1.msra.mxu0 %v1751
    %1796 = vmatprep.subr.mxu0 0.0
    %1797 = vmatpush1.msra.mxu0 %v1750
    %1798 = vmatprep.subr.mxu0 0.0
    %1799 = vmatpush2.msra.mxu0 0.0
    %1800 = vmatprep.subr.mxu0 0.0
    %1801 = vmatpush2.msra.mxu0 0.0
    %1802 = vmatprep.subr.mxu0 0.0
    %1803 = vmatpush2.msra.mxu0 0.0
    %1804 = vmatprep.subr.mxu0 0.0
    %1805 = vmatpush2.msra.mxu0 0.0
    %1806 = vmatprep.subr.mxu0 0.0
    %1807 = vmatpush2.msra.mxu0 0.0
    %1808 = vmatprep.subr.mxu0 0.0
    %1809 = vmatpush2.msra.mxu0 0.0
    %1810 = vmatprep.subr.mxu0 0.0
    %1811 = vmatpush2.msra.mxu0 0.0
    %1812 = vmatprep.subr.mxu0 0.0
    %1813 = vmatpush2.msra.mxu0 0.0
    %1814 = vmatprep.subr.mxu0 0.0
    %1815 = vmatpush2.msra.mxu0 0.0
    %1816 = vmatprep.subr.mxu0 0.0
    %1817 = vmatpush2.msra.mxu0 0.0
    %1818 = vmatprep.subr.mxu0 0.0
    %1819 = vmatpush2.msra.mxu0 0.0
    %1820 = vmatprep.subr.mxu0 0.0
    %1821 = vmatpush2.msra.mxu0 0.0
    %1822 = vmatprep.subr.mxu0 0.0
    %1823 = vmatpush2.msra.mxu0 0.0
    %1824 = vmatprep.subr.mxu0 0.0
    %1825 = vmatpush2.msra.mxu0 0.0
    %1826 = vmatprep.subr.mxu0 0.0
    %1827 = vmatpush2.msra.mxu0 0.0
    %1828 = vmatprep.subr.mxu0 0.0
    %1829 = vmatpush2.msra.mxu0 0.0
    %1830 = vmatprep.mubr.f32.mxu0 0.0
    %1831 = vmatmul.mubr.f32.gmra.mxu0 %v1742
    %v1832 = vpop.f32.mrf.mxu0
    %v1833 = vadd.f32 0.0, %v1832
    %v1834 = vpop.f32.mrf.mxu0
    %1835 = vmatprep.mubr.f32.mxu0 0.0
    %1836 = vmatmul.mubr.f32.gmra.mxu0 %v1743
    %v1837 = vpop.f32.mrf.mxu0
    %v1838 = vadd.f32 0.0, %v1837
    %v1839 = vpop.f32.mrf.mxu0
    %1840 = vmatprep.mubr.f32.mxu0 0.0
    %1841 = vmatmul.mubr.f32.gmra.mxu0 %v1744
    %v1842 = vpop.f32.mrf.mxu0
    %v1843 = vadd.f32 0.0, %v1842
    %v1844 = vpop.f32.mrf.mxu0
    %1845 = vmatprep.mubr.f32.mxu0 0.0
    %1846 = vmatmul.mubr.f32.gmra.mxu0 %v1745
    %v1847 = vpop.f32.mrf.mxu0
    %v1848 = vadd.f32 0.0, %v1847
    %v1849 = vpop.f32.mrf.mxu0
    %1850 = vmatprep.mubr.f32.mxu0 0.0
    %1851 = vmatmul.mubr.f32.gmra.mxu0 %v1746
    %v1852 = vpop.f32.mrf.mxu0
    %v1853 = vadd.f32 0.0, %v1852
    %v1854 = vpop.f32.mrf.mxu0
    %1855 = vmatprep.mubr.f32.mxu0 0.0
    %1856 = vmatmul.mubr.f32.gmra.mxu0 %v1747
    %v1857 = vpop.f32.mrf.mxu0
    %v1858 = vadd.f32 0.0, %v1857
    %v1859 = vpop.f32.mrf.mxu0
    %1860 = vmatprep.mubr.f32.mxu0 0.0
    %1861 = vmatmul.mubr.f32.gmra.mxu0 %v1748
    %v1862 = vpop.f32.mrf.mxu0
    %v1863 = vadd.f32 0.0, %v1862
    %v1864 = vpop.f32.mrf.mxu0
    %1865 = vmatprep.mubr.f32.mxu0 0.0
    %1866 = vmatmul.mubr.f32.gmra.mxu0 %v1749
    %v1867 = vpop.f32.mrf.mxu0
    %v1868 = vadd.f32 0.0, %v1867
    %v1869 = vpop.f32.mrf.mxu0
    %1870 = vdwg.mxu0
    %1871 = vmatprep.subr.mxu0 0.0
    %1872 = vmatpush1.msra.mxu0 0.0
    %1873 = vmatprep.subr.mxu0 0.0
    %1874 = vmatpush1.msra.mxu0 0.0
    %1875 = vmatprep.subr.mxu0 0.0
    %1876 = vmatpush1.msra.mxu0 0.0
    %1877 = vmatprep.subr.mxu0 0.0
    %1878 = vmatpush1.msra.mxu0 0.0
    %1879 = vmatprep.subr.mxu0 0.0
    %1880 = vmatpush1.msra.mxu0 0.0
    %1881 = vmatprep.subr.mxu0 0.0
    %1882 = vmatpush1.msra.mxu0 0.0
    %1883 = vmatprep.subr.mxu0 0.0
    %1884 = vmatpush1.msra.mxu0 0.0
    %1885 = vmatprep.subr.mxu0 0.0
    %1886 = vmatpush1.msra.mxu0 0.0
    %1887 = vmatprep.subr.mxu0 0.0
    %1888 = vmatpush1.msra.mxu0 %v1868
    %1889 = vmatprep.subr.mxu0 0.0
    %1890 = vmatpush1.msra.mxu0 %v1863
    %1891 = vmatprep.subr.mxu0 0.0
    %1892 = vmatpush1.msra.mxu0 %v1858
    %1893 = vmatprep.subr.mxu0 0.0
    %1894 = vmatpush1.msra.mxu0 %v1853
    %1895 = vmatprep.subr.mxu0 0.0
    %1896 = vmatpush1.msra.mxu0 %v1848
    %1897 = vmatprep.subr.mxu0 0.0
    %1898 = vmatpush1.msra.mxu0 %v1843
    %1899 = vmatprep.subr.mxu0 0.0
    %1900 = vmatpush1.msra.mxu0 %v1838
    %1901 = vmatprep.subr.mxu0 0.0
    %1902 = vmatpush1.msra.mxu0 %v1833
    %1903 = vmatprep.subr.mxu0 0.0
    %1904 = vmatpush2.msra.mxu0 0.0
    %1905 = vmatprep.subr.mxu0 0.0
    %1906 = vmatpush2.msra.mxu0 0.0
    %1907 = vmatprep.subr.mxu0 0.0
    %1908 = vmatpush2.msra.mxu0 0.0
    %1909 = vmatprep.subr.mxu0 0.0
    %1910 = vmatpush2.msra.mxu0 0.0
    %1911 = vmatprep.subr.mxu0 0.0
    %1912 = vmatpush2.msra.mxu0 0.0
    %1913 = vmatprep.subr.mxu0 0.0
    %1914 = vmatpush2.msra.mxu0 0.0
    %1915 = vmatprep.subr.mxu0 0.0
    %1916 = vmatpush2.msra.mxu0 0.0
    %1917 = vmatprep.subr.mxu0 0.0
    %1918 = vmatpush2.msra.mxu0 0.0
    %1919 = vmatprep.subr.mxu0 0.0
    %1920 = vmatpush2.msra.mxu0 0.0
    %1921 = vmatprep.subr.mxu0 0.0
    %1922 = vmatpush2.msra.mxu0 0.0
    %1923 = vmatprep.subr.mxu0 0.0
    %1924 = vmatpush2.msra.mxu0 0.0
    %1925 = vmatprep.subr.mxu0 0.0
    %1926 = vmatpush2.msra.mxu0 0.0
    %1927 = vmatprep.subr.mxu0 0.0
    %1928 = vmatpush2.msra.mxu0 0.0
    %1929 = vmatprep.subr.mxu0 0.0
    %1930 = vmatpush2.msra.mxu0 0.0
    %1931 = vmatprep.subr.mxu0 0.0
    %1932 = vmatpush2.msra.mxu0 0.0
    %1933 = vmatprep.subr.mxu0 0.0
    %1934 = vmatpush2.msra.mxu0 0.0
    %1935 = vmatprep.mubr.f32.mxu0 0.0
    %1936 = vmatmul.mubr.f32.gmra.mxu0 %v215
    %v1937 = vpop.f32.mrf.mxu0
    %v1938 = vadd.f32 0.0, %v1937
    %v1939 = vpop.f32.mrf.mxu0
    %1940 = vmatprep.mubr.f32.mxu0 0.0
    %1941 = vmatmul.mubr.f32.gmra.mxu0 %v218
    %v1942 = vpop.f32.mrf.mxu0
    %v1943 = vadd.f32 0.0, %v1942
    %v1944 = vpop.f32.mrf.mxu0
    %1945 = vmatprep.mubr.f32.mxu0 0.0
    %1946 = vmatmul.mubr.f32.gmra.mxu0 %v221
    %v1947 = vpop.f32.mrf.mxu0
    %v1948 = vadd.f32 0.0, %v1947
    %v1949 = vpop.f32.mrf.mxu0
    %1950 = vmatprep.mubr.f32.mxu0 0.0
    %1951 = vmatmul.mubr.f32.gmra.mxu0 %v224
    %v1952 = vpop.f32.mrf.mxu0
    %v1953 = vadd.f32 0.0, %v1952
    %v1954 = vpop.f32.mrf.mxu0
    %1955 = vmatprep.mubr.f32.mxu0 0.0
    %1956 = vmatmul.mubr.f32.gmra.mxu0 %v227
    %v1957 = vpop.f32.mrf.mxu0
    %v1958 = vadd.f32 0.0, %v1957
    %v1959 = vpop.f32.mrf.mxu0
    %1960 = vmatprep.mubr.f32.mxu0 0.0
    %1961 = vmatmul.mubr.f32.gmra.mxu0 %v230
    %v1962 = vpop.f32.mrf.mxu0
    %v1963 = vadd.f32 0.0, %v1962
    %v1964 = vpop.f32.mrf.mxu0
    %1965 = vmatprep.mubr.f32.mxu0 0.0
    %1966 = vmatmul.mubr.f32.gmra.mxu0 %v233
    %v1967 = vpop.f32.mrf.mxu0
    %v1968 = vadd.f32 0.0, %v1967
    %v1969 = vpop.f32.mrf.mxu0
    %1970 = vmatprep.mubr.f32.mxu0 0.0
    %1971 = vmatmul.mubr.f32.gmra.mxu0 %v236
    %v1972 = vpop.f32.mrf.mxu0
    %v1973 = vadd.f32 0.0, %v1972
    %v1974 = vpop.f32.mrf.mxu0
    %1975 = vdwg.mxu0
    %1976 = vst [vmem:[#allocation2] sm:$0xff] %v1938
    %1977 = vst [vmem:[#allocation2 + $0x8] sm:$0xff] %v1943
    %1978 = vst [vmem:[#allocation2 + $0x10] sm:$0xff] %v1948
    %1979 = vst [vmem:[#allocation2 + $0x18] sm:$0xff] %v1953
    %1980 = vst [vmem:[#allocation2 + $0x20] sm:$0xff] %v1958
    %1981 = vst [vmem:[#allocation2 + $0x28] sm:$0xff] %v1963
    %1982 = vst [vmem:[#allocation2 + $0x30] sm:$0xff] %v1968
    %1983 = vst [vmem:[#allocation2 + $0x38] sm:$0xff] %v1973
    %v1984 = vld [vmem:[#allocation2] sm:$0x1]
    %v1985 = vadd.f32 %v1984, 0.0
    %vm1986 = vcmp.ge.f32.partialorder %v1985, 10.0
    %v1987 = vsel %vm1986, 1, 0
    %v1988 = vcvt.s32.f32 %v1987
    %1989 = vst [vmem:[%s5] sm:$0x1] %v1988
    %v1990 = vlaneseq
    %v1991 = vshrl.u32 %v1990, 7
    %v1992 = vsub.s32 0, %v1991
    %v1993 = vrot.slane %v1988, %v1992
    %v1994 = vmul.f32 %v1993, %v61
    %v1995 = vmul.f32 %v1993, %v66
    %v1996 = vadd.f32 %v1994, 0.0
    %v1997 = vadd.f32 %v1995, 0.0
    %v2000 = vrot.slane %v1996, 1
    %v2001 = vrot.slane %v1997, 1
    %v2002 = vsel %vm367, %v2000, %v2001
    %v2005 = vsel %vm367, %v2001, 0.0
    %v2006 = vld [vmem:[#allocation2 + $0x1] sm:$0x1]
    %v2007 = vadd.f32 %v2006, %v2002
    %vm2008 = vcmp.ge.f32.partialorder %v2007, 10.0
    %v2009 = vsel %vm2008, 1, 0
    %v2010 = vcvt.s32.f32 %v2009
    %2011 = vst [vmem:[%s5 + $0x1] sm:$0x1] %v2010
    %v2012 = vlaneseq
    %v2013 = vshrl.u32 %v2012, 7
    %v2014 = vsub.s32 0, %v2013
    %v2015 = vrot.slane %v2010, %v2014
    %v2016 = vmul.f32 %v2015, %v61
    %v2017 = vmul.f32 %v2015, %v66
    %v2018 = vadd.f32 %v2002, %v2016
    %v2019 = vadd.f32 %v2005, %v2017
    %v2022 = vrot.slane %v2018, 1
    %v2023 = vrot.slane %v2019, 1
    %v2024 = vsel %vm367, %v2022, %v2023
    %v2027 = vsel %vm367, %v2023, 0.0
    %v2028 = vld [vmem:[#allocation2 + $0x2] sm:$0x1]
    %v2029 = vadd.f32 %v2028, %v2024
    %vm2030 = vcmp.ge.f32.partialorder %v2029, 10.0
    %v2031 = vsel %vm2030, 1, 0
    %v2032 = vcvt.s32.f32 %v2031
    %2033 = vst [vmem:[%s5 + $0x2] sm:$0x1] %v2032
    %v2034 = vlaneseq
    %v2035 = vshrl.u32 %v2034, 7
    %v2036 = vsub.s32 0, %v2035
    %v2037 = vrot.slane %v2032, %v2036
    %v2038 = vmul.f32 %v2037, %v61
    %v2039 = vmul.f32 %v2037, %v66
    %v2040 = vadd.f32 %v2024, %v2038
    %v2041 = vadd.f32 %v2027, %v2039
    %v2044 = vrot.slane %v2040, 1
    %v2045 = vrot.slane %v2041, 1
    %v2046 = vsel %vm367, %v2044, %v2045
    %v2049 = vsel %vm367, %v2045, 0.0
    %v2050 = vld [vmem:[#allocation2 + $0x3] sm:$0x1]
    %v2051 = vadd.f32 %v2050, %v2046
    %vm2052 = vcmp.ge.f32.partialorder %v2051, 10.0
    %v2053 = vsel %vm2052, 1, 0
    %v2054 = vcvt.s32.f32 %v2053
    %2055 = vst [vmem:[%s5 + $0x3] sm:$0x1] %v2054
    %v2056 = vlaneseq
    %v2057 = vshrl.u32 %v2056, 7
    %v2058 = vsub.s32 0, %v2057
    %v2059 = vrot.slane %v2054, %v2058
    %v2060 = vmul.f32 %v2059, %v61
    %v2061 = vmul.f32 %v2059, %v66
    %v2062 = vadd.f32 %v2046, %v2060
    %v2063 = vadd.f32 %v2049, %v2061
    %v2066 = vrot.slane %v2062, 1
    %v2067 = vrot.slane %v2063, 1
    %v2068 = vsel %vm367, %v2066, %v2067
    %v2071 = vsel %vm367, %v2067, 0.0
    %v2072 = vld [vmem:[#allocation2 + $0x4] sm:$0x1]
    %v2073 = vadd.f32 %v2072, %v2068
    %vm2074 = vcmp.ge.f32.partialorder %v2073, 10.0
    %v2075 = vsel %vm2074, 1, 0
    %v2076 = vcvt.s32.f32 %v2075
    %2077 = vst [vmem:[%s5 + $0x4] sm:$0x1] %v2076
    %v2078 = vlaneseq
    %v2079 = vshrl.u32 %v2078, 7
    %v2080 = vsub.s32 0, %v2079
    %v2081 = vrot.slane %v2076, %v2080
    %v2082 = vmul.f32 %v2081, %v61
    %v2083 = vmul.f32 %v2081, %v66
    %v2084 = vadd.f32 %v2068, %v2082
    %v2085 = vadd.f32 %v2071, %v2083
    %v2088 = vrot.slane %v2084, 1
    %v2089 = vrot.slane %v2085, 1
    %v2090 = vsel %vm367, %v2088, %v2089
    %v2093 = vsel %vm367, %v2089, 0.0
    %v2094 = vld [vmem:[#allocation2 + $0x5] sm:$0x1]
    %v2095 = vadd.f32 %v2094, %v2090
    %vm2096 = vcmp.ge.f32.partialorder %v2095, 10.0
    %v2097 = vsel %vm2096, 1, 0
    %v2098 = vcvt.s32.f32 %v2097
    %2099 = vst [vmem:[%s5 + $0x5] sm:$0x1] %v2098
    %v2100 = vlaneseq
    %v2101 = vshrl.u32 %v2100, 7
    %v2102 = vsub.s32 0, %v2101
    %v2103 = vrot.slane %v2098, %v2102
    %v2104 = vmul.f32 %v2103, %v61
    %v2105 = vmul.f32 %v2103, %v66
    %v2106 = vadd.f32 %v2090, %v2104
    %v2107 = vadd.f32 %v2093, %v2105
    %v2110 = vrot.slane %v2106, 1
    %v2111 = vrot.slane %v2107, 1
    %v2112 = vsel %vm367, %v2110, %v2111
    %v2115 = vsel %vm367, %v2111, 0.0
    %v2116 = vld [vmem:[#allocation2 + $0x6] sm:$0x1]
    %v2117 = vadd.f32 %v2116, %v2112
    %vm2118 = vcmp.ge.f32.partialorder %v2117, 10.0
    %v2119 = vsel %vm2118, 1, 0
    %v2120 = vcvt.s32.f32 %v2119
    %2121 = vst [vmem:[%s5 + $0x6] sm:$0x1] %v2120
    %v2122 = vlaneseq
    %v2123 = vshrl.u32 %v2122, 7
    %v2124 = vsub.s32 0, %v2123
    %v2125 = vrot.slane %v2120, %v2124
    %v2126 = vmul.f32 %v2125, %v61
    %v2127 = vmul.f32 %v2125, %v66
    %v2128 = vadd.f32 %v2112, %v2126
    %v2129 = vadd.f32 %v2115, %v2127
    %v2132 = vrot.slane %v2128, 1
    %v2133 = vrot.slane %v2129, 1
    %v2134 = vsel %vm367, %v2132, %v2133
    %v2137 = vsel %vm367, %v2133, 0.0
    %v2138 = vld [vmem:[#allocation2 + $0x7] sm:$0x1]
    %v2139 = vadd.f32 %v2138, %v2134
    %vm2140 = vcmp.ge.f32.partialorder %v2139, 10.0
    %v2141 = vsel %vm2140, 1, 0
    %v2142 = vcvt.s32.f32 %v2141
    %2143 = vst [vmem:[%s5 + $0x7] sm:$0x1] %v2142
    %v2144 = vlaneseq
    %v2145 = vshrl.u32 %v2144, 7
    %v2146 = vsub.s32 0, %v2145
    %v2147 = vrot.slane %v2142, %v2146
    %v2148 = vmul.f32 %v2147, %v61
    %v2149 = vmul.f32 %v2147, %v66
    %v2150 = vadd.f32 %v2134, %v2148
    %v2151 = vadd.f32 %v2137, %v2149
    %v2154 = vrot.slane %v2150, 1
    %v2155 = vrot.slane %v2151, 1
    %v2156 = vsel %vm367, %v2154, %v2155
    %v2159 = vsel %vm367, %v2155, 0.0
    %v2160 = vld [vmem:[#allocation2 + $0x8] sm:$0x1]
    %v2161 = vadd.f32 %v2160, %v2156
    %vm2162 = vcmp.ge.f32.partialorder %v2161, 10.0
    %v2163 = vsel %vm2162, 1, 0
    %v2164 = vcvt.s32.f32 %v2163
    %2165 = vst [vmem:[%s5 + $0x8] sm:$0x1] %v2164
    %v2166 = vlaneseq
    %v2167 = vshrl.u32 %v2166, 7
    %v2168 = vsub.s32 0, %v2167
    %v2169 = vrot.slane %v2164, %v2168
    %v2170 = vmul.f32 %v2169, %v61
    %v2171 = vmul.f32 %v2169, %v66
    %v2172 = vadd.f32 %v2156, %v2170
    %v2173 = vadd.f32 %v2159, %v2171
    %v2176 = vrot.slane %v2172, 1
    %v2177 = vrot.slane %v2173, 1
    %v2178 = vsel %vm367, %v2176, %v2177
    %v2181 = vsel %vm367, %v2177, 0.0
    %v2182 = vld [vmem:[#allocation2 + $0x9] sm:$0x1]
    %v2183 = vadd.f32 %v2182, %v2178
    %vm2184 = vcmp.ge.f32.partialorder %v2183, 10.0
    %v2185 = vsel %vm2184, 1, 0
    %v2186 = vcvt.s32.f32 %v2185
    %2187 = vst [vmem:[%s5 + $0x9] sm:$0x1] %v2186
    %v2188 = vlaneseq
    %v2189 = vshrl.u32 %v2188, 7
    %v2190 = vsub.s32 0, %v2189
    %v2191 = vrot.slane %v2186, %v2190
    %v2192 = vmul.f32 %v2191, %v61
    %v2193 = vmul.f32 %v2191, %v66
    %v2194 = vadd.f32 %v2178, %v2192
    %v2195 = vadd.f32 %v2181, %v2193
    %v2198 = vrot.slane %v2194, 1
    %v2199 = vrot.slane %v2195, 1
    %v2200 = vsel %vm367, %v2198, %v2199
    %v2203 = vsel %vm367, %v2199, 0.0
    %v2204 = vld [vmem:[#allocation2 + $0xa] sm:$0x1]
    %v2205 = vadd.f32 %v2204, %v2200
    %vm2206 = vcmp.ge.f32.partialorder %v2205, 10.0
    %v2207 = vsel %vm2206, 1, 0
    %v2208 = vcvt.s32.f32 %v2207
    %2209 = vst [vmem:[%s5 + $0xa] sm:$0x1] %v2208
    %v2210 = vlaneseq
    %v2211 = vshrl.u32 %v2210, 7
    %v2212 = vsub.s32 0, %v2211
    %v2213 = vrot.slane %v2208, %v2212
    %v2214 = vmul.f32 %v2213, %v61
    %v2215 = vmul.f32 %v2213, %v66
    %v2216 = vadd.f32 %v2200, %v2214
    %v2217 = vadd.f32 %v2203, %v2215
    %v2220 = vrot.slane %v2216, 1
    %v2221 = vrot.slane %v2217, 1
    %v2222 = vsel %vm367, %v2220, %v2221
    %v2225 = vsel %vm367, %v2221, 0.0
    %v2226 = vld [vmem:[#allocation2 + $0xb] sm:$0x1]
    %v2227 = vadd.f32 %v2226, %v2222
    %vm2228 = vcmp.ge.f32.partialorder %v2227, 10.0
    %v2229 = vsel %vm2228, 1, 0
    %v2230 = vcvt.s32.f32 %v2229
    %2231 = vst [vmem:[%s5 + $0xb] sm:$0x1] %v2230
    %v2232 = vlaneseq
    %v2233 = vshrl.u32 %v2232, 7
    %v2234 = vsub.s32 0, %v2233
    %v2235 = vrot.slane %v2230, %v2234
    %v2236 = vmul.f32 %v2235, %v61
    %v2237 = vmul.f32 %v2235, %v66
    %v2238 = vadd.f32 %v2222, %v2236
    %v2239 = vadd.f32 %v2225, %v2237
    %v2242 = vrot.slane %v2238, 1
    %v2243 = vrot.slane %v2239, 1
    %v2244 = vsel %vm367, %v2242, %v2243
    %v2247 = vsel %vm367, %v2243, 0.0
    %v2248 = vld [vmem:[#allocation2 + $0xc] sm:$0x1]
    %v2249 = vadd.f32 %v2248, %v2244
    %vm2250 = vcmp.ge.f32.partialorder %v2249, 10.0
    %v2251 = vsel %vm2250, 1, 0
    %v2252 = vcvt.s32.f32 %v2251
    %2253 = vst [vmem:[%s5 + $0xc] sm:$0x1] %v2252
    %v2254 = vlaneseq
    %v2255 = vshrl.u32 %v2254, 7
    %v2256 = vsub.s32 0, %v2255
    %v2257 = vrot.slane %v2252, %v2256
    %v2258 = vmul.f32 %v2257, %v61
    %v2259 = vmul.f32 %v2257, %v66
    %v2260 = vadd.f32 %v2244, %v2258
    %v2261 = vadd.f32 %v2247, %v2259
    %v2264 = vrot.slane %v2260, 1
    %v2265 = vrot.slane %v2261, 1
    %v2266 = vsel %vm367, %v2264, %v2265
    %v2269 = vsel %vm367, %v2265, 0.0
    %v2270 = vld [vmem:[#allocation2 + $0xd] sm:$0x1]
    %v2271 = vadd.f32 %v2270, %v2266
    %vm2272 = vcmp.ge.f32.partialorder %v2271, 10.0
    %v2273 = vsel %vm2272, 1, 0
    %v2274 = vcvt.s32.f32 %v2273
    %2275 = vst [vmem:[%s5 + $0xd] sm:$0x1] %v2274
    %v2276 = vlaneseq
    %v2277 = vshrl.u32 %v2276, 7
    %v2278 = vsub.s32 0, %v2277
    %v2279 = vrot.slane %v2274, %v2278
    %v2280 = vmul.f32 %v2279, %v61
    %v2281 = vmul.f32 %v2279, %v66
    %v2282 = vadd.f32 %v2266, %v2280
    %v2283 = vadd.f32 %v2269, %v2281
    %v2286 = vrot.slane %v2282, 1
    %v2287 = vrot.slane %v2283, 1
    %v2288 = vsel %vm367, %v2286, %v2287
    %v2291 = vsel %vm367, %v2287, 0.0
    %v2292 = vld [vmem:[#allocation2 + $0xe] sm:$0x1]
    %v2293 = vadd.f32 %v2292, %v2288
    %vm2294 = vcmp.ge.f32.partialorder %v2293, 10.0
    %v2295 = vsel %vm2294, 1, 0
    %v2296 = vcvt.s32.f32 %v2295
    %2297 = vst [vmem:[%s5 + $0xe] sm:$0x1] %v2296
    %v2298 = vlaneseq
    %v2299 = vshrl.u32 %v2298, 7
    %v2300 = vsub.s32 0, %v2299
    %v2301 = vrot.slane %v2296, %v2300
    %v2302 = vmul.f32 %v2301, %v61
    %v2303 = vmul.f32 %v2301, %v66
    %v2304 = vadd.f32 %v2288, %v2302
    %v2305 = vadd.f32 %v2291, %v2303
    %v2308 = vrot.slane %v2304, 1
    %v2309 = vrot.slane %v2305, 1
    %v2310 = vsel %vm367, %v2308, %v2309
    %v2313 = vsel %vm367, %v2309, 0.0
    %v2314 = vld [vmem:[#allocation2 + $0xf] sm:$0x1]
    %v2315 = vadd.f32 %v2314, %v2310
    %vm2316 = vcmp.ge.f32.partialorder %v2315, 10.0
    %v2317 = vsel %vm2316, 1, 0
    %v2318 = vcvt.s32.f32 %v2317
    %2319 = vst [vmem:[%s5 + $0xf] sm:$0x1] %v2318
    %v2320 = vlaneseq
    %v2321 = vshrl.u32 %v2320, 7
    %v2322 = vsub.s32 0, %v2321
    %v2323 = vrot.slane %v2318, %v2322
    %v2324 = vmul.f32 %v2323, %v61
    %v2325 = vmul.f32 %v2323, %v66
    %v2326 = vadd.f32 %v2310, %v2324
    %v2327 = vadd.f32 %v2313, %v2325
    %v2330 = vrot.slane %v2326, 1
    %v2331 = vrot.slane %v2327, 1
    %v2332 = vsel %vm367, %v2330, %v2331
    %v2335 = vsel %vm367, %v2331, 0.0
    %v2336 = vld [vmem:[#allocation2 + $0x10] sm:$0x1]
    %v2337 = vadd.f32 %v2336, %v2332
    %vm2338 = vcmp.ge.f32.partialorder %v2337, 10.0
    %v2339 = vsel %vm2338, 1, 0
    %v2340 = vcvt.s32.f32 %v2339
    %2341 = vst [vmem:[%s5 + $0x10] sm:$0x1] %v2340
    %v2342 = vlaneseq
    %v2343 = vshrl.u32 %v2342, 7
    %v2344 = vsub.s32 0, %v2343
    %v2345 = vrot.slane %v2340, %v2344
    %v2346 = vmul.f32 %v2345, %v61
    %v2347 = vmul.f32 %v2345, %v66
    %v2348 = vadd.f32 %v2332, %v2346
    %v2349 = vadd.f32 %v2335, %v2347
    %v2352 = vrot.slane %v2348, 1
    %v2353 = vrot.slane %v2349, 1
    %v2354 = vsel %vm367, %v2352, %v2353
    %v2357 = vsel %vm367, %v2353, 0.0
    %v2358 = vld [vmem:[#allocation2 + $0x11] sm:$0x1]
    %v2359 = vadd.f32 %v2358, %v2354
    %vm2360 = vcmp.ge.f32.partialorder %v2359, 10.0
    %v2361 = vsel %vm2360, 1, 0
    %v2362 = vcvt.s32.f32 %v2361
    %2363 = vst [vmem:[%s5 + $0x11] sm:$0x1] %v2362
    %v2364 = vlaneseq
    %v2365 = vshrl.u32 %v2364, 7
    %v2366 = vsub.s32 0, %v2365
    %v2367 = vrot.slane %v2362, %v2366
    %v2368 = vmul.f32 %v2367, %v61
    %v2369 = vmul.f32 %v2367, %v66
    %v2370 = vadd.f32 %v2354, %v2368
    %v2371 = vadd.f32 %v2357, %v2369
    %v2374 = vrot.slane %v2370, 1
    %v2375 = vrot.slane %v2371, 1
    %v2376 = vsel %vm367, %v2374, %v2375
    %v2379 = vsel %vm367, %v2375, 0.0
    %v2380 = vld [vmem:[#allocation2 + $0x12] sm:$0x1]
    %v2381 = vadd.f32 %v2380, %v2376
    %vm2382 = vcmp.ge.f32.partialorder %v2381, 10.0
    %v2383 = vsel %vm2382, 1, 0
    %v2384 = vcvt.s32.f32 %v2383
    %2385 = vst [vmem:[%s5 + $0x12] sm:$0x1] %v2384
    %v2386 = vlaneseq
    %v2387 = vshrl.u32 %v2386, 7
    %v2388 = vsub.s32 0, %v2387
    %v2389 = vrot.slane %v2384, %v2388
    %v2390 = vmul.f32 %v2389, %v61
    %v2391 = vmul.f32 %v2389, %v66
    %v2392 = vadd.f32 %v2376, %v2390
    %v2393 = vadd.f32 %v2379, %v2391
    %v2396 = vrot.slane %v2392, 1
    %v2397 = vrot.slane %v2393, 1
    %v2398 = vsel %vm367, %v2396, %v2397
    %v2401 = vsel %vm367, %v2397, 0.0
    %v2402 = vld [vmem:[#allocation2 + $0x13] sm:$0x1]
    %v2403 = vadd.f32 %v2402, %v2398
    %vm2404 = vcmp.ge.f32.partialorder %v2403, 10.0
    %v2405 = vsel %vm2404, 1, 0
    %v2406 = vcvt.s32.f32 %v2405
    %2407 = vst [vmem:[%s5 + $0x13] sm:$0x1] %v2406
    %v2408 = vlaneseq
    %v2409 = vshrl.u32 %v2408, 7
    %v2410 = vsub.s32 0, %v2409
    %v2411 = vrot.slane %v2406, %v2410
    %v2412 = vmul.f32 %v2411, %v61
    %v2413 = vmul.f32 %v2411, %v66
    %v2414 = vadd.f32 %v2398, %v2412
    %v2415 = vadd.f32 %v2401, %v2413
    %v2418 = vrot.slane %v2414, 1
    %v2419 = vrot.slane %v2415, 1
    %v2420 = vsel %vm367, %v2418, %v2419
    %v2423 = vsel %vm367, %v2419, 0.0
    %v2424 = vld [vmem:[#allocation2 + $0x14] sm:$0x1]
    %v2425 = vadd.f32 %v2424, %v2420
    %vm2426 = vcmp.ge.f32.partialorder %v2425, 10.0
    %v2427 = vsel %vm2426, 1, 0
    %v2428 = vcvt.s32.f32 %v2427
    %2429 = vst [vmem:[%s5 + $0x14] sm:$0x1] %v2428
    %v2430 = vlaneseq
    %v2431 = vshrl.u32 %v2430, 7
    %v2432 = vsub.s32 0, %v2431
    %v2433 = vrot.slane %v2428, %v2432
    %v2434 = vmul.f32 %v2433, %v61
    %v2435 = vmul.f32 %v2433, %v66
    %v2436 = vadd.f32 %v2420, %v2434
    %v2437 = vadd.f32 %v2423, %v2435
    %v2440 = vrot.slane %v2436, 1
    %v2441 = vrot.slane %v2437, 1
    %v2442 = vsel %vm367, %v2440, %v2441
    %v2445 = vsel %vm367, %v2441, 0.0
    %v2446 = vld [vmem:[#allocation2 + $0x15] sm:$0x1]
    %v2447 = vadd.f32 %v2446, %v2442
    %vm2448 = vcmp.ge.f32.partialorder %v2447, 10.0
    %v2449 = vsel %vm2448, 1, 0
    %v2450 = vcvt.s32.f32 %v2449
    %2451 = vst [vmem:[%s5 + $0x15] sm:$0x1] %v2450
    %v2452 = vlaneseq
    %v2453 = vshrl.u32 %v2452, 7
    %v2454 = vsub.s32 0, %v2453
    %v2455 = vrot.slane %v2450, %v2454
    %v2456 = vmul.f32 %v2455, %v61
    %v2457 = vmul.f32 %v2455, %v66
    %v2458 = vadd.f32 %v2442, %v2456
    %v2459 = vadd.f32 %v2445, %v2457
    %v2462 = vrot.slane %v2458, 1
    %v2463 = vrot.slane %v2459, 1
    %v2464 = vsel %vm367, %v2462, %v2463
    %v2467 = vsel %vm367, %v2463, 0.0
    %v2468 = vld [vmem:[#allocation2 + $0x16] sm:$0x1]
    %v2469 = vadd.f32 %v2468, %v2464
    %vm2470 = vcmp.ge.f32.partialorder %v2469, 10.0
    %v2471 = vsel %vm2470, 1, 0
    %v2472 = vcvt.s32.f32 %v2471
    %2473 = vst [vmem:[%s5 + $0x16] sm:$0x1] %v2472
    %v2474 = vlaneseq
    %v2475 = vshrl.u32 %v2474, 7
    %v2476 = vsub.s32 0, %v2475
    %v2477 = vrot.slane %v2472, %v2476
    %v2478 = vmul.f32 %v2477, %v61
    %v2479 = vmul.f32 %v2477, %v66
    %v2480 = vadd.f32 %v2464, %v2478
    %v2481 = vadd.f32 %v2467, %v2479
    %v2484 = vrot.slane %v2480, 1
    %v2485 = vrot.slane %v2481, 1
    %v2486 = vsel %vm367, %v2484, %v2485
    %v2489 = vsel %vm367, %v2485, 0.0
    %v2490 = vld [vmem:[#allocation2 + $0x17] sm:$0x1]
    %v2491 = vadd.f32 %v2490, %v2486
    %vm2492 = vcmp.ge.f32.partialorder %v2491, 10.0
    %v2493 = vsel %vm2492, 1, 0
    %v2494 = vcvt.s32.f32 %v2493
    %2495 = vst [vmem:[%s5 + $0x17] sm:$0x1] %v2494
    %v2496 = vlaneseq
    %v2497 = vshrl.u32 %v2496, 7
    %v2498 = vsub.s32 0, %v2497
    %v2499 = vrot.slane %v2494, %v2498
    %v2500 = vmul.f32 %v2499, %v61
    %v2501 = vmul.f32 %v2499, %v66
    %v2502 = vadd.f32 %v2486, %v2500
    %v2503 = vadd.f32 %v2489, %v2501
    %v2506 = vrot.slane %v2502, 1
    %v2507 = vrot.slane %v2503, 1
    %v2508 = vsel %vm367, %v2506, %v2507
    %v2511 = vsel %vm367, %v2507, 0.0
    %v2512 = vld [vmem:[#allocation2 + $0x18] sm:$0x1]
    %v2513 = vadd.f32 %v2512, %v2508
    %vm2514 = vcmp.ge.f32.partialorder %v2513, 10.0
    %v2515 = vsel %vm2514, 1, 0
    %v2516 = vcvt.s32.f32 %v2515
    %2517 = vst [vmem:[%s5 + $0x18] sm:$0x1] %v2516
    %v2518 = vlaneseq
    %v2519 = vshrl.u32 %v2518, 7
    %v2520 = vsub.s32 0, %v2519
    %v2521 = vrot.slane %v2516, %v2520
    %v2522 = vmul.f32 %v2521, %v61
    %v2523 = vmul.f32 %v2521, %v66
    %v2524 = vadd.f32 %v2508, %v2522
    %v2525 = vadd.f32 %v2511, %v2523
    %v2528 = vrot.slane %v2524, 1
    %v2529 = vrot.slane %v2525, 1
    %v2530 = vsel %vm367, %v2528, %v2529
    %v2533 = vsel %vm367, %v2529, 0.0
    %v2534 = vld [vmem:[#allocation2 + $0x19] sm:$0x1]
    %v2535 = vadd.f32 %v2534, %v2530
    %vm2536 = vcmp.ge.f32.partialorder %v2535, 10.0
    %v2537 = vsel %vm2536, 1, 0
    %v2538 = vcvt.s32.f32 %v2537
    %2539 = vst [vmem:[%s5 + $0x19] sm:$0x1] %v2538
    %v2540 = vlaneseq
    %v2541 = vshrl.u32 %v2540, 7
    %v2542 = vsub.s32 0, %v2541
    %v2543 = vrot.slane %v2538, %v2542
    %v2544 = vmul.f32 %v2543, %v61
    %v2545 = vmul.f32 %v2543, %v66
    %v2546 = vadd.f32 %v2530, %v2544
    %v2547 = vadd.f32 %v2533, %v2545
    %v2550 = vrot.slane %v2546, 1
    %v2551 = vrot.slane %v2547, 1
    %v2552 = vsel %vm367, %v2550, %v2551
    %v2555 = vsel %vm367, %v2551, 0.0
    %v2556 = vld [vmem:[#allocation2 + $0x1a] sm:$0x1]
    %v2557 = vadd.f32 %v2556, %v2552
    %vm2558 = vcmp.ge.f32.partialorder %v2557, 10.0
    %v2559 = vsel %vm2558, 1, 0
    %v2560 = vcvt.s32.f32 %v2559
    %2561 = vst [vmem:[%s5 + $0x1a] sm:$0x1] %v2560
    %v2562 = vlaneseq
    %v2563 = vshrl.u32 %v2562, 7
    %v2564 = vsub.s32 0, %v2563
    %v2565 = vrot.slane %v2560, %v2564
    %v2566 = vmul.f32 %v2565, %v61
    %v2567 = vmul.f32 %v2565, %v66
    %v2568 = vadd.f32 %v2552, %v2566
    %v2569 = vadd.f32 %v2555, %v2567
    %v2572 = vrot.slane %v2568, 1
    %v2573 = vrot.slane %v2569, 1
    %v2574 = vsel %vm367, %v2572, %v2573
    %v2577 = vsel %vm367, %v2573, 0.0
    %v2578 = vld [vmem:[#allocation2 + $0x1b] sm:$0x1]
    %v2579 = vadd.f32 %v2578, %v2574
    %vm2580 = vcmp.ge.f32.partialorder %v2579, 10.0
    %v2581 = vsel %vm2580, 1, 0
    %v2582 = vcvt.s32.f32 %v2581
    %2583 = vst [vmem:[%s5 + $0x1b] sm:$0x1] %v2582
    %v2584 = vlaneseq
    %v2585 = vshrl.u32 %v2584, 7
    %v2586 = vsub.s32 0, %v2585
    %v2587 = vrot.slane %v2582, %v2586
    %v2588 = vmul.f32 %v2587, %v61
    %v2589 = vmul.f32 %v2587, %v66
    %v2590 = vadd.f32 %v2574, %v2588
    %v2591 = vadd.f32 %v2577, %v2589
    %v2594 = vrot.slane %v2590, 1
    %v2595 = vrot.slane %v2591, 1
    %v2596 = vsel %vm367, %v2594, %v2595
    %v2599 = vsel %vm367, %v2595, 0.0
    %v2600 = vld [vmem:[#allocation2 + $0x1c] sm:$0x1]
    %v2601 = vadd.f32 %v2600, %v2596
    %vm2602 = vcmp.ge.f32.partialorder %v2601, 10.0
    %v2603 = vsel %vm2602, 1, 0
    %v2604 = vcvt.s32.f32 %v2603
    %2605 = vst [vmem:[%s5 + $0x1c] sm:$0x1] %v2604
    %v2606 = vlaneseq
    %v2607 = vshrl.u32 %v2606, 7
    %v2608 = vsub.s32 0, %v2607
    %v2609 = vrot.slane %v2604, %v2608
    %v2610 = vmul.f32 %v2609, %v61
    %v2611 = vmul.f32 %v2609, %v66
    %v2612 = vadd.f32 %v2596, %v2610
    %v2613 = vadd.f32 %v2599, %v2611
    %v2616 = vrot.slane %v2612, 1
    %v2617 = vrot.slane %v2613, 1
    %v2618 = vsel %vm367, %v2616, %v2617
    %v2621 = vsel %vm367, %v2617, 0.0
    %v2622 = vld [vmem:[#allocation2 + $0x1d] sm:$0x1]
    %v2623 = vadd.f32 %v2622, %v2618
    %vm2624 = vcmp.ge.f32.partialorder %v2623, 10.0
    %v2625 = vsel %vm2624, 1, 0
    %v2626 = vcvt.s32.f32 %v2625
    %2627 = vst [vmem:[%s5 + $0x1d] sm:$0x1] %v2626
    %v2628 = vlaneseq
    %v2629 = vshrl.u32 %v2628, 7
    %v2630 = vsub.s32 0, %v2629
    %v2631 = vrot.slane %v2626, %v2630
    %v2632 = vmul.f32 %v2631, %v61
    %v2633 = vmul.f32 %v2631, %v66
    %v2634 = vadd.f32 %v2618, %v2632
    %v2635 = vadd.f32 %v2621, %v2633
    %v2638 = vrot.slane %v2634, 1
    %v2639 = vrot.slane %v2635, 1
    %v2640 = vsel %vm367, %v2638, %v2639
    %v2643 = vsel %vm367, %v2639, 0.0
    %v2644 = vld [vmem:[#allocation2 + $0x1e] sm:$0x1]
    %v2645 = vadd.f32 %v2644, %v2640
    %vm2646 = vcmp.ge.f32.partialorder %v2645, 10.0
    %v2647 = vsel %vm2646, 1, 0
    %v2648 = vcvt.s32.f32 %v2647
    %2649 = vst [vmem:[%s5 + $0x1e] sm:$0x1] %v2648
    %v2650 = vlaneseq
    %v2651 = vshrl.u32 %v2650, 7
    %v2652 = vsub.s32 0, %v2651
    %v2653 = vrot.slane %v2648, %v2652
    %v2654 = vmul.f32 %v2653, %v61
    %v2655 = vmul.f32 %v2653, %v66
    %v2656 = vadd.f32 %v2640, %v2654
    %v2657 = vadd.f32 %v2643, %v2655
    %v2660 = vrot.slane %v2656, 1
    %v2661 = vrot.slane %v2657, 1
    %v2662 = vsel %vm367, %v2660, %v2661
    %v2665 = vsel %vm367, %v2661, 0.0
    %v2666 = vld [vmem:[#allocation2 + $0x1f] sm:$0x1]
    %v2667 = vadd.f32 %v2666, %v2662
    %vm2668 = vcmp.ge.f32.partialorder %v2667, 10.0
    %v2669 = vsel %vm2668, 1, 0
    %v2670 = vcvt.s32.f32 %v2669
    %2671 = vst [vmem:[%s5 + $0x1f] sm:$0x1] %v2670
    %v2672 = vlaneseq
    %v2673 = vshrl.u32 %v2672, 7
    %v2674 = vsub.s32 0, %v2673
    %v2675 = vrot.slane %v2670, %v2674
    %v2676 = vmul.f32 %v2675, %v61
    %v2677 = vmul.f32 %v2675, %v66
    %v2678 = vadd.f32 %v2662, %v2676
    %v2679 = vadd.f32 %v2665, %v2677
    %v2682 = vrot.slane %v2678, 1
    %v2683 = vrot.slane %v2679, 1
    %v2684 = vsel %vm367, %v2682, %v2683
    %v2687 = vsel %vm367, %v2683, 0.0
    %v2688 = vld [vmem:[#allocation2 + $0x20] sm:$0x1]
    %v2689 = vadd.f32 %v2688, %v2684
    %vm2690 = vcmp.ge.f32.partialorder %v2689, 10.0
    %v2691 = vsel %vm2690, 1, 0
    %v2692 = vcvt.s32.f32 %v2691
    %2693 = vst [vmem:[%s5 + $0x20] sm:$0x1] %v2692
    %v2694 = vlaneseq
    %v2695 = vshrl.u32 %v2694, 7
    %v2696 = vsub.s32 0, %v2695
    %v2697 = vrot.slane %v2692, %v2696
    %v2698 = vmul.f32 %v2697, %v61
    %v2699 = vmul.f32 %v2697, %v66
    %v2700 = vadd.f32 %v2684, %v2698
    %v2701 = vadd.f32 %v2687, %v2699
    %v2704 = vrot.slane %v2700, 1
    %v2705 = vrot.slane %v2701, 1
    %v2706 = vsel %vm367, %v2704, %v2705
    %v2709 = vsel %vm367, %v2705, 0.0
    %v2710 = vld [vmem:[#allocation2 + $0x21] sm:$0x1]
    %v2711 = vadd.f32 %v2710, %v2706
    %vm2712 = vcmp.ge.f32.partialorder %v2711, 10.0
    %v2713 = vsel %vm2712, 1, 0
    %v2714 = vcvt.s32.f32 %v2713
    %2715 = vst [vmem:[%s5 + $0x21] sm:$0x1] %v2714
    %v2716 = vlaneseq
    %v2717 = vshrl.u32 %v2716, 7
    %v2718 = vsub.s32 0, %v2717
    %v2719 = vrot.slane %v2714, %v2718
    %v2720 = vmul.f32 %v2719, %v61
    %v2721 = vmul.f32 %v2719, %v66
    %v2722 = vadd.f32 %v2706, %v2720
    %v2723 = vadd.f32 %v2709, %v2721
    %v2726 = vrot.slane %v2722, 1
    %v2727 = vrot.slane %v2723, 1
    %v2728 = vsel %vm367, %v2726, %v2727
    %v2731 = vsel %vm367, %v2727, 0.0
    %v2732 = vld [vmem:[#allocation2 + $0x22] sm:$0x1]
    %v2733 = vadd.f32 %v2732, %v2728
    %vm2734 = vcmp.ge.f32.partialorder %v2733, 10.0
    %v2735 = vsel %vm2734, 1, 0
    %v2736 = vcvt.s32.f32 %v2735
    %2737 = vst [vmem:[%s5 + $0x22] sm:$0x1] %v2736
    %v2738 = vlaneseq
    %v2739 = vshrl.u32 %v2738, 7
    %v2740 = vsub.s32 0, %v2739
    %v2741 = vrot.slane %v2736, %v2740
    %v2742 = vmul.f32 %v2741, %v61
    %v2743 = vmul.f32 %v2741, %v66
    %v2744 = vadd.f32 %v2728, %v2742
    %v2745 = vadd.f32 %v2731, %v2743
    %v2748 = vrot.slane %v2744, 1
    %v2749 = vrot.slane %v2745, 1
    %v2750 = vsel %vm367, %v2748, %v2749
    %v2753 = vsel %vm367, %v2749, 0.0
    %v2754 = vld [vmem:[#allocation2 + $0x23] sm:$0x1]
    %v2755 = vadd.f32 %v2754, %v2750
    %vm2756 = vcmp.ge.f32.partialorder %v2755, 10.0
    %v2757 = vsel %vm2756, 1, 0
    %v2758 = vcvt.s32.f32 %v2757
    %2759 = vst [vmem:[%s5 + $0x23] sm:$0x1] %v2758
    %v2760 = vlaneseq
    %v2761 = vshrl.u32 %v2760, 7
    %v2762 = vsub.s32 0, %v2761
    %v2763 = vrot.slane %v2758, %v2762
    %v2764 = vmul.f32 %v2763, %v61
    %v2765 = vmul.f32 %v2763, %v66
    %v2766 = vadd.f32 %v2750, %v2764
    %v2767 = vadd.f32 %v2753, %v2765
    %v2770 = vrot.slane %v2766, 1
    %v2771 = vrot.slane %v2767, 1
    %v2772 = vsel %vm367, %v2770, %v2771
    %v2775 = vsel %vm367, %v2771, 0.0
    %v2776 = vld [vmem:[#allocation2 + $0x24] sm:$0x1]
    %v2777 = vadd.f32 %v2776, %v2772
    %vm2778 = vcmp.ge.f32.partialorder %v2777, 10.0
    %v2779 = vsel %vm2778, 1, 0
    %v2780 = vcvt.s32.f32 %v2779
    %2781 = vst [vmem:[%s5 + $0x24] sm:$0x1] %v2780
    %v2782 = vlaneseq
    %v2783 = vshrl.u32 %v2782, 7
    %v2784 = vsub.s32 0, %v2783
    %v2785 = vrot.slane %v2780, %v2784
    %v2786 = vmul.f32 %v2785, %v61
    %v2787 = vmul.f32 %v2785, %v66
    %v2788 = vadd.f32 %v2772, %v2786
    %v2789 = vadd.f32 %v2775, %v2787
    %v2792 = vrot.slane %v2788, 1
    %v2793 = vrot.slane %v2789, 1
    %v2794 = vsel %vm367, %v2792, %v2793
    %v2797 = vsel %vm367, %v2793, 0.0
    %v2798 = vld [vmem:[#allocation2 + $0x25] sm:$0x1]
    %v2799 = vadd.f32 %v2798, %v2794
    %vm2800 = vcmp.ge.f32.partialorder %v2799, 10.0
    %v2801 = vsel %vm2800, 1, 0
    %v2802 = vcvt.s32.f32 %v2801
    %2803 = vst [vmem:[%s5 + $0x25] sm:$0x1] %v2802
    %v2804 = vlaneseq
    %v2805 = vshrl.u32 %v2804, 7
    %v2806 = vsub.s32 0, %v2805
    %v2807 = vrot.slane %v2802, %v2806
    %v2808 = vmul.f32 %v2807, %v61
    %v2809 = vmul.f32 %v2807, %v66
    %v2810 = vadd.f32 %v2794, %v2808
    %v2811 = vadd.f32 %v2797, %v2809
    %v2814 = vrot.slane %v2810, 1
    %v2815 = vrot.slane %v2811, 1
    %v2816 = vsel %vm367, %v2814, %v2815
    %v2819 = vsel %vm367, %v2815, 0.0
    %v2820 = vld [vmem:[#allocation2 + $0x26] sm:$0x1]
    %v2821 = vadd.f32 %v2820, %v2816
    %vm2822 = vcmp.ge.f32.partialorder %v2821, 10.0
    %v2823 = vsel %vm2822, 1, 0
    %v2824 = vcvt.s32.f32 %v2823
    %2825 = vst [vmem:[%s5 + $0x26] sm:$0x1] %v2824
    %v2826 = vlaneseq
    %v2827 = vshrl.u32 %v2826, 7
    %v2828 = vsub.s32 0, %v2827
    %v2829 = vrot.slane %v2824, %v2828
    %v2830 = vmul.f32 %v2829, %v61
    %v2831 = vmul.f32 %v2829, %v66
    %v2832 = vadd.f32 %v2816, %v2830
    %v2833 = vadd.f32 %v2819, %v2831
    %v2836 = vrot.slane %v2832, 1
    %v2837 = vrot.slane %v2833, 1
    %v2838 = vsel %vm367, %v2836, %v2837
    %v2841 = vsel %vm367, %v2837, 0.0
    %v2842 = vld [vmem:[#allocation2 + $0x27] sm:$0x1]
    %v2843 = vadd.f32 %v2842, %v2838
    %vm2844 = vcmp.ge.f32.partialorder %v2843, 10.0
    %v2845 = vsel %vm2844, 1, 0
    %v2846 = vcvt.s32.f32 %v2845
    %2847 = vst [vmem:[%s5 + $0x27] sm:$0x1] %v2846
    %v2848 = vlaneseq
    %v2849 = vshrl.u32 %v2848, 7
    %v2850 = vsub.s32 0, %v2849
    %v2851 = vrot.slane %v2846, %v2850
    %v2852 = vmul.f32 %v2851, %v61
    %v2853 = vmul.f32 %v2851, %v66
    %v2854 = vadd.f32 %v2838, %v2852
    %v2855 = vadd.f32 %v2841, %v2853
    %v2858 = vrot.slane %v2854, 1
    %v2859 = vrot.slane %v2855, 1
    %v2860 = vsel %vm367, %v2858, %v2859
    %v2863 = vsel %vm367, %v2859, 0.0
    %v2864 = vld [vmem:[#allocation2 + $0x28] sm:$0x1]
    %v2865 = vadd.f32 %v2864, %v2860
    %vm2866 = vcmp.ge.f32.partialorder %v2865, 10.0
    %v2867 = vsel %vm2866, 1, 0
    %v2868 = vcvt.s32.f32 %v2867
    %2869 = vst [vmem:[%s5 + $0x28] sm:$0x1] %v2868
    %v2870 = vlaneseq
    %v2871 = vshrl.u32 %v2870, 7
    %v2872 = vsub.s32 0, %v2871
    %v2873 = vrot.slane %v2868, %v2872
    %v2874 = vmul.f32 %v2873, %v61
    %v2875 = vmul.f32 %v2873, %v66
    %v2876 = vadd.f32 %v2860, %v2874
    %v2877 = vadd.f32 %v2863, %v2875
    %v2880 = vrot.slane %v2876, 1
    %v2881 = vrot.slane %v2877, 1
    %v2882 = vsel %vm367, %v2880, %v2881
    %v2885 = vsel %vm367, %v2881, 0.0
    %v2886 = vld [vmem:[#allocation2 + $0x29] sm:$0x1]
    %v2887 = vadd.f32 %v2886, %v2882
    %vm2888 = vcmp.ge.f32.partialorder %v2887, 10.0
    %v2889 = vsel %vm2888, 1, 0
    %v2890 = vcvt.s32.f32 %v2889
    %2891 = vst [vmem:[%s5 + $0x29] sm:$0x1] %v2890
    %v2892 = vlaneseq
    %v2893 = vshrl.u32 %v2892, 7
    %v2894 = vsub.s32 0, %v2893
    %v2895 = vrot.slane %v2890, %v2894
    %v2896 = vmul.f32 %v2895, %v61
    %v2897 = vmul.f32 %v2895, %v66
    %v2898 = vadd.f32 %v2882, %v2896
    %v2899 = vadd.f32 %v2885, %v2897
    %v2902 = vrot.slane %v2898, 1
    %v2903 = vrot.slane %v2899, 1
    %v2904 = vsel %vm367, %v2902, %v2903
    %v2907 = vsel %vm367, %v2903, 0.0
    %v2908 = vld [vmem:[#allocation2 + $0x2a] sm:$0x1]
    %v2909 = vadd.f32 %v2908, %v2904
    %vm2910 = vcmp.ge.f32.partialorder %v2909, 10.0
    %v2911 = vsel %vm2910, 1, 0
    %v2912 = vcvt.s32.f32 %v2911
    %2913 = vst [vmem:[%s5 + $0x2a] sm:$0x1] %v2912
    %v2914 = vlaneseq
    %v2915 = vshrl.u32 %v2914, 7
    %v2916 = vsub.s32 0, %v2915
    %v2917 = vrot.slane %v2912, %v2916
    %v2918 = vmul.f32 %v2917, %v61
    %v2919 = vmul.f32 %v2917, %v66
    %v2920 = vadd.f32 %v2904, %v2918
    %v2921 = vadd.f32 %v2907, %v2919
    %v2924 = vrot.slane %v2920, 1
    %v2925 = vrot.slane %v2921, 1
    %v2926 = vsel %vm367, %v2924, %v2925
    %v2929 = vsel %vm367, %v2925, 0.0
    %v2930 = vld [vmem:[#allocation2 + $0x2b] sm:$0x1]
    %v2931 = vadd.f32 %v2930, %v2926
    %vm2932 = vcmp.ge.f32.partialorder %v2931, 10.0
    %v2933 = vsel %vm2932, 1, 0
    %v2934 = vcvt.s32.f32 %v2933
    %2935 = vst [vmem:[%s5 + $0x2b] sm:$0x1] %v2934
    %v2936 = vlaneseq
    %v2937 = vshrl.u32 %v2936, 7
    %v2938 = vsub.s32 0, %v2937
    %v2939 = vrot.slane %v2934, %v2938
    %v2940 = vmul.f32 %v2939, %v61
    %v2941 = vmul.f32 %v2939, %v66
    %v2942 = vadd.f32 %v2926, %v2940
    %v2943 = vadd.f32 %v2929, %v2941
    %v2946 = vrot.slane %v2942, 1
    %v2947 = vrot.slane %v2943, 1
    %v2948 = vsel %vm367, %v2946, %v2947
    %v2951 = vsel %vm367, %v2947, 0.0
    %v2952 = vld [vmem:[#allocation2 + $0x2c] sm:$0x1]
    %v2953 = vadd.f32 %v2952, %v2948
    %vm2954 = vcmp.ge.f32.partialorder %v2953, 10.0
    %v2955 = vsel %vm2954, 1, 0
    %v2956 = vcvt.s32.f32 %v2955
    %2957 = vst [vmem:[%s5 + $0x2c] sm:$0x1] %v2956
    %v2958 = vlaneseq
    %v2959 = vshrl.u32 %v2958, 7
    %v2960 = vsub.s32 0, %v2959
    %v2961 = vrot.slane %v2956, %v2960
    %v2962 = vmul.f32 %v2961, %v61
    %v2963 = vmul.f32 %v2961, %v66
    %v2964 = vadd.f32 %v2948, %v2962
    %v2965 = vadd.f32 %v2951, %v2963
    %v2968 = vrot.slane %v2964, 1
    %v2969 = vrot.slane %v2965, 1
    %v2970 = vsel %vm367, %v2968, %v2969
    %v2973 = vsel %vm367, %v2969, 0.0
    %v2974 = vld [vmem:[#allocation2 + $0x2d] sm:$0x1]
    %v2975 = vadd.f32 %v2974, %v2970
    %vm2976 = vcmp.ge.f32.partialorder %v2975, 10.0
    %v2977 = vsel %vm2976, 1, 0
    %v2978 = vcvt.s32.f32 %v2977
    %2979 = vst [vmem:[%s5 + $0x2d] sm:$0x1] %v2978
    %v2980 = vlaneseq
    %v2981 = vshrl.u32 %v2980, 7
    %v2982 = vsub.s32 0, %v2981
    %v2983 = vrot.slane %v2978, %v2982
    %v2984 = vmul.f32 %v2983, %v61
    %v2985 = vmul.f32 %v2983, %v66
    %v2986 = vadd.f32 %v2970, %v2984
    %v2987 = vadd.f32 %v2973, %v2985
    %v2990 = vrot.slane %v2986, 1
    %v2991 = vrot.slane %v2987, 1
    %v2992 = vsel %vm367, %v2990, %v2991
    %v2995 = vsel %vm367, %v2991, 0.0
    %v2996 = vld [vmem:[#allocation2 + $0x2e] sm:$0x1]
    %v2997 = vadd.f32 %v2996, %v2992
    %vm2998 = vcmp.ge.f32.partialorder %v2997, 10.0
    %v2999 = vsel %vm2998, 1, 0
    %v3000 = vcvt.s32.f32 %v2999
    %3001 = vst [vmem:[%s5 + $0x2e] sm:$0x1] %v3000
    %v3002 = vlaneseq
    %v3003 = vshrl.u32 %v3002, 7
    %v3004 = vsub.s32 0, %v3003
    %v3005 = vrot.slane %v3000, %v3004
    %v3006 = vmul.f32 %v3005, %v61
    %v3007 = vmul.f32 %v3005, %v66
    %v3008 = vadd.f32 %v2992, %v3006
    %v3009 = vadd.f32 %v2995, %v3007
    %v3012 = vrot.slane %v3008, 1
    %v3013 = vrot.slane %v3009, 1
    %v3014 = vsel %vm367, %v3012, %v3013
    %v3017 = vsel %vm367, %v3013, 0.0
    %v3018 = vld [vmem:[#allocation2 + $0x2f] sm:$0x1]
    %v3019 = vadd.f32 %v3018, %v3014
    %vm3020 = vcmp.ge.f32.partialorder %v3019, 10.0
    %v3021 = vsel %vm3020, 1, 0
    %v3022 = vcvt.s32.f32 %v3021
    %3023 = vst [vmem:[%s5 + $0x2f] sm:$0x1] %v3022
    %v3024 = vlaneseq
    %v3025 = vshrl.u32 %v3024, 7
    %v3026 = vsub.s32 0, %v3025
    %v3027 = vrot.slane %v3022, %v3026
    %v3028 = vmul.f32 %v3027, %v61
    %v3029 = vmul.f32 %v3027, %v66
    %v3030 = vadd.f32 %v3014, %v3028
    %v3031 = vadd.f32 %v3017, %v3029
    %v3034 = vrot.slane %v3030, 1
    %v3035 = vrot.slane %v3031, 1
    %v3036 = vsel %vm367, %v3034, %v3035
    %v3039 = vsel %vm367, %v3035, 0.0
    %v3040 = vld [vmem:[#allocation2 + $0x30] sm:$0x1]
    %v3041 = vadd.f32 %v3040, %v3036
    %vm3042 = vcmp.ge.f32.partialorder %v3041, 10.0
    %v3043 = vsel %vm3042, 1, 0
    %v3044 = vcvt.s32.f32 %v3043
    %3045 = vst [vmem:[%s5 + $0x30] sm:$0x1] %v3044
    %v3046 = vlaneseq
    %v3047 = vshrl.u32 %v3046, 7
    %v3048 = vsub.s32 0, %v3047
    %v3049 = vrot.slane %v3044, %v3048
    %v3050 = vmul.f32 %v3049, %v61
    %v3051 = vmul.f32 %v3049, %v66
    %v3052 = vadd.f32 %v3036, %v3050
    %v3053 = vadd.f32 %v3039, %v3051
    %v3056 = vrot.slane %v3052, 1
    %v3057 = vrot.slane %v3053, 1
    %v3058 = vsel %vm367, %v3056, %v3057
    %v3061 = vsel %vm367, %v3057, 0.0
    %v3062 = vld [vmem:[#allocation2 + $0x31] sm:$0x1]
    %v3063 = vadd.f32 %v3062, %v3058
    %vm3064 = vcmp.ge.f32.partialorder %v3063, 10.0
    %v3065 = vsel %vm3064, 1, 0
    %v3066 = vcvt.s32.f32 %v3065
    %3067 = vst [vmem:[%s5 + $0x31] sm:$0x1] %v3066
    %v3068 = vlaneseq
    %v3069 = vshrl.u32 %v3068, 7
    %v3070 = vsub.s32 0, %v3069
    %v3071 = vrot.slane %v3066, %v3070
    %v3072 = vmul.f32 %v3071, %v61
    %v3073 = vmul.f32 %v3071, %v66
    %v3074 = vadd.f32 %v3058, %v3072
    %v3075 = vadd.f32 %v3061, %v3073
    %v3078 = vrot.slane %v3074, 1
    %v3079 = vrot.slane %v3075, 1
    %v3080 = vsel %vm367, %v3078, %v3079
    %v3083 = vsel %vm367, %v3079, 0.0
    %v3084 = vld [vmem:[#allocation2 + $0x32] sm:$0x1]
    %v3085 = vadd.f32 %v3084, %v3080
    %vm3086 = vcmp.ge.f32.partialorder %v3085, 10.0
    %v3087 = vsel %vm3086, 1, 0
    %v3088 = vcvt.s32.f32 %v3087
    %3089 = vst [vmem:[%s5 + $0x32] sm:$0x1] %v3088
    %v3090 = vlaneseq
    %v3091 = vshrl.u32 %v3090, 7
    %v3092 = vsub.s32 0, %v3091
    %v3093 = vrot.slane %v3088, %v3092
    %v3094 = vmul.f32 %v3093, %v61
    %v3095 = vmul.f32 %v3093, %v66
    %v3096 = vadd.f32 %v3080, %v3094
    %v3097 = vadd.f32 %v3083, %v3095
    %v3100 = vrot.slane %v3096, 1
    %v3101 = vrot.slane %v3097, 1
    %v3102 = vsel %vm367, %v3100, %v3101
    %v3105 = vsel %vm367, %v3101, 0.0
    %v3106 = vld [vmem:[#allocation2 + $0x33] sm:$0x1]
    %v3107 = vadd.f32 %v3106, %v3102
    %vm3108 = vcmp.ge.f32.partialorder %v3107, 10.0
    %v3109 = vsel %vm3108, 1, 0
    %v3110 = vcvt.s32.f32 %v3109
    %3111 = vst [vmem:[%s5 + $0x33] sm:$0x1] %v3110
    %v3112 = vlaneseq
    %v3113 = vshrl.u32 %v3112, 7
    %v3114 = vsub.s32 0, %v3113
    %v3115 = vrot.slane %v3110, %v3114
    %v3116 = vmul.f32 %v3115, %v61
    %v3117 = vmul.f32 %v3115, %v66
    %v3118 = vadd.f32 %v3102, %v3116
    %v3119 = vadd.f32 %v3105, %v3117
    %v3122 = vrot.slane %v3118, 1
    %v3123 = vrot.slane %v3119, 1
    %v3124 = vsel %vm367, %v3122, %v3123
    %v3127 = vsel %vm367, %v3123, 0.0
    %v3128 = vld [vmem:[#allocation2 + $0x34] sm:$0x1]
    %v3129 = vadd.f32 %v3128, %v3124
    %vm3130 = vcmp.ge.f32.partialorder %v3129, 10.0
    %v3131 = vsel %vm3130, 1, 0
    %v3132 = vcvt.s32.f32 %v3131
    %3133 = vst [vmem:[%s5 + $0x34] sm:$0x1] %v3132
    %v3134 = vlaneseq
    %v3135 = vshrl.u32 %v3134, 7
    %v3136 = vsub.s32 0, %v3135
    %v3137 = vrot.slane %v3132, %v3136
    %v3138 = vmul.f32 %v3137, %v61
    %v3139 = vmul.f32 %v3137, %v66
    %v3140 = vadd.f32 %v3124, %v3138
    %v3141 = vadd.f32 %v3127, %v3139
    %v3144 = vrot.slane %v3140, 1
    %v3145 = vrot.slane %v3141, 1
    %v3146 = vsel %vm367, %v3144, %v3145
    %v3149 = vsel %vm367, %v3145, 0.0
    %v3150 = vld [vmem:[#allocation2 + $0x35] sm:$0x1]
    %v3151 = vadd.f32 %v3150, %v3146
    %vm3152 = vcmp.ge.f32.partialorder %v3151, 10.0
    %v3153 = vsel %vm3152, 1, 0
    %v3154 = vcvt.s32.f32 %v3153
    %3155 = vst [vmem:[%s5 + $0x35] sm:$0x1] %v3154
    %v3156 = vlaneseq
    %v3157 = vshrl.u32 %v3156, 7
    %v3158 = vsub.s32 0, %v3157
    %v3159 = vrot.slane %v3154, %v3158
    %v3160 = vmul.f32 %v3159, %v61
    %v3161 = vmul.f32 %v3159, %v66
    %v3162 = vadd.f32 %v3146, %v3160
    %v3163 = vadd.f32 %v3149, %v3161
    %v3166 = vrot.slane %v3162, 1
    %v3167 = vrot.slane %v3163, 1
    %v3168 = vsel %vm367, %v3166, %v3167
    %v3171 = vsel %vm367, %v3167, 0.0
    %v3172 = vld [vmem:[#allocation2 + $0x36] sm:$0x1]
    %v3173 = vadd.f32 %v3172, %v3168
    %vm3174 = vcmp.ge.f32.partialorder %v3173, 10.0
    %v3175 = vsel %vm3174, 1, 0
    %v3176 = vcvt.s32.f32 %v3175
    %3177 = vst [vmem:[%s5 + $0x36] sm:$0x1] %v3176
    %v3178 = vlaneseq
    %v3179 = vshrl.u32 %v3178, 7
    %v3180 = vsub.s32 0, %v3179
    %v3181 = vrot.slane %v3176, %v3180
    %v3182 = vmul.f32 %v3181, %v61
    %v3183 = vmul.f32 %v3181, %v66
    %v3184 = vadd.f32 %v3168, %v3182
    %v3185 = vadd.f32 %v3171, %v3183
    %v3188 = vrot.slane %v3184, 1
    %v3189 = vrot.slane %v3185, 1
    %v3190 = vsel %vm367, %v3188, %v3189
    %v3193 = vsel %vm367, %v3189, 0.0
    %v3194 = vld [vmem:[#allocation2 + $0x37] sm:$0x1]
    %v3195 = vadd.f32 %v3194, %v3190
    %vm3196 = vcmp.ge.f32.partialorder %v3195, 10.0
    %v3197 = vsel %vm3196, 1, 0
    %v3198 = vcvt.s32.f32 %v3197
    %3199 = vst [vmem:[%s5 + $0x37] sm:$0x1] %v3198
    %v3200 = vlaneseq
    %v3201 = vshrl.u32 %v3200, 7
    %v3202 = vsub.s32 0, %v3201
    %v3203 = vrot.slane %v3198, %v3202
    %v3204 = vmul.f32 %v3203, %v61
    %v3205 = vmul.f32 %v3203, %v66
    %v3206 = vadd.f32 %v3190, %v3204
    %v3207 = vadd.f32 %v3193, %v3205
    %v3210 = vrot.slane %v3206, 1
    %v3211 = vrot.slane %v3207, 1
    %v3212 = vsel %vm367, %v3210, %v3211
    %v3215 = vsel %vm367, %v3211, 0.0
    %v3216 = vld [vmem:[#allocation2 + $0x38] sm:$0x1]
    %v3217 = vadd.f32 %v3216, %v3212
    %vm3218 = vcmp.ge.f32.partialorder %v3217, 10.0
    %v3219 = vsel %vm3218, 1, 0
    %v3220 = vcvt.s32.f32 %v3219
    %3221 = vst [vmem:[%s5 + $0x38] sm:$0x1] %v3220
    %v3222 = vlaneseq
    %v3223 = vshrl.u32 %v3222, 7
    %v3224 = vsub.s32 0, %v3223
    %v3225 = vrot.slane %v3220, %v3224
    %v3226 = vmul.f32 %v3225, %v61
    %v3227 = vmul.f32 %v3225, %v66
    %v3228 = vadd.f32 %v3212, %v3226
    %v3229 = vadd.f32 %v3215, %v3227
    %v3232 = vrot.slane %v3228, 1
    %v3233 = vrot.slane %v3229, 1
    %v3234 = vsel %vm367, %v3232, %v3233
    %v3237 = vsel %vm367, %v3233, 0.0
    %v3238 = vld [vmem:[#allocation2 + $0x39] sm:$0x1]
    %v3239 = vadd.f32 %v3238, %v3234
    %vm3240 = vcmp.ge.f32.partialorder %v3239, 10.0
    %v3241 = vsel %vm3240, 1, 0
    %v3242 = vcvt.s32.f32 %v3241
    %3243 = vst [vmem:[%s5 + $0x39] sm:$0x1] %v3242
    %v3244 = vlaneseq
    %v3245 = vshrl.u32 %v3244, 7
    %v3246 = vsub.s32 0, %v3245
    %v3247 = vrot.slane %v3242, %v3246
    %v3248 = vmul.f32 %v3247, %v61
    %v3249 = vmul.f32 %v3247, %v66
    %v3250 = vadd.f32 %v3234, %v3248
    %v3251 = vadd.f32 %v3237, %v3249
    %v3254 = vrot.slane %v3250, 1
    %v3255 = vrot.slane %v3251, 1
    %v3256 = vsel %vm367, %v3254, %v3255
    %v3259 = vsel %vm367, %v3255, 0.0
    %v3260 = vld [vmem:[#allocation2 + $0x3a] sm:$0x1]
    %v3261 = vadd.f32 %v3260, %v3256
    %vm3262 = vcmp.ge.f32.partialorder %v3261, 10.0
    %v3263 = vsel %vm3262, 1, 0
    %v3264 = vcvt.s32.f32 %v3263
    %3265 = vst [vmem:[%s5 + $0x3a] sm:$0x1] %v3264
    %v3266 = vlaneseq
    %v3267 = vshrl.u32 %v3266, 7
    %v3268 = vsub.s32 0, %v3267
    %v3269 = vrot.slane %v3264, %v3268
    %v3270 = vmul.f32 %v3269, %v61
    %v3271 = vmul.f32 %v3269, %v66
    %v3272 = vadd.f32 %v3256, %v3270
    %v3273 = vadd.f32 %v3259, %v3271
    %v3276 = vrot.slane %v3272, 1
    %v3277 = vrot.slane %v3273, 1
    %v3278 = vsel %vm367, %v3276, %v3277
    %v3281 = vsel %vm367, %v3277, 0.0
    %v3282 = vld [vmem:[#allocation2 + $0x3b] sm:$0x1]
    %v3283 = vadd.f32 %v3282, %v3278
    %vm3284 = vcmp.ge.f32.partialorder %v3283, 10.0
    %v3285 = vsel %vm3284, 1, 0
    %v3286 = vcvt.s32.f32 %v3285
    %3287 = vst [vmem:[%s5 + $0x3b] sm:$0x1] %v3286
    %v3288 = vlaneseq
    %v3289 = vshrl.u32 %v3288, 7
    %v3290 = vsub.s32 0, %v3289
    %v3291 = vrot.slane %v3286, %v3290
    %v3292 = vmul.f32 %v3291, %v61
    %v3293 = vmul.f32 %v3291, %v66
    %v3294 = vadd.f32 %v3278, %v3292
    %v3295 = vadd.f32 %v3281, %v3293
    %v3298 = vrot.slane %v3294, 1
    %v3299 = vrot.slane %v3295, 1
    %v3300 = vsel %vm367, %v3298, %v3299
    %v3303 = vsel %vm367, %v3299, 0.0
    %v3304 = vld [vmem:[#allocation2 + $0x3c] sm:$0x1]
    %v3305 = vadd.f32 %v3304, %v3300
    %vm3306 = vcmp.ge.f32.partialorder %v3305, 10.0
    %v3307 = vsel %vm3306, 1, 0
    %v3308 = vcvt.s32.f32 %v3307
    %3309 = vst [vmem:[%s5 + $0x3c] sm:$0x1] %v3308
    %v3310 = vlaneseq
    %v3311 = vshrl.u32 %v3310, 7
    %v3312 = vsub.s32 0, %v3311
    %v3313 = vrot.slane %v3308, %v3312
    %v3314 = vmul.f32 %v3313, %v61
    %v3315 = vmul.f32 %v3313, %v66
    %v3316 = vadd.f32 %v3300, %v3314
    %v3317 = vadd.f32 %v3303, %v3315
    %v3320 = vrot.slane %v3316, 1
    %v3321 = vrot.slane %v3317, 1
    %v3322 = vsel %vm367, %v3320, %v3321
    %v3325 = vsel %vm367, %v3321, 0.0
    %v3326 = vld [vmem:[#allocation2 + $0x3d] sm:$0x1]
    %v3327 = vadd.f32 %v3326, %v3322
    %vm3328 = vcmp.ge.f32.partialorder %v3327, 10.0
    %v3329 = vsel %vm3328, 1, 0
    %v3330 = vcvt.s32.f32 %v3329
    %3331 = vst [vmem:[%s5 + $0x3d] sm:$0x1] %v3330
    %v3332 = vlaneseq
    %v3333 = vshrl.u32 %v3332, 7
    %v3334 = vsub.s32 0, %v3333
    %v3335 = vrot.slane %v3330, %v3334
    %v3336 = vmul.f32 %v3335, %v61
    %v3337 = vmul.f32 %v3335, %v66
    %v3338 = vadd.f32 %v3322, %v3336
    %v3339 = vadd.f32 %v3325, %v3337
    %v3342 = vrot.slane %v3338, 1
    %v3343 = vrot.slane %v3339, 1
    %v3344 = vsel %vm367, %v3342, %v3343
    %v3347 = vsel %vm367, %v3343, 0.0
    %v3348 = vld [vmem:[#allocation2 + $0x3e] sm:$0x1]
    %v3349 = vadd.f32 %v3348, %v3344
    %vm3350 = vcmp.ge.f32.partialorder %v3349, 10.0
    %v3351 = vsel %vm3350, 1, 0
    %v3352 = vcvt.s32.f32 %v3351
    %3353 = vst [vmem:[%s5 + $0x3e] sm:$0x1] %v3352
    %v3354 = vlaneseq
    %v3355 = vshrl.u32 %v3354, 7
    %v3356 = vsub.s32 0, %v3355
    %v3357 = vrot.slane %v3352, %v3356
    %v3358 = vmul.f32 %v3357, %v61
    %v3359 = vmul.f32 %v3357, %v66
    %v3360 = vadd.f32 %v3344, %v3358
    %v3361 = vadd.f32 %v3347, %v3359
    %v3364 = vrot.slane %v3360, 1
    %v3365 = vrot.slane %v3361, 1
    %v3366 = vsel %vm367, %v3364, %v3365
    %v3368 = vld [vmem:[#allocation2 + $0x3f] sm:$0x1]
    %v3369 = vadd.f32 %v3368, %v3366
    %vm3370 = vcmp.ge.f32.partialorder %v3369, 10.0
    %v3371 = vsel %vm3370, 1, 0
    %v3372 = vcvt.s32.f32 %v3371
    %3373 = vst [vmem:[%s5 + $0x3f] sm:$0x1] %v3372
    // Predicated region
    $region30: #{network_forward.1} parent=1 // pred_check
      _
    $region31: #{network_forward.1} parent=1 // pred_check_branch
      %3375 = sbr.rel (0) target = $region33
    $region32: #{network_forward.1} parent=1 // pred_region
      _
    $region33: #{network_forward.1} parent=1 // pred_fallthru
      _
    // Predicated region
    $region34: #{network_forward.1} parent=1 // pred_check
      _
    $region35: #{network_forward.1} parent=1 // pred_check_branch
      %3377 = sbr.rel (0) target = $region37
    $region36: #{network_forward.1} parent=1 // pred_region
      _
    $region37: #{network_forward.1} parent=1 // pred_fallthru
      _
    %3378 = vsyncpa [#allocation5], 1
    %3379 = vsyncpa [#allocation7], 1

</llo_original>
